<compile_context>
chip_gen: v6e
topology: v6e:2x2x1
jax: 0.10.0
libtpu: 0.0.40
codegen_flags: <defaults>
</compile_context>

<pallas_src>
import functools

import jax
import jax.numpy as jnp
from jax import lax
from jax.experimental import pallas as pl
from jax.experimental.pallas import tpu as pltpu


def _prelu(v, a):
    return jnp.where(v >= 0, v, a * v)


def _rca_kernel(H, W, C, nb,
                x_ref, w1_ref, b1_ref, w2_ref, b2_ref,
                wc1_ref, bc1_ref, wc2_ref, bc2_ref, alpha_ref,
                o_ref, pad_ref):
    HW = H * W
    a1 = alpha_ref[0, 0]          # firstblock PReLU alpha
    ac = alpha_ref[0, 1]          # cab PReLU alpha

    x4 = x_ref[...]               # (nb, H, W, C) f32, also the residual

    # zero the padded scratch once; only its interior is ever rewritten below,
    # so the 1-pixel halo stays zero for both convolutions.
    pad_ref[...] = jnp.zeros_like(pad_ref)

    def conv3x3(v4, w9_ref, b_ref):
        # write the (bf16) tile into the interior of the zero-padded scratch
        pad_ref[:, 1:H + 1, 1:W + 1, :] = v4.astype(jnp.bfloat16)
        # gather the 9 spatially-shifted taps and fuse them into one K=9C matmul
        taps = [pad_ref[:, ky:ky + H, kx:kx + W, :].reshape(nb * HW, C)
                for ky in range(3) for kx in range(3)]
        col = jnp.concatenate(taps, axis=-1)                     # (nb*HW, 9C) bf16
        y = jnp.dot(col, w9_ref[...],
                    preferred_element_type=jnp.float32)          # (nb*HW, C) f32
        return y + b_ref[...]

    # ---- firstblock: conv3x3 -> PReLU -> conv3x3 ----
    h1 = _prelu(conv3x3(x4, w1_ref, b1_ref), a1)                 # (nb*HW, C)
    data = conv3x3(h1.reshape(nb, H, W, C), w2_ref, b2_ref)      # (nb*HW, C)

    xf = x4.reshape(nb * HW, C)

    # ---- channel attention (cab) + residual, per image ----
    rows = []
    for i in range(nb):                                          # nb is small & static
        di = data[i * HW:(i + 1) * HW, :]                        # (HW, C)
        gap = jnp.mean(di, axis=0, keepdims=True)                # (1, C)
        t = jnp.sum(gap * wc1_ref[...], axis=1, keepdims=True) + bc1_ref[...]   # (Cr, 1)
        t = _prelu(t, ac)
        s = jnp.sum(t * wc2_ref[...], axis=0, keepdims=True) + bc2_ref[...]     # (1, C)
        cs = pl.reciprocal(1.0 + jnp.exp(-s), approx=True)       # sigmoid (EUP recip)
        rows.append(di * cs + xf[i * HW:(i + 1) * HW, :])
    out = rows[0] if nb == 1 else jnp.concatenate(rows, axis=0)  # (nb*HW, C)

    o_ref[...] = out.reshape(nb, H, W, C)


def rca_block_pallas(x_nhwc, params, nb=None):
    N, H, W, C = x_nhwc.shape
    Cr = params['wc1'].shape[0]
    if nb is None:
        # choose a batch block so M = nb*H*W >= 256 (one full MXU pass) if possible
        nb = 1
        while nb < N and nb * H * W < 256 and N % (nb * 2) == 0:
            nb *= 2
    assert N % nb == 0

    # 3x3 conv weights (HWIO) reshaped for the fused im2col matmul, cast to bf16.
    w9_1 = params['w1'].reshape(9 * C, C).astype(jnp.bfloat16)
    w9_2 = params['w2'].reshape(9 * C, C).astype(jnp.bfloat16)

    kernel = functools.partial(_rca_kernel, H, W, C, nb)

    def const_spec(shape):
        return pl.BlockSpec(shape, lambda n, _r=len(shape): (0,) * _r)

    in_specs = [
        pl.BlockSpec((nb, H, W, C), lambda n: (n, 0, 0, 0)),   # x
        const_spec((9 * C, C)),   # w1 (im2col layout, bf16)
        const_spec((1, C)),       # b1
        const_spec((9 * C, C)),   # w2 (im2col layout, bf16)
        const_spec((1, C)),       # b2
        const_spec((Cr, C)),      # wc1  (stored [out=Cr, in=C])
        const_spec((Cr, 1)),      # bc1
        const_spec((Cr, C)),      # wc2  (stored [in=Cr, out=C])
        const_spec((1, C)),       # bc2
        pl.BlockSpec(memory_space=pltpu.MemorySpace.SMEM),     # packed PReLU alphas
    ]
    out_spec = pl.BlockSpec((nb, H, W, C), lambda n: (n, 0, 0, 0))

    return pl.pallas_call(
        kernel,
        out_shape=jax.ShapeDtypeStruct((N, H, W, C), jnp.float32),
        grid_spec=pltpu.PrefetchScalarGridSpec(
            num_scalar_prefetch=0,
            grid=(N // nb,),
            in_specs=in_specs,
            out_specs=out_spec,
            scratch_shapes=[pltpu.VMEM((nb, H + 2, W + 2, C), jnp.bfloat16)]),
        compiler_params=pltpu.CompilerParams(
            dimension_semantics=("parallel",)),
    )(x_nhwc, w9_1, params['b1'], w9_2, params['b2'],
      params['wc1'], params['bc1'], params['wc2'], params['bc2'],
      params['alphas'])


def rca_block_ref(x_nhwc, p):
    """Pure-JAX reference (same math as the PyTorch module, NHWC)."""
    def conv(v, w, b):
        y = lax.conv_general_dilated(
            v, w, window_strides=(1, 1), padding='SAME',
            dimension_numbers=('NHWC', 'HWIO', 'NHWC'),
            precision=lax.Precision.HIGHEST)
        return y + b.reshape(1, 1, 1, -1)

    a1 = p['alphas'][0, 0]
    ac = p['alphas'][0, 1]
    data = conv(_prelu(conv(x_nhwc, p['w1'], p['b1']), a1), p['w2'], p['b2'])
    gap = data.mean(axis=(1, 2))                                   # (N, C)
    t = _prelu(gap @ p['wc1'].T + p['bc1'].reshape(1, -1), ac)     # (N, Cr)
    cs = jax.nn.sigmoid(t @ p['wc2'] + p['bc2'])                   # (N, C)
    return data * cs[:, None, None, :] + x_nhwc


if __name__ == "__main__":
    key = jax.random.PRNGKey(0)
    N, C, H, W = 2, 128, 16, 16        # features=128 -> squeeze channels = 8
    Cr = C // 16
    ks = jax.random.split(key, 9)

    wscale = float((9 * C) ** -0.5)    # keep conv activations O(1)
    params = {
        'w1': wscale * jax.random.normal(ks[0], (3, 3, C, C), jnp.float32),
        'b1': 0.05 * jax.random.normal(ks[1], (1, C), jnp.float32),
        'w2': wscale * jax.random.normal(ks[2], (3, 3, C, C), jnp.float32),
        'b2': 0.05 * jax.random.normal(ks[3], (1, C), jnp.float32),
        'wc1': 0.2 * jax.random.normal(ks[4], (Cr, C), jnp.float32),
        'bc1': 0.05 * jax.random.normal(ks[5], (Cr, 1), jnp.float32),
        'wc2': 0.2 * jax.random.normal(ks[6], (Cr, C), jnp.float32),
        'bc2': 0.05 * jax.random.normal(ks[7], (1, C), jnp.float32),
        # [firstblock PReLU alpha, cab PReLU alpha] (PyTorch default init 0.25)
        'alphas': jnp.full((1, 2), 0.25, jnp.float32),
    }

    # PyTorch-style NCHW input, transposed to the kernel's NHWC layout.
    x_nchw = jax.random.normal(ks[8], (N, C, H, W), jnp.float32)
    x_nhwc = jnp.transpose(x_nchw, (0, 2, 3, 1))

    out = jax.block_until_ready(rca_block_pallas(x_nhwc, params))
    ref = rca_block_ref(x_nhwc, params)

    assert out.shape == (N, H, W, C)
    assert bool(jnp.allclose(out, ref, atol=4e-2, rtol=4e-2)), (
        "max abs err = %f" % float(jnp.max(jnp.abs(out - ref))))

    print("KERNEL_OK")
</pallas_src>

<mosaic_0001>
module attributes {stable_mosaic.version = 11 : i64} {
  func.func @_rca_kernel(%arg0: i32, %arg1: memref<1x16x16x128xf32, #tpu.memory_space<vmem>>, %arg2: memref<1152x128xbf16, #tpu.memory_space<vmem>>, %arg3: memref<1x128xf32, #tpu.memory_space<vmem>>, %arg4: memref<1152x128xbf16, #tpu.memory_space<vmem>>, %arg5: memref<1x128xf32, #tpu.memory_space<vmem>>, %arg6: memref<8x128xf32, #tpu.memory_space<vmem>>, %arg7: memref<8x1xf32, #tpu.memory_space<vmem>>, %arg8: memref<8x128xf32, #tpu.memory_space<vmem>>, %arg9: memref<1x128xf32, #tpu.memory_space<vmem>>, %arg10: memref<1x2xf32, #tpu.memory_space<smem>>, %arg11: memref<1x16x16x128xf32, #tpu.memory_space<vmem>>, %arg12: memref<1x18x18x128xbf16, #tpu.memory_space<vmem>>) attributes {dimension_semantics = [#tpu.dimension_semantics<parallel>], iteration_bounds = array<i64: 2>, scalar_prefetch = 0 : i64, scratch_operands = 1 : i64, tpu.core_type = #tpu.core_type<tc>, window_params = [{transform_indices = @transform_0, window_bounds = array<i64: 1, 16, 16, 128>}, {pipeline_mode = #tpu.pipeline_mode<synchronous>, transform_indices = @transform_1, window_bounds = array<i64: 1152, 128>}, {pipeline_mode = #tpu.pipeline_mode<synchronous>, transform_indices = @transform_2, window_bounds = array<i64: 1, 128>}, {pipeline_mode = #tpu.pipeline_mode<synchronous>, transform_indices = @transform_3, window_bounds = array<i64: 1152, 128>}, {pipeline_mode = #tpu.pipeline_mode<synchronous>, transform_indices = @transform_4, window_bounds = array<i64: 1, 128>}, {pipeline_mode = #tpu.pipeline_mode<synchronous>, transform_indices = @transform_5, window_bounds = array<i64: 8, 128>}, {pipeline_mode = #tpu.pipeline_mode<synchronous>, transform_indices = @transform_6, window_bounds = array<i64: 8, 1>}, {pipeline_mode = #tpu.pipeline_mode<synchronous>, transform_indices = @transform_7, window_bounds = array<i64: 8, 128>}, {pipeline_mode = #tpu.pipeline_mode<synchronous>, transform_indices = @transform_8, window_bounds = array<i64: 1, 128>}, {transform_indices = @transform_9, window_bounds = array<i64: 1, 2>}, {transform_indices = @transform_10, window_bounds = array<i64: 1, 16, 16, 128>}]} {
    %c0 = arith.constant 0 : index
    %c0_0 = arith.constant 0 : index
    %0 = memref.load %arg10[%c0, %c0_0] : memref<1x2xf32, #tpu.memory_space<smem>>
    %c0_1 = arith.constant 0 : index
    %c1 = arith.constant 1 : index
    %1 = memref.load %arg10[%c0_1, %c1] : memref<1x2xf32, #tpu.memory_space<smem>>
    %c0_2 = arith.constant 0 : index
    %c0_3 = arith.constant 0 : index
    %c0_4 = arith.constant 0 : index
    %c0_5 = arith.constant 0 : index
    %2 = vector.load %arg1[%c0_2, %c0_3, %c0_4, %c0_5] : memref<1x16x16x128xf32, #tpu.memory_space<vmem>>, vector<1x16x16x128xf32>
    %cst = arith.constant 0.000000e+00 : bf16
    %3 = vector.broadcast %cst : bf16 to vector<1x18x18x128xbf16>
    %c0_6 = arith.constant 0 : index
    %c0_7 = arith.constant 0 : index
    %c0_8 = arith.constant 0 : index
    %c0_9 = arith.constant 0 : index
    %4 = vector.load %arg12[%c0_6, %c0_7, %c0_8, %c0_9] : memref<1x18x18x128xbf16, #tpu.memory_space<vmem>>, vector<1x18x18x128xbf16>
    tpu.vector_store %arg12[%c0_6, %c0_7, %c0_8, %c0_9], %3 {strides = array<i32>} : memref<1x18x18x128xbf16, #tpu.memory_space<vmem>>, vector<1x18x18x128xbf16>,
    %5 = arith.truncf %2 : vector<1x16x16x128xf32> to vector<1x16x16x128xbf16>
    %c0_10 = arith.constant 0 : index
    %c1_11 = arith.constant 1 : index
    %c1_12 = arith.constant 1 : index
    %c0_13 = arith.constant 0 : index
    %6 = vector.load %arg12[%c0_10, %c1_11, %c1_12, %c0_13] : memref<1x18x18x128xbf16, #tpu.memory_space<vmem>>, vector<1x16x16x128xbf16>
    tpu.vector_store %arg12[%c0_10, %c1_11, %c1_12, %c0_13], %5 {strides = array<i32>} : memref<1x18x18x128xbf16, #tpu.memory_space<vmem>>, vector<1x16x16x128xbf16>,
    %c0_14 = arith.constant 0 : index
    %c0_15 = arith.constant 0 : index
    %c0_16 = arith.constant 0 : index
    %c0_17 = arith.constant 0 : index
    %7 = vector.load %arg12[%c0_14, %c0_15, %c0_16, %c0_17] : memref<1x18x18x128xbf16, #tpu.memory_space<vmem>>, vector<1x16x16x128xbf16>
    %8 = vector.shape_cast %7 : vector<1x16x16x128xbf16> to vector<256x128xbf16>
    %c0_18 = arith.constant 0 : index
    %c0_19 = arith.constant 0 : index
    %c1_20 = arith.constant 1 : index
    %c0_21 = arith.constant 0 : index
    %9 = vector.load %arg12[%c0_18, %c0_19, %c1_20, %c0_21] : memref<1x18x18x128xbf16, #tpu.memory_space<vmem>>, vector<1x16x16x128xbf16>
    %10 = vector.shape_cast %9 : vector<1x16x16x128xbf16> to vector<256x128xbf16>
    %c0_22 = arith.constant 0 : index
    %c0_23 = arith.constant 0 : index
    %c2 = arith.constant 2 : index
    %c0_24 = arith.constant 0 : index
    %11 = vector.load %arg12[%c0_22, %c0_23, %c2, %c0_24] : memref<1x18x18x128xbf16, #tpu.memory_space<vmem>>, vector<1x16x16x128xbf16>
    %12 = vector.shape_cast %11 : vector<1x16x16x128xbf16> to vector<256x128xbf16>
    %c0_25 = arith.constant 0 : index
    %c1_26 = arith.constant 1 : index
    %c0_27 = arith.constant 0 : index
    %c0_28 = arith.constant 0 : index
    %13 = vector.load %arg12[%c0_25, %c1_26, %c0_27, %c0_28] : memref<1x18x18x128xbf16, #tpu.memory_space<vmem>>, vector<1x16x16x128xbf16>
    %14 = vector.shape_cast %13 : vector<1x16x16x128xbf16> to vector<256x128xbf16>
    %c0_29 = arith.constant 0 : index
    %c1_30 = arith.constant 1 : index
    %c1_31 = arith.constant 1 : index
    %c0_32 = arith.constant 0 : index
    %15 = vector.load %arg12[%c0_29, %c1_30, %c1_31, %c0_32] : memref<1x18x18x128xbf16, #tpu.memory_space<vmem>>, vector<1x16x16x128xbf16>
    %16 = vector.shape_cast %15 : vector<1x16x16x128xbf16> to vector<256x128xbf16>
    %c0_33 = arith.constant 0 : index
    %c1_34 = arith.constant 1 : index
    %c2_35 = arith.constant 2 : index
    %c0_36 = arith.constant 0 : index
    %17 = vector.load %arg12[%c0_33, %c1_34, %c2_35, %c0_36] : memref<1x18x18x128xbf16, #tpu.memory_space<vmem>>, vector<1x16x16x128xbf16>
    %18 = vector.shape_cast %17 : vector<1x16x16x128xbf16> to vector<256x128xbf16>
    %c0_37 = arith.constant 0 : index
    %c2_38 = arith.constant 2 : index
    %c0_39 = arith.constant 0 : index
    %c0_40 = arith.constant 0 : index
    %19 = vector.load %arg12[%c0_37, %c2_38, %c0_39, %c0_40] : memref<1x18x18x128xbf16, #tpu.memory_space<vmem>>, vector<1x16x16x128xbf16>
    %20 = vector.shape_cast %19 : vector<1x16x16x128xbf16> to vector<256x128xbf16>
    %c0_41 = arith.constant 0 : index
    %c2_42 = arith.constant 2 : index
    %c1_43 = arith.constant 1 : index
    %c0_44 = arith.constant 0 : index
    %21 = vector.load %arg12[%c0_41, %c2_42, %c1_43, %c0_44] : memref<1x18x18x128xbf16, #tpu.memory_space<vmem>>, vector<1x16x16x128xbf16>
    %22 = vector.shape_cast %21 : vector<1x16x16x128xbf16> to vector<256x128xbf16>
    %c0_45 = arith.constant 0 : index
    %c2_46 = arith.constant 2 : index
    %c2_47 = arith.constant 2 : index
    %c0_48 = arith.constant 0 : index
    %23 = vector.load %arg12[%c0_45, %c2_46, %c2_47, %c0_48] : memref<1x18x18x128xbf16, #tpu.memory_space<vmem>>, vector<1x16x16x128xbf16>
    %24 = vector.shape_cast %23 : vector<1x16x16x128xbf16> to vector<256x128xbf16>
    %25 = tpu.concatenate %8, %10, %12, %14, %16, %18, %20, %22, %24 in 1 : vector<256x128xbf16>, vector<256x128xbf16>, vector<256x128xbf16>, vector<256x128xbf16>, vector<256x128xbf16>, vector<256x128xbf16>, vector<256x128xbf16>, vector<256x128xbf16>, vector<256x128xbf16> -> vector<256x1152xbf16>
    %c0_49 = arith.constant 0 : index
    %c0_50 = arith.constant 0 : index
    %26 = vector.load %arg2[%c0_49, %c0_50] : memref<1152x128xbf16, #tpu.memory_space<vmem>>, vector<1152x128xbf16>
    %cst_51 = arith.constant dense<0.000000e+00> : vector<256x128xf32>
    %27 = tpu.matmul %25, %26, %cst_51 {dimension_numbers = #tpu.dot_dimension_numbers<[1], [0], [0], [1], [0, 0, 1, 1], [], []>} : vector<256x1152xbf16>, vector<1152x128xbf16>, vector<256x128xf32> -> vector<256x128xf32>
    %c0_52 = arith.constant 0 : index
    %c0_53 = arith.constant 0 : index
    %28 = vector.load %arg3[%c0_52, %c0_53] : memref<1x128xf32, #tpu.memory_space<vmem>>, vector<1x128xf32>
    %29 = vector.broadcast %28 : vector<1x128xf32> to vector<256x128xf32>
    %30 = arith.addf %27, %29 : vector<256x128xf32>
    %cst_54 = arith.constant 0.000000e+00 : f32
    %31 = vector.broadcast %cst_54 : f32 to vector<256x128xf32>
    %32 = arith.cmpf oge, %30, %31 : vector<256x128xf32>
    %33 = vector.broadcast %0 : f32 to vector<256x128xf32>
    %34 = arith.mulf %33, %30 : vector<256x128xf32>
    %35 = arith.select %32, %30, %34 : vector<256x128xi1>, vector<256x128xf32>
    %36 = vector.shape_cast %35 : vector<256x128xf32> to vector<1x16x16x128xf32>
    %37 = arith.truncf %36 : vector<1x16x16x128xf32> to vector<1x16x16x128xbf16>
    %c0_55 = arith.constant 0 : index
    %c1_56 = arith.constant 1 : index
    %c1_57 = arith.constant 1 : index
    %c0_58 = arith.constant 0 : index
    %38 = vector.load %arg12[%c0_55, %c1_56, %c1_57, %c0_58] : memref<1x18x18x128xbf16, #tpu.memory_space<vmem>>, vector<1x16x16x128xbf16>
    tpu.vector_store %arg12[%c0_55, %c1_56, %c1_57, %c0_58], %37 {strides = array<i32>} : memref<1x18x18x128xbf16, #tpu.memory_space<vmem>>, vector<1x16x16x128xbf16>,
    %c0_59 = arith.constant 0 : index
    %c0_60 = arith.constant 0 : index
    %c0_61 = arith.constant 0 : index
    %c0_62 = arith.constant 0 : index
    %39 = vector.load %arg12[%c0_59, %c0_60, %c0_61, %c0_62] : memref<1x18x18x128xbf16, #tpu.memory_space<vmem>>, vector<1x16x16x128xbf16>
    %40 = vector.shape_cast %39 : vector<1x16x16x128xbf16> to vector<256x128xbf16>
    %c0_63 = arith.constant 0 : index
    %c0_64 = arith.constant 0 : index
    %c1_65 = arith.constant 1 : index
    %c0_66 = arith.constant 0 : index
    %41 = vector.load %arg12[%c0_63, %c0_64, %c1_65, %c0_66] : memref<1x18x18x128xbf16, #tpu.memory_space<vmem>>, vector<1x16x16x128xbf16>
    %42 = vector.shape_cast %41 : vector<1x16x16x128xbf16> to vector<256x128xbf16>
    %c0_67 = arith.constant 0 : index
    %c0_68 = arith.constant 0 : index
    %c2_69 = arith.constant 2 : index
    %c0_70 = arith.constant 0 : index
    %43 = vector.load %arg12[%c0_67, %c0_68, %c2_69, %c0_70] : memref<1x18x18x128xbf16, #tpu.memory_space<vmem>>, vector<1x16x16x128xbf16>
    %44 = vector.shape_cast %43 : vector<1x16x16x128xbf16> to vector<256x128xbf16>
    %c0_71 = arith.constant 0 : index
    %c1_72 = arith.constant 1 : index
    %c0_73 = arith.constant 0 : index
    %c0_74 = arith.constant 0 : index
    %45 = vector.load %arg12[%c0_71, %c1_72, %c0_73, %c0_74] : memref<1x18x18x128xbf16, #tpu.memory_space<vmem>>, vector<1x16x16x128xbf16>
    %46 = vector.shape_cast %45 : vector<1x16x16x128xbf16> to vector<256x128xbf16>
    %c0_75 = arith.constant 0 : index
    %c1_76 = arith.constant 1 : index
    %c1_77 = arith.constant 1 : index
    %c0_78 = arith.constant 0 : index
    %47 = vector.load %arg12[%c0_75, %c1_76, %c1_77, %c0_78] : memref<1x18x18x128xbf16, #tpu.memory_space<vmem>>, vector<1x16x16x128xbf16>
    %48 = vector.shape_cast %47 : vector<1x16x16x128xbf16> to vector<256x128xbf16>
    %c0_79 = arith.constant 0 : index
    %c1_80 = arith.constant 1 : index
    %c2_81 = arith.constant 2 : index
    %c0_82 = arith.constant 0 : index
    %49 = vector.load %arg12[%c0_79, %c1_80, %c2_81, %c0_82] : memref<1x18x18x128xbf16, #tpu.memory_space<vmem>>, vector<1x16x16x128xbf16>
    %50 = vector.shape_cast %49 : vector<1x16x16x128xbf16> to vector<256x128xbf16>
    %c0_83 = arith.constant 0 : index
    %c2_84 = arith.constant 2 : index
    %c0_85 = arith.constant 0 : index
    %c0_86 = arith.constant 0 : index
    %51 = vector.load %arg12[%c0_83, %c2_84, %c0_85, %c0_86] : memref<1x18x18x128xbf16, #tpu.memory_space<vmem>>, vector<1x16x16x128xbf16>
    %52 = vector.shape_cast %51 : vector<1x16x16x128xbf16> to vector<256x128xbf16>
    %c0_87 = arith.constant 0 : index
    %c2_88 = arith.constant 2 : index
    %c1_89 = arith.constant 1 : index
    %c0_90 = arith.constant 0 : index
    %53 = vector.load %arg12[%c0_87, %c2_88, %c1_89, %c0_90] : memref<1x18x18x128xbf16, #tpu.memory_space<vmem>>, vector<1x16x16x128xbf16>
    %54 = vector.shape_cast %53 : vector<1x16x16x128xbf16> to vector<256x128xbf16>
    %c0_91 = arith.constant 0 : index
    %c2_92 = arith.constant 2 : index
    %c2_93 = arith.constant 2 : index
    %c0_94 = arith.constant 0 : index
    %55 = vector.load %arg12[%c0_91, %c2_92, %c2_93, %c0_94] : memref<1x18x18x128xbf16, #tpu.memory_space<vmem>>, vector<1x16x16x128xbf16>
    %56 = vector.shape_cast %55 : vector<1x16x16x128xbf16> to vector<256x128xbf16>
    %57 = tpu.concatenate %40, %42, %44, %46, %48, %50, %52, %54, %56 in 1 : vector<256x128xbf16>, vector<256x128xbf16>, vector<256x128xbf16>, vector<256x128xbf16>, vector<256x128xbf16>, vector<256x128xbf16>, vector<256x128xbf16>, vector<256x128xbf16>, vector<256x128xbf16> -> vector<256x1152xbf16>
    %c0_95 = arith.constant 0 : index
    %c0_96 = arith.constant 0 : index
    %58 = vector.load %arg4[%c0_95, %c0_96] : memref<1152x128xbf16, #tpu.memory_space<vmem>>, vector<1152x128xbf16>
    %cst_97 = arith.constant dense<0.000000e+00> : vector<256x128xf32>
    %59 = tpu.matmul %57, %58, %cst_97 {dimension_numbers = #tpu.dot_dimension_numbers<[1], [0], [0], [1], [0, 0, 1, 1], [], []>} : vector<256x1152xbf16>, vector<1152x128xbf16>, vector<256x128xf32> -> vector<256x128xf32>
    %c0_98 = arith.constant 0 : index
    %c0_99 = arith.constant 0 : index
    %60 = vector.load %arg5[%c0_98, %c0_99] : memref<1x128xf32, #tpu.memory_space<vmem>>, vector<1x128xf32>
    %61 = vector.broadcast %60 : vector<1x128xf32> to vector<256x128xf32>
    %62 = arith.addf %59, %61 : vector<256x128xf32>
    %63 = vector.shape_cast %2 : vector<1x16x16x128xf32> to vector<256x128xf32>
    %cst_100 = arith.constant dense<0.000000e+00> : vector<128xf32>
    %64 = vector.multi_reduction <add>, %62, %cst_100 [0] : vector<256x128xf32> to vector<128xf32>
    %65 = vector.shape_cast %64 : vector<128xf32> to vector<1x128xf32>
    %cst_101 = arith.constant 2.560000e+02 : f32
    %66 = vector.broadcast %cst_101 : f32 to vector<1x128xf32>
    %67 = arith.divf %65, %66 : vector<1x128xf32>
    %c0_102 = arith.constant 0 : index
    %c0_103 = arith.constant 0 : index
    %68 = vector.load %arg6[%c0_102, %c0_103] : memref<8x128xf32, #tpu.memory_space<vmem>>, vector<8x128xf32>
    %69 = vector.broadcast %67 : vector<1x128xf32> to vector<8x128xf32>
    %70 = arith.mulf %69, %68 : vector<8x128xf32>
    %cst_104 = arith.constant dense<0.000000e+00> : vector<8xf32>
    %71 = vector.multi_reduction <add>, %70, %cst_104 [1] : vector<8x128xf32> to vector<8xf32>
    %72 = vector.shape_cast %71 : vector<8xf32> to vector<8x1xf32>
    %c0_105 = arith.constant 0 : index
    %c0_106 = arith.constant 0 : index
    %73 = vector.load %arg7[%c0_105, %c0_106] : memref<8x1xf32, #tpu.memory_space<vmem>>, vector<8x1xf32>
    %74 = arith.addf %72, %73 : vector<8x1xf32>
    %cst_107 = arith.constant 0.000000e+00 : f32
    %75 = vector.broadcast %cst_107 : f32 to vector<8x1xf32>
    %76 = arith.cmpf oge, %74, %75 : vector<8x1xf32>
    %77 = vector.broadcast %1 : f32 to vector<8x1xf32>
    %78 = arith.mulf %77, %74 : vector<8x1xf32>
    %79 = arith.select %76, %74, %78 : vector<8x1xi1>, vector<8x1xf32>
    %c0_108 = arith.constant 0 : index
    %c0_109 = arith.constant 0 : index
    %80 = vector.load %arg8[%c0_108, %c0_109] : memref<8x128xf32, #tpu.memory_space<vmem>>, vector<8x128xf32>
    %81 = vector.broadcast %79 : vector<8x1xf32> to vector<8x128xf32>
    %82 = arith.mulf %81, %80 : vector<8x128xf32>
    %cst_110 = arith.constant dense<0.000000e+00> : vector<128xf32>
    %83 = vector.multi_reduction <add>, %82, %cst_110 [0] : vector<8x128xf32> to vector<128xf32>
    %84 = vector.shape_cast %83 : vector<128xf32> to vector<1x128xf32>
    %c0_111 = arith.constant 0 : index
    %c0_112 = arith.constant 0 : index
    %85 = vector.load %arg9[%c0_111, %c0_112] : memref<1x128xf32, #tpu.memory_space<vmem>>, vector<1x128xf32>
    %86 = arith.addf %84, %85 : vector<1x128xf32>
    %cst_113 = arith.constant 0.000000e+00 : f32
    %87 = vector.broadcast %cst_113 : f32 to vector<1x128xf32>
    %88 = arith.subf %87, %86 : vector<1x128xf32>
    %89 = math.exp %88 : vector<1x128xf32>
    %cst_114 = arith.constant 1.000000e+00 : f32
    %90 = vector.broadcast %cst_114 : f32 to vector<1x128xf32>
    %91 = arith.addf %90, %89 : vector<1x128xf32>
    %92 = tpu.reciprocal %91 {approx = true} : vector<1x128xf32> -> vector<1x128xf32>
    %93 = vector.broadcast %92 : vector<1x128xf32> to vector<256x128xf32>
    %94 = arith.mulf %62, %93 : vector<256x128xf32>
    %95 = arith.addf %94, %63 : vector<256x128xf32>
    %96 = vector.shape_cast %95 : vector<256x128xf32> to vector<1x16x16x128xf32>
    %c0_115 = arith.constant 0 : index
    %c0_116 = arith.constant 0 : index
    %c0_117 = arith.constant 0 : index
    %c0_118 = arith.constant 0 : index
    %97 = vector.load %arg11[%c0_115, %c0_116, %c0_117, %c0_118] : memref<1x16x16x128xf32, #tpu.memory_space<vmem>>, vector<1x16x16x128xf32>
    tpu.vector_store %arg11[%c0_115, %c0_116, %c0_117, %c0_118], %96 {strides = array<i32>} : memref<1x16x16x128xf32, #tpu.memory_space<vmem>>, vector<1x16x16x128xf32>,
    return
  }
  func.func @transform_0(%arg0: i32) -> (i32, i32, i32, i32) {
    %c0_i32 = arith.constant 0 : i32
    %c0_i32_0 = arith.constant 0 : i32
    %c0_i32_1 = arith.constant 0 : i32
    %c0_i32_2 = arith.constant 0 : i32
    return %arg0, %c0_i32, %c0_i32_0, %c0_i32_1 : i32, i32, i32, i32
  }
  func.func @transform_1(%arg0: i32) -> (i32, i32) {
    %c0_i32 = arith.constant 0 : i32
    %c0_i32_0 = arith.constant 0 : i32
    %c0_i32_1 = arith.constant 0 : i32
    return %c0_i32, %c0_i32_0 : i32, i32
  }
  func.func @transform_2(%arg0: i32) -> (i32, i32) {
    %c0_i32 = arith.constant 0 : i32
    %c0_i32_0 = arith.constant 0 : i32
    %c0_i32_1 = arith.constant 0 : i32
    return %c0_i32, %c0_i32_0 : i32, i32
  }
  func.func @transform_3(%arg0: i32) -> (i32, i32) {
    %c0_i32 = arith.constant 0 : i32
    %c0_i32_0 = arith.constant 0 : i32
    %c0_i32_1 = arith.constant 0 : i32
    return %c0_i32, %c0_i32_0 : i32, i32
  }
  func.func @transform_4(%arg0: i32) -> (i32, i32) {
    %c0_i32 = arith.constant 0 : i32
    %c0_i32_0 = arith.constant 0 : i32
    %c0_i32_1 = arith.constant 0 : i32
    return %c0_i32, %c0_i32_0 : i32, i32
  }
  func.func @transform_5(%arg0: i32) -> (i32, i32) {
    %c0_i32 = arith.constant 0 : i32
    %c0_i32_0 = arith.constant 0 : i32
    %c0_i32_1 = arith.constant 0 : i32
    return %c0_i32, %c0_i32_0 : i32, i32
  }
  func.func @transform_6(%arg0: i32) -> (i32, i32) {
    %c0_i32 = arith.constant 0 : i32
    %c0_i32_0 = arith.constant 0 : i32
    %c0_i32_1 = arith.constant 0 : i32
    return %c0_i32, %c0_i32_0 : i32, i32
  }
  func.func @transform_7(%arg0: i32) -> (i32, i32) {
    %c0_i32 = arith.constant 0 : i32
    %c0_i32_0 = arith.constant 0 : i32
    %c0_i32_1 = arith.constant 0 : i32
    return %c0_i32, %c0_i32_0 : i32, i32
  }
  func.func @transform_8(%arg0: i32) -> (i32, i32) {
    %c0_i32 = arith.constant 0 : i32
    %c0_i32_0 = arith.constant 0 : i32
    %c0_i32_1 = arith.constant 0 : i32
    return %c0_i32, %c0_i32_0 : i32, i32
  }
  func.func @transform_9(%arg0: i32) -> (i32, i32) {
    %c0_i32 = arith.constant 0 : i32
    %c0_i32_0 = arith.constant 0 : i32
    %c0_i32_1 = arith.constant 0 : i32
    return %c0_i32, %c0_i32_0 : i32, i32
  }
  func.func @transform_10(%arg0: i32) -> (i32, i32, i32, i32) {
    %c0_i32 = arith.constant 0 : i32
    %c0_i32_0 = arith.constant 0 : i32
    %c0_i32_1 = arith.constant 0 : i32
    %c0_i32_2 = arith.constant 0 : i32
    return %arg0, %c0_i32, %c0_i32_0, %c0_i32_1 : i32, i32, i32, i32
  }
}

</mosaic_0001>

<llo_original>
// kernel: tpu_custom_call.1
$region0: #{tpu_custom_call.1}
  #allocation0 [shape = 'u32[]', space=smem, size = 0x4, offset = 0x4, fixed_abs, tag = 'smem constant byte address 0x4 - core index']
  #allocation1 [shape = 'u32[144,128]{1,0:T(1,128)}', space=vmem, size = 0x12000, scoped, tag = 'internal scratch']
  #allocation2 [shape = 'bf16[1,18,18,128]{3,2,1,0:T(8,128)(2,1)}', space=vmem, size = 0x1b000, scoped, tag = 'scratch operand']
  %s0 = inlined_call_operand.hbm [shape: f32[2,16,16,128], index: 0, kind: input, shape index: {}]
  %s1 = inlined_call_operand.hbm [shape: bf16[1152,128], index: 1, kind: input, shape index: {}]
  %s2 = inlined_call_operand.hbm [shape: f32[1,128], index: 2, kind: input, shape index: {}]
  %s3 = inlined_call_operand.hbm [shape: bf16[1152,128], index: 3, kind: input, shape index: {}]
  %s4 = inlined_call_operand.hbm [shape: f32[1,128], index: 4, kind: input, shape index: {}]
  %s5 = inlined_call_operand.vmem [shape: f32[8,128], index: 5, kind: input, shape index: {}]
  %s6 = inlined_call_operand.vmem [shape: f32[8,1], index: 6, kind: input, shape index: {}]
  %s7 = inlined_call_operand.vmem [shape: f32[8,128], index: 7, kind: input, shape index: {}]
  %s8 = inlined_call_operand.vmem [shape: f32[1,128], index: 8, kind: input, shape index: {}]
  %s9 = inlined_call_operand.vmem [shape: f32[1,2], index: 9, kind: input, shape index: {}]
  %s10 = inlined_call_operand.hbm [shape: f32[2,16,16,128], index: 10, kind: output, shape index: {}]
  %s11 = sld [smem:[#allocation0]]
  $region97: #{tpu_custom_call.1} parent=0
    _
  %s13 = ssub.s32 1, %s11
  %s14 = scalar_select 0, %s13, %s11
  $region1: #{tpu_custom_call.1} parent=0
    #allocation3 [shape = 'u8[262144]{0}', space=vmem, size = 0x40000, scoped, tag = 'input window, operand 0']
    #allocation4 [shape = 's32[2]{0}', space=sflag, size = 0x8, scoped, tag = 'scoped memory for tpu_custom_call.1']
    #allocation5 [shape = 's32[2]{0}', space=sflag, size = 0x8, scoped, tag = 'scoped memory for tpu_custom_call.1']
    #allocation6 [shape = 's32[2]{0}', space=sflag, size = 0x8, scoped, tag = 'scoped memory for tpu_custom_call.1']
    #allocation7 [shape = 'u8[294912]{0}', space=vmem, size = 0x48000, scoped, tag = 'input window, operand 1, single buffered']
    #allocation8 [shape = 's32[1]{0}', space=sflag, size = 0x4, scoped, tag = 'scoped memory for tpu_custom_call.1']
    #allocation9 [shape = 'u8[512]{0}', space=vmem, size = 0x400, scoped, tag = 'input window, operand 2, single buffered']
    #allocation10 [shape = 'u8[294912]{0}', space=vmem, size = 0x48000, scoped, tag = 'input window, operand 3, single buffered']
    #allocation11 [shape = 's32[1]{0}', space=sflag, size = 0x4, scoped, tag = 'scoped memory for tpu_custom_call.1']
    #allocation12 [shape = 'u8[512]{0}', space=vmem, size = 0x400, scoped, tag = 'input window, operand 4, single buffered']
    #allocation13 [shape = 'u8[512]{0}', space=smem, size = 0x200, scoped, tag = 'input window, operand 9, single buffered']
    #allocation14 [shape = 'u8[262144]{0}', space=vmem, size = 0x40000, scoped, tag = 'output window, operand 0']
    %15 = vsyncpa [#allocation4], 0
    %s16 = scalar_lea.sflag [#allocation4], 1
    %17 = vsyncpa %s16, 0
    %18 = vsyncpa [#allocation8], 0
    %19 = vsyncpa [#allocation11], 0
    %20 = vsyncpa [#allocation6], 0
    %21 = vsyncpa [#allocation5], 0
    %s22 = scalar_lea.sflag [#allocation5], 1
    %23 = vsyncpa %s22, 0
    loop: start=0, step=1, limit=4
    $region2: #{tpu_custom_call.1} parent=1 // loop_pre_header
      _
    $region3: #{tpu_custom_call.1} parent=1 // loop_header
      %s25 = sphi 0, %s29
      %p26 = scmp.ge.s32.totalorder %s25, 4
      %s35 = sphi 0, %s37
      %s38 = sphi 0, %s35
      %s39 = sphi 0, %s38
      %s55 = sphi 0, %s39
      %s59 = sphi 0, %s59
      %s61 = sphi 0, %s59
      %s62 = sphi 0, %s61
      %s76 = sphi 0, %s62
      %s80 = sphi 0, %s80
      %s82 = sphi 0, %s80
      %s83 = sphi 0, %s82
      %s97 = sphi 0, %s83
      %s101 = sphi 0, %s101
      %s103 = sphi 0, %s101
      %s104 = sphi 0, %s103
      %s118 = sphi 0, %s104
      %s122 = sphi 0, %s122
      %s124 = sphi 0, %s122
      %s125 = sphi 0, %s124
      %s139 = sphi 0, %s125
      %s143 = sphi 0, %s143
      %s145 = sphi 0, %s143
      %s146 = sphi 0, %s145
      %s160 = sphi 0, %s146
      %s164 = sphi 0, %s164
      %s166 = sphi 0, %s164
      %s167 = sphi 0, %s166
      %s181 = sphi 0, %s167
      %s185 = sphi 0, %s185
      %s187 = sphi 0, %s185
      %s188 = sphi 0, %s187
      %s202 = sphi 0, %s188
      %s206 = sphi 0, %s206
      %s208 = sphi 0, %s206
      %s209 = sphi 0, %s208
      %s223 = sphi 0, %s209
      %s227 = sphi 0, %s227
      %s229 = sphi 0, %s227
      %s230 = sphi 0, %s229
      %s244 = sphi 0, %s230
      %s250 = sphi 0, %s252
      %s253 = sphi 0, %s250
      %s254 = sphi 0, %s253
      %s270 = sphi 0, %s254
    $region4: #{tpu_custom_call.1} parent=1 // loop_header_branch
      %28 = sbr.rel (%p26) target = $region8
    $region5: #{tpu_custom_call.1} parent=1 // loop_body
      %s30 = ssub.s32 %s25, 1
      %s31 = ssub.s32 %s25, 2
      %s32 = sadd.s32 %s25, 1
      %s33 = ssub.s32 %s25, %s32
      %p34 = scmp.eq.s32.totalorder %s33, 0
      %s36 = sadd.s32 %s35, 1
      %s37 = scalar_select %p34, %s35, %s36
      %p40 = pneg %p34
      %p41 = scmp.eq.s32.totalorder %s25, 1
      %p42 = por %p40, %p41
      %p43 = scmp.ne.s32.totalorder %s35, %s38
      %p44 = scmp.eq.s32.totalorder %s25, 0
      %p45 = por %p43, %p44
      %p46 = scmp.ne.s32.totalorder %s35, %s38
      %p47 = scmp.eq.s32.totalorder %s30, 1
      %p48 = por %p46, %p47
      %p49 = scmp.ne.s32.totalorder %s38, %s39
      %p50 = scmp.eq.s32.totalorder %s30, 0
      %p51 = por %p49, %p50
      %p52 = scmp.ne.s32.totalorder %s38, %s39
      %p53 = scmp.eq.s32.totalorder %s31, 1
      %p54 = por %p52, %p53
      %p56 = scmp.ne.s32.totalorder %s39, %s55
      %p57 = scmp.eq.s32.totalorder %s31, 0
      %p58 = por %p56, %p57
      %s60 = sadd.s32 %s59, 1
      %p63 = scmp.eq.s32.totalorder %s25, 1
      %p64 = scmp.ne.s32.totalorder %s59, %s61
      %p65 = scmp.eq.s32.totalorder %s25, 0
      %p66 = por %p64, %p65
      %p67 = scmp.ne.s32.totalorder %s59, %s61
      %p68 = scmp.eq.s32.totalorder %s30, 1
      %p69 = por %p67, %p68
      %p70 = scmp.ne.s32.totalorder %s61, %s62
      %p71 = scmp.eq.s32.totalorder %s30, 0
      %p72 = por %p70, %p71
      %p73 = scmp.ne.s32.totalorder %s61, %s62
      %p74 = scmp.eq.s32.totalorder %s31, 1
      %p75 = por %p73, %p74
      %p77 = scmp.ne.s32.totalorder %s62, %s76
      %p78 = scmp.eq.s32.totalorder %s31, 0
      %p79 = por %p77, %p78
      %s81 = sadd.s32 %s80, 1
      %p84 = scmp.eq.s32.totalorder %s25, 1
      %p85 = scmp.ne.s32.totalorder %s80, %s82
      %p86 = scmp.eq.s32.totalorder %s25, 0
      %p87 = por %p85, %p86
      %p88 = scmp.ne.s32.totalorder %s80, %s82
      %p89 = scmp.eq.s32.totalorder %s30, 1
      %p90 = por %p88, %p89
      %p91 = scmp.ne.s32.totalorder %s82, %s83
      %p92 = scmp.eq.s32.totalorder %s30, 0
      %p93 = por %p91, %p92
      %p94 = scmp.ne.s32.totalorder %s82, %s83
      %p95 = scmp.eq.s32.totalorder %s31, 1
      %p96 = por %p94, %p95
      %p98 = scmp.ne.s32.totalorder %s83, %s97
      %p99 = scmp.eq.s32.totalorder %s31, 0
      %p100 = por %p98, %p99
      %s102 = sadd.s32 %s101, 1
      %p105 = scmp.eq.s32.totalorder %s25, 1
      %p106 = scmp.ne.s32.totalorder %s101, %s103
      %p107 = scmp.eq.s32.totalorder %s25, 0
      %p108 = por %p106, %p107
      %p109 = scmp.ne.s32.totalorder %s101, %s103
      %p110 = scmp.eq.s32.totalorder %s30, 1
      %p111 = por %p109, %p110
      %p112 = scmp.ne.s32.totalorder %s103, %s104
      %p113 = scmp.eq.s32.totalorder %s30, 0
      %p114 = por %p112, %p113
      %p115 = scmp.ne.s32.totalorder %s103, %s104
      %p116 = scmp.eq.s32.totalorder %s31, 1
      %p117 = por %p115, %p116
      %p119 = scmp.ne.s32.totalorder %s104, %s118
      %p120 = scmp.eq.s32.totalorder %s31, 0
      %p121 = por %p119, %p120
      %s123 = sadd.s32 %s122, 1
      %p126 = scmp.eq.s32.totalorder %s25, 1
      %p127 = scmp.ne.s32.totalorder %s122, %s124
      %p128 = scmp.eq.s32.totalorder %s25, 0
      %p129 = por %p127, %p128
      %p130 = scmp.ne.s32.totalorder %s122, %s124
      %p131 = scmp.eq.s32.totalorder %s30, 1
      %p132 = por %p130, %p131
      %p133 = scmp.ne.s32.totalorder %s124, %s125
      %p134 = scmp.eq.s32.totalorder %s30, 0
      %p135 = por %p133, %p134
      %p136 = scmp.ne.s32.totalorder %s124, %s125
      %p137 = scmp.eq.s32.totalorder %s31, 1
      %p138 = por %p136, %p137
      %p140 = scmp.ne.s32.totalorder %s125, %s139
      %p141 = scmp.eq.s32.totalorder %s31, 0
      %p142 = por %p140, %p141
      %s144 = sadd.s32 %s143, 1
      %p147 = scmp.eq.s32.totalorder %s25, 1
      %p148 = scmp.ne.s32.totalorder %s143, %s145
      %p149 = scmp.eq.s32.totalorder %s25, 0
      %p150 = por %p148, %p149
      %p151 = scmp.ne.s32.totalorder %s143, %s145
      %p152 = scmp.eq.s32.totalorder %s30, 1
      %p153 = por %p151, %p152
      %p154 = scmp.ne.s32.totalorder %s145, %s146
      %p155 = scmp.eq.s32.totalorder %s30, 0
      %p156 = por %p154, %p155
      %p157 = scmp.ne.s32.totalorder %s145, %s146
      %p158 = scmp.eq.s32.totalorder %s31, 1
      %p159 = por %p157, %p158
      %p161 = scmp.ne.s32.totalorder %s146, %s160
      %p162 = scmp.eq.s32.totalorder %s31, 0
      %p163 = por %p161, %p162
      %s165 = sadd.s32 %s164, 1
      %p168 = scmp.eq.s32.totalorder %s25, 1
      %p169 = scmp.ne.s32.totalorder %s164, %s166
      %p170 = scmp.eq.s32.totalorder %s25, 0
      %p171 = por %p169, %p170
      %p172 = scmp.ne.s32.totalorder %s164, %s166
      %p173 = scmp.eq.s32.totalorder %s30, 1
      %p174 = por %p172, %p173
      %p175 = scmp.ne.s32.totalorder %s166, %s167
      %p176 = scmp.eq.s32.totalorder %s30, 0
      %p177 = por %p175, %p176
      %p178 = scmp.ne.s32.totalorder %s166, %s167
      %p179 = scmp.eq.s32.totalorder %s31, 1
      %p180 = por %p178, %p179
      %p182 = scmp.ne.s32.totalorder %s167, %s181
      %p183 = scmp.eq.s32.totalorder %s31, 0
      %p184 = por %p182, %p183
      %s186 = sadd.s32 %s185, 1
      %p189 = scmp.eq.s32.totalorder %s25, 1
      %p190 = scmp.ne.s32.totalorder %s185, %s187
      %p191 = scmp.eq.s32.totalorder %s25, 0
      %p192 = por %p190, %p191
      %p193 = scmp.ne.s32.totalorder %s185, %s187
      %p194 = scmp.eq.s32.totalorder %s30, 1
      %p195 = por %p193, %p194
      %p196 = scmp.ne.s32.totalorder %s187, %s188
      %p197 = scmp.eq.s32.totalorder %s30, 0
      %p198 = por %p196, %p197
      %p199 = scmp.ne.s32.totalorder %s187, %s188
      %p200 = scmp.eq.s32.totalorder %s31, 1
      %p201 = por %p199, %p200
      %p203 = scmp.ne.s32.totalorder %s188, %s202
      %p204 = scmp.eq.s32.totalorder %s31, 0
      %p205 = por %p203, %p204
      %s207 = sadd.s32 %s206, 1
      %p210 = scmp.eq.s32.totalorder %s25, 1
      %p211 = scmp.ne.s32.totalorder %s206, %s208
      %p212 = scmp.eq.s32.totalorder %s25, 0
      %p213 = por %p211, %p212
      %p214 = scmp.ne.s32.totalorder %s206, %s208
      %p215 = scmp.eq.s32.totalorder %s30, 1
      %p216 = por %p214, %p215
      %p217 = scmp.ne.s32.totalorder %s208, %s209
      %p218 = scmp.eq.s32.totalorder %s30, 0
      %p219 = por %p217, %p218
      %p220 = scmp.ne.s32.totalorder %s208, %s209
      %p221 = scmp.eq.s32.totalorder %s31, 1
      %p222 = por %p220, %p221
      %p224 = scmp.ne.s32.totalorder %s209, %s223
      %p225 = scmp.eq.s32.totalorder %s31, 0
      %p226 = por %p224, %p225
      %s228 = sadd.s32 %s227, 1
      %p231 = scmp.eq.s32.totalorder %s25, 1
      %p232 = scmp.ne.s32.totalorder %s227, %s229
      %p233 = scmp.eq.s32.totalorder %s25, 0
      %p234 = por %p232, %p233
      %p235 = scmp.ne.s32.totalorder %s227, %s229
      %p236 = scmp.eq.s32.totalorder %s30, 1
      %p237 = por %p235, %p236
      %p238 = scmp.ne.s32.totalorder %s229, %s230
      %p239 = scmp.eq.s32.totalorder %s30, 0
      %p240 = por %p238, %p239
      %p241 = scmp.ne.s32.totalorder %s229, %s230
      %p242 = scmp.eq.s32.totalorder %s31, 1
      %p243 = por %p241, %p242
      %p245 = scmp.ne.s32.totalorder %s230, %s244
      %p246 = scmp.eq.s32.totalorder %s31, 0
      %p247 = por %p245, %p246
      %s248 = ssub.s32 %s25, %s32
      %p249 = scmp.eq.s32.totalorder %s248, 0
      %s251 = sadd.s32 %s250, 1
      %s252 = scalar_select %p249, %s250, %s251
      %p255 = pneg %p249
      %p256 = scmp.eq.s32.totalorder %s25, 1
      %p257 = por %p255, %p256
      %p258 = scmp.ne.s32.totalorder %s250, %s253
      %p259 = scmp.eq.s32.totalorder %s25, 0
      %p260 = por %p258, %p259
      %p261 = scmp.ne.s32.totalorder %s250, %s253
      %p262 = scmp.eq.s32.totalorder %s30, 1
      %p263 = por %p261, %p262
      %p264 = scmp.ne.s32.totalorder %s253, %s254
      %p265 = scmp.eq.s32.totalorder %s30, 0
      %p266 = por %p264, %p265
      %p267 = scmp.ne.s32.totalorder %s253, %s254
      %p268 = scmp.eq.s32.totalorder %s31, 1
      %p269 = por %p267, %p268
      %p271 = scmp.ne.s32.totalorder %s254, %s270
      %p272 = scmp.eq.s32.totalorder %s31, 0
      %p273 = por %p271, %p272
      %p274 = scmp.le.s32.totalorder 1, %s25
      %p275 = scmp.lt.s32.totalorder %s25, 3
      %p276 = pnand %p274, %p275
      %p277 = pneg %p276
      // Predicated region
      $region9: #{tpu_custom_call.1} parent=5 // pred_check
        _
      $region10: #{tpu_custom_call.1} parent=5 // pred_check_branch
        %279 = sbr.rel (%p276) target = $region12
      $region11: #{tpu_custom_call.1} parent=5 // pred_region
        %s280 = ssub.s32 %s25, 1
        // Predicated region
        $region13: #{tpu_custom_call.1} parent=11 // pred_check
          %p281 = pneg %p72
        $region14: #{tpu_custom_call.1} parent=11 // pred_check_branch
          %283 = sbr.rel (%p281) target = $region16
        $region15: #{tpu_custom_call.1} parent=11 // pred_region
          %s285 = ssub.s32 9216, 9216
          %286 = vsyncadd [#allocation8], %s285
          %s287 = sshll.u32 [#allocation7], 4
          %s288 = int_to_ptr.vmem [resolvable:$true] %s287
          %293 = dma.hbm_to_vmem [thread:$0]  %s1, 9216, %s288, [#allocation8], 64, 64, 4
        $region16: #{tpu_custom_call.1} parent=11 // pred_fallthru
          _
        // Predicated region
        $region17: #{tpu_custom_call.1} parent=11 // pred_check
          %p294 = pneg %p93
        $region18: #{tpu_custom_call.1} parent=11 // pred_check_branch
          %296 = sbr.rel (%p294) target = $region20
        $region19: #{tpu_custom_call.1} parent=11 // pred_region
          %s298 = ssub.s32 16, 16
          %299 = vsyncadd [#allocation8], %s298
          %s301 = sshll.u32 [#allocation9], 4
          %s302 = int_to_ptr.vmem [resolvable:$true] %s301
          %304 = dma.hbm_to_vmem [thread:$0]  %s2, 16, %s302, [#allocation8]
        $region20: #{tpu_custom_call.1} parent=11 // pred_fallthru
          _
        // Predicated region
        $region21: #{tpu_custom_call.1} parent=11 // pred_check
          %p305 = pneg %p114
        $region22: #{tpu_custom_call.1} parent=11 // pred_check_branch
          %307 = sbr.rel (%p305) target = $region24
        $region23: #{tpu_custom_call.1} parent=11 // pred_region
          %s309 = ssub.s32 9216, 9216
          %310 = vsyncadd [#allocation11], %s309
          %s311 = sshll.u32 [#allocation10], 4
          %s312 = int_to_ptr.vmem [resolvable:$true] %s311
          %317 = dma.hbm_to_vmem [thread:$0]  %s3, 9216, %s312, [#allocation11], 64, 64, 4
        $region24: #{tpu_custom_call.1} parent=11 // pred_fallthru
          _
        // Predicated region
        $region25: #{tpu_custom_call.1} parent=11 // pred_check
          %p318 = pneg %p135
        $region26: #{tpu_custom_call.1} parent=11 // pred_check_branch
          %320 = sbr.rel (%p318) target = $region28
        $region27: #{tpu_custom_call.1} parent=11 // pred_region
          %s322 = ssub.s32 16, 16
          %323 = vsyncadd [#allocation11], %s322
          %s325 = sshll.u32 [#allocation12], 4
          %s326 = int_to_ptr.vmem [resolvable:$true] %s325
          %328 = dma.hbm_to_vmem [thread:$0]  %s4, 16, %s326, [#allocation11]
        $region28: #{tpu_custom_call.1} parent=11 // pred_fallthru
          _
        // Predicated region
        $region29: #{tpu_custom_call.1} parent=11 // pred_check
          %p329 = pneg %p156
        $region30: #{tpu_custom_call.1} parent=11 // pred_check_branch
          %331 = sbr.rel (%p329) target = $region32
        $region31: #{tpu_custom_call.1} parent=11 // pred_region
          _
        $region32: #{tpu_custom_call.1} parent=11 // pred_fallthru
          _
        // Predicated region
        $region33: #{tpu_custom_call.1} parent=11 // pred_check
          %p332 = pneg %p177
        $region34: #{tpu_custom_call.1} parent=11 // pred_check_branch
          %334 = sbr.rel (%p332) target = $region36
        $region35: #{tpu_custom_call.1} parent=11 // pred_region
          _
        $region36: #{tpu_custom_call.1} parent=11 // pred_fallthru
          _
        // Predicated region
        $region37: #{tpu_custom_call.1} parent=11 // pred_check
          %p335 = pneg %p198
        $region38: #{tpu_custom_call.1} parent=11 // pred_check_branch
          %337 = sbr.rel (%p335) target = $region40
        $region39: #{tpu_custom_call.1} parent=11 // pred_region
          _
        $region40: #{tpu_custom_call.1} parent=11 // pred_fallthru
          _
        // Predicated region
        $region41: #{tpu_custom_call.1} parent=11 // pred_check
          %p338 = pneg %p219
        $region42: #{tpu_custom_call.1} parent=11 // pred_check_branch
          %340 = sbr.rel (%p338) target = $region44
        $region43: #{tpu_custom_call.1} parent=11 // pred_region
          _
        $region44: #{tpu_custom_call.1} parent=11 // pred_fallthru
          _
        // Predicated region
        $region45: #{tpu_custom_call.1} parent=11 // pred_check
          %p341 = pneg %p240
        $region46: #{tpu_custom_call.1} parent=11 // pred_check_branch
          %343 = sbr.rel (%p341) target = $region48
        $region47: #{tpu_custom_call.1} parent=11 // pred_region
          %s345 = ssub.s32 16, 16
          %346 = vsyncadd [#allocation6], %s345
          %s348 = sshll.u32 %s9, 4
          %s349 = int_to_ptr.vmem [resolvable:$true] %s348
          %351 = dma.vmem_to_smem %s349, 16, [#allocation13], [#allocation6]
        $region48: #{tpu_custom_call.1} parent=11 // pred_fallthru
          _
      $region12: #{tpu_custom_call.1} parent=5 // pred_fallthru
        _
      %p352 = scmp.lt.s32.totalorder %s25, 2
      // Predicated region
      $region49: #{tpu_custom_call.1} parent=5 // pred_check
        %p353 = pneg %p352
      $region50: #{tpu_custom_call.1} parent=5 // pred_check_branch
        %355 = sbr.rel (%p353) target = $region52
      $region51: #{tpu_custom_call.1} parent=5 // pred_region
        // Predicated region
        $region53: #{tpu_custom_call.1} parent=51 // pred_check
          %p356 = pneg %p45
        $region54: #{tpu_custom_call.1} parent=51 // pred_check_branch
          %358 = sbr.rel (%p356) target = $region56
        $region55: #{tpu_custom_call.1} parent=51 // pred_region
          %s359 = sand.u32 %s35, 1
          %s360 = scalar_lea.sflag [#allocation4], %s359
          %s361 = sand.u32 %s35, 1
          %s362 = smul.addr %s361, 256
          %s363 = scalar_lea.vmem [#allocation3], %s362
          %s365 = ssub.s32 4096, 4096
          %366 = vsyncadd %s360, %s365
          %s367 = smul.addr %s25, 32
          %s368 = smul.addr %s367, 128
          %s369 = scalar_lea.hbm %s0, %s368
          %s370 = sshll.u32 %s363, 4
          %s371 = int_to_ptr.vmem [resolvable:$true] %s370
          %376 = dma.hbm_to_vmem [thread:$0]  %s369, 4096, %s371, %s360, 128, 128, 8
        $region56: #{tpu_custom_call.1} parent=51 // pred_fallthru
          _
      $region52: #{tpu_custom_call.1} parent=5 // pred_fallthru
        _
      %p377 = scmp.le.s32.totalorder 1, %s25
      %p378 = scmp.lt.s32.totalorder %s25, 3
      %p379 = pnand %p377, %p378
      %p380 = pneg %p379
      // Predicated region
      $region57: #{tpu_custom_call.1} parent=5 // pred_check
        _
      $region58: #{tpu_custom_call.1} parent=5 // pred_check_branch
        %382 = sbr.rel (%p379) target = $region60
      $region59: #{tpu_custom_call.1} parent=5 // pred_region
        %s383 = ssub.s32 %s25, 1
        %s384 = sand.u32 %s38, 1
        %s385 = scalar_lea.sflag [#allocation4], %s384
        %s386 = sand.u32 %s38, 1
        %s387 = smul.addr %s386, 256
        %s388 = scalar_lea.vmem [#allocation3], %s387
        // Predicated region
        $region61: #{tpu_custom_call.1} parent=59 // pred_check
          %p389 = pneg %p51
        $region62: #{tpu_custom_call.1} parent=59 // pred_check_branch
          %391 = sbr.rel (%p389) target = $region64
        $region63: #{tpu_custom_call.1} parent=59 // pred_region
          %392 = dma.done %s385, 4096
        $region64: #{tpu_custom_call.1} parent=59 // pred_fallthru
          _
        // Predicated region
        $region65: #{tpu_custom_call.1} parent=59 // pred_check
          %p393 = pneg %p72
        $region66: #{tpu_custom_call.1} parent=59 // pred_check_branch
          %395 = sbr.rel (%p393) target = $region68
        $region67: #{tpu_custom_call.1} parent=59 // pred_region
          %396 = dma.done [#allocation8], 9216
        $region68: #{tpu_custom_call.1} parent=59 // pred_fallthru
          _
        // Predicated region
        $region69: #{tpu_custom_call.1} parent=59 // pred_check
          %p397 = pneg %p93
        $region70: #{tpu_custom_call.1} parent=59 // pred_check_branch
          %399 = sbr.rel (%p397) target = $region72
        $region71: #{tpu_custom_call.1} parent=59 // pred_region
          %400 = dma.done [#allocation8], 16
        $region72: #{tpu_custom_call.1} parent=59 // pred_fallthru
          _
        // Predicated region
        $region73: #{tpu_custom_call.1} parent=59 // pred_check
          %p401 = pneg %p114
        $region74: #{tpu_custom_call.1} parent=59 // pred_check_branch
          %403 = sbr.rel (%p401) target = $region76
        $region75: #{tpu_custom_call.1} parent=59 // pred_region
          %404 = dma.done [#allocation11], 9216
        $region76: #{tpu_custom_call.1} parent=59 // pred_fallthru
          _
        // Predicated region
        $region77: #{tpu_custom_call.1} parent=59 // pred_check
          %p405 = pneg %p135
        $region78: #{tpu_custom_call.1} parent=59 // pred_check_branch
          %407 = sbr.rel (%p405) target = $region80
        $region79: #{tpu_custom_call.1} parent=59 // pred_region
          %408 = dma.done [#allocation11], 16
        $region80: #{tpu_custom_call.1} parent=59 // pred_fallthru
          _
        // Predicated region
        $region81: #{tpu_custom_call.1} parent=59 // pred_check
          %p409 = pneg %p240
        $region82: #{tpu_custom_call.1} parent=59 // pred_check_branch
          %411 = sbr.rel (%p409) target = $region84
        $region83: #{tpu_custom_call.1} parent=59 // pred_region
          %412 = dma.done [#allocation6], 16
        $region84: #{tpu_custom_call.1} parent=59 // pred_fallthru
          _
        %413 = sfence
        %s414 = sand.u32 %s38, 1
        %s415 = scalar_lea.sflag [#allocation4], %s414
        %s416 = sand.u32 %s38, 1
        %s417 = smul.addr %s416, 256
        %s418 = scalar_lea.vmem [#allocation3], %s417
        %p419 = pneg %p51
        %p420 = pneg %p48
        %p421 = pneg %p72
        %p422 = pneg %p69
        %p423 = pneg %p93
        %p424 = pneg %p90
        %p425 = pneg %p114
        %p426 = pneg %p111
        %p427 = pneg %p135
        %p428 = pneg %p132
        %p429 = pneg %p156
        %p430 = pneg %p153
        %p431 = pneg %p177
        %p432 = pneg %p174
        %p433 = pneg %p198
        %p434 = pneg %p195
        %p435 = pneg %p219
        %p436 = pneg %p216
        %p437 = pneg %p240
        %p438 = pneg %p237
        %p439 = pneg %p266
        %p440 = pneg %p263
        %s441 = sand.u32 %s253, 1
        %s442 = scalar_lea.sflag [#allocation5], %s441
        %s443 = sand.u32 %s253, 1
        %s444 = smul.addr %s443, 256
        %s445 = scalar_lea.vmem [#allocation14], %s444
        %s447 = sld [smem:[#allocation13]]
        %s448 = sld [smem:[#allocation13 + $0x1]]
        %v449 = vld [vmem:[%s388] sm:$0xff]
        %v450 = vld [vmem:[%s388 + $0x8] sm:$0xff]
        %v451 = vld [vmem:[%s388 + $0x10] sm:$0xff]
        %v452 = vld [vmem:[%s388 + $0x18] sm:$0xff]
        %v453 = vld [vmem:[%s388 + $0x20] sm:$0xff]
        %v454 = vld [vmem:[%s388 + $0x28] sm:$0xff]
        %v455 = vld [vmem:[%s388 + $0x30] sm:$0xff]
        %v456 = vld [vmem:[%s388 + $0x38] sm:$0xff]
        %v457 = vld [vmem:[%s388 + $0x40] sm:$0xff]
        %v458 = vld [vmem:[%s388 + $0x48] sm:$0xff]
        %v459 = vld [vmem:[%s388 + $0x50] sm:$0xff]
        %v460 = vld [vmem:[%s388 + $0x58] sm:$0xff]
        %v461 = vld [vmem:[%s388 + $0x60] sm:$0xff]
        %v462 = vld [vmem:[%s388 + $0x68] sm:$0xff]
        %v463 = vld [vmem:[%s388 + $0x70] sm:$0xff]
        %v464 = vld [vmem:[%s388 + $0x78] sm:$0xff]
        %v465 = vld [vmem:[%s388 + $0x80] sm:$0xff]
        %v466 = vld [vmem:[%s388 + $0x88] sm:$0xff]
        %v467 = vld [vmem:[%s388 + $0x90] sm:$0xff]
        %v468 = vld [vmem:[%s388 + $0x98] sm:$0xff]
        %v469 = vld [vmem:[%s388 + $0xa0] sm:$0xff]
        %v470 = vld [vmem:[%s388 + $0xa8] sm:$0xff]
        %v471 = vld [vmem:[%s388 + $0xb0] sm:$0xff]
        %v472 = vld [vmem:[%s388 + $0xb8] sm:$0xff]
        %v473 = vld [vmem:[%s388 + $0xc0] sm:$0xff]
        %v474 = vld [vmem:[%s388 + $0xc8] sm:$0xff]
        %v475 = vld [vmem:[%s388 + $0xd0] sm:$0xff]
        %v476 = vld [vmem:[%s388 + $0xd8] sm:$0xff]
        %v477 = vld [vmem:[%s388 + $0xe0] sm:$0xff]
        %v478 = vld [vmem:[%s388 + $0xe8] sm:$0xff]
        %v479 = vld [vmem:[%s388 + $0xf0] sm:$0xff]
        %v480 = vld [vmem:[%s388 + $0xf8] sm:$0xff]
        %481 = vst [vmem:[#allocation2] sm:$0xf] 0
        %482 = vst [vmem:[#allocation2 + $0x4] sm:$0xf] 0
        %483 = vst [vmem:[#allocation2 + $0x8] sm:$0x1] 0
        %484 = vst [vmem:[#allocation2 + $0xc] sm:$0xf] 0
        %485 = vst [vmem:[#allocation2 + $0x10] sm:$0xf] 0
        %486 = vst [vmem:[#allocation2 + $0x14] sm:$0x1] 0
        %487 = vst [vmem:[#allocation2 + $0x18] sm:$0xf] 0
        %488 = vst [vmem:[#allocation2 + $0x1c] sm:$0xf] 0
        %489 = vst [vmem:[#allocation2 + $0x20] sm:$0x1] 0
        %490 = vst [vmem:[#allocation2 + $0x24] sm:$0xf] 0
        %491 = vst [vmem:[#allocation2 + $0x28] sm:$0xf] 0
        %492 = vst [vmem:[#allocation2 + $0x2c] sm:$0x1] 0
        %493 = vst [vmem:[#allocation2 + $0x30] sm:$0xf] 0
        %494 = vst [vmem:[#allocation2 + $0x34] sm:$0xf] 0
        %495 = vst [vmem:[#allocation2 + $0x38] sm:$0x1] 0
        %496 = vst [vmem:[#allocation2 + $0x3c] sm:$0xf] 0
        %497 = vst [vmem:[#allocation2 + $0x40] sm:$0xf] 0
        %498 = vst [vmem:[#allocation2 + $0x44] sm:$0x1] 0
        %499 = vst [vmem:[#allocation2 + $0x48] sm:$0xf] 0
        %500 = vst [vmem:[#allocation2 + $0x4c] sm:$0xf] 0
        %501 = vst [vmem:[#allocation2 + $0x50] sm:$0x1] 0
        %502 = vst [vmem:[#allocation2 + $0x54] sm:$0xf] 0
        %503 = vst [vmem:[#allocation2 + $0x58] sm:$0xf] 0
        %504 = vst [vmem:[#allocation2 + $0x5c] sm:$0x1] 0
        %505 = vst [vmem:[#allocation2 + $0x60] sm:$0xf] 0
        %506 = vst [vmem:[#allocation2 + $0x64] sm:$0xf] 0
        %507 = vst [vmem:[#allocation2 + $0x68] sm:$0x1] 0
        %508 = vst [vmem:[#allocation2 + $0x6c] sm:$0xf] 0
        %509 = vst [vmem:[#allocation2 + $0x70] sm:$0xf] 0
        %510 = vst [vmem:[#allocation2 + $0x74] sm:$0x1] 0
        %511 = vst [vmem:[#allocation2 + $0x78] sm:$0xf] 0
        %512 = vst [vmem:[#allocation2 + $0x7c] sm:$0xf] 0
        %513 = vst [vmem:[#allocation2 + $0x80] sm:$0x1] 0
        %514 = vst [vmem:[#allocation2 + $0x84] sm:$0xf] 0
        %515 = vst [vmem:[#allocation2 + $0x88] sm:$0xf] 0
        %516 = vst [vmem:[#allocation2 + $0x8c] sm:$0x1] 0
        %517 = vst [vmem:[#allocation2 + $0x90] sm:$0xf] 0
        %518 = vst [vmem:[#allocation2 + $0x94] sm:$0xf] 0
        %519 = vst [vmem:[#allocation2 + $0x98] sm:$0x1] 0
        %520 = vst [vmem:[#allocation2 + $0x9c] sm:$0xf] 0
        %521 = vst [vmem:[#allocation2 + $0xa0] sm:$0xf] 0
        %522 = vst [vmem:[#allocation2 + $0xa4] sm:$0x1] 0
        %523 = vst [vmem:[#allocation2 + $0xa8] sm:$0xf] 0
        %524 = vst [vmem:[#allocation2 + $0xac] sm:$0xf] 0
        %525 = vst [vmem:[#allocation2 + $0xb0] sm:$0x1] 0
        %526 = vst [vmem:[#allocation2 + $0xb4] sm:$0xf] 0
        %527 = vst [vmem:[#allocation2 + $0xb8] sm:$0xf] 0
        %528 = vst [vmem:[#allocation2 + $0xbc] sm:$0x1] 0
        %529 = vst [vmem:[#allocation2 + $0xc0] sm:$0xf] 0
        %530 = vst [vmem:[#allocation2 + $0xc4] sm:$0xf] 0
        %531 = vst [vmem:[#allocation2 + $0xc8] sm:$0x1] 0
        %532 = vst [vmem:[#allocation2 + $0xcc] sm:$0xf] 0
        %533 = vst [vmem:[#allocation2 + $0xd0] sm:$0xf] 0
        %534 = vst [vmem:[#allocation2 + $0xd4] sm:$0x1] 0
        %v535 = vpack.c.bf16 %v450, %v449
        %v536 = vpack.c.bf16 %v452, %v451
        %v537 = vpack.c.bf16 %v454, %v453
        %v538 = vpack.c.bf16 %v456, %v455
        %v539 = vpack.c.bf16 %v458, %v457
        %v540 = vpack.c.bf16 %v460, %v459
        %v541 = vpack.c.bf16 %v462, %v461
        %v542 = vpack.c.bf16 %v464, %v463
        %v543 = vpack.c.bf16 %v466, %v465
        %v544 = vpack.c.bf16 %v468, %v467
        %v545 = vpack.c.bf16 %v470, %v469
        %v546 = vpack.c.bf16 %v472, %v471
        %v547 = vpack.c.bf16 %v474, %v473
        %v548 = vpack.c.bf16 %v476, %v475
        %v549 = vpack.c.bf16 %v478, %v477
        %v550 = vpack.c.bf16 %v480, %v479
        %v567 = vunpack.c.l.b16 %v535
        %v568 = vunpack.c.h.b16 %v535
        %v569 = vunpack.c.l.b16 %v536
        %v570 = vunpack.c.h.b16 %v536
        %v571 = vunpack.c.l.b16 %v537
        %v572 = vunpack.c.h.b16 %v537
        %v573 = vunpack.c.l.b16 %v538
        %v574 = vunpack.c.h.b16 %v538
        %v575 = vunpack.c.l.b16 %v539
        %v576 = vunpack.c.h.b16 %v539
        %v577 = vunpack.c.l.b16 %v540
        %v578 = vunpack.c.h.b16 %v540
        %v579 = vunpack.c.l.b16 %v541
        %v580 = vunpack.c.h.b16 %v541
        %v581 = vunpack.c.l.b16 %v542
        %v582 = vunpack.c.h.b16 %v542
        %v583 = vunpack.c.l.b16 %v543
        %v584 = vunpack.c.h.b16 %v543
        %v585 = vunpack.c.l.b16 %v544
        %v586 = vunpack.c.h.b16 %v544
        %v587 = vunpack.c.l.b16 %v545
        %v588 = vunpack.c.h.b16 %v545
        %v589 = vunpack.c.l.b16 %v546
        %v590 = vunpack.c.h.b16 %v546
        %v591 = vunpack.c.l.b16 %v547
        %v592 = vunpack.c.h.b16 %v547
        %v593 = vunpack.c.l.b16 %v548
        %v594 = vunpack.c.h.b16 %v548
        %v595 = vunpack.c.l.b16 %v549
        %v596 = vunpack.c.h.b16 %v549
        %v597 = vunpack.c.l.b16 %v550
        %v598 = vunpack.c.h.b16 %v550
        %v599 = vpack.c.b16 %v567, %v567
        %v600 = vpack.c.b16 %v568, %v568
        %v601 = vpack.c.b16 %v569, %v569
        %v602 = vpack.c.b16 %v570, %v570
        %v603 = vpack.c.b16 %v571, %v571
        %v604 = vpack.c.b16 %v572, %v572
        %v605 = vpack.c.b16 %v573, %v573
        %v606 = vpack.c.b16 %v574, %v574
        %v607 = vpack.c.b16 %v575, %v575
        %v608 = vpack.c.b16 %v576, %v576
        %v609 = vpack.c.b16 %v577, %v577
        %v610 = vpack.c.b16 %v578, %v578
        %v611 = vpack.c.b16 %v579, %v579
        %v612 = vpack.c.b16 %v580, %v580
        %v613 = vpack.c.b16 %v581, %v581
        %v614 = vpack.c.b16 %v582, %v582
        %v615 = vpack.c.b16 %v583, %v583
        %v616 = vpack.c.b16 %v584, %v584
        %v617 = vpack.c.b16 %v585, %v585
        %v618 = vpack.c.b16 %v586, %v586
        %v619 = vpack.c.b16 %v587, %v587
        %v620 = vpack.c.b16 %v588, %v588
        %v621 = vpack.c.b16 %v589, %v589
        %v622 = vpack.c.b16 %v590, %v590
        %v623 = vpack.c.b16 %v591, %v591
        %v624 = vpack.c.b16 %v592, %v592
        %v625 = vpack.c.b16 %v593, %v593
        %v626 = vpack.c.b16 %v594, %v594
        %v627 = vpack.c.b16 %v595, %v595
        %v628 = vpack.c.b16 %v596, %v596
        %v629 = vpack.c.b16 %v597, %v597
        %v630 = vpack.c.b16 %v598, %v598
        %vm631 = vsmask.f32 256
        %vm632 = vsmask.f32 4368
        %vm633 = vmor %vm631, %vm632
        %v635 = vshrl.u32 %v599, 16
        %v637 = vrot.slane %v635, 7
        %v638 = vshll.u32 %v599, 16
        %v640 = vor.u32 %v637, %v638
        %v641 = vrot.slane %v637, 4
        %v643 = vshrl.u32 %v600, 16
        %v645 = vrot.slane %v643, 7
        %v646 = vshll.u32 %v600, 16
        %v648 = vor.u32 %v645, %v646
        %v649 = vsel %vm633, %v641, %v648
        %v650 = vrot.slane %v645, 4
        %v652 = vshrl.u32 %v601, 16
        %v654 = vrot.slane %v652, 7
        %v655 = vshll.u32 %v601, 16
        %v657 = vor.u32 %v654, %v655
        %v658 = vrot.slane %v654, 4
        %v660 = vshrl.u32 %v602, 16
        %v662 = vrot.slane %v660, 7
        %v663 = vshll.u32 %v602, 16
        %v665 = vor.u32 %v662, %v663
        %v666 = vsel %vm633, %v658, %v665
        %v667 = vrot.slane %v662, 4
        %v669 = vshrl.u32 %v603, 16
        %v671 = vrot.slane %v669, 7
        %v672 = vshll.u32 %v603, 16
        %v674 = vor.u32 %v671, %v672
        %v675 = vrot.slane %v671, 4
        %v677 = vshrl.u32 %v604, 16
        %v679 = vrot.slane %v677, 7
        %v680 = vshll.u32 %v604, 16
        %v682 = vor.u32 %v679, %v680
        %v683 = vsel %vm633, %v675, %v682
        %v684 = vrot.slane %v679, 4
        %v686 = vshrl.u32 %v605, 16
        %v688 = vrot.slane %v686, 7
        %v689 = vshll.u32 %v605, 16
        %v691 = vor.u32 %v688, %v689
        %v692 = vrot.slane %v688, 4
        %v694 = vshrl.u32 %v606, 16
        %v696 = vrot.slane %v694, 7
        %v697 = vshll.u32 %v606, 16
        %v699 = vor.u32 %v696, %v697
        %v700 = vsel %vm633, %v692, %v699
        %v701 = vrot.slane %v696, 4
        %v703 = vshrl.u32 %v607, 16
        %v705 = vrot.slane %v703, 7
        %v706 = vshll.u32 %v607, 16
        %v708 = vor.u32 %v705, %v706
        %v709 = vrot.slane %v705, 4
        %v711 = vshrl.u32 %v608, 16
        %v713 = vrot.slane %v711, 7
        %v714 = vshll.u32 %v608, 16
        %v716 = vor.u32 %v713, %v714
        %v717 = vsel %vm633, %v709, %v716
        %v718 = vrot.slane %v713, 4
        %v720 = vshrl.u32 %v609, 16
        %v722 = vrot.slane %v720, 7
        %v723 = vshll.u32 %v609, 16
        %v725 = vor.u32 %v722, %v723
        %v726 = vrot.slane %v722, 4
        %v728 = vshrl.u32 %v610, 16
        %v730 = vrot.slane %v728, 7
        %v731 = vshll.u32 %v610, 16
        %v733 = vor.u32 %v730, %v731
        %v734 = vsel %vm633, %v726, %v733
        %v735 = vrot.slane %v730, 4
        %v737 = vshrl.u32 %v611, 16
        %v739 = vrot.slane %v737, 7
        %v740 = vshll.u32 %v611, 16
        %v742 = vor.u32 %v739, %v740
        %v743 = vrot.slane %v739, 4
        %v745 = vshrl.u32 %v612, 16
        %v747 = vrot.slane %v745, 7
        %v748 = vshll.u32 %v612, 16
        %v750 = vor.u32 %v747, %v748
        %v751 = vsel %vm633, %v743, %v750
        %v752 = vrot.slane %v747, 4
        %v754 = vshrl.u32 %v613, 16
        %v756 = vrot.slane %v754, 7
        %v757 = vshll.u32 %v613, 16
        %v759 = vor.u32 %v756, %v757
        %v760 = vrot.slane %v756, 4
        %v762 = vshrl.u32 %v614, 16
        %v764 = vrot.slane %v762, 7
        %v765 = vshll.u32 %v614, 16
        %v767 = vor.u32 %v764, %v765
        %v768 = vsel %vm633, %v760, %v767
        %v769 = vrot.slane %v764, 4
        %v771 = vshrl.u32 %v615, 16
        %v773 = vrot.slane %v771, 7
        %v774 = vshll.u32 %v615, 16
        %v776 = vor.u32 %v773, %v774
        %v777 = vrot.slane %v773, 4
        %v779 = vshrl.u32 %v616, 16
        %v781 = vrot.slane %v779, 7
        %v782 = vshll.u32 %v616, 16
        %v784 = vor.u32 %v781, %v782
        %v785 = vsel %vm633, %v777, %v784
        %v786 = vrot.slane %v781, 4
        %v788 = vshrl.u32 %v617, 16
        %v790 = vrot.slane %v788, 7
        %v791 = vshll.u32 %v617, 16
        %v793 = vor.u32 %v790, %v791
        %v794 = vrot.slane %v790, 4
        %v796 = vshrl.u32 %v618, 16
        %v798 = vrot.slane %v796, 7
        %v799 = vshll.u32 %v618, 16
        %v801 = vor.u32 %v798, %v799
        %v802 = vsel %vm633, %v794, %v801
        %v803 = vrot.slane %v798, 4
        %v805 = vshrl.u32 %v619, 16
        %v807 = vrot.slane %v805, 7
        %v808 = vshll.u32 %v619, 16
        %v810 = vor.u32 %v807, %v808
        %v811 = vrot.slane %v807, 4
        %v813 = vshrl.u32 %v620, 16
        %v815 = vrot.slane %v813, 7
        %v816 = vshll.u32 %v620, 16
        %v818 = vor.u32 %v815, %v816
        %v819 = vsel %vm633, %v811, %v818
        %v820 = vrot.slane %v815, 4
        %v822 = vshrl.u32 %v621, 16
        %v824 = vrot.slane %v822, 7
        %v825 = vshll.u32 %v621, 16
        %v827 = vor.u32 %v824, %v825
        %v828 = vrot.slane %v824, 4
        %v830 = vshrl.u32 %v622, 16
        %v832 = vrot.slane %v830, 7
        %v833 = vshll.u32 %v622, 16
        %v835 = vor.u32 %v832, %v833
        %v836 = vsel %vm633, %v828, %v835
        %v837 = vrot.slane %v832, 4
        %v839 = vshrl.u32 %v623, 16
        %v841 = vrot.slane %v839, 7
        %v842 = vshll.u32 %v623, 16
        %v844 = vor.u32 %v841, %v842
        %v845 = vrot.slane %v841, 4
        %v847 = vshrl.u32 %v624, 16
        %v849 = vrot.slane %v847, 7
        %v850 = vshll.u32 %v624, 16
        %v852 = vor.u32 %v849, %v850
        %v853 = vsel %vm633, %v845, %v852
        %v854 = vrot.slane %v849, 4
        %v856 = vshrl.u32 %v625, 16
        %v858 = vrot.slane %v856, 7
        %v859 = vshll.u32 %v625, 16
        %v861 = vor.u32 %v858, %v859
        %v862 = vrot.slane %v858, 4
        %v864 = vshrl.u32 %v626, 16
        %v866 = vrot.slane %v864, 7
        %v867 = vshll.u32 %v626, 16
        %v869 = vor.u32 %v866, %v867
        %v870 = vsel %vm633, %v862, %v869
        %v871 = vrot.slane %v866, 4
        %v873 = vshrl.u32 %v627, 16
        %v875 = vrot.slane %v873, 7
        %v876 = vshll.u32 %v627, 16
        %v878 = vor.u32 %v875, %v876
        %v879 = vrot.slane %v875, 4
        %v881 = vshrl.u32 %v628, 16
        %v883 = vrot.slane %v881, 7
        %v884 = vshll.u32 %v628, 16
        %v886 = vor.u32 %v883, %v884
        %v887 = vsel %vm633, %v879, %v886
        %v888 = vrot.slane %v883, 4
        %v890 = vshrl.u32 %v629, 16
        %v892 = vrot.slane %v890, 7
        %v893 = vshll.u32 %v629, 16
        %v895 = vor.u32 %v892, %v893
        %v896 = vrot.slane %v892, 4
        %v898 = vshrl.u32 %v630, 16
        %v900 = vrot.slane %v898, 7
        %v901 = vshll.u32 %v630, 16
        %v903 = vor.u32 %v900, %v901
        %v904 = vsel %vm633, %v896, %v903
        %v905 = vrot.slane %v900, 4
        %s954 = scalar_lea.vmem [#allocation2], 12
        %vm955 = vcmask 1043456
        %vm956 = vsmask.f32 7938
        %vm957 = vmand %vm955, %vm956
        %v958 = vld [vmem:[%s954] sm:$0xf]
        %v959 = vsel %vm957, %v640, %v958
        %960 = vst [vmem:[%s954] sm:$0xf] %v959
        %961 = vst [vmem:[%s954 + $0x4] sm:$0xf] %v649
        %vm962 = vcmask 1040384
        %vm963 = vmand %vm962, %vm631
        %v964 = vld [vmem:[%s954 + $0x8] sm:$0x1]
        %v965 = vsel %vm963, %v650, %v964
        %966 = vst [vmem:[%s954 + $0x8] sm:$0x1] %v965
        %v967 = vld [vmem:[%s954 + $0xc] sm:$0xf]
        %v968 = vsel %vm957, %v657, %v967
        %969 = vst [vmem:[%s954 + $0xc] sm:$0xf] %v968
        %970 = vst [vmem:[%s954 + $0x10] sm:$0xf] %v666
        %v971 = vld [vmem:[%s954 + $0x14] sm:$0x1]
        %v972 = vsel %vm963, %v667, %v971
        %973 = vst [vmem:[%s954 + $0x14] sm:$0x1] %v972
        %v974 = vld [vmem:[%s954 + $0x18] sm:$0xf]
        %v975 = vsel %vm957, %v674, %v974
        %976 = vst [vmem:[%s954 + $0x18] sm:$0xf] %v975
        %977 = vst [vmem:[%s954 + $0x1c] sm:$0xf] %v683
        %v978 = vld [vmem:[%s954 + $0x20] sm:$0x1]
        %v979 = vsel %vm963, %v684, %v978
        %980 = vst [vmem:[%s954 + $0x20] sm:$0x1] %v979
        %v981 = vld [vmem:[%s954 + $0x24] sm:$0xf]
        %v982 = vsel %vm957, %v691, %v981
        %983 = vst [vmem:[%s954 + $0x24] sm:$0xf] %v982
        %984 = vst [vmem:[%s954 + $0x28] sm:$0xf] %v700
        %v985 = vld [vmem:[%s954 + $0x2c] sm:$0x1]
        %v986 = vsel %vm963, %v701, %v985
        %987 = vst [vmem:[%s954 + $0x2c] sm:$0x1] %v986
        %v988 = vld [vmem:[%s954 + $0x30] sm:$0xf]
        %v989 = vsel %vm957, %v708, %v988
        %990 = vst [vmem:[%s954 + $0x30] sm:$0xf] %v989
        %991 = vst [vmem:[%s954 + $0x34] sm:$0xf] %v717
        %v992 = vld [vmem:[%s954 + $0x38] sm:$0x1]
        %v993 = vsel %vm963, %v718, %v992
        %994 = vst [vmem:[%s954 + $0x38] sm:$0x1] %v993
        %v995 = vld [vmem:[%s954 + $0x3c] sm:$0xf]
        %v996 = vsel %vm957, %v725, %v995
        %997 = vst [vmem:[%s954 + $0x3c] sm:$0xf] %v996
        %998 = vst [vmem:[%s954 + $0x40] sm:$0xf] %v734
        %v999 = vld [vmem:[%s954 + $0x44] sm:$0x1]
        %v1000 = vsel %vm963, %v735, %v999
        %1001 = vst [vmem:[%s954 + $0x44] sm:$0x1] %v1000
        %v1002 = vld [vmem:[%s954 + $0x48] sm:$0xf]
        %v1003 = vsel %vm957, %v742, %v1002
        %1004 = vst [vmem:[%s954 + $0x48] sm:$0xf] %v1003
        %1005 = vst [vmem:[%s954 + $0x4c] sm:$0xf] %v751
        %v1006 = vld [vmem:[%s954 + $0x50] sm:$0x1]
        %v1007 = vsel %vm963, %v752, %v1006
        %1008 = vst [vmem:[%s954 + $0x50] sm:$0x1] %v1007
        %v1009 = vld [vmem:[%s954 + $0x54] sm:$0xf]
        %v1010 = vsel %vm957, %v759, %v1009
        %1011 = vst [vmem:[%s954 + $0x54] sm:$0xf] %v1010
        %1012 = vst [vmem:[%s954 + $0x58] sm:$0xf] %v768
        %v1013 = vld [vmem:[%s954 + $0x5c] sm:$0x1]
        %v1014 = vsel %vm963, %v769, %v1013
        %1015 = vst [vmem:[%s954 + $0x5c] sm:$0x1] %v1014
        %v1016 = vld [vmem:[%s954 + $0x60] sm:$0xf]
        %v1017 = vsel %vm957, %v776, %v1016
        %1018 = vst [vmem:[%s954 + $0x60] sm:$0xf] %v1017
        %1019 = vst [vmem:[%s954 + $0x64] sm:$0xf] %v785
        %v1020 = vld [vmem:[%s954 + $0x68] sm:$0x1]
        %v1021 = vsel %vm963, %v786, %v1020
        %1022 = vst [vmem:[%s954 + $0x68] sm:$0x1] %v1021
        %v1023 = vld [vmem:[%s954 + $0x6c] sm:$0xf]
        %v1024 = vsel %vm957, %v793, %v1023
        %1025 = vst [vmem:[%s954 + $0x6c] sm:$0xf] %v1024
        %1026 = vst [vmem:[%s954 + $0x70] sm:$0xf] %v802
        %v1027 = vld [vmem:[%s954 + $0x74] sm:$0x1]
        %v1028 = vsel %vm963, %v803, %v1027
        %1029 = vst [vmem:[%s954 + $0x74] sm:$0x1] %v1028
        %v1030 = vld [vmem:[%s954 + $0x78] sm:$0xf]
        %v1031 = vsel %vm957, %v810, %v1030
        %1032 = vst [vmem:[%s954 + $0x78] sm:$0xf] %v1031
        %1033 = vst [vmem:[%s954 + $0x7c] sm:$0xf] %v819
        %v1034 = vld [vmem:[%s954 + $0x80] sm:$0x1]
        %v1035 = vsel %vm963, %v820, %v1034
        %1036 = vst [vmem:[%s954 + $0x80] sm:$0x1] %v1035
        %v1037 = vld [vmem:[%s954 + $0x84] sm:$0xf]
        %v1038 = vsel %vm957, %v827, %v1037
        %1039 = vst [vmem:[%s954 + $0x84] sm:$0xf] %v1038
        %1040 = vst [vmem:[%s954 + $0x88] sm:$0xf] %v836
        %v1041 = vld [vmem:[%s954 + $0x8c] sm:$0x1]
        %v1042 = vsel %vm963, %v837, %v1041
        %1043 = vst [vmem:[%s954 + $0x8c] sm:$0x1] %v1042
        %v1044 = vld [vmem:[%s954 + $0x90] sm:$0xf]
        %v1045 = vsel %vm957, %v844, %v1044
        %1046 = vst [vmem:[%s954 + $0x90] sm:$0xf] %v1045
        %1047 = vst [vmem:[%s954 + $0x94] sm:$0xf] %v853
        %v1048 = vld [vmem:[%s954 + $0x98] sm:$0x1]
        %v1049 = vsel %vm963, %v854, %v1048
        %1050 = vst [vmem:[%s954 + $0x98] sm:$0x1] %v1049
        %v1051 = vld [vmem:[%s954 + $0x9c] sm:$0xf]
        %v1052 = vsel %vm957, %v861, %v1051
        %1053 = vst [vmem:[%s954 + $0x9c] sm:$0xf] %v1052
        %1054 = vst [vmem:[%s954 + $0xa0] sm:$0xf] %v870
        %v1055 = vld [vmem:[%s954 + $0xa4] sm:$0x1]
        %v1056 = vsel %vm963, %v871, %v1055
        %1057 = vst [vmem:[%s954 + $0xa4] sm:$0x1] %v1056
        %v1058 = vld [vmem:[%s954 + $0xa8] sm:$0xf]
        %v1059 = vsel %vm957, %v878, %v1058
        %1060 = vst [vmem:[%s954 + $0xa8] sm:$0xf] %v1059
        %1061 = vst [vmem:[%s954 + $0xac] sm:$0xf] %v887
        %v1062 = vld [vmem:[%s954 + $0xb0] sm:$0x1]
        %v1063 = vsel %vm963, %v888, %v1062
        %1064 = vst [vmem:[%s954 + $0xb0] sm:$0x1] %v1063
        %v1065 = vld [vmem:[%s954 + $0xb4] sm:$0xf]
        %v1066 = vsel %vm957, %v895, %v1065
        %1067 = vst [vmem:[%s954 + $0xb4] sm:$0xf] %v1066
        %1068 = vst [vmem:[%s954 + $0xb8] sm:$0xf] %v904
        %v1069 = vld [vmem:[%s954 + $0xbc] sm:$0x1]
        %v1070 = vsel %vm963, %v905, %v1069
        %1071 = vst [vmem:[%s954 + $0xbc] sm:$0x1] %v1070
        %v1072 = vld [vmem:[#allocation2] sm:$0xf]
        %v1073 = vld [vmem:[#allocation2 + $0x4] sm:$0xf]
        %v1074 = vld [vmem:[#allocation2 + $0xc] sm:$0xf]
        %v1075 = vld [vmem:[#allocation2 + $0x10] sm:$0xf]
        %v1076 = vld [vmem:[#allocation2 + $0x18] sm:$0xf]
        %v1077 = vld [vmem:[#allocation2 + $0x1c] sm:$0xf]
        %v1078 = vld [vmem:[#allocation2 + $0x24] sm:$0xf]
        %v1079 = vld [vmem:[#allocation2 + $0x28] sm:$0xf]
        %v1080 = vld [vmem:[#allocation2 + $0x30] sm:$0xf]
        %v1081 = vld [vmem:[#allocation2 + $0x34] sm:$0xf]
        %v1082 = vld [vmem:[#allocation2 + $0x3c] sm:$0xf]
        %v1083 = vld [vmem:[#allocation2 + $0x40] sm:$0xf]
        %v1084 = vld [vmem:[#allocation2 + $0x48] sm:$0xf]
        %v1085 = vld [vmem:[#allocation2 + $0x4c] sm:$0xf]
        %v1086 = vld [vmem:[#allocation2 + $0x54] sm:$0xf]
        %v1087 = vld [vmem:[#allocation2 + $0x58] sm:$0xf]
        %v1088 = vld [vmem:[#allocation2 + $0x60] sm:$0xf]
        %v1089 = vld [vmem:[#allocation2 + $0x64] sm:$0xf]
        %v1090 = vld [vmem:[#allocation2 + $0x6c] sm:$0xf]
        %v1091 = vld [vmem:[#allocation2 + $0x70] sm:$0xf]
        %v1092 = vld [vmem:[#allocation2 + $0x78] sm:$0xf]
        %v1093 = vld [vmem:[#allocation2 + $0x7c] sm:$0xf]
        %v1094 = vld [vmem:[#allocation2 + $0x84] sm:$0xf]
        %v1095 = vld [vmem:[#allocation2 + $0x88] sm:$0xf]
        %v1096 = vld [vmem:[#allocation2 + $0x90] sm:$0xf]
        %v1097 = vld [vmem:[#allocation2 + $0x94] sm:$0xf]
        %v1098 = vld [vmem:[#allocation2 + $0x9c] sm:$0xf]
        %v1099 = vld [vmem:[#allocation2 + $0xa0] sm:$0xf]
        %v1100 = vld [vmem:[#allocation2 + $0xa8] sm:$0xf]
        %v1101 = vld [vmem:[#allocation2 + $0xac] sm:$0xf]
        %v1102 = vld [vmem:[#allocation2 + $0xb4] sm:$0xf]
        %v1103 = vld [vmem:[#allocation2 + $0xb8] sm:$0xf]
        %v1104 = vld [vmem:[#allocation2 + $0x8] sm:$0x1]
        %v1105 = vld [vmem:[#allocation2 + $0x14] sm:$0x1]
        %v1106 = vld [vmem:[#allocation2 + $0x20] sm:$0x1]
        %v1107 = vld [vmem:[#allocation2 + $0x2c] sm:$0x1]
        %v1108 = vld [vmem:[#allocation2 + $0x38] sm:$0x1]
        %v1109 = vld [vmem:[#allocation2 + $0x44] sm:$0x1]
        %v1110 = vld [vmem:[#allocation2 + $0x50] sm:$0x1]
        %v1111 = vld [vmem:[#allocation2 + $0x5c] sm:$0x1]
        %v1112 = vld [vmem:[#allocation2 + $0x68] sm:$0x1]
        %v1113 = vld [vmem:[#allocation2 + $0x74] sm:$0x1]
        %v1114 = vld [vmem:[#allocation2 + $0x80] sm:$0x1]
        %v1115 = vld [vmem:[#allocation2 + $0x8c] sm:$0x1]
        %v1116 = vld [vmem:[#allocation2 + $0x98] sm:$0x1]
        %v1117 = vld [vmem:[#allocation2 + $0xa4] sm:$0x1]
        %v1118 = vld [vmem:[#allocation2 + $0xb0] sm:$0x1]
        %v1119 = vld [vmem:[#allocation2 + $0xbc] sm:$0x1]
        %vm1120 = vsmask.f32 3328
        %vm1121 = vsmask.f32 7440
        %vm1122 = vmor %vm1120, %vm1121
        %v1124 = vshrl.u32 %v1072, 16
        %v1126 = vrot.slane %v1124, 4
        %v1127 = vshll.u32 %v1072, 16
        %v1129 = vrot.slane %v1127, 5
        %v1130 = vor.u32 %v1126, %v1129
        %v1131 = vrot.slane %v1130, 4
        %v1133 = vshll.u32 %v1073, 16
        %v1135 = vrot.slane %v1133, 5
        %v1136 = vsel %vm1122, %v1131, %v1135
        %v1137 = vshrl.u32 %v1073, 16
        %v1139 = vrot.slane %v1137, 4
        %v1140 = vor.u32 %v1139, %v1135
        %v1141 = vrot.slane %v1140, 4
        %v1143 = vshll.u32 %v1104, 16
        %v1145 = vrot.slane %v1143, 5
        %v1146 = vsel %vm1122, %v1141, %v1145
        %v1148 = vshrl.u32 %v1074, 16
        %v1150 = vrot.slane %v1148, 4
        %v1151 = vshll.u32 %v1074, 16
        %v1153 = vrot.slane %v1151, 5
        %v1154 = vor.u32 %v1150, %v1153
        %v1155 = vrot.slane %v1154, 4
        %v1157 = vshll.u32 %v1075, 16
        %v1159 = vrot.slane %v1157, 5
        %v1160 = vsel %vm1122, %v1155, %v1159
        %v1161 = vshrl.u32 %v1075, 16
        %v1163 = vrot.slane %v1161, 4
        %v1164 = vor.u32 %v1163, %v1159
        %v1165 = vrot.slane %v1164, 4
        %v1167 = vshll.u32 %v1105, 16
        %v1169 = vrot.slane %v1167, 5
        %v1170 = vsel %vm1122, %v1165, %v1169
        %v1172 = vshrl.u32 %v1076, 16
        %v1174 = vrot.slane %v1172, 4
        %v1175 = vshll.u32 %v1076, 16
        %v1177 = vrot.slane %v1175, 5
        %v1178 = vor.u32 %v1174, %v1177
        %v1179 = vrot.slane %v1178, 4
        %v1181 = vshll.u32 %v1077, 16
        %v1183 = vrot.slane %v1181, 5
        %v1184 = vsel %vm1122, %v1179, %v1183
        %v1185 = vshrl.u32 %v1077, 16
        %v1187 = vrot.slane %v1185, 4
        %v1188 = vor.u32 %v1187, %v1183
        %v1189 = vrot.slane %v1188, 4
        %v1191 = vshll.u32 %v1106, 16
        %v1193 = vrot.slane %v1191, 5
        %v1194 = vsel %vm1122, %v1189, %v1193
        %v1196 = vshrl.u32 %v1078, 16
        %v1198 = vrot.slane %v1196, 4
        %v1199 = vshll.u32 %v1078, 16
        %v1201 = vrot.slane %v1199, 5
        %v1202 = vor.u32 %v1198, %v1201
        %v1203 = vrot.slane %v1202, 4
        %v1205 = vshll.u32 %v1079, 16
        %v1207 = vrot.slane %v1205, 5
        %v1208 = vsel %vm1122, %v1203, %v1207
        %v1209 = vshrl.u32 %v1079, 16
        %v1211 = vrot.slane %v1209, 4
        %v1212 = vor.u32 %v1211, %v1207
        %v1213 = vrot.slane %v1212, 4
        %v1215 = vshll.u32 %v1107, 16
        %v1217 = vrot.slane %v1215, 5
        %v1218 = vsel %vm1122, %v1213, %v1217
        %v1220 = vshrl.u32 %v1080, 16
        %v1222 = vrot.slane %v1220, 4
        %v1223 = vshll.u32 %v1080, 16
        %v1225 = vrot.slane %v1223, 5
        %v1226 = vor.u32 %v1222, %v1225
        %v1227 = vrot.slane %v1226, 4
        %v1229 = vshll.u32 %v1081, 16
        %v1231 = vrot.slane %v1229, 5
        %v1232 = vsel %vm1122, %v1227, %v1231
        %v1233 = vshrl.u32 %v1081, 16
        %v1235 = vrot.slane %v1233, 4
        %v1236 = vor.u32 %v1235, %v1231
        %v1237 = vrot.slane %v1236, 4
        %v1239 = vshll.u32 %v1108, 16
        %v1241 = vrot.slane %v1239, 5
        %v1242 = vsel %vm1122, %v1237, %v1241
        %v1244 = vshrl.u32 %v1082, 16
        %v1246 = vrot.slane %v1244, 4
        %v1247 = vshll.u32 %v1082, 16
        %v1249 = vrot.slane %v1247, 5
        %v1250 = vor.u32 %v1246, %v1249
        %v1251 = vrot.slane %v1250, 4
        %v1253 = vshll.u32 %v1083, 16
        %v1255 = vrot.slane %v1253, 5
        %v1256 = vsel %vm1122, %v1251, %v1255
        %v1257 = vshrl.u32 %v1083, 16
        %v1259 = vrot.slane %v1257, 4
        %v1260 = vor.u32 %v1259, %v1255
        %v1261 = vrot.slane %v1260, 4
        %v1263 = vshll.u32 %v1109, 16
        %v1265 = vrot.slane %v1263, 5
        %v1266 = vsel %vm1122, %v1261, %v1265
        %v1268 = vshrl.u32 %v1084, 16
        %v1270 = vrot.slane %v1268, 4
        %v1271 = vshll.u32 %v1084, 16
        %v1273 = vrot.slane %v1271, 5
        %v1274 = vor.u32 %v1270, %v1273
        %v1275 = vrot.slane %v1274, 4
        %v1277 = vshll.u32 %v1085, 16
        %v1279 = vrot.slane %v1277, 5
        %v1280 = vsel %vm1122, %v1275, %v1279
        %v1281 = vshrl.u32 %v1085, 16
        %v1283 = vrot.slane %v1281, 4
        %v1284 = vor.u32 %v1283, %v1279
        %v1285 = vrot.slane %v1284, 4
        %v1287 = vshll.u32 %v1110, 16
        %v1289 = vrot.slane %v1287, 5
        %v1290 = vsel %vm1122, %v1285, %v1289
        %v1292 = vshrl.u32 %v1086, 16
        %v1294 = vrot.slane %v1292, 4
        %v1295 = vshll.u32 %v1086, 16
        %v1297 = vrot.slane %v1295, 5
        %v1298 = vor.u32 %v1294, %v1297
        %v1299 = vrot.slane %v1298, 4
        %v1301 = vshll.u32 %v1087, 16
        %v1303 = vrot.slane %v1301, 5
        %v1304 = vsel %vm1122, %v1299, %v1303
        %v1305 = vshrl.u32 %v1087, 16
        %v1307 = vrot.slane %v1305, 4
        %v1308 = vor.u32 %v1307, %v1303
        %v1309 = vrot.slane %v1308, 4
        %v1311 = vshll.u32 %v1111, 16
        %v1313 = vrot.slane %v1311, 5
        %v1314 = vsel %vm1122, %v1309, %v1313
        %v1316 = vshrl.u32 %v1088, 16
        %v1318 = vrot.slane %v1316, 4
        %v1319 = vshll.u32 %v1088, 16
        %v1321 = vrot.slane %v1319, 5
        %v1322 = vor.u32 %v1318, %v1321
        %v1323 = vrot.slane %v1322, 4
        %v1325 = vshll.u32 %v1089, 16
        %v1327 = vrot.slane %v1325, 5
        %v1328 = vsel %vm1122, %v1323, %v1327
        %v1329 = vshrl.u32 %v1089, 16
        %v1331 = vrot.slane %v1329, 4
        %v1332 = vor.u32 %v1331, %v1327
        %v1333 = vrot.slane %v1332, 4
        %v1335 = vshll.u32 %v1112, 16
        %v1337 = vrot.slane %v1335, 5
        %v1338 = vsel %vm1122, %v1333, %v1337
        %v1340 = vshrl.u32 %v1090, 16
        %v1342 = vrot.slane %v1340, 4
        %v1343 = vshll.u32 %v1090, 16
        %v1345 = vrot.slane %v1343, 5
        %v1346 = vor.u32 %v1342, %v1345
        %v1347 = vrot.slane %v1346, 4
        %v1349 = vshll.u32 %v1091, 16
        %v1351 = vrot.slane %v1349, 5
        %v1352 = vsel %vm1122, %v1347, %v1351
        %v1353 = vshrl.u32 %v1091, 16
        %v1355 = vrot.slane %v1353, 4
        %v1356 = vor.u32 %v1355, %v1351
        %v1357 = vrot.slane %v1356, 4
        %v1359 = vshll.u32 %v1113, 16
        %v1361 = vrot.slane %v1359, 5
        %v1362 = vsel %vm1122, %v1357, %v1361
        %v1364 = vshrl.u32 %v1092, 16
        %v1366 = vrot.slane %v1364, 4
        %v1367 = vshll.u32 %v1092, 16
        %v1369 = vrot.slane %v1367, 5
        %v1370 = vor.u32 %v1366, %v1369
        %v1371 = vrot.slane %v1370, 4
        %v1373 = vshll.u32 %v1093, 16
        %v1375 = vrot.slane %v1373, 5
        %v1376 = vsel %vm1122, %v1371, %v1375
        %v1377 = vshrl.u32 %v1093, 16
        %v1379 = vrot.slane %v1377, 4
        %v1380 = vor.u32 %v1379, %v1375
        %v1381 = vrot.slane %v1380, 4
        %v1383 = vshll.u32 %v1114, 16
        %v1385 = vrot.slane %v1383, 5
        %v1386 = vsel %vm1122, %v1381, %v1385
        %v1388 = vshrl.u32 %v1094, 16
        %v1390 = vrot.slane %v1388, 4
        %v1391 = vshll.u32 %v1094, 16
        %v1393 = vrot.slane %v1391, 5
        %v1394 = vor.u32 %v1390, %v1393
        %v1395 = vrot.slane %v1394, 4
        %v1397 = vshll.u32 %v1095, 16
        %v1399 = vrot.slane %v1397, 5
        %v1400 = vsel %vm1122, %v1395, %v1399
        %v1401 = vshrl.u32 %v1095, 16
        %v1403 = vrot.slane %v1401, 4
        %v1404 = vor.u32 %v1403, %v1399
        %v1405 = vrot.slane %v1404, 4
        %v1407 = vshll.u32 %v1115, 16
        %v1409 = vrot.slane %v1407, 5
        %v1410 = vsel %vm1122, %v1405, %v1409
        %v1412 = vshrl.u32 %v1096, 16
        %v1414 = vrot.slane %v1412, 4
        %v1415 = vshll.u32 %v1096, 16
        %v1417 = vrot.slane %v1415, 5
        %v1418 = vor.u32 %v1414, %v1417
        %v1419 = vrot.slane %v1418, 4
        %v1421 = vshll.u32 %v1097, 16
        %v1423 = vrot.slane %v1421, 5
        %v1424 = vsel %vm1122, %v1419, %v1423
        %v1425 = vshrl.u32 %v1097, 16
        %v1427 = vrot.slane %v1425, 4
        %v1428 = vor.u32 %v1427, %v1423
        %v1429 = vrot.slane %v1428, 4
        %v1431 = vshll.u32 %v1116, 16
        %v1433 = vrot.slane %v1431, 5
        %v1434 = vsel %vm1122, %v1429, %v1433
        %v1436 = vshrl.u32 %v1098, 16
        %v1438 = vrot.slane %v1436, 4
        %v1439 = vshll.u32 %v1098, 16
        %v1441 = vrot.slane %v1439, 5
        %v1442 = vor.u32 %v1438, %v1441
        %v1443 = vrot.slane %v1442, 4
        %v1445 = vshll.u32 %v1099, 16
        %v1447 = vrot.slane %v1445, 5
        %v1448 = vsel %vm1122, %v1443, %v1447
        %v1449 = vshrl.u32 %v1099, 16
        %v1451 = vrot.slane %v1449, 4
        %v1452 = vor.u32 %v1451, %v1447
        %v1453 = vrot.slane %v1452, 4
        %v1455 = vshll.u32 %v1117, 16
        %v1457 = vrot.slane %v1455, 5
        %v1458 = vsel %vm1122, %v1453, %v1457
        %v1460 = vshrl.u32 %v1100, 16
        %v1462 = vrot.slane %v1460, 4
        %v1463 = vshll.u32 %v1100, 16
        %v1465 = vrot.slane %v1463, 5
        %v1466 = vor.u32 %v1462, %v1465
        %v1467 = vrot.slane %v1466, 4
        %v1469 = vshll.u32 %v1101, 16
        %v1471 = vrot.slane %v1469, 5
        %v1472 = vsel %vm1122, %v1467, %v1471
        %v1473 = vshrl.u32 %v1101, 16
        %v1475 = vrot.slane %v1473, 4
        %v1476 = vor.u32 %v1475, %v1471
        %v1477 = vrot.slane %v1476, 4
        %v1479 = vshll.u32 %v1118, 16
        %v1481 = vrot.slane %v1479, 5
        %v1482 = vsel %vm1122, %v1477, %v1481
        %v1484 = vshrl.u32 %v1102, 16
        %v1486 = vrot.slane %v1484, 4
        %v1487 = vshll.u32 %v1102, 16
        %v1489 = vrot.slane %v1487, 5
        %v1490 = vor.u32 %v1486, %v1489
        %v1491 = vrot.slane %v1490, 4
        %v1493 = vshll.u32 %v1103, 16
        %v1495 = vrot.slane %v1493, 5
        %v1496 = vsel %vm1122, %v1491, %v1495
        %v1497 = vshrl.u32 %v1103, 16
        %v1499 = vrot.slane %v1497, 4
        %v1500 = vor.u32 %v1499, %v1495
        %v1501 = vrot.slane %v1500, 4
        %v1503 = vshll.u32 %v1119, 16
        %v1505 = vrot.slane %v1503, 5
        %v1506 = vsel %vm1122, %v1501, %v1505
        %v1507 = vld [vmem:[#allocation2] sm:$0xe]
        %v1508 = vld [vmem:[#allocation2 + $0xc] sm:$0xe]
        %v1509 = vld [vmem:[#allocation2 + $0x18] sm:$0xe]
        %v1510 = vld [vmem:[#allocation2 + $0x24] sm:$0xe]
        %v1511 = vld [vmem:[#allocation2 + $0x30] sm:$0xe]
        %v1512 = vld [vmem:[#allocation2 + $0x3c] sm:$0xe]
        %v1513 = vld [vmem:[#allocation2 + $0x48] sm:$0xe]
        %v1514 = vld [vmem:[#allocation2 + $0x54] sm:$0xe]
        %v1515 = vld [vmem:[#allocation2 + $0x60] sm:$0xe]
        %v1516 = vld [vmem:[#allocation2 + $0x6c] sm:$0xe]
        %v1517 = vld [vmem:[#allocation2 + $0x78] sm:$0xe]
        %v1518 = vld [vmem:[#allocation2 + $0x84] sm:$0xe]
        %v1519 = vld [vmem:[#allocation2 + $0x90] sm:$0xe]
        %v1520 = vld [vmem:[#allocation2 + $0x9c] sm:$0xe]
        %v1521 = vld [vmem:[#allocation2 + $0xa8] sm:$0xe]
        %v1522 = vld [vmem:[#allocation2 + $0xb4] sm:$0xe]
        %vm1571 = vcmask 1042432
        %vm1572 = vcmask 1046532
        %vm1573 = vmor %vm1571, %vm1572
        %v1574 = vrot.slane %v1507, 5
        %v1575 = vrot.slane %v1574, 4
        %v1576 = vrot.slane %v1073, 5
        %v1577 = vsel %vm1573, %v1575, %v1576
        %v1578 = vrot.slane %v1576, 4
        %v1579 = vrot.slane %v1104, 5
        %v1580 = vsel %vm1573, %v1578, %v1579
        %v1581 = vrot.slane %v1508, 5
        %v1582 = vrot.slane %v1581, 4
        %v1583 = vrot.slane %v1075, 5
        %v1584 = vsel %vm1573, %v1582, %v1583
        %v1585 = vrot.slane %v1583, 4
        %v1586 = vrot.slane %v1105, 5
        %v1587 = vsel %vm1573, %v1585, %v1586
        %v1588 = vrot.slane %v1509, 5
        %v1589 = vrot.slane %v1588, 4
        %v1590 = vrot.slane %v1077, 5
        %v1591 = vsel %vm1573, %v1589, %v1590
        %v1592 = vrot.slane %v1590, 4
        %v1593 = vrot.slane %v1106, 5
        %v1594 = vsel %vm1573, %v1592, %v1593
        %v1595 = vrot.slane %v1510, 5
        %v1596 = vrot.slane %v1595, 4
        %v1597 = vrot.slane %v1079, 5
        %v1598 = vsel %vm1573, %v1596, %v1597
        %v1599 = vrot.slane %v1597, 4
        %v1600 = vrot.slane %v1107, 5
        %v1601 = vsel %vm1573, %v1599, %v1600
        %v1602 = vrot.slane %v1511, 5
        %v1603 = vrot.slane %v1602, 4
        %v1604 = vrot.slane %v1081, 5
        %v1605 = vsel %vm1573, %v1603, %v1604
        %v1606 = vrot.slane %v1604, 4
        %v1607 = vrot.slane %v1108, 5
        %v1608 = vsel %vm1573, %v1606, %v1607
        %v1609 = vrot.slane %v1512, 5
        %v1610 = vrot.slane %v1609, 4
        %v1611 = vrot.slane %v1083, 5
        %v1612 = vsel %vm1573, %v1610, %v1611
        %v1613 = vrot.slane %v1611, 4
        %v1614 = vrot.slane %v1109, 5
        %v1615 = vsel %vm1573, %v1613, %v1614
        %v1616 = vrot.slane %v1513, 5
        %v1617 = vrot.slane %v1616, 4
        %v1618 = vrot.slane %v1085, 5
        %v1619 = vsel %vm1573, %v1617, %v1618
        %v1620 = vrot.slane %v1618, 4
        %v1621 = vrot.slane %v1110, 5
        %v1622 = vsel %vm1573, %v1620, %v1621
        %v1623 = vrot.slane %v1514, 5
        %v1624 = vrot.slane %v1623, 4
        %v1625 = vrot.slane %v1087, 5
        %v1626 = vsel %vm1573, %v1624, %v1625
        %v1627 = vrot.slane %v1625, 4
        %v1628 = vrot.slane %v1111, 5
        %v1629 = vsel %vm1573, %v1627, %v1628
        %v1630 = vrot.slane %v1515, 5
        %v1631 = vrot.slane %v1630, 4
        %v1632 = vrot.slane %v1089, 5
        %v1633 = vsel %vm1573, %v1631, %v1632
        %v1634 = vrot.slane %v1632, 4
        %v1635 = vrot.slane %v1112, 5
        %v1636 = vsel %vm1573, %v1634, %v1635
        %v1637 = vrot.slane %v1516, 5
        %v1638 = vrot.slane %v1637, 4
        %v1639 = vrot.slane %v1091, 5
        %v1640 = vsel %vm1573, %v1638, %v1639
        %v1641 = vrot.slane %v1639, 4
        %v1642 = vrot.slane %v1113, 5
        %v1643 = vsel %vm1573, %v1641, %v1642
        %v1644 = vrot.slane %v1517, 5
        %v1645 = vrot.slane %v1644, 4
        %v1646 = vrot.slane %v1093, 5
        %v1647 = vsel %vm1573, %v1645, %v1646
        %v1648 = vrot.slane %v1646, 4
        %v1649 = vrot.slane %v1114, 5
        %v1650 = vsel %vm1573, %v1648, %v1649
        %v1651 = vrot.slane %v1518, 5
        %v1652 = vrot.slane %v1651, 4
        %v1653 = vrot.slane %v1095, 5
        %v1654 = vsel %vm1573, %v1652, %v1653
        %v1655 = vrot.slane %v1653, 4
        %v1656 = vrot.slane %v1115, 5
        %v1657 = vsel %vm1573, %v1655, %v1656
        %v1658 = vrot.slane %v1519, 5
        %v1659 = vrot.slane %v1658, 4
        %v1660 = vrot.slane %v1097, 5
        %v1661 = vsel %vm1573, %v1659, %v1660
        %v1662 = vrot.slane %v1660, 4
        %v1663 = vrot.slane %v1116, 5
        %v1664 = vsel %vm1573, %v1662, %v1663
        %v1665 = vrot.slane %v1520, 5
        %v1666 = vrot.slane %v1665, 4
        %v1667 = vrot.slane %v1099, 5
        %v1668 = vsel %vm1573, %v1666, %v1667
        %v1669 = vrot.slane %v1667, 4
        %v1670 = vrot.slane %v1117, 5
        %v1671 = vsel %vm1573, %v1669, %v1670
        %v1672 = vrot.slane %v1521, 5
        %v1673 = vrot.slane %v1672, 4
        %v1674 = vrot.slane %v1101, 5
        %v1675 = vsel %vm1573, %v1673, %v1674
        %v1676 = vrot.slane %v1674, 4
        %v1677 = vrot.slane %v1118, 5
        %v1678 = vsel %vm1573, %v1676, %v1677
        %v1679 = vrot.slane %v1522, 5
        %v1680 = vrot.slane %v1679, 4
        %v1681 = vrot.slane %v1103, 5
        %v1682 = vsel %vm1573, %v1680, %v1681
        %v1683 = vrot.slane %v1681, 4
        %v1684 = vrot.slane %v1119, 5
        %v1685 = vsel %vm1573, %v1683, %v1684
        %v1686 = vld [vmem:[%s954] sm:$0xf]
        %v1687 = vld [vmem:[%s954 + $0x4] sm:$0xf]
        %v1688 = vld [vmem:[%s954 + $0xc] sm:$0xf]
        %v1689 = vld [vmem:[%s954 + $0x10] sm:$0xf]
        %v1690 = vld [vmem:[%s954 + $0x18] sm:$0xf]
        %v1691 = vld [vmem:[%s954 + $0x1c] sm:$0xf]
        %v1692 = vld [vmem:[%s954 + $0x24] sm:$0xf]
        %v1693 = vld [vmem:[%s954 + $0x28] sm:$0xf]
        %v1694 = vld [vmem:[%s954 + $0x30] sm:$0xf]
        %v1695 = vld [vmem:[%s954 + $0x34] sm:$0xf]
        %v1696 = vld [vmem:[%s954 + $0x3c] sm:$0xf]
        %v1697 = vld [vmem:[%s954 + $0x40] sm:$0xf]
        %v1698 = vld [vmem:[%s954 + $0x48] sm:$0xf]
        %v1699 = vld [vmem:[%s954 + $0x4c] sm:$0xf]
        %v1700 = vld [vmem:[%s954 + $0x54] sm:$0xf]
        %v1701 = vld [vmem:[%s954 + $0x58] sm:$0xf]
        %v1702 = vld [vmem:[%s954 + $0x60] sm:$0xf]
        %v1703 = vld [vmem:[%s954 + $0x64] sm:$0xf]
        %v1704 = vld [vmem:[%s954 + $0x6c] sm:$0xf]
        %v1705 = vld [vmem:[%s954 + $0x70] sm:$0xf]
        %v1706 = vld [vmem:[%s954 + $0x78] sm:$0xf]
        %v1707 = vld [vmem:[%s954 + $0x7c] sm:$0xf]
        %v1708 = vld [vmem:[%s954 + $0x84] sm:$0xf]
        %v1709 = vld [vmem:[%s954 + $0x88] sm:$0xf]
        %v1710 = vld [vmem:[%s954 + $0x90] sm:$0xf]
        %v1711 = vld [vmem:[%s954 + $0x94] sm:$0xf]
        %v1712 = vld [vmem:[%s954 + $0x9c] sm:$0xf]
        %v1713 = vld [vmem:[%s954 + $0xa0] sm:$0xf]
        %v1714 = vld [vmem:[%s954 + $0xa8] sm:$0xf]
        %v1715 = vld [vmem:[%s954 + $0xac] sm:$0xf]
        %v1716 = vld [vmem:[%s954 + $0xb4] sm:$0xf]
        %v1717 = vld [vmem:[%s954 + $0xb8] sm:$0xf]
        %v1718 = vld [vmem:[%s954 + $0x8] sm:$0x1]
        %v1719 = vld [vmem:[%s954 + $0x14] sm:$0x1]
        %v1720 = vld [vmem:[%s954 + $0x20] sm:$0x1]
        %v1721 = vld [vmem:[%s954 + $0x2c] sm:$0x1]
        %v1722 = vld [vmem:[%s954 + $0x38] sm:$0x1]
        %v1723 = vld [vmem:[%s954 + $0x44] sm:$0x1]
        %v1724 = vld [vmem:[%s954 + $0x50] sm:$0x1]
        %v1725 = vld [vmem:[%s954 + $0x5c] sm:$0x1]
        %v1726 = vld [vmem:[%s954 + $0x68] sm:$0x1]
        %v1727 = vld [vmem:[%s954 + $0x74] sm:$0x1]
        %v1728 = vld [vmem:[%s954 + $0x80] sm:$0x1]
        %v1729 = vld [vmem:[%s954 + $0x8c] sm:$0x1]
        %v1730 = vld [vmem:[%s954 + $0x98] sm:$0x1]
        %v1731 = vld [vmem:[%s954 + $0xa4] sm:$0x1]
        %v1732 = vld [vmem:[%s954 + $0xb0] sm:$0x1]
        %v1733 = vld [vmem:[%s954 + $0xbc] sm:$0x1]
        %v1735 = vshrl.u32 %v1686, 16
        %v1737 = vrot.slane %v1735, 4
        %v1738 = vshll.u32 %v1686, 16
        %v1740 = vrot.slane %v1738, 5
        %v1741 = vor.u32 %v1737, %v1740
        %v1742 = vrot.slane %v1741, 4
        %v1744 = vshll.u32 %v1687, 16
        %v1746 = vrot.slane %v1744, 5
        %v1747 = vsel %vm1122, %v1742, %v1746
        %v1748 = vshrl.u32 %v1687, 16
        %v1750 = vrot.slane %v1748, 4
        %v1751 = vor.u32 %v1750, %v1746
        %v1752 = vrot.slane %v1751, 4
        %v1754 = vshll.u32 %v1718, 16
        %v1756 = vrot.slane %v1754, 5
        %v1757 = vsel %vm1122, %v1752, %v1756
        %v1759 = vshrl.u32 %v1688, 16
        %v1761 = vrot.slane %v1759, 4
        %v1762 = vshll.u32 %v1688, 16
        %v1764 = vrot.slane %v1762, 5
        %v1765 = vor.u32 %v1761, %v1764
        %v1766 = vrot.slane %v1765, 4
        %v1768 = vshll.u32 %v1689, 16
        %v1770 = vrot.slane %v1768, 5
        %v1771 = vsel %vm1122, %v1766, %v1770
        %v1772 = vshrl.u32 %v1689, 16
        %v1774 = vrot.slane %v1772, 4
        %v1775 = vor.u32 %v1774, %v1770
        %v1776 = vrot.slane %v1775, 4
        %v1778 = vshll.u32 %v1719, 16
        %v1780 = vrot.slane %v1778, 5
        %v1781 = vsel %vm1122, %v1776, %v1780
        %v1783 = vshrl.u32 %v1690, 16
        %v1785 = vrot.slane %v1783, 4
        %v1786 = vshll.u32 %v1690, 16
        %v1788 = vrot.slane %v1786, 5
        %v1789 = vor.u32 %v1785, %v1788
        %v1790 = vrot.slane %v1789, 4
        %v1792 = vshll.u32 %v1691, 16
        %v1794 = vrot.slane %v1792, 5
        %v1795 = vsel %vm1122, %v1790, %v1794
        %v1796 = vshrl.u32 %v1691, 16
        %v1798 = vrot.slane %v1796, 4
        %v1799 = vor.u32 %v1798, %v1794
        %v1800 = vrot.slane %v1799, 4
        %v1802 = vshll.u32 %v1720, 16
        %v1804 = vrot.slane %v1802, 5
        %v1805 = vsel %vm1122, %v1800, %v1804
        %v1807 = vshrl.u32 %v1692, 16
        %v1809 = vrot.slane %v1807, 4
        %v1810 = vshll.u32 %v1692, 16
        %v1812 = vrot.slane %v1810, 5
        %v1813 = vor.u32 %v1809, %v1812
        %v1814 = vrot.slane %v1813, 4
        %v1816 = vshll.u32 %v1693, 16
        %v1818 = vrot.slane %v1816, 5
        %v1819 = vsel %vm1122, %v1814, %v1818
        %v1820 = vshrl.u32 %v1693, 16
        %v1822 = vrot.slane %v1820, 4
        %v1823 = vor.u32 %v1822, %v1818
        %v1824 = vrot.slane %v1823, 4
        %v1826 = vshll.u32 %v1721, 16
        %v1828 = vrot.slane %v1826, 5
        %v1829 = vsel %vm1122, %v1824, %v1828
        %v1831 = vshrl.u32 %v1694, 16
        %v1833 = vrot.slane %v1831, 4
        %v1834 = vshll.u32 %v1694, 16
        %v1836 = vrot.slane %v1834, 5
        %v1837 = vor.u32 %v1833, %v1836
        %v1838 = vrot.slane %v1837, 4
        %v1840 = vshll.u32 %v1695, 16
        %v1842 = vrot.slane %v1840, 5
        %v1843 = vsel %vm1122, %v1838, %v1842
        %v1844 = vshrl.u32 %v1695, 16
        %v1846 = vrot.slane %v1844, 4
        %v1847 = vor.u32 %v1846, %v1842
        %v1848 = vrot.slane %v1847, 4
        %v1850 = vshll.u32 %v1722, 16
        %v1852 = vrot.slane %v1850, 5
        %v1853 = vsel %vm1122, %v1848, %v1852
        %v1855 = vshrl.u32 %v1696, 16
        %v1857 = vrot.slane %v1855, 4
        %v1858 = vshll.u32 %v1696, 16
        %v1860 = vrot.slane %v1858, 5
        %v1861 = vor.u32 %v1857, %v1860
        %v1862 = vrot.slane %v1861, 4
        %v1864 = vshll.u32 %v1697, 16
        %v1866 = vrot.slane %v1864, 5
        %v1867 = vsel %vm1122, %v1862, %v1866
        %v1868 = vshrl.u32 %v1697, 16
        %v1870 = vrot.slane %v1868, 4
        %v1871 = vor.u32 %v1870, %v1866
        %v1872 = vrot.slane %v1871, 4
        %v1874 = vshll.u32 %v1723, 16
        %v1876 = vrot.slane %v1874, 5
        %v1877 = vsel %vm1122, %v1872, %v1876
        %v1879 = vshrl.u32 %v1698, 16
        %v1881 = vrot.slane %v1879, 4
        %v1882 = vshll.u32 %v1698, 16
        %v1884 = vrot.slane %v1882, 5
        %v1885 = vor.u32 %v1881, %v1884
        %v1886 = vrot.slane %v1885, 4
        %v1888 = vshll.u32 %v1699, 16
        %v1890 = vrot.slane %v1888, 5
        %v1891 = vsel %vm1122, %v1886, %v1890
        %v1892 = vshrl.u32 %v1699, 16
        %v1894 = vrot.slane %v1892, 4
        %v1895 = vor.u32 %v1894, %v1890
        %v1896 = vrot.slane %v1895, 4
        %v1898 = vshll.u32 %v1724, 16
        %v1900 = vrot.slane %v1898, 5
        %v1901 = vsel %vm1122, %v1896, %v1900
        %v1903 = vshrl.u32 %v1700, 16
        %v1905 = vrot.slane %v1903, 4
        %v1906 = vshll.u32 %v1700, 16
        %v1908 = vrot.slane %v1906, 5
        %v1909 = vor.u32 %v1905, %v1908
        %v1910 = vrot.slane %v1909, 4
        %v1912 = vshll.u32 %v1701, 16
        %v1914 = vrot.slane %v1912, 5
        %v1915 = vsel %vm1122, %v1910, %v1914
        %v1916 = vshrl.u32 %v1701, 16
        %v1918 = vrot.slane %v1916, 4
        %v1919 = vor.u32 %v1918, %v1914
        %v1920 = vrot.slane %v1919, 4
        %v1922 = vshll.u32 %v1725, 16
        %v1924 = vrot.slane %v1922, 5
        %v1925 = vsel %vm1122, %v1920, %v1924
        %v1927 = vshrl.u32 %v1702, 16
        %v1929 = vrot.slane %v1927, 4
        %v1930 = vshll.u32 %v1702, 16
        %v1932 = vrot.slane %v1930, 5
        %v1933 = vor.u32 %v1929, %v1932
        %v1934 = vrot.slane %v1933, 4
        %v1936 = vshll.u32 %v1703, 16
        %v1938 = vrot.slane %v1936, 5
        %v1939 = vsel %vm1122, %v1934, %v1938
        %v1940 = vshrl.u32 %v1703, 16
        %v1942 = vrot.slane %v1940, 4
        %v1943 = vor.u32 %v1942, %v1938
        %v1944 = vrot.slane %v1943, 4
        %v1946 = vshll.u32 %v1726, 16
        %v1948 = vrot.slane %v1946, 5
        %v1949 = vsel %vm1122, %v1944, %v1948
        %v1951 = vshrl.u32 %v1704, 16
        %v1953 = vrot.slane %v1951, 4
        %v1954 = vshll.u32 %v1704, 16
        %v1956 = vrot.slane %v1954, 5
        %v1957 = vor.u32 %v1953, %v1956
        %v1958 = vrot.slane %v1957, 4
        %v1960 = vshll.u32 %v1705, 16
        %v1962 = vrot.slane %v1960, 5
        %v1963 = vsel %vm1122, %v1958, %v1962
        %v1964 = vshrl.u32 %v1705, 16
        %v1966 = vrot.slane %v1964, 4
        %v1967 = vor.u32 %v1966, %v1962
        %v1968 = vrot.slane %v1967, 4
        %v1970 = vshll.u32 %v1727, 16
        %v1972 = vrot.slane %v1970, 5
        %v1973 = vsel %vm1122, %v1968, %v1972
        %v1975 = vshrl.u32 %v1706, 16
        %v1977 = vrot.slane %v1975, 4
        %v1978 = vshll.u32 %v1706, 16
        %v1980 = vrot.slane %v1978, 5
        %v1981 = vor.u32 %v1977, %v1980
        %v1982 = vrot.slane %v1981, 4
        %v1984 = vshll.u32 %v1707, 16
        %v1986 = vrot.slane %v1984, 5
        %v1987 = vsel %vm1122, %v1982, %v1986
        %v1988 = vshrl.u32 %v1707, 16
        %v1990 = vrot.slane %v1988, 4
        %v1991 = vor.u32 %v1990, %v1986
        %v1992 = vrot.slane %v1991, 4
        %v1994 = vshll.u32 %v1728, 16
        %v1996 = vrot.slane %v1994, 5
        %v1997 = vsel %vm1122, %v1992, %v1996
        %v1999 = vshrl.u32 %v1708, 16
        %v2001 = vrot.slane %v1999, 4
        %v2002 = vshll.u32 %v1708, 16
        %v2004 = vrot.slane %v2002, 5
        %v2005 = vor.u32 %v2001, %v2004
        %v2006 = vrot.slane %v2005, 4
        %v2008 = vshll.u32 %v1709, 16
        %v2010 = vrot.slane %v2008, 5
        %v2011 = vsel %vm1122, %v2006, %v2010
        %v2012 = vshrl.u32 %v1709, 16
        %v2014 = vrot.slane %v2012, 4
        %v2015 = vor.u32 %v2014, %v2010
        %v2016 = vrot.slane %v2015, 4
        %v2018 = vshll.u32 %v1729, 16
        %v2020 = vrot.slane %v2018, 5
        %v2021 = vsel %vm1122, %v2016, %v2020
        %v2023 = vshrl.u32 %v1710, 16
        %v2025 = vrot.slane %v2023, 4
        %v2026 = vshll.u32 %v1710, 16
        %v2028 = vrot.slane %v2026, 5
        %v2029 = vor.u32 %v2025, %v2028
        %v2030 = vrot.slane %v2029, 4
        %v2032 = vshll.u32 %v1711, 16
        %v2034 = vrot.slane %v2032, 5
        %v2035 = vsel %vm1122, %v2030, %v2034
        %v2036 = vshrl.u32 %v1711, 16
        %v2038 = vrot.slane %v2036, 4
        %v2039 = vor.u32 %v2038, %v2034
        %v2040 = vrot.slane %v2039, 4
        %v2042 = vshll.u32 %v1730, 16
        %v2044 = vrot.slane %v2042, 5
        %v2045 = vsel %vm1122, %v2040, %v2044
        %v2047 = vshrl.u32 %v1712, 16
        %v2049 = vrot.slane %v2047, 4
        %v2050 = vshll.u32 %v1712, 16
        %v2052 = vrot.slane %v2050, 5
        %v2053 = vor.u32 %v2049, %v2052
        %v2054 = vrot.slane %v2053, 4
        %v2056 = vshll.u32 %v1713, 16
        %v2058 = vrot.slane %v2056, 5
        %v2059 = vsel %vm1122, %v2054, %v2058
        %v2060 = vshrl.u32 %v1713, 16
        %v2062 = vrot.slane %v2060, 4
        %v2063 = vor.u32 %v2062, %v2058
        %v2064 = vrot.slane %v2063, 4
        %v2066 = vshll.u32 %v1731, 16
        %v2068 = vrot.slane %v2066, 5
        %v2069 = vsel %vm1122, %v2064, %v2068
        %v2071 = vshrl.u32 %v1714, 16
        %v2073 = vrot.slane %v2071, 4
        %v2074 = vshll.u32 %v1714, 16
        %v2076 = vrot.slane %v2074, 5
        %v2077 = vor.u32 %v2073, %v2076
        %v2078 = vrot.slane %v2077, 4
        %v2080 = vshll.u32 %v1715, 16
        %v2082 = vrot.slane %v2080, 5
        %v2083 = vsel %vm1122, %v2078, %v2082
        %v2084 = vshrl.u32 %v1715, 16
        %v2086 = vrot.slane %v2084, 4
        %v2087 = vor.u32 %v2086, %v2082
        %v2088 = vrot.slane %v2087, 4
        %v2090 = vshll.u32 %v1732, 16
        %v2092 = vrot.slane %v2090, 5
        %v2093 = vsel %vm1122, %v2088, %v2092
        %v2095 = vshrl.u32 %v1716, 16
        %v2097 = vrot.slane %v2095, 4
        %v2098 = vshll.u32 %v1716, 16
        %v2100 = vrot.slane %v2098, 5
        %v2101 = vor.u32 %v2097, %v2100
        %v2102 = vrot.slane %v2101, 4
        %v2104 = vshll.u32 %v1717, 16
        %v2106 = vrot.slane %v2104, 5
        %v2107 = vsel %vm1122, %v2102, %v2106
        %v2108 = vshrl.u32 %v1717, 16
        %v2110 = vrot.slane %v2108, 4
        %v2111 = vor.u32 %v2110, %v2106
        %v2112 = vrot.slane %v2111, 4
        %v2114 = vshll.u32 %v1733, 16
        %v2116 = vrot.slane %v2114, 5
        %v2117 = vsel %vm1122, %v2112, %v2116
        %v2118 = vld [vmem:[%s954] sm:$0xe]
        %v2119 = vld [vmem:[%s954 + $0xc] sm:$0xe]
        %v2120 = vld [vmem:[%s954 + $0x18] sm:$0xe]
        %v2121 = vld [vmem:[%s954 + $0x24] sm:$0xe]
        %v2122 = vld [vmem:[%s954 + $0x30] sm:$0xe]
        %v2123 = vld [vmem:[%s954 + $0x3c] sm:$0xe]
        %v2124 = vld [vmem:[%s954 + $0x48] sm:$0xe]
        %v2125 = vld [vmem:[%s954 + $0x54] sm:$0xe]
        %v2126 = vld [vmem:[%s954 + $0x60] sm:$0xe]
        %v2127 = vld [vmem:[%s954 + $0x6c] sm:$0xe]
        %v2128 = vld [vmem:[%s954 + $0x78] sm:$0xe]
        %v2129 = vld [vmem:[%s954 + $0x84] sm:$0xe]
        %v2130 = vld [vmem:[%s954 + $0x90] sm:$0xe]
        %v2131 = vld [vmem:[%s954 + $0x9c] sm:$0xe]
        %v2132 = vld [vmem:[%s954 + $0xa8] sm:$0xe]
        %v2133 = vld [vmem:[%s954 + $0xb4] sm:$0xe]
        %v2182 = vrot.slane %v2118, 5
        %v2183 = vrot.slane %v2182, 4
        %v2184 = vrot.slane %v1687, 5
        %v2185 = vsel %vm1573, %v2183, %v2184
        %v2186 = vrot.slane %v2184, 4
        %v2187 = vrot.slane %v1718, 5
        %v2188 = vsel %vm1573, %v2186, %v2187
        %v2189 = vrot.slane %v2119, 5
        %v2190 = vrot.slane %v2189, 4
        %v2191 = vrot.slane %v1689, 5
        %v2192 = vsel %vm1573, %v2190, %v2191
        %v2193 = vrot.slane %v2191, 4
        %v2194 = vrot.slane %v1719, 5
        %v2195 = vsel %vm1573, %v2193, %v2194
        %v2196 = vrot.slane %v2120, 5
        %v2197 = vrot.slane %v2196, 4
        %v2198 = vrot.slane %v1691, 5
        %v2199 = vsel %vm1573, %v2197, %v2198
        %v2200 = vrot.slane %v2198, 4
        %v2201 = vrot.slane %v1720, 5
        %v2202 = vsel %vm1573, %v2200, %v2201
        %v2203 = vrot.slane %v2121, 5
        %v2204 = vrot.slane %v2203, 4
        %v2205 = vrot.slane %v1693, 5
        %v2206 = vsel %vm1573, %v2204, %v2205
        %v2207 = vrot.slane %v2205, 4
        %v2208 = vrot.slane %v1721, 5
        %v2209 = vsel %vm1573, %v2207, %v2208
        %v2210 = vrot.slane %v2122, 5
        %v2211 = vrot.slane %v2210, 4
        %v2212 = vrot.slane %v1695, 5
        %v2213 = vsel %vm1573, %v2211, %v2212
        %v2214 = vrot.slane %v2212, 4
        %v2215 = vrot.slane %v1722, 5
        %v2216 = vsel %vm1573, %v2214, %v2215
        %v2217 = vrot.slane %v2123, 5
        %v2218 = vrot.slane %v2217, 4
        %v2219 = vrot.slane %v1697, 5
        %v2220 = vsel %vm1573, %v2218, %v2219
        %v2221 = vrot.slane %v2219, 4
        %v2222 = vrot.slane %v1723, 5
        %v2223 = vsel %vm1573, %v2221, %v2222
        %v2224 = vrot.slane %v2124, 5
        %v2225 = vrot.slane %v2224, 4
        %v2226 = vrot.slane %v1699, 5
        %v2227 = vsel %vm1573, %v2225, %v2226
        %v2228 = vrot.slane %v2226, 4
        %v2229 = vrot.slane %v1724, 5
        %v2230 = vsel %vm1573, %v2228, %v2229
        %v2231 = vrot.slane %v2125, 5
        %v2232 = vrot.slane %v2231, 4
        %v2233 = vrot.slane %v1701, 5
        %v2234 = vsel %vm1573, %v2232, %v2233
        %v2235 = vrot.slane %v2233, 4
        %v2236 = vrot.slane %v1725, 5
        %v2237 = vsel %vm1573, %v2235, %v2236
        %v2238 = vrot.slane %v2126, 5
        %v2239 = vrot.slane %v2238, 4
        %v2240 = vrot.slane %v1703, 5
        %v2241 = vsel %vm1573, %v2239, %v2240
        %v2242 = vrot.slane %v2240, 4
        %v2243 = vrot.slane %v1726, 5
        %v2244 = vsel %vm1573, %v2242, %v2243
        %v2245 = vrot.slane %v2127, 5
        %v2246 = vrot.slane %v2245, 4
        %v2247 = vrot.slane %v1705, 5
        %v2248 = vsel %vm1573, %v2246, %v2247
        %v2249 = vrot.slane %v2247, 4
        %v2250 = vrot.slane %v1727, 5
        %v2251 = vsel %vm1573, %v2249, %v2250
        %v2252 = vrot.slane %v2128, 5
        %v2253 = vrot.slane %v2252, 4
        %v2254 = vrot.slane %v1707, 5
        %v2255 = vsel %vm1573, %v2253, %v2254
        %v2256 = vrot.slane %v2254, 4
        %v2257 = vrot.slane %v1728, 5
        %v2258 = vsel %vm1573, %v2256, %v2257
        %v2259 = vrot.slane %v2129, 5
        %v2260 = vrot.slane %v2259, 4
        %v2261 = vrot.slane %v1709, 5
        %v2262 = vsel %vm1573, %v2260, %v2261
        %v2263 = vrot.slane %v2261, 4
        %v2264 = vrot.slane %v1729, 5
        %v2265 = vsel %vm1573, %v2263, %v2264
        %v2266 = vrot.slane %v2130, 5
        %v2267 = vrot.slane %v2266, 4
        %v2268 = vrot.slane %v1711, 5
        %v2269 = vsel %vm1573, %v2267, %v2268
        %v2270 = vrot.slane %v2268, 4
        %v2271 = vrot.slane %v1730, 5
        %v2272 = vsel %vm1573, %v2270, %v2271
        %v2273 = vrot.slane %v2131, 5
        %v2274 = vrot.slane %v2273, 4
        %v2275 = vrot.slane %v1713, 5
        %v2276 = vsel %vm1573, %v2274, %v2275
        %v2277 = vrot.slane %v2275, 4
        %v2278 = vrot.slane %v1731, 5
        %v2279 = vsel %vm1573, %v2277, %v2278
        %v2280 = vrot.slane %v2132, 5
        %v2281 = vrot.slane %v2280, 4
        %v2282 = vrot.slane %v1715, 5
        %v2283 = vsel %vm1573, %v2281, %v2282
        %v2284 = vrot.slane %v2282, 4
        %v2285 = vrot.slane %v1732, 5
        %v2286 = vsel %vm1573, %v2284, %v2285
        %v2287 = vrot.slane %v2133, 5
        %v2288 = vrot.slane %v2287, 4
        %v2289 = vrot.slane %v1717, 5
        %v2290 = vsel %vm1573, %v2288, %v2289
        %v2291 = vrot.slane %v2289, 4
        %v2292 = vrot.slane %v1733, 5
        %v2293 = vsel %vm1573, %v2291, %v2292
        %s2294 = scalar_lea.vmem [#allocation2], 24
        %v2295 = vld [vmem:[%s2294] sm:$0xf]
        %v2296 = vld [vmem:[%s2294 + $0x4] sm:$0xf]
        %v2297 = vld [vmem:[%s2294 + $0xc] sm:$0xf]
        %v2298 = vld [vmem:[%s2294 + $0x10] sm:$0xf]
        %v2299 = vld [vmem:[%s2294 + $0x18] sm:$0xf]
        %v2300 = vld [vmem:[%s2294 + $0x1c] sm:$0xf]
        %v2301 = vld [vmem:[%s2294 + $0x24] sm:$0xf]
        %v2302 = vld [vmem:[%s2294 + $0x28] sm:$0xf]
        %v2303 = vld [vmem:[%s2294 + $0x30] sm:$0xf]
        %v2304 = vld [vmem:[%s2294 + $0x34] sm:$0xf]
        %v2305 = vld [vmem:[%s2294 + $0x3c] sm:$0xf]
        %v2306 = vld [vmem:[%s2294 + $0x40] sm:$0xf]
        %v2307 = vld [vmem:[%s2294 + $0x48] sm:$0xf]
        %v2308 = vld [vmem:[%s2294 + $0x4c] sm:$0xf]
        %v2309 = vld [vmem:[%s2294 + $0x54] sm:$0xf]
        %v2310 = vld [vmem:[%s2294 + $0x58] sm:$0xf]
        %v2311 = vld [vmem:[%s2294 + $0x60] sm:$0xf]
        %v2312 = vld [vmem:[%s2294 + $0x64] sm:$0xf]
        %v2313 = vld [vmem:[%s2294 + $0x6c] sm:$0xf]
        %v2314 = vld [vmem:[%s2294 + $0x70] sm:$0xf]
        %v2315 = vld [vmem:[%s2294 + $0x78] sm:$0xf]
        %v2316 = vld [vmem:[%s2294 + $0x7c] sm:$0xf]
        %v2317 = vld [vmem:[%s2294 + $0x84] sm:$0xf]
        %v2318 = vld [vmem:[%s2294 + $0x88] sm:$0xf]
        %v2319 = vld [vmem:[%s2294 + $0x90] sm:$0xf]
        %v2320 = vld [vmem:[%s2294 + $0x94] sm:$0xf]
        %v2321 = vld [vmem:[%s2294 + $0x9c] sm:$0xf]
        %v2322 = vld [vmem:[%s2294 + $0xa0] sm:$0xf]
        %v2323 = vld [vmem:[%s2294 + $0xa8] sm:$0xf]
        %v2324 = vld [vmem:[%s2294 + $0xac] sm:$0xf]
        %v2325 = vld [vmem:[%s2294 + $0xb4] sm:$0xf]
        %v2326 = vld [vmem:[%s2294 + $0xb8] sm:$0xf]
        %v2327 = vld [vmem:[%s2294 + $0x8] sm:$0x1]
        %v2328 = vld [vmem:[%s2294 + $0x14] sm:$0x1]
        %v2329 = vld [vmem:[%s2294 + $0x20] sm:$0x1]
        %v2330 = vld [vmem:[%s2294 + $0x2c] sm:$0x1]
        %v2331 = vld [vmem:[%s2294 + $0x38] sm:$0x1]
        %v2332 = vld [vmem:[%s2294 + $0x44] sm:$0x1]
        %v2333 = vld [vmem:[%s2294 + $0x50] sm:$0x1]
        %v2334 = vld [vmem:[%s2294 + $0x5c] sm:$0x1]
        %v2335 = vld [vmem:[%s2294 + $0x68] sm:$0x1]
        %v2336 = vld [vmem:[%s2294 + $0x74] sm:$0x1]
        %v2337 = vld [vmem:[%s2294 + $0x80] sm:$0x1]
        %v2338 = vld [vmem:[%s2294 + $0x8c] sm:$0x1]
        %v2339 = vld [vmem:[%s2294 + $0x98] sm:$0x1]
        %v2340 = vld [vmem:[%s2294 + $0xa4] sm:$0x1]
        %v2341 = vld [vmem:[%s2294 + $0xb0] sm:$0x1]
        %v2342 = vld [vmem:[%s2294 + $0xbc] sm:$0x1]
        %v2344 = vshrl.u32 %v2295, 16
        %v2346 = vrot.slane %v2344, 4
        %v2347 = vshll.u32 %v2295, 16
        %v2349 = vrot.slane %v2347, 5
        %v2350 = vor.u32 %v2346, %v2349
        %v2351 = vrot.slane %v2350, 4
        %v2353 = vshll.u32 %v2296, 16
        %v2355 = vrot.slane %v2353, 5
        %v2356 = vsel %vm1122, %v2351, %v2355
        %v2357 = vshrl.u32 %v2296, 16
        %v2359 = vrot.slane %v2357, 4
        %v2360 = vor.u32 %v2359, %v2355
        %v2361 = vrot.slane %v2360, 4
        %v2363 = vshll.u32 %v2327, 16
        %v2365 = vrot.slane %v2363, 5
        %v2366 = vsel %vm1122, %v2361, %v2365
        %v2368 = vshrl.u32 %v2297, 16
        %v2370 = vrot.slane %v2368, 4
        %v2371 = vshll.u32 %v2297, 16
        %v2373 = vrot.slane %v2371, 5
        %v2374 = vor.u32 %v2370, %v2373
        %v2375 = vrot.slane %v2374, 4
        %v2377 = vshll.u32 %v2298, 16
        %v2379 = vrot.slane %v2377, 5
        %v2380 = vsel %vm1122, %v2375, %v2379
        %v2381 = vshrl.u32 %v2298, 16
        %v2383 = vrot.slane %v2381, 4
        %v2384 = vor.u32 %v2383, %v2379
        %v2385 = vrot.slane %v2384, 4
        %v2387 = vshll.u32 %v2328, 16
        %v2389 = vrot.slane %v2387, 5
        %v2390 = vsel %vm1122, %v2385, %v2389
        %v2392 = vshrl.u32 %v2299, 16
        %v2394 = vrot.slane %v2392, 4
        %v2395 = vshll.u32 %v2299, 16
        %v2397 = vrot.slane %v2395, 5
        %v2398 = vor.u32 %v2394, %v2397
        %v2399 = vrot.slane %v2398, 4
        %v2401 = vshll.u32 %v2300, 16
        %v2403 = vrot.slane %v2401, 5
        %v2404 = vsel %vm1122, %v2399, %v2403
        %v2405 = vshrl.u32 %v2300, 16
        %v2407 = vrot.slane %v2405, 4
        %v2408 = vor.u32 %v2407, %v2403
        %v2409 = vrot.slane %v2408, 4
        %v2411 = vshll.u32 %v2329, 16
        %v2413 = vrot.slane %v2411, 5
        %v2414 = vsel %vm1122, %v2409, %v2413
        %v2416 = vshrl.u32 %v2301, 16
        %v2418 = vrot.slane %v2416, 4
        %v2419 = vshll.u32 %v2301, 16
        %v2421 = vrot.slane %v2419, 5
        %v2422 = vor.u32 %v2418, %v2421
        %v2423 = vrot.slane %v2422, 4
        %v2425 = vshll.u32 %v2302, 16
        %v2427 = vrot.slane %v2425, 5
        %v2428 = vsel %vm1122, %v2423, %v2427
        %v2429 = vshrl.u32 %v2302, 16
        %v2431 = vrot.slane %v2429, 4
        %v2432 = vor.u32 %v2431, %v2427
        %v2433 = vrot.slane %v2432, 4
        %v2435 = vshll.u32 %v2330, 16
        %v2437 = vrot.slane %v2435, 5
        %v2438 = vsel %vm1122, %v2433, %v2437
        %v2440 = vshrl.u32 %v2303, 16
        %v2442 = vrot.slane %v2440, 4
        %v2443 = vshll.u32 %v2303, 16
        %v2445 = vrot.slane %v2443, 5
        %v2446 = vor.u32 %v2442, %v2445
        %v2447 = vrot.slane %v2446, 4
        %v2449 = vshll.u32 %v2304, 16
        %v2451 = vrot.slane %v2449, 5
        %v2452 = vsel %vm1122, %v2447, %v2451
        %v2453 = vshrl.u32 %v2304, 16
        %v2455 = vrot.slane %v2453, 4
        %v2456 = vor.u32 %v2455, %v2451
        %v2457 = vrot.slane %v2456, 4
        %v2459 = vshll.u32 %v2331, 16
        %v2461 = vrot.slane %v2459, 5
        %v2462 = vsel %vm1122, %v2457, %v2461
        %v2464 = vshrl.u32 %v2305, 16
        %v2466 = vrot.slane %v2464, 4
        %v2467 = vshll.u32 %v2305, 16
        %v2469 = vrot.slane %v2467, 5
        %v2470 = vor.u32 %v2466, %v2469
        %v2471 = vrot.slane %v2470, 4
        %v2473 = vshll.u32 %v2306, 16
        %v2475 = vrot.slane %v2473, 5
        %v2476 = vsel %vm1122, %v2471, %v2475
        %v2477 = vshrl.u32 %v2306, 16
        %v2479 = vrot.slane %v2477, 4
        %v2480 = vor.u32 %v2479, %v2475
        %v2481 = vrot.slane %v2480, 4
        %v2483 = vshll.u32 %v2332, 16
        %v2485 = vrot.slane %v2483, 5
        %v2486 = vsel %vm1122, %v2481, %v2485
        %v2488 = vshrl.u32 %v2307, 16
        %v2490 = vrot.slane %v2488, 4
        %v2491 = vshll.u32 %v2307, 16
        %v2493 = vrot.slane %v2491, 5
        %v2494 = vor.u32 %v2490, %v2493
        %v2495 = vrot.slane %v2494, 4
        %v2497 = vshll.u32 %v2308, 16
        %v2499 = vrot.slane %v2497, 5
        %v2500 = vsel %vm1122, %v2495, %v2499
        %v2501 = vshrl.u32 %v2308, 16
        %v2503 = vrot.slane %v2501, 4
        %v2504 = vor.u32 %v2503, %v2499
        %v2505 = vrot.slane %v2504, 4
        %v2507 = vshll.u32 %v2333, 16
        %v2509 = vrot.slane %v2507, 5
        %v2510 = vsel %vm1122, %v2505, %v2509
        %v2512 = vshrl.u32 %v2309, 16
        %v2514 = vrot.slane %v2512, 4
        %v2515 = vshll.u32 %v2309, 16
        %v2517 = vrot.slane %v2515, 5
        %v2518 = vor.u32 %v2514, %v2517
        %v2519 = vrot.slane %v2518, 4
        %v2521 = vshll.u32 %v2310, 16
        %v2523 = vrot.slane %v2521, 5
        %v2524 = vsel %vm1122, %v2519, %v2523
        %v2525 = vshrl.u32 %v2310, 16
        %v2527 = vrot.slane %v2525, 4
        %v2528 = vor.u32 %v2527, %v2523
        %v2529 = vrot.slane %v2528, 4
        %v2531 = vshll.u32 %v2334, 16
        %v2533 = vrot.slane %v2531, 5
        %v2534 = vsel %vm1122, %v2529, %v2533
        %v2536 = vshrl.u32 %v2311, 16
        %v2538 = vrot.slane %v2536, 4
        %v2539 = vshll.u32 %v2311, 16
        %v2541 = vrot.slane %v2539, 5
        %v2542 = vor.u32 %v2538, %v2541
        %v2543 = vrot.slane %v2542, 4
        %v2545 = vshll.u32 %v2312, 16
        %v2547 = vrot.slane %v2545, 5
        %v2548 = vsel %vm1122, %v2543, %v2547
        %v2549 = vshrl.u32 %v2312, 16
        %v2551 = vrot.slane %v2549, 4
        %v2552 = vor.u32 %v2551, %v2547
        %v2553 = vrot.slane %v2552, 4
        %v2555 = vshll.u32 %v2335, 16
        %v2557 = vrot.slane %v2555, 5
        %v2558 = vsel %vm1122, %v2553, %v2557
        %v2560 = vshrl.u32 %v2313, 16
        %v2562 = vrot.slane %v2560, 4
        %v2563 = vshll.u32 %v2313, 16
        %v2565 = vrot.slane %v2563, 5
        %v2566 = vor.u32 %v2562, %v2565
        %v2567 = vrot.slane %v2566, 4
        %v2569 = vshll.u32 %v2314, 16
        %v2571 = vrot.slane %v2569, 5
        %v2572 = vsel %vm1122, %v2567, %v2571
        %v2573 = vshrl.u32 %v2314, 16
        %v2575 = vrot.slane %v2573, 4
        %v2576 = vor.u32 %v2575, %v2571
        %v2577 = vrot.slane %v2576, 4
        %v2579 = vshll.u32 %v2336, 16
        %v2581 = vrot.slane %v2579, 5
        %v2582 = vsel %vm1122, %v2577, %v2581
        %v2584 = vshrl.u32 %v2315, 16
        %v2586 = vrot.slane %v2584, 4
        %v2587 = vshll.u32 %v2315, 16
        %v2589 = vrot.slane %v2587, 5
        %v2590 = vor.u32 %v2586, %v2589
        %v2591 = vrot.slane %v2590, 4
        %v2593 = vshll.u32 %v2316, 16
        %v2595 = vrot.slane %v2593, 5
        %v2596 = vsel %vm1122, %v2591, %v2595
        %v2597 = vshrl.u32 %v2316, 16
        %v2599 = vrot.slane %v2597, 4
        %v2600 = vor.u32 %v2599, %v2595
        %v2601 = vrot.slane %v2600, 4
        %v2603 = vshll.u32 %v2337, 16
        %v2605 = vrot.slane %v2603, 5
        %v2606 = vsel %vm1122, %v2601, %v2605
        %v2608 = vshrl.u32 %v2317, 16
        %v2610 = vrot.slane %v2608, 4
        %v2611 = vshll.u32 %v2317, 16
        %v2613 = vrot.slane %v2611, 5
        %v2614 = vor.u32 %v2610, %v2613
        %v2615 = vrot.slane %v2614, 4
        %v2617 = vshll.u32 %v2318, 16
        %v2619 = vrot.slane %v2617, 5
        %v2620 = vsel %vm1122, %v2615, %v2619
        %v2621 = vshrl.u32 %v2318, 16
        %v2623 = vrot.slane %v2621, 4
        %v2624 = vor.u32 %v2623, %v2619
        %v2625 = vrot.slane %v2624, 4
        %v2627 = vshll.u32 %v2338, 16
        %v2629 = vrot.slane %v2627, 5
        %v2630 = vsel %vm1122, %v2625, %v2629
        %v2632 = vshrl.u32 %v2319, 16
        %v2634 = vrot.slane %v2632, 4
        %v2635 = vshll.u32 %v2319, 16
        %v2637 = vrot.slane %v2635, 5
        %v2638 = vor.u32 %v2634, %v2637
        %v2639 = vrot.slane %v2638, 4
        %v2641 = vshll.u32 %v2320, 16
        %v2643 = vrot.slane %v2641, 5
        %v2644 = vsel %vm1122, %v2639, %v2643
        %v2645 = vshrl.u32 %v2320, 16
        %v2647 = vrot.slane %v2645, 4
        %v2648 = vor.u32 %v2647, %v2643
        %v2649 = vrot.slane %v2648, 4
        %v2651 = vshll.u32 %v2339, 16
        %v2653 = vrot.slane %v2651, 5
        %v2654 = vsel %vm1122, %v2649, %v2653
        %v2656 = vshrl.u32 %v2321, 16
        %v2658 = vrot.slane %v2656, 4
        %v2659 = vshll.u32 %v2321, 16
        %v2661 = vrot.slane %v2659, 5
        %v2662 = vor.u32 %v2658, %v2661
        %v2663 = vrot.slane %v2662, 4
        %v2665 = vshll.u32 %v2322, 16
        %v2667 = vrot.slane %v2665, 5
        %v2668 = vsel %vm1122, %v2663, %v2667
        %v2669 = vshrl.u32 %v2322, 16
        %v2671 = vrot.slane %v2669, 4
        %v2672 = vor.u32 %v2671, %v2667
        %v2673 = vrot.slane %v2672, 4
        %v2675 = vshll.u32 %v2340, 16
        %v2677 = vrot.slane %v2675, 5
        %v2678 = vsel %vm1122, %v2673, %v2677
        %v2680 = vshrl.u32 %v2323, 16
        %v2682 = vrot.slane %v2680, 4
        %v2683 = vshll.u32 %v2323, 16
        %v2685 = vrot.slane %v2683, 5
        %v2686 = vor.u32 %v2682, %v2685
        %v2687 = vrot.slane %v2686, 4
        %v2689 = vshll.u32 %v2324, 16
        %v2691 = vrot.slane %v2689, 5
        %v2692 = vsel %vm1122, %v2687, %v2691
        %v2693 = vshrl.u32 %v2324, 16
        %v2695 = vrot.slane %v2693, 4
        %v2696 = vor.u32 %v2695, %v2691
        %v2697 = vrot.slane %v2696, 4
        %v2699 = vshll.u32 %v2341, 16
        %v2701 = vrot.slane %v2699, 5
        %v2702 = vsel %vm1122, %v2697, %v2701
        %v2704 = vshrl.u32 %v2325, 16
        %v2706 = vrot.slane %v2704, 4
        %v2707 = vshll.u32 %v2325, 16
        %v2709 = vrot.slane %v2707, 5
        %v2710 = vor.u32 %v2706, %v2709
        %v2711 = vrot.slane %v2710, 4
        %v2713 = vshll.u32 %v2326, 16
        %v2715 = vrot.slane %v2713, 5
        %v2716 = vsel %vm1122, %v2711, %v2715
        %v2717 = vshrl.u32 %v2326, 16
        %v2719 = vrot.slane %v2717, 4
        %v2720 = vor.u32 %v2719, %v2715
        %v2721 = vrot.slane %v2720, 4
        %v2723 = vshll.u32 %v2342, 16
        %v2725 = vrot.slane %v2723, 5
        %v2726 = vsel %vm1122, %v2721, %v2725
        %v2727 = vld [vmem:[%s2294] sm:$0xe]
        %v2728 = vld [vmem:[%s2294 + $0xc] sm:$0xe]
        %v2729 = vld [vmem:[%s2294 + $0x18] sm:$0xe]
        %v2730 = vld [vmem:[%s2294 + $0x24] sm:$0xe]
        %v2731 = vld [vmem:[%s2294 + $0x30] sm:$0xe]
        %v2732 = vld [vmem:[%s2294 + $0x3c] sm:$0xe]
        %v2733 = vld [vmem:[%s2294 + $0x48] sm:$0xe]
        %v2734 = vld [vmem:[%s2294 + $0x54] sm:$0xe]
        %v2735 = vld [vmem:[%s2294 + $0x60] sm:$0xe]
        %v2736 = vld [vmem:[%s2294 + $0x6c] sm:$0xe]
        %v2737 = vld [vmem:[%s2294 + $0x78] sm:$0xe]
        %v2738 = vld [vmem:[%s2294 + $0x84] sm:$0xe]
        %v2739 = vld [vmem:[%s2294 + $0x90] sm:$0xe]
        %v2740 = vld [vmem:[%s2294 + $0x9c] sm:$0xe]
        %v2741 = vld [vmem:[%s2294 + $0xa8] sm:$0xe]
        %v2742 = vld [vmem:[%s2294 + $0xb4] sm:$0xe]
        %v2791 = vrot.slane %v2727, 5
        %v2792 = vrot.slane %v2791, 4
        %v2793 = vrot.slane %v2296, 5
        %v2794 = vsel %vm1573, %v2792, %v2793
        %v2795 = vrot.slane %v2793, 4
        %v2796 = vrot.slane %v2327, 5
        %v2797 = vsel %vm1573, %v2795, %v2796
        %v2798 = vrot.slane %v2728, 5
        %v2799 = vrot.slane %v2798, 4
        %v2800 = vrot.slane %v2298, 5
        %v2801 = vsel %vm1573, %v2799, %v2800
        %v2802 = vrot.slane %v2800, 4
        %v2803 = vrot.slane %v2328, 5
        %v2804 = vsel %vm1573, %v2802, %v2803
        %v2805 = vrot.slane %v2729, 5
        %v2806 = vrot.slane %v2805, 4
        %v2807 = vrot.slane %v2300, 5
        %v2808 = vsel %vm1573, %v2806, %v2807
        %v2809 = vrot.slane %v2807, 4
        %v2810 = vrot.slane %v2329, 5
        %v2811 = vsel %vm1573, %v2809, %v2810
        %v2812 = vrot.slane %v2730, 5
        %v2813 = vrot.slane %v2812, 4
        %v2814 = vrot.slane %v2302, 5
        %v2815 = vsel %vm1573, %v2813, %v2814
        %v2816 = vrot.slane %v2814, 4
        %v2817 = vrot.slane %v2330, 5
        %v2818 = vsel %vm1573, %v2816, %v2817
        %v2819 = vrot.slane %v2731, 5
        %v2820 = vrot.slane %v2819, 4
        %v2821 = vrot.slane %v2304, 5
        %v2822 = vsel %vm1573, %v2820, %v2821
        %v2823 = vrot.slane %v2821, 4
        %v2824 = vrot.slane %v2331, 5
        %v2825 = vsel %vm1573, %v2823, %v2824
        %v2826 = vrot.slane %v2732, 5
        %v2827 = vrot.slane %v2826, 4
        %v2828 = vrot.slane %v2306, 5
        %v2829 = vsel %vm1573, %v2827, %v2828
        %v2830 = vrot.slane %v2828, 4
        %v2831 = vrot.slane %v2332, 5
        %v2832 = vsel %vm1573, %v2830, %v2831
        %v2833 = vrot.slane %v2733, 5
        %v2834 = vrot.slane %v2833, 4
        %v2835 = vrot.slane %v2308, 5
        %v2836 = vsel %vm1573, %v2834, %v2835
        %v2837 = vrot.slane %v2835, 4
        %v2838 = vrot.slane %v2333, 5
        %v2839 = vsel %vm1573, %v2837, %v2838
        %v2840 = vrot.slane %v2734, 5
        %v2841 = vrot.slane %v2840, 4
        %v2842 = vrot.slane %v2310, 5
        %v2843 = vsel %vm1573, %v2841, %v2842
        %v2844 = vrot.slane %v2842, 4
        %v2845 = vrot.slane %v2334, 5
        %v2846 = vsel %vm1573, %v2844, %v2845
        %v2847 = vrot.slane %v2735, 5
        %v2848 = vrot.slane %v2847, 4
        %v2849 = vrot.slane %v2312, 5
        %v2850 = vsel %vm1573, %v2848, %v2849
        %v2851 = vrot.slane %v2849, 4
        %v2852 = vrot.slane %v2335, 5
        %v2853 = vsel %vm1573, %v2851, %v2852
        %v2854 = vrot.slane %v2736, 5
        %v2855 = vrot.slane %v2854, 4
        %v2856 = vrot.slane %v2314, 5
        %v2857 = vsel %vm1573, %v2855, %v2856
        %v2858 = vrot.slane %v2856, 4
        %v2859 = vrot.slane %v2336, 5
        %v2860 = vsel %vm1573, %v2858, %v2859
        %v2861 = vrot.slane %v2737, 5
        %v2862 = vrot.slane %v2861, 4
        %v2863 = vrot.slane %v2316, 5
        %v2864 = vsel %vm1573, %v2862, %v2863
        %v2865 = vrot.slane %v2863, 4
        %v2866 = vrot.slane %v2337, 5
        %v2867 = vsel %vm1573, %v2865, %v2866
        %v2868 = vrot.slane %v2738, 5
        %v2869 = vrot.slane %v2868, 4
        %v2870 = vrot.slane %v2318, 5
        %v2871 = vsel %vm1573, %v2869, %v2870
        %v2872 = vrot.slane %v2870, 4
        %v2873 = vrot.slane %v2338, 5
        %v2874 = vsel %vm1573, %v2872, %v2873
        %v2875 = vrot.slane %v2739, 5
        %v2876 = vrot.slane %v2875, 4
        %v2877 = vrot.slane %v2320, 5
        %v2878 = vsel %vm1573, %v2876, %v2877
        %v2879 = vrot.slane %v2877, 4
        %v2880 = vrot.slane %v2339, 5
        %v2881 = vsel %vm1573, %v2879, %v2880
        %v2882 = vrot.slane %v2740, 5
        %v2883 = vrot.slane %v2882, 4
        %v2884 = vrot.slane %v2322, 5
        %v2885 = vsel %vm1573, %v2883, %v2884
        %v2886 = vrot.slane %v2884, 4
        %v2887 = vrot.slane %v2340, 5
        %v2888 = vsel %vm1573, %v2886, %v2887
        %v2889 = vrot.slane %v2741, 5
        %v2890 = vrot.slane %v2889, 4
        %v2891 = vrot.slane %v2324, 5
        %v2892 = vsel %vm1573, %v2890, %v2891
        %v2893 = vrot.slane %v2891, 4
        %v2894 = vrot.slane %v2341, 5
        %v2895 = vsel %vm1573, %v2893, %v2894
        %v2896 = vrot.slane %v2742, 5
        %v2897 = vrot.slane %v2896, 4
        %v2898 = vrot.slane %v2326, 5
        %v2899 = vsel %vm1573, %v2897, %v2898
        %v2900 = vrot.slane %v2898, 4
        %v2901 = vrot.slane %v2342, 5
        %v2902 = vsel %vm1573, %v2900, %v2901
        %v2919 = vunpack.c.l.b16 %v1072
        %v2920 = vunpack.c.l.b16 %v1073
        %v2921 = vunpack.c.l.b16 %v1074
        %v2922 = vunpack.c.l.b16 %v1075
        %v2923 = vunpack.c.l.b16 %v1076
        %v2924 = vunpack.c.l.b16 %v1077
        %v2925 = vunpack.c.l.b16 %v1078
        %v2926 = vunpack.c.l.b16 %v1079
        %v2927 = vunpack.c.l.b16 %v1080
        %v2928 = vunpack.c.l.b16 %v1081
        %v2929 = vunpack.c.l.b16 %v1082
        %v2930 = vunpack.c.l.b16 %v1083
        %v2931 = vunpack.c.l.b16 %v1084
        %v2932 = vunpack.c.l.b16 %v1085
        %v2933 = vunpack.c.l.b16 %v1086
        %v2934 = vunpack.c.l.b16 %v1087
        %v2935 = vunpack.c.l.b16 %v1088
        %v2936 = vunpack.c.l.b16 %v1089
        %v2937 = vunpack.c.l.b16 %v1090
        %v2938 = vunpack.c.l.b16 %v1091
        %v2939 = vunpack.c.l.b16 %v1092
        %v2940 = vunpack.c.l.b16 %v1093
        %v2941 = vunpack.c.l.b16 %v1094
        %v2942 = vunpack.c.l.b16 %v1095
        %v2943 = vunpack.c.l.b16 %v1096
        %v2944 = vunpack.c.l.b16 %v1097
        %v2945 = vunpack.c.l.b16 %v1098
        %v2946 = vunpack.c.l.b16 %v1099
        %v2947 = vunpack.c.l.b16 %v1100
        %v2948 = vunpack.c.l.b16 %v1101
        %v2949 = vunpack.c.l.b16 %v1102
        %v2950 = vunpack.c.l.b16 %v1103
        %v2951 = vpack.c.b16 %v2920, %v2919
        %v2952 = vpack.c.b16 %v2922, %v2921
        %v2953 = vpack.c.b16 %v2924, %v2923
        %v2954 = vpack.c.b16 %v2926, %v2925
        %v2955 = vpack.c.b16 %v2928, %v2927
        %v2956 = vpack.c.b16 %v2930, %v2929
        %v2957 = vpack.c.b16 %v2932, %v2931
        %v2958 = vpack.c.b16 %v2934, %v2933
        %v2959 = vpack.c.b16 %v2936, %v2935
        %v2960 = vpack.c.b16 %v2938, %v2937
        %v2961 = vpack.c.b16 %v2940, %v2939
        %v2962 = vpack.c.b16 %v2942, %v2941
        %v2963 = vpack.c.b16 %v2944, %v2943
        %v2964 = vpack.c.b16 %v2946, %v2945
        %v2965 = vpack.c.b16 %v2948, %v2947
        %v2966 = vpack.c.b16 %v2950, %v2949
        %v2983 = vunpack.c.l.b16 %v1136
        %v2984 = vunpack.c.l.b16 %v1146
        %v2985 = vunpack.c.l.b16 %v1160
        %v2986 = vunpack.c.l.b16 %v1170
        %v2987 = vunpack.c.l.b16 %v1184
        %v2988 = vunpack.c.l.b16 %v1194
        %v2989 = vunpack.c.l.b16 %v1208
        %v2990 = vunpack.c.l.b16 %v1218
        %v2991 = vunpack.c.l.b16 %v1232
        %v2992 = vunpack.c.l.b16 %v1242
        %v2993 = vunpack.c.l.b16 %v1256
        %v2994 = vunpack.c.l.b16 %v1266
        %v2995 = vunpack.c.l.b16 %v1280
        %v2996 = vunpack.c.l.b16 %v1290
        %v2997 = vunpack.c.l.b16 %v1304
        %v2998 = vunpack.c.l.b16 %v1314
        %v2999 = vunpack.c.l.b16 %v1328
        %v3000 = vunpack.c.l.b16 %v1338
        %v3001 = vunpack.c.l.b16 %v1352
        %v3002 = vunpack.c.l.b16 %v1362
        %v3003 = vunpack.c.l.b16 %v1376
        %v3004 = vunpack.c.l.b16 %v1386
        %v3005 = vunpack.c.l.b16 %v1400
        %v3006 = vunpack.c.l.b16 %v1410
        %v3007 = vunpack.c.l.b16 %v1424
        %v3008 = vunpack.c.l.b16 %v1434
        %v3009 = vunpack.c.l.b16 %v1448
        %v3010 = vunpack.c.l.b16 %v1458
        %v3011 = vunpack.c.l.b16 %v1472
        %v3012 = vunpack.c.l.b16 %v1482
        %v3013 = vunpack.c.l.b16 %v1496
        %v3014 = vunpack.c.l.b16 %v1506
        %v3015 = vpack.c.b16 %v2984, %v2983
        %v3016 = vpack.c.b16 %v2986, %v2985
        %v3017 = vpack.c.b16 %v2988, %v2987
        %v3018 = vpack.c.b16 %v2990, %v2989
        %v3019 = vpack.c.b16 %v2992, %v2991
        %v3020 = vpack.c.b16 %v2994, %v2993
        %v3021 = vpack.c.b16 %v2996, %v2995
        %v3022 = vpack.c.b16 %v2998, %v2997
        %v3023 = vpack.c.b16 %v3000, %v2999
        %v3024 = vpack.c.b16 %v3002, %v3001
        %v3025 = vpack.c.b16 %v3004, %v3003
        %v3026 = vpack.c.b16 %v3006, %v3005
        %v3027 = vpack.c.b16 %v3008, %v3007
        %v3028 = vpack.c.b16 %v3010, %v3009
        %v3029 = vpack.c.b16 %v3012, %v3011
        %v3030 = vpack.c.b16 %v3014, %v3013
        %v3047 = vunpack.c.l.b16 %v1577
        %v3048 = vunpack.c.l.b16 %v1580
        %v3049 = vunpack.c.l.b16 %v1584
        %v3050 = vunpack.c.l.b16 %v1587
        %v3051 = vunpack.c.l.b16 %v1591
        %v3052 = vunpack.c.l.b16 %v1594
        %v3053 = vunpack.c.l.b16 %v1598
        %v3054 = vunpack.c.l.b16 %v1601
        %v3055 = vunpack.c.l.b16 %v1605
        %v3056 = vunpack.c.l.b16 %v1608
        %v3057 = vunpack.c.l.b16 %v1612
        %v3058 = vunpack.c.l.b16 %v1615
        %v3059 = vunpack.c.l.b16 %v1619
        %v3060 = vunpack.c.l.b16 %v1622
        %v3061 = vunpack.c.l.b16 %v1626
        %v3062 = vunpack.c.l.b16 %v1629
        %v3063 = vunpack.c.l.b16 %v1633
        %v3064 = vunpack.c.l.b16 %v1636
        %v3065 = vunpack.c.l.b16 %v1640
        %v3066 = vunpack.c.l.b16 %v1643
        %v3067 = vunpack.c.l.b16 %v1647
        %v3068 = vunpack.c.l.b16 %v1650
        %v3069 = vunpack.c.l.b16 %v1654
        %v3070 = vunpack.c.l.b16 %v1657
        %v3071 = vunpack.c.l.b16 %v1661
        %v3072 = vunpack.c.l.b16 %v1664
        %v3073 = vunpack.c.l.b16 %v1668
        %v3074 = vunpack.c.l.b16 %v1671
        %v3075 = vunpack.c.l.b16 %v1675
        %v3076 = vunpack.c.l.b16 %v1678
        %v3077 = vunpack.c.l.b16 %v1682
        %v3078 = vunpack.c.l.b16 %v1685
        %v3079 = vpack.c.b16 %v3048, %v3047
        %v3080 = vpack.c.b16 %v3050, %v3049
        %v3081 = vpack.c.b16 %v3052, %v3051
        %v3082 = vpack.c.b16 %v3054, %v3053
        %v3083 = vpack.c.b16 %v3056, %v3055
        %v3084 = vpack.c.b16 %v3058, %v3057
        %v3085 = vpack.c.b16 %v3060, %v3059
        %v3086 = vpack.c.b16 %v3062, %v3061
        %v3087 = vpack.c.b16 %v3064, %v3063
        %v3088 = vpack.c.b16 %v3066, %v3065
        %v3089 = vpack.c.b16 %v3068, %v3067
        %v3090 = vpack.c.b16 %v3070, %v3069
        %v3091 = vpack.c.b16 %v3072, %v3071
        %v3092 = vpack.c.b16 %v3074, %v3073
        %v3093 = vpack.c.b16 %v3076, %v3075
        %v3094 = vpack.c.b16 %v3078, %v3077
        %v3127 = vunpack.c.l.b16 %v1686
        %v3128 = vunpack.c.l.b16 %v1687
        %v3129 = vunpack.c.l.b16 %v1688
        %v3130 = vunpack.c.l.b16 %v1689
        %v3131 = vunpack.c.l.b16 %v1690
        %v3132 = vunpack.c.l.b16 %v1691
        %v3133 = vunpack.c.l.b16 %v1692
        %v3134 = vunpack.c.l.b16 %v1693
        %v3135 = vunpack.c.l.b16 %v1694
        %v3136 = vunpack.c.l.b16 %v1695
        %v3137 = vunpack.c.l.b16 %v1696
        %v3138 = vunpack.c.l.b16 %v1697
        %v3139 = vunpack.c.l.b16 %v1698
        %v3140 = vunpack.c.l.b16 %v1699
        %v3141 = vunpack.c.l.b16 %v1700
        %v3142 = vunpack.c.l.b16 %v1701
        %v3143 = vunpack.c.l.b16 %v1702
        %v3144 = vunpack.c.l.b16 %v1703
        %v3145 = vunpack.c.l.b16 %v1704
        %v3146 = vunpack.c.l.b16 %v1705
        %v3147 = vunpack.c.l.b16 %v1706
        %v3148 = vunpack.c.l.b16 %v1707
        %v3149 = vunpack.c.l.b16 %v1708
        %v3150 = vunpack.c.l.b16 %v1709
        %v3151 = vunpack.c.l.b16 %v1710
        %v3152 = vunpack.c.l.b16 %v1711
        %v3153 = vunpack.c.l.b16 %v1712
        %v3154 = vunpack.c.l.b16 %v1713
        %v3155 = vunpack.c.l.b16 %v1714
        %v3156 = vunpack.c.l.b16 %v1715
        %v3157 = vunpack.c.l.b16 %v1716
        %v3158 = vunpack.c.l.b16 %v1717
        %v3159 = vpack.c.b16 %v3128, %v3127
        %v3160 = vpack.c.b16 %v3130, %v3129
        %v3161 = vpack.c.b16 %v3132, %v3131
        %v3162 = vpack.c.b16 %v3134, %v3133
        %v3163 = vpack.c.b16 %v3136, %v3135
        %v3164 = vpack.c.b16 %v3138, %v3137
        %v3165 = vpack.c.b16 %v3140, %v3139
        %v3166 = vpack.c.b16 %v3142, %v3141
        %v3167 = vpack.c.b16 %v3144, %v3143
        %v3168 = vpack.c.b16 %v3146, %v3145
        %v3169 = vpack.c.b16 %v3148, %v3147
        %v3170 = vpack.c.b16 %v3150, %v3149
        %v3171 = vpack.c.b16 %v3152, %v3151
        %v3172 = vpack.c.b16 %v3154, %v3153
        %v3173 = vpack.c.b16 %v3156, %v3155
        %v3174 = vpack.c.b16 %v3158, %v3157
        %v3191 = vunpack.c.l.b16 %v1747
        %v3192 = vunpack.c.l.b16 %v1757
        %v3193 = vunpack.c.l.b16 %v1771
        %v3194 = vunpack.c.l.b16 %v1781
        %v3195 = vunpack.c.l.b16 %v1795
        %v3196 = vunpack.c.l.b16 %v1805
        %v3197 = vunpack.c.l.b16 %v1819
        %v3198 = vunpack.c.l.b16 %v1829
        %v3199 = vunpack.c.l.b16 %v1843
        %v3200 = vunpack.c.l.b16 %v1853
        %v3201 = vunpack.c.l.b16 %v1867
        %v3202 = vunpack.c.l.b16 %v1877
        %v3203 = vunpack.c.l.b16 %v1891
        %v3204 = vunpack.c.l.b16 %v1901
        %v3205 = vunpack.c.l.b16 %v1915
        %v3206 = vunpack.c.l.b16 %v1925
        %v3207 = vunpack.c.l.b16 %v1939
        %v3208 = vunpack.c.l.b16 %v1949
        %v3209 = vunpack.c.l.b16 %v1963
        %v3210 = vunpack.c.l.b16 %v1973
        %v3211 = vunpack.c.l.b16 %v1987
        %v3212 = vunpack.c.l.b16 %v1997
        %v3213 = vunpack.c.l.b16 %v2011
        %v3214 = vunpack.c.l.b16 %v2021
        %v3215 = vunpack.c.l.b16 %v2035
        %v3216 = vunpack.c.l.b16 %v2045
        %v3217 = vunpack.c.l.b16 %v2059
        %v3218 = vunpack.c.l.b16 %v2069
        %v3219 = vunpack.c.l.b16 %v2083
        %v3220 = vunpack.c.l.b16 %v2093
        %v3221 = vunpack.c.l.b16 %v2107
        %v3222 = vunpack.c.l.b16 %v2117
        %v3223 = vpack.c.b16 %v3192, %v3191
        %v3224 = vpack.c.b16 %v3194, %v3193
        %v3225 = vpack.c.b16 %v3196, %v3195
        %v3226 = vpack.c.b16 %v3198, %v3197
        %v3227 = vpack.c.b16 %v3200, %v3199
        %v3228 = vpack.c.b16 %v3202, %v3201
        %v3229 = vpack.c.b16 %v3204, %v3203
        %v3230 = vpack.c.b16 %v3206, %v3205
        %v3231 = vpack.c.b16 %v3208, %v3207
        %v3232 = vpack.c.b16 %v3210, %v3209
        %v3233 = vpack.c.b16 %v3212, %v3211
        %v3234 = vpack.c.b16 %v3214, %v3213
        %v3235 = vpack.c.b16 %v3216, %v3215
        %v3236 = vpack.c.b16 %v3218, %v3217
        %v3237 = vpack.c.b16 %v3220, %v3219
        %v3238 = vpack.c.b16 %v3222, %v3221
        %v3255 = vunpack.c.l.b16 %v2185
        %v3256 = vunpack.c.l.b16 %v2188
        %v3257 = vunpack.c.l.b16 %v2192
        %v3258 = vunpack.c.l.b16 %v2195
        %v3259 = vunpack.c.l.b16 %v2199
        %v3260 = vunpack.c.l.b16 %v2202
        %v3261 = vunpack.c.l.b16 %v2206
        %v3262 = vunpack.c.l.b16 %v2209
        %v3263 = vunpack.c.l.b16 %v2213
        %v3264 = vunpack.c.l.b16 %v2216
        %v3265 = vunpack.c.l.b16 %v2220
        %v3266 = vunpack.c.l.b16 %v2223
        %v3267 = vunpack.c.l.b16 %v2227
        %v3268 = vunpack.c.l.b16 %v2230
        %v3269 = vunpack.c.l.b16 %v2234
        %v3270 = vunpack.c.l.b16 %v2237
        %v3271 = vunpack.c.l.b16 %v2241
        %v3272 = vunpack.c.l.b16 %v2244
        %v3273 = vunpack.c.l.b16 %v2248
        %v3274 = vunpack.c.l.b16 %v2251
        %v3275 = vunpack.c.l.b16 %v2255
        %v3276 = vunpack.c.l.b16 %v2258
        %v3277 = vunpack.c.l.b16 %v2262
        %v3278 = vunpack.c.l.b16 %v2265
        %v3279 = vunpack.c.l.b16 %v2269
        %v3280 = vunpack.c.l.b16 %v2272
        %v3281 = vunpack.c.l.b16 %v2276
        %v3282 = vunpack.c.l.b16 %v2279
        %v3283 = vunpack.c.l.b16 %v2283
        %v3284 = vunpack.c.l.b16 %v2286
        %v3285 = vunpack.c.l.b16 %v2290
        %v3286 = vunpack.c.l.b16 %v2293
        %v3287 = vpack.c.b16 %v3256, %v3255
        %v3288 = vpack.c.b16 %v3258, %v3257
        %v3289 = vpack.c.b16 %v3260, %v3259
        %v3290 = vpack.c.b16 %v3262, %v3261
        %v3291 = vpack.c.b16 %v3264, %v3263
        %v3292 = vpack.c.b16 %v3266, %v3265
        %v3293 = vpack.c.b16 %v3268, %v3267
        %v3294 = vpack.c.b16 %v3270, %v3269
        %v3295 = vpack.c.b16 %v3272, %v3271
        %v3296 = vpack.c.b16 %v3274, %v3273
        %v3297 = vpack.c.b16 %v3276, %v3275
        %v3298 = vpack.c.b16 %v3278, %v3277
        %v3299 = vpack.c.b16 %v3280, %v3279
        %v3300 = vpack.c.b16 %v3282, %v3281
        %v3301 = vpack.c.b16 %v3284, %v3283
        %v3302 = vpack.c.b16 %v3286, %v3285
        %v3335 = vunpack.c.l.b16 %v2295
        %v3336 = vunpack.c.l.b16 %v2296
        %v3337 = vunpack.c.l.b16 %v2297
        %v3338 = vunpack.c.l.b16 %v2298
        %v3339 = vunpack.c.l.b16 %v2299
        %v3340 = vunpack.c.l.b16 %v2300
        %v3341 = vunpack.c.l.b16 %v2301
        %v3342 = vunpack.c.l.b16 %v2302
        %v3343 = vunpack.c.l.b16 %v2303
        %v3344 = vunpack.c.l.b16 %v2304
        %v3345 = vunpack.c.l.b16 %v2305
        %v3346 = vunpack.c.l.b16 %v2306
        %v3347 = vunpack.c.l.b16 %v2307
        %v3348 = vunpack.c.l.b16 %v2308
        %v3349 = vunpack.c.l.b16 %v2309
        %v3350 = vunpack.c.l.b16 %v2310
        %v3351 = vunpack.c.l.b16 %v2311
        %v3352 = vunpack.c.l.b16 %v2312
        %v3353 = vunpack.c.l.b16 %v2313
        %v3354 = vunpack.c.l.b16 %v2314
        %v3355 = vunpack.c.l.b16 %v2315
        %v3356 = vunpack.c.l.b16 %v2316
        %v3357 = vunpack.c.l.b16 %v2317
        %v3358 = vunpack.c.l.b16 %v2318
        %v3359 = vunpack.c.l.b16 %v2319
        %v3360 = vunpack.c.l.b16 %v2320
        %v3361 = vunpack.c.l.b16 %v2321
        %v3362 = vunpack.c.l.b16 %v2322
        %v3363 = vunpack.c.l.b16 %v2323
        %v3364 = vunpack.c.l.b16 %v2324
        %v3365 = vunpack.c.l.b16 %v2325
        %v3366 = vunpack.c.l.b16 %v2326
        %v3367 = vpack.c.b16 %v3336, %v3335
        %v3368 = vpack.c.b16 %v3338, %v3337
        %v3369 = vpack.c.b16 %v3340, %v3339
        %v3370 = vpack.c.b16 %v3342, %v3341
        %v3371 = vpack.c.b16 %v3344, %v3343
        %v3372 = vpack.c.b16 %v3346, %v3345
        %v3373 = vpack.c.b16 %v3348, %v3347
        %v3374 = vpack.c.b16 %v3350, %v3349
        %v3375 = vpack.c.b16 %v3352, %v3351
        %v3376 = vpack.c.b16 %v3354, %v3353
        %v3377 = vpack.c.b16 %v3356, %v3355
        %v3378 = vpack.c.b16 %v3358, %v3357
        %v3379 = vpack.c.b16 %v3360, %v3359
        %v3380 = vpack.c.b16 %v3362, %v3361
        %v3381 = vpack.c.b16 %v3364, %v3363
        %v3382 = vpack.c.b16 %v3366, %v3365
        %v3399 = vunpack.c.l.b16 %v2356
        %v3400 = vunpack.c.l.b16 %v2366
        %v3401 = vunpack.c.l.b16 %v2380
        %v3402 = vunpack.c.l.b16 %v2390
        %v3403 = vunpack.c.l.b16 %v2404
        %v3404 = vunpack.c.l.b16 %v2414
        %v3405 = vunpack.c.l.b16 %v2428
        %v3406 = vunpack.c.l.b16 %v2438
        %v3407 = vunpack.c.l.b16 %v2452
        %v3408 = vunpack.c.l.b16 %v2462
        %v3409 = vunpack.c.l.b16 %v2476
        %v3410 = vunpack.c.l.b16 %v2486
        %v3411 = vunpack.c.l.b16 %v2500
        %v3412 = vunpack.c.l.b16 %v2510
        %v3413 = vunpack.c.l.b16 %v2524
        %v3414 = vunpack.c.l.b16 %v2534
        %v3415 = vunpack.c.l.b16 %v2548
        %v3416 = vunpack.c.l.b16 %v2558
        %v3417 = vunpack.c.l.b16 %v2572
        %v3418 = vunpack.c.l.b16 %v2582
        %v3419 = vunpack.c.l.b16 %v2596
        %v3420 = vunpack.c.l.b16 %v2606
        %v3421 = vunpack.c.l.b16 %v2620
        %v3422 = vunpack.c.l.b16 %v2630
        %v3423 = vunpack.c.l.b16 %v2644
        %v3424 = vunpack.c.l.b16 %v2654
        %v3425 = vunpack.c.l.b16 %v2668
        %v3426 = vunpack.c.l.b16 %v2678
        %v3427 = vunpack.c.l.b16 %v2692
        %v3428 = vunpack.c.l.b16 %v2702
        %v3429 = vunpack.c.l.b16 %v2716
        %v3430 = vunpack.c.l.b16 %v2726
        %v3431 = vpack.c.b16 %v3400, %v3399
        %v3432 = vpack.c.b16 %v3402, %v3401
        %v3433 = vpack.c.b16 %v3404, %v3403
        %v3434 = vpack.c.b16 %v3406, %v3405
        %v3435 = vpack.c.b16 %v3408, %v3407
        %v3436 = vpack.c.b16 %v3410, %v3409
        %v3437 = vpack.c.b16 %v3412, %v3411
        %v3438 = vpack.c.b16 %v3414, %v3413
        %v3439 = vpack.c.b16 %v3416, %v3415
        %v3440 = vpack.c.b16 %v3418, %v3417
        %v3441 = vpack.c.b16 %v3420, %v3419
        %v3442 = vpack.c.b16 %v3422, %v3421
        %v3443 = vpack.c.b16 %v3424, %v3423
        %v3444 = vpack.c.b16 %v3426, %v3425
        %v3445 = vpack.c.b16 %v3428, %v3427
        %v3446 = vpack.c.b16 %v3430, %v3429
        %v3463 = vunpack.c.l.b16 %v2794
        %v3464 = vunpack.c.l.b16 %v2797
        %v3465 = vunpack.c.l.b16 %v2801
        %v3466 = vunpack.c.l.b16 %v2804
        %v3467 = vunpack.c.l.b16 %v2808
        %v3468 = vunpack.c.l.b16 %v2811
        %v3469 = vunpack.c.l.b16 %v2815
        %v3470 = vunpack.c.l.b16 %v2818
        %v3471 = vunpack.c.l.b16 %v2822
        %v3472 = vunpack.c.l.b16 %v2825
        %v3473 = vunpack.c.l.b16 %v2829
        %v3474 = vunpack.c.l.b16 %v2832
        %v3475 = vunpack.c.l.b16 %v2836
        %v3476 = vunpack.c.l.b16 %v2839
        %v3477 = vunpack.c.l.b16 %v2843
        %v3478 = vunpack.c.l.b16 %v2846
        %v3479 = vunpack.c.l.b16 %v2850
        %v3480 = vunpack.c.l.b16 %v2853
        %v3481 = vunpack.c.l.b16 %v2857
        %v3482 = vunpack.c.l.b16 %v2860
        %v3483 = vunpack.c.l.b16 %v2864
        %v3484 = vunpack.c.l.b16 %v2867
        %v3485 = vunpack.c.l.b16 %v2871
        %v3486 = vunpack.c.l.b16 %v2874
        %v3487 = vunpack.c.l.b16 %v2878
        %v3488 = vunpack.c.l.b16 %v2881
        %v3489 = vunpack.c.l.b16 %v2885
        %v3490 = vunpack.c.l.b16 %v2888
        %v3491 = vunpack.c.l.b16 %v2892
        %v3492 = vunpack.c.l.b16 %v2895
        %v3493 = vunpack.c.l.b16 %v2899
        %v3494 = vunpack.c.l.b16 %v2902
        %v3495 = vpack.c.b16 %v3464, %v3463
        %v3496 = vpack.c.b16 %v3466, %v3465
        %v3497 = vpack.c.b16 %v3468, %v3467
        %v3498 = vpack.c.b16 %v3470, %v3469
        %v3499 = vpack.c.b16 %v3472, %v3471
        %v3500 = vpack.c.b16 %v3474, %v3473
        %v3501 = vpack.c.b16 %v3476, %v3475
        %v3502 = vpack.c.b16 %v3478, %v3477
        %v3503 = vpack.c.b16 %v3480, %v3479
        %v3504 = vpack.c.b16 %v3482, %v3481
        %v3505 = vpack.c.b16 %v3484, %v3483
        %v3506 = vpack.c.b16 %v3486, %v3485
        %v3507 = vpack.c.b16 %v3488, %v3487
        %v3508 = vpack.c.b16 %v3490, %v3489
        %v3509 = vpack.c.b16 %v3492, %v3491
        %v3510 = vpack.c.b16 %v3494, %v3493
        %v3527 = vld [vmem:[#allocation7] sm:$0xf]
        %v3528 = vld [vmem:[#allocation7 + $0x4] sm:$0xf]
        %v3529 = vld [vmem:[#allocation7 + $0x8] sm:$0xf]
        %v3530 = vld [vmem:[#allocation7 + $0xc] sm:$0xf]
        %v3531 = vld [vmem:[#allocation7 + $0x10] sm:$0xf]
        %v3532 = vld [vmem:[#allocation7 + $0x14] sm:$0xf]
        %v3533 = vld [vmem:[#allocation7 + $0x18] sm:$0xf]
        %v3534 = vld [vmem:[#allocation7 + $0x1c] sm:$0xf]
        %v3535 = vld [vmem:[#allocation7 + $0x20] sm:$0xf]
        %v3536 = vld [vmem:[#allocation7 + $0x24] sm:$0xf]
        %v3537 = vld [vmem:[#allocation7 + $0x28] sm:$0xf]
        %v3538 = vld [vmem:[#allocation7 + $0x2c] sm:$0xf]
        %v3539 = vld [vmem:[#allocation7 + $0x30] sm:$0xf]
        %v3540 = vld [vmem:[#allocation7 + $0x34] sm:$0xf]
        %v3541 = vld [vmem:[#allocation7 + $0x38] sm:$0xf]
        %v3542 = vld [vmem:[#allocation7 + $0x3c] sm:$0xf]
        %v3543 = vld [vmem:[#allocation7 + $0x40] sm:$0xf]
        %v3544 = vld [vmem:[#allocation7 + $0x44] sm:$0xf]
        %v3545 = vld [vmem:[#allocation7 + $0x48] sm:$0xf]
        %v3546 = vld [vmem:[#allocation7 + $0x4c] sm:$0xf]
        %v3547 = vld [vmem:[#allocation7 + $0x50] sm:$0xf]
        %v3548 = vld [vmem:[#allocation7 + $0x54] sm:$0xf]
        %v3549 = vld [vmem:[#allocation7 + $0x58] sm:$0xf]
        %v3550 = vld [vmem:[#allocation7 + $0x5c] sm:$0xf]
        %v3551 = vld [vmem:[#allocation7 + $0x60] sm:$0xf]
        %v3552 = vld [vmem:[#allocation7 + $0x64] sm:$0xf]
        %v3553 = vld [vmem:[#allocation7 + $0x68] sm:$0xf]
        %v3554 = vld [vmem:[#allocation7 + $0x6c] sm:$0xf]
        %v3555 = vld [vmem:[#allocation7 + $0x70] sm:$0xf]
        %v3556 = vld [vmem:[#allocation7 + $0x74] sm:$0xf]
        %v3557 = vld [vmem:[#allocation7 + $0x78] sm:$0xf]
        %v3558 = vld [vmem:[#allocation7 + $0x7c] sm:$0xf]
        %v3559 = vld [vmem:[#allocation7 + $0x80] sm:$0xf]
        %v3560 = vld [vmem:[#allocation7 + $0x84] sm:$0xf]
        %v3561 = vld [vmem:[#allocation7 + $0x88] sm:$0xf]
        %v3562 = vld [vmem:[#allocation7 + $0x8c] sm:$0xf]
        %v3563 = vld [vmem:[#allocation7 + $0x90] sm:$0xf]
        %v3564 = vld [vmem:[#allocation7 + $0x94] sm:$0xf]
        %v3565 = vld [vmem:[#allocation7 + $0x98] sm:$0xf]
        %v3566 = vld [vmem:[#allocation7 + $0x9c] sm:$0xf]
        %v3567 = vld [vmem:[#allocation7 + $0xa0] sm:$0xf]
        %v3568 = vld [vmem:[#allocation7 + $0xa4] sm:$0xf]
        %v3569 = vld [vmem:[#allocation7 + $0xa8] sm:$0xf]
        %v3570 = vld [vmem:[#allocation7 + $0xac] sm:$0xf]
        %v3571 = vld [vmem:[#allocation7 + $0xb0] sm:$0xf]
        %v3572 = vld [vmem:[#allocation7 + $0xb4] sm:$0xf]
        %v3573 = vld [vmem:[#allocation7 + $0xb8] sm:$0xf]
        %v3574 = vld [vmem:[#allocation7 + $0xbc] sm:$0xf]
        %v3575 = vld [vmem:[#allocation7 + $0xc0] sm:$0xf]
        %v3576 = vld [vmem:[#allocation7 + $0xc4] sm:$0xf]
        %v3577 = vld [vmem:[#allocation7 + $0xc8] sm:$0xf]
        %v3578 = vld [vmem:[#allocation7 + $0xcc] sm:$0xf]
        %v3579 = vld [vmem:[#allocation7 + $0xd0] sm:$0xf]
        %v3580 = vld [vmem:[#allocation7 + $0xd4] sm:$0xf]
        %v3581 = vld [vmem:[#allocation7 + $0xd8] sm:$0xf]
        %v3582 = vld [vmem:[#allocation7 + $0xdc] sm:$0xf]
        %v3583 = vld [vmem:[#allocation7 + $0xe0] sm:$0xf]
        %v3584 = vld [vmem:[#allocation7 + $0xe4] sm:$0xf]
        %v3585 = vld [vmem:[#allocation7 + $0xe8] sm:$0xf]
        %v3586 = vld [vmem:[#allocation7 + $0xec] sm:$0xf]
        %v3587 = vld [vmem:[#allocation7 + $0xf0] sm:$0xf]
        %v3588 = vld [vmem:[#allocation7 + $0xf4] sm:$0xf]
        %v3589 = vld [vmem:[#allocation7 + $0xf8] sm:$0xf]
        %v3590 = vld [vmem:[#allocation7 + $0xfc] sm:$0xf]
        %v3591 = vld [vmem:[#allocation7 + $0x100] sm:$0xf]
        %v3592 = vld [vmem:[#allocation7 + $0x104] sm:$0xf]
        %v3593 = vld [vmem:[#allocation7 + $0x108] sm:$0xf]
        %v3594 = vld [vmem:[#allocation7 + $0x10c] sm:$0xf]
        %v3595 = vld [vmem:[#allocation7 + $0x110] sm:$0xf]
        %v3596 = vld [vmem:[#allocation7 + $0x114] sm:$0xf]
        %v3597 = vld [vmem:[#allocation7 + $0x118] sm:$0xf]
        %v3598 = vld [vmem:[#allocation7 + $0x11c] sm:$0xf]
        %v3599 = vld [vmem:[#allocation7 + $0x120] sm:$0xf]
        %v3600 = vld [vmem:[#allocation7 + $0x124] sm:$0xf]
        %v3601 = vld [vmem:[#allocation7 + $0x128] sm:$0xf]
        %v3602 = vld [vmem:[#allocation7 + $0x12c] sm:$0xf]
        %v3603 = vld [vmem:[#allocation7 + $0x130] sm:$0xf]
        %v3604 = vld [vmem:[#allocation7 + $0x134] sm:$0xf]
        %v3605 = vld [vmem:[#allocation7 + $0x138] sm:$0xf]
        %v3606 = vld [vmem:[#allocation7 + $0x13c] sm:$0xf]
        %v3607 = vld [vmem:[#allocation7 + $0x140] sm:$0xf]
        %v3608 = vld [vmem:[#allocation7 + $0x144] sm:$0xf]
        %v3609 = vld [vmem:[#allocation7 + $0x148] sm:$0xf]
        %v3610 = vld [vmem:[#allocation7 + $0x14c] sm:$0xf]
        %v3611 = vld [vmem:[#allocation7 + $0x150] sm:$0xf]
        %v3612 = vld [vmem:[#allocation7 + $0x154] sm:$0xf]
        %v3613 = vld [vmem:[#allocation7 + $0x158] sm:$0xf]
        %v3614 = vld [vmem:[#allocation7 + $0x15c] sm:$0xf]
        %v3615 = vld [vmem:[#allocation7 + $0x160] sm:$0xf]
        %v3616 = vld [vmem:[#allocation7 + $0x164] sm:$0xf]
        %v3617 = vld [vmem:[#allocation7 + $0x168] sm:$0xf]
        %v3618 = vld [vmem:[#allocation7 + $0x16c] sm:$0xf]
        %v3619 = vld [vmem:[#allocation7 + $0x170] sm:$0xf]
        %v3620 = vld [vmem:[#allocation7 + $0x174] sm:$0xf]
        %v3621 = vld [vmem:[#allocation7 + $0x178] sm:$0xf]
        %v3622 = vld [vmem:[#allocation7 + $0x17c] sm:$0xf]
        %v3623 = vld [vmem:[#allocation7 + $0x180] sm:$0xf]
        %v3624 = vld [vmem:[#allocation7 + $0x184] sm:$0xf]
        %v3625 = vld [vmem:[#allocation7 + $0x188] sm:$0xf]
        %v3626 = vld [vmem:[#allocation7 + $0x18c] sm:$0xf]
        %v3627 = vld [vmem:[#allocation7 + $0x190] sm:$0xf]
        %v3628 = vld [vmem:[#allocation7 + $0x194] sm:$0xf]
        %v3629 = vld [vmem:[#allocation7 + $0x198] sm:$0xf]
        %v3630 = vld [vmem:[#allocation7 + $0x19c] sm:$0xf]
        %v3631 = vld [vmem:[#allocation7 + $0x1a0] sm:$0xf]
        %v3632 = vld [vmem:[#allocation7 + $0x1a4] sm:$0xf]
        %v3633 = vld [vmem:[#allocation7 + $0x1a8] sm:$0xf]
        %v3634 = vld [vmem:[#allocation7 + $0x1ac] sm:$0xf]
        %v3635 = vld [vmem:[#allocation7 + $0x1b0] sm:$0xf]
        %v3636 = vld [vmem:[#allocation7 + $0x1b4] sm:$0xf]
        %v3637 = vld [vmem:[#allocation7 + $0x1b8] sm:$0xf]
        %v3638 = vld [vmem:[#allocation7 + $0x1bc] sm:$0xf]
        %v3639 = vld [vmem:[#allocation7 + $0x1c0] sm:$0xf]
        %v3640 = vld [vmem:[#allocation7 + $0x1c4] sm:$0xf]
        %v3641 = vld [vmem:[#allocation7 + $0x1c8] sm:$0xf]
        %v3642 = vld [vmem:[#allocation7 + $0x1cc] sm:$0xf]
        %v3643 = vld [vmem:[#allocation7 + $0x1d0] sm:$0xf]
        %v3644 = vld [vmem:[#allocation7 + $0x1d4] sm:$0xf]
        %v3645 = vld [vmem:[#allocation7 + $0x1d8] sm:$0xf]
        %v3646 = vld [vmem:[#allocation7 + $0x1dc] sm:$0xf]
        %v3647 = vld [vmem:[#allocation7 + $0x1e0] sm:$0xf]
        %v3648 = vld [vmem:[#allocation7 + $0x1e4] sm:$0xf]
        %v3649 = vld [vmem:[#allocation7 + $0x1e8] sm:$0xf]
        %v3650 = vld [vmem:[#allocation7 + $0x1ec] sm:$0xf]
        %v3651 = vld [vmem:[#allocation7 + $0x1f0] sm:$0xf]
        %v3652 = vld [vmem:[#allocation7 + $0x1f4] sm:$0xf]
        %v3653 = vld [vmem:[#allocation7 + $0x1f8] sm:$0xf]
        %v3654 = vld [vmem:[#allocation7 + $0x1fc] sm:$0xf]
        %v3655 = vld [vmem:[#allocation7 + $0x200] sm:$0xf]
        %v3656 = vld [vmem:[#allocation7 + $0x204] sm:$0xf]
        %v3657 = vld [vmem:[#allocation7 + $0x208] sm:$0xf]
        %v3658 = vld [vmem:[#allocation7 + $0x20c] sm:$0xf]
        %v3659 = vld [vmem:[#allocation7 + $0x210] sm:$0xf]
        %v3660 = vld [vmem:[#allocation7 + $0x214] sm:$0xf]
        %v3661 = vld [vmem:[#allocation7 + $0x218] sm:$0xf]
        %v3662 = vld [vmem:[#allocation7 + $0x21c] sm:$0xf]
        %v3663 = vld [vmem:[#allocation7 + $0x220] sm:$0xf]
        %v3664 = vld [vmem:[#allocation7 + $0x224] sm:$0xf]
        %v3665 = vld [vmem:[#allocation7 + $0x228] sm:$0xf]
        %v3666 = vld [vmem:[#allocation7 + $0x22c] sm:$0xf]
        %v3667 = vld [vmem:[#allocation7 + $0x230] sm:$0xf]
        %v3668 = vld [vmem:[#allocation7 + $0x234] sm:$0xf]
        %v3669 = vld [vmem:[#allocation7 + $0x238] sm:$0xf]
        %v3670 = vld [vmem:[#allocation7 + $0x23c] sm:$0xf]
        %v3671 = vld [vmem:[#allocation9] sm:$0x1]
        %v3673 = vlaneseq
        %v3674 = vshrl.u32 %v3673, 7
        %v3675 = vsub.s32 0, %v3674
        %v3676 = vrot.slane %v3671, %v3675
        %v3822 = vunpack.c.l.b16 %v3527
        %v3823 = vunpack.c.l.b16 %v3528
        %v3824 = vunpack.c.l.b16 %v3529
        %v3825 = vunpack.c.l.b16 %v3530
        %v3826 = vunpack.c.l.b16 %v3531
        %v3827 = vunpack.c.l.b16 %v3532
        %v3828 = vunpack.c.l.b16 %v3533
        %v3829 = vunpack.c.l.b16 %v3534
        %v3830 = vunpack.c.l.b16 %v3535
        %v3831 = vunpack.c.l.b16 %v3536
        %v3832 = vunpack.c.l.b16 %v3537
        %v3833 = vunpack.c.l.b16 %v3538
        %v3834 = vunpack.c.l.b16 %v3539
        %v3835 = vunpack.c.l.b16 %v3540
        %v3836 = vunpack.c.l.b16 %v3541
        %v3837 = vunpack.c.l.b16 %v3542
        %v3838 = vunpack.c.l.b16 %v3543
        %v3839 = vunpack.c.l.b16 %v3544
        %v3840 = vunpack.c.l.b16 %v3545
        %v3841 = vunpack.c.l.b16 %v3546
        %v3842 = vunpack.c.l.b16 %v3547
        %v3843 = vunpack.c.l.b16 %v3548
        %v3844 = vunpack.c.l.b16 %v3549
        %v3845 = vunpack.c.l.b16 %v3550
        %v3846 = vunpack.c.l.b16 %v3551
        %v3847 = vunpack.c.l.b16 %v3552
        %v3848 = vunpack.c.l.b16 %v3553
        %v3849 = vunpack.c.l.b16 %v3554
        %v3850 = vunpack.c.l.b16 %v3555
        %v3851 = vunpack.c.l.b16 %v3556
        %v3852 = vunpack.c.l.b16 %v3557
        %v3853 = vunpack.c.l.b16 %v3558
        %v3854 = vunpack.c.l.b16 %v3559
        %v3855 = vunpack.c.l.b16 %v3560
        %v3856 = vunpack.c.l.b16 %v3561
        %v3857 = vunpack.c.l.b16 %v3562
        %v3858 = vunpack.c.l.b16 %v3563
        %v3859 = vunpack.c.l.b16 %v3564
        %v3860 = vunpack.c.l.b16 %v3565
        %v3861 = vunpack.c.l.b16 %v3566
        %v3862 = vunpack.c.l.b16 %v3567
        %v3863 = vunpack.c.l.b16 %v3568
        %v3864 = vunpack.c.l.b16 %v3569
        %v3865 = vunpack.c.l.b16 %v3570
        %v3866 = vunpack.c.l.b16 %v3571
        %v3867 = vunpack.c.l.b16 %v3572
        %v3868 = vunpack.c.l.b16 %v3573
        %v3869 = vunpack.c.l.b16 %v3574
        %v3870 = vunpack.c.l.b16 %v3575
        %v3871 = vunpack.c.l.b16 %v3576
        %v3872 = vunpack.c.l.b16 %v3577
        %v3873 = vunpack.c.l.b16 %v3578
        %v3874 = vunpack.c.l.b16 %v3579
        %v3875 = vunpack.c.l.b16 %v3580
        %v3876 = vunpack.c.l.b16 %v3581
        %v3877 = vunpack.c.l.b16 %v3582
        %v3878 = vunpack.c.l.b16 %v3583
        %v3879 = vunpack.c.l.b16 %v3584
        %v3880 = vunpack.c.l.b16 %v3585
        %v3881 = vunpack.c.l.b16 %v3586
        %v3882 = vunpack.c.l.b16 %v3587
        %v3883 = vunpack.c.l.b16 %v3588
        %v3884 = vunpack.c.l.b16 %v3589
        %v3885 = vunpack.c.l.b16 %v3590
        %v3886 = vunpack.c.l.b16 %v3591
        %v3887 = vunpack.c.l.b16 %v3592
        %v3888 = vunpack.c.l.b16 %v3593
        %v3889 = vunpack.c.l.b16 %v3594
        %v3890 = vunpack.c.l.b16 %v3595
        %v3891 = vunpack.c.l.b16 %v3596
        %v3892 = vunpack.c.l.b16 %v3597
        %v3893 = vunpack.c.l.b16 %v3598
        %v3894 = vunpack.c.l.b16 %v3599
        %v3895 = vunpack.c.l.b16 %v3600
        %v3896 = vunpack.c.l.b16 %v3601
        %v3897 = vunpack.c.l.b16 %v3602
        %v3898 = vunpack.c.l.b16 %v3603
        %v3899 = vunpack.c.l.b16 %v3604
        %v3900 = vunpack.c.l.b16 %v3605
        %v3901 = vunpack.c.l.b16 %v3606
        %v3902 = vunpack.c.l.b16 %v3607
        %v3903 = vunpack.c.l.b16 %v3608
        %v3904 = vunpack.c.l.b16 %v3609
        %v3905 = vunpack.c.l.b16 %v3610
        %v3906 = vunpack.c.l.b16 %v3611
        %v3907 = vunpack.c.l.b16 %v3612
        %v3908 = vunpack.c.l.b16 %v3613
        %v3909 = vunpack.c.l.b16 %v3614
        %v3910 = vunpack.c.l.b16 %v3615
        %v3911 = vunpack.c.l.b16 %v3616
        %v3912 = vunpack.c.l.b16 %v3617
        %v3913 = vunpack.c.l.b16 %v3618
        %v3914 = vunpack.c.l.b16 %v3619
        %v3915 = vunpack.c.l.b16 %v3620
        %v3916 = vunpack.c.l.b16 %v3621
        %v3917 = vunpack.c.l.b16 %v3622
        %v3918 = vunpack.c.l.b16 %v3623
        %v3919 = vunpack.c.l.b16 %v3624
        %v3920 = vunpack.c.l.b16 %v3625
        %v3921 = vunpack.c.l.b16 %v3626
        %v3922 = vunpack.c.l.b16 %v3627
        %v3923 = vunpack.c.l.b16 %v3628
        %v3924 = vunpack.c.l.b16 %v3629
        %v3925 = vunpack.c.l.b16 %v3630
        %v3926 = vunpack.c.l.b16 %v3631
        %v3927 = vunpack.c.l.b16 %v3632
        %v3928 = vunpack.c.l.b16 %v3633
        %v3929 = vunpack.c.l.b16 %v3634
        %v3930 = vunpack.c.l.b16 %v3635
        %v3931 = vunpack.c.l.b16 %v3636
        %v3932 = vunpack.c.l.b16 %v3637
        %v3933 = vunpack.c.l.b16 %v3638
        %v3934 = vunpack.c.l.b16 %v3639
        %v3935 = vunpack.c.l.b16 %v3640
        %v3936 = vunpack.c.l.b16 %v3641
        %v3937 = vunpack.c.l.b16 %v3642
        %v3938 = vunpack.c.l.b16 %v3643
        %v3939 = vunpack.c.l.b16 %v3644
        %v3940 = vunpack.c.l.b16 %v3645
        %v3941 = vunpack.c.l.b16 %v3646
        %v3942 = vunpack.c.l.b16 %v3647
        %v3943 = vunpack.c.l.b16 %v3648
        %v3944 = vunpack.c.l.b16 %v3649
        %v3945 = vunpack.c.l.b16 %v3650
        %v3946 = vunpack.c.l.b16 %v3651
        %v3947 = vunpack.c.l.b16 %v3652
        %v3948 = vunpack.c.l.b16 %v3653
        %v3949 = vunpack.c.l.b16 %v3654
        %v3950 = vunpack.c.l.b16 %v3655
        %v3951 = vunpack.c.l.b16 %v3656
        %v3952 = vunpack.c.l.b16 %v3657
        %v3953 = vunpack.c.l.b16 %v3658
        %v3954 = vunpack.c.l.b16 %v3659
        %v3955 = vunpack.c.l.b16 %v3660
        %v3956 = vunpack.c.l.b16 %v3661
        %v3957 = vunpack.c.l.b16 %v3662
        %v3958 = vunpack.c.l.b16 %v3663
        %v3959 = vunpack.c.l.b16 %v3664
        %v3960 = vunpack.c.l.b16 %v3665
        %v3961 = vunpack.c.l.b16 %v3666
        %v3962 = vunpack.c.l.b16 %v3667
        %v3963 = vunpack.c.l.b16 %v3668
        %v3964 = vunpack.c.l.b16 %v3669
        %v3965 = vunpack.c.l.b16 %v3670
        %v3966 = vpack.c.b16 %v3823, %v3822
        %v3967 = vpack.c.b16 %v3825, %v3824
        %v3968 = vpack.c.b16 %v3827, %v3826
        %v3969 = vpack.c.b16 %v3829, %v3828
        %v3970 = vpack.c.b16 %v3831, %v3830
        %v3971 = vpack.c.b16 %v3833, %v3832
        %v3972 = vpack.c.b16 %v3835, %v3834
        %v3973 = vpack.c.b16 %v3837, %v3836
        %v3974 = vpack.c.b16 %v3839, %v3838
        %v3975 = vpack.c.b16 %v3841, %v3840
        %v3976 = vpack.c.b16 %v3843, %v3842
        %v3977 = vpack.c.b16 %v3845, %v3844
        %v3978 = vpack.c.b16 %v3847, %v3846
        %v3979 = vpack.c.b16 %v3849, %v3848
        %v3980 = vpack.c.b16 %v3851, %v3850
        %v3981 = vpack.c.b16 %v3853, %v3852
        %v3982 = vpack.c.b16 %v3855, %v3854
        %v3983 = vpack.c.b16 %v3857, %v3856
        %v3984 = vpack.c.b16 %v3859, %v3858
        %v3985 = vpack.c.b16 %v3861, %v3860
        %v3986 = vpack.c.b16 %v3863, %v3862
        %v3987 = vpack.c.b16 %v3865, %v3864
        %v3988 = vpack.c.b16 %v3867, %v3866
        %v3989 = vpack.c.b16 %v3869, %v3868
        %v3990 = vpack.c.b16 %v3871, %v3870
        %v3991 = vpack.c.b16 %v3873, %v3872
        %v3992 = vpack.c.b16 %v3875, %v3874
        %v3993 = vpack.c.b16 %v3877, %v3876
        %v3994 = vpack.c.b16 %v3879, %v3878
        %v3995 = vpack.c.b16 %v3881, %v3880
        %v3996 = vpack.c.b16 %v3883, %v3882
        %v3997 = vpack.c.b16 %v3885, %v3884
        %v3998 = vpack.c.b16 %v3887, %v3886
        %v3999 = vpack.c.b16 %v3889, %v3888
        %v4000 = vpack.c.b16 %v3891, %v3890
        %v4001 = vpack.c.b16 %v3893, %v3892
        %v4002 = vpack.c.b16 %v3895, %v3894
        %v4003 = vpack.c.b16 %v3897, %v3896
        %v4004 = vpack.c.b16 %v3899, %v3898
        %v4005 = vpack.c.b16 %v3901, %v3900
        %v4006 = vpack.c.b16 %v3903, %v3902
        %v4007 = vpack.c.b16 %v3905, %v3904
        %v4008 = vpack.c.b16 %v3907, %v3906
        %v4009 = vpack.c.b16 %v3909, %v3908
        %v4010 = vpack.c.b16 %v3911, %v3910
        %v4011 = vpack.c.b16 %v3913, %v3912
        %v4012 = vpack.c.b16 %v3915, %v3914
        %v4013 = vpack.c.b16 %v3917, %v3916
        %v4014 = vpack.c.b16 %v3919, %v3918
        %v4015 = vpack.c.b16 %v3921, %v3920
        %v4016 = vpack.c.b16 %v3923, %v3922
        %v4017 = vpack.c.b16 %v3925, %v3924
        %v4018 = vpack.c.b16 %v3927, %v3926
        %v4019 = vpack.c.b16 %v3929, %v3928
        %v4020 = vpack.c.b16 %v3931, %v3930
        %v4021 = vpack.c.b16 %v3933, %v3932
        %v4022 = vpack.c.b16 %v3935, %v3934
        %v4023 = vpack.c.b16 %v3937, %v3936
        %v4024 = vpack.c.b16 %v3939, %v3938
        %v4025 = vpack.c.b16 %v3941, %v3940
        %v4026 = vpack.c.b16 %v3943, %v3942
        %v4027 = vpack.c.b16 %v3945, %v3944
        %v4028 = vpack.c.b16 %v3947, %v3946
        %v4029 = vpack.c.b16 %v3949, %v3948
        %v4030 = vpack.c.b16 %v3951, %v3950
        %v4031 = vpack.c.b16 %v3953, %v3952
        %v4032 = vpack.c.b16 %v3955, %v3954
        %v4033 = vpack.c.b16 %v3957, %v3956
        %v4034 = vpack.c.b16 %v3959, %v3958
        %v4035 = vpack.c.b16 %v3961, %v3960
        %v4036 = vpack.c.b16 %v3963, %v3962
        %v4037 = vpack.c.b16 %v3965, %v3964
        %4110 = vmatprep.subr.bf16.mxu0 0
        %4111 = vmatpush1.bf16.msra.mxu0 %v3973
        %4112 = vmatprep.subr.bf16.mxu0 0
        %4113 = vmatpush1.bf16.msra.mxu0 %v3972
        %4114 = vmatprep.subr.bf16.mxu0 0
        %4115 = vmatpush1.bf16.msra.mxu0 %v3971
        %4116 = vmatprep.subr.bf16.mxu0 0
        %4117 = vmatpush1.bf16.msra.mxu0 %v3970
        %4118 = vmatprep.subr.bf16.mxu0 0
        %4119 = vmatpush1.bf16.msra.mxu0 %v3969
        %4120 = vmatprep.subr.bf16.mxu0 0
        %4121 = vmatpush1.bf16.msra.mxu0 %v3968
        %4122 = vmatprep.subr.bf16.mxu0 0
        %4123 = vmatpush1.bf16.msra.mxu0 %v3967
        %4124 = vmatprep.subr.bf16.mxu0 0
        %4125 = vmatpush1.bf16.msra.mxu0 %v3966
        %4126 = vmatprep.subr.bf16.mxu0 0
        %4127 = vmatpush2.bf16.msra.mxu0 %v3981
        %4128 = vmatprep.subr.bf16.mxu0 0
        %4129 = vmatpush2.bf16.msra.mxu0 %v3980
        %4130 = vmatprep.subr.bf16.mxu0 0
        %4131 = vmatpush2.bf16.msra.mxu0 %v3979
        %4132 = vmatprep.subr.bf16.mxu0 0
        %4133 = vmatpush2.bf16.msra.mxu0 %v3978
        %4134 = vmatprep.subr.bf16.mxu0 0
        %4135 = vmatpush2.bf16.msra.mxu0 %v3977
        %4136 = vmatprep.subr.bf16.mxu0 0
        %4137 = vmatpush2.bf16.msra.mxu0 %v3976
        %4138 = vmatprep.subr.bf16.mxu0 0
        %4139 = vmatpush2.bf16.msra.mxu0 %v3975
        %4140 = vmatprep.subr.bf16.mxu0 0
        %4141 = vmatpush2.bf16.msra.mxu0 %v3974
        %4142 = vmatprep.mubr.bf16.mxu0 %v3015
        %4143 = vmatmul.mubr.bf16.gmra.mxu0 %v2951
        %v4144 = vpop.f32.mrf.mxu0
        %v4145 = vadd.f32 %v3676, %v4144
        %v4146 = vpop.f32.mrf.mxu0
        %v4147 = vpop.f32.mrf.mxu0
        %v4148 = vadd.f32 %v3676, %v4147
        %v4149 = vpop.f32.mrf.mxu0
        %4150 = vmatprep.mubr.bf16.mxu0 %v3016
        %4151 = vmatmul.mubr.bf16.gmra.mxu0 %v2952
        %v4152 = vpop.f32.mrf.mxu0
        %v4153 = vadd.f32 %v3676, %v4152
        %v4154 = vpop.f32.mrf.mxu0
        %v4155 = vpop.f32.mrf.mxu0
        %v4156 = vadd.f32 %v3676, %v4155
        %v4157 = vpop.f32.mrf.mxu0
        %4158 = vmatprep.mubr.bf16.mxu0 %v3017
        %4159 = vmatmul.mubr.bf16.gmra.mxu0 %v2953
        %v4160 = vpop.f32.mrf.mxu0
        %v4161 = vadd.f32 %v3676, %v4160
        %v4162 = vpop.f32.mrf.mxu0
        %v4163 = vpop.f32.mrf.mxu0
        %v4164 = vadd.f32 %v3676, %v4163
        %v4165 = vpop.f32.mrf.mxu0
        %4166 = vmatprep.mubr.bf16.mxu0 %v3018
        %4167 = vmatmul.mubr.bf16.gmra.mxu0 %v2954
        %v4168 = vpop.f32.mrf.mxu0
        %v4169 = vadd.f32 %v3676, %v4168
        %v4170 = vpop.f32.mrf.mxu0
        %v4171 = vpop.f32.mrf.mxu0
        %v4172 = vadd.f32 %v3676, %v4171
        %v4173 = vpop.f32.mrf.mxu0
        %4174 = vmatprep.mubr.bf16.mxu0 %v3019
        %4175 = vmatmul.mubr.bf16.gmra.mxu0 %v2955
        %v4176 = vpop.f32.mrf.mxu0
        %v4177 = vadd.f32 %v3676, %v4176
        %v4178 = vpop.f32.mrf.mxu0
        %v4179 = vpop.f32.mrf.mxu0
        %v4180 = vadd.f32 %v3676, %v4179
        %v4181 = vpop.f32.mrf.mxu0
        %4182 = vmatprep.mubr.bf16.mxu0 %v3020
        %4183 = vmatmul.mubr.bf16.gmra.mxu0 %v2956
        %v4184 = vpop.f32.mrf.mxu0
        %v4185 = vadd.f32 %v3676, %v4184
        %v4186 = vpop.f32.mrf.mxu0
        %v4187 = vpop.f32.mrf.mxu0
        %v4188 = vadd.f32 %v3676, %v4187
        %v4189 = vpop.f32.mrf.mxu0
        %4190 = vmatprep.mubr.bf16.mxu0 %v3021
        %4191 = vmatmul.mubr.bf16.gmra.mxu0 %v2957
        %v4192 = vpop.f32.mrf.mxu0
        %v4193 = vadd.f32 %v3676, %v4192
        %v4194 = vpop.f32.mrf.mxu0
        %v4195 = vpop.f32.mrf.mxu0
        %v4196 = vadd.f32 %v3676, %v4195
        %v4197 = vpop.f32.mrf.mxu0
        %4198 = vmatprep.mubr.bf16.mxu0 %v3022
        %4199 = vmatmul.mubr.bf16.gmra.mxu0 %v2958
        %v4200 = vpop.f32.mrf.mxu0
        %v4201 = vadd.f32 %v3676, %v4200
        %v4202 = vpop.f32.mrf.mxu0
        %v4203 = vpop.f32.mrf.mxu0
        %v4204 = vadd.f32 %v3676, %v4203
        %v4205 = vpop.f32.mrf.mxu0
        %4206 = vmatprep.mubr.bf16.mxu0 %v3023
        %4207 = vmatmul.mubr.bf16.gmra.mxu0 %v2959
        %v4208 = vpop.f32.mrf.mxu0
        %v4209 = vadd.f32 %v3676, %v4208
        %v4210 = vpop.f32.mrf.mxu0
        %v4211 = vpop.f32.mrf.mxu0
        %v4212 = vadd.f32 %v3676, %v4211
        %v4213 = vpop.f32.mrf.mxu0
        %4214 = vmatprep.mubr.bf16.mxu0 %v3024
        %4215 = vmatmul.mubr.bf16.gmra.mxu0 %v2960
        %v4216 = vpop.f32.mrf.mxu0
        %v4217 = vadd.f32 %v3676, %v4216
        %v4218 = vpop.f32.mrf.mxu0
        %v4219 = vpop.f32.mrf.mxu0
        %v4220 = vadd.f32 %v3676, %v4219
        %v4221 = vpop.f32.mrf.mxu0
        %4222 = vmatprep.mubr.bf16.mxu0 %v3025
        %4223 = vmatmul.mubr.bf16.gmra.mxu0 %v2961
        %v4224 = vpop.f32.mrf.mxu0
        %v4225 = vadd.f32 %v3676, %v4224
        %v4226 = vpop.f32.mrf.mxu0
        %v4227 = vpop.f32.mrf.mxu0
        %v4228 = vadd.f32 %v3676, %v4227
        %v4229 = vpop.f32.mrf.mxu0
        %4230 = vmatprep.mubr.bf16.mxu0 %v3026
        %4231 = vmatmul.mubr.bf16.gmra.mxu0 %v2962
        %v4232 = vpop.f32.mrf.mxu0
        %v4233 = vadd.f32 %v3676, %v4232
        %v4234 = vpop.f32.mrf.mxu0
        %v4235 = vpop.f32.mrf.mxu0
        %v4236 = vadd.f32 %v3676, %v4235
        %v4237 = vpop.f32.mrf.mxu0
        %4238 = vmatprep.mubr.bf16.mxu0 %v3027
        %4239 = vmatmul.mubr.bf16.gmra.mxu0 %v2963
        %v4240 = vpop.f32.mrf.mxu0
        %v4241 = vadd.f32 %v3676, %v4240
        %v4242 = vpop.f32.mrf.mxu0
        %v4243 = vpop.f32.mrf.mxu0
        %v4244 = vadd.f32 %v3676, %v4243
        %v4245 = vpop.f32.mrf.mxu0
        %4246 = vmatprep.mubr.bf16.mxu0 %v3028
        %4247 = vmatmul.mubr.bf16.gmra.mxu0 %v2964
        %v4248 = vpop.f32.mrf.mxu0
        %v4249 = vadd.f32 %v3676, %v4248
        %v4250 = vpop.f32.mrf.mxu0
        %v4251 = vpop.f32.mrf.mxu0
        %v4252 = vadd.f32 %v3676, %v4251
        %v4253 = vpop.f32.mrf.mxu0
        %4254 = vmatprep.mubr.bf16.mxu0 %v3029
        %4255 = vmatmul.mubr.bf16.gmra.mxu0 %v2965
        %v4256 = vpop.f32.mrf.mxu0
        %v4257 = vadd.f32 %v3676, %v4256
        %v4258 = vpop.f32.mrf.mxu0
        %v4259 = vpop.f32.mrf.mxu0
        %v4260 = vadd.f32 %v3676, %v4259
        %v4261 = vpop.f32.mrf.mxu0
        %4262 = vmatprep.mubr.bf16.mxu0 %v3030
        %4263 = vmatmul.mubr.bf16.gmra.mxu0 %v2966
        %v4264 = vpop.f32.mrf.mxu0
        %v4265 = vadd.f32 %v3676, %v4264
        %v4266 = vpop.f32.mrf.mxu0
        %v4267 = vpop.f32.mrf.mxu0
        %v4268 = vadd.f32 %v3676, %v4267
        %v4269 = vpop.f32.mrf.mxu0
        %4270 = vdwg.mxu0
        %4271 = vmatprep.subr.bf16.mxu0 0
        %4272 = vmatpush1.bf16.msra.mxu0 %v3989
        %4273 = vmatprep.subr.bf16.mxu0 0
        %4274 = vmatpush1.bf16.msra.mxu0 %v3988
        %4275 = vmatprep.subr.bf16.mxu0 0
        %4276 = vmatpush1.bf16.msra.mxu0 %v3987
        %4277 = vmatprep.subr.bf16.mxu0 0
        %4278 = vmatpush1.bf16.msra.mxu0 %v3986
        %4279 = vmatprep.subr.bf16.mxu0 0
        %4280 = vmatpush1.bf16.msra.mxu0 %v3985
        %4281 = vmatprep.subr.bf16.mxu0 0
        %4282 = vmatpush1.bf16.msra.mxu0 %v3984
        %4283 = vmatprep.subr.bf16.mxu0 0
        %4284 = vmatpush1.bf16.msra.mxu0 %v3983
        %4285 = vmatprep.subr.bf16.mxu0 0
        %4286 = vmatpush1.bf16.msra.mxu0 %v3982
        %4287 = vmatprep.subr.bf16.mxu0 0
        %4288 = vmatpush2.bf16.msra.mxu0 %v3997
        %4289 = vmatprep.subr.bf16.mxu0 0
        %4290 = vmatpush2.bf16.msra.mxu0 %v3996
        %4291 = vmatprep.subr.bf16.mxu0 0
        %4292 = vmatpush2.bf16.msra.mxu0 %v3995
        %4293 = vmatprep.subr.bf16.mxu0 0
        %4294 = vmatpush2.bf16.msra.mxu0 %v3994
        %4295 = vmatprep.subr.bf16.mxu0 0
        %4296 = vmatpush2.bf16.msra.mxu0 %v3993
        %4297 = vmatprep.subr.bf16.mxu0 0
        %4298 = vmatpush2.bf16.msra.mxu0 %v3992
        %4299 = vmatprep.subr.bf16.mxu0 0
        %4300 = vmatpush2.bf16.msra.mxu0 %v3991
        %4301 = vmatprep.subr.bf16.mxu0 0
        %4302 = vmatpush2.bf16.msra.mxu0 %v3990
        %4303 = vmatprep.mubr.bf16.mxu0 %v3159
        %4304 = vmatmul.mubr.bf16.gmra.mxu0 %v3079
        %v4305 = vpop.f32.mrf.mxu0
        %v4306 = vadd.f32 %v4145, %v4305
        %v4307 = vpop.f32.mrf.mxu0
        %v4308 = vpop.f32.mrf.mxu0
        %v4309 = vadd.f32 %v4148, %v4308
        %v4310 = vpop.f32.mrf.mxu0
        %4311 = vmatprep.mubr.bf16.mxu0 %v3160
        %4312 = vmatmul.mubr.bf16.gmra.mxu0 %v3080
        %v4313 = vpop.f32.mrf.mxu0
        %v4314 = vadd.f32 %v4153, %v4313
        %v4315 = vpop.f32.mrf.mxu0
        %v4316 = vpop.f32.mrf.mxu0
        %v4317 = vadd.f32 %v4156, %v4316
        %v4318 = vpop.f32.mrf.mxu0
        %4319 = vmatprep.mubr.bf16.mxu0 %v3161
        %4320 = vmatmul.mubr.bf16.gmra.mxu0 %v3081
        %v4321 = vpop.f32.mrf.mxu0
        %v4322 = vadd.f32 %v4161, %v4321
        %v4323 = vpop.f32.mrf.mxu0
        %v4324 = vpop.f32.mrf.mxu0
        %v4325 = vadd.f32 %v4164, %v4324
        %v4326 = vpop.f32.mrf.mxu0
        %4327 = vmatprep.mubr.bf16.mxu0 %v3162
        %4328 = vmatmul.mubr.bf16.gmra.mxu0 %v3082
        %v4329 = vpop.f32.mrf.mxu0
        %v4330 = vadd.f32 %v4169, %v4329
        %v4331 = vpop.f32.mrf.mxu0
        %v4332 = vpop.f32.mrf.mxu0
        %v4333 = vadd.f32 %v4172, %v4332
        %v4334 = vpop.f32.mrf.mxu0
        %4335 = vmatprep.mubr.bf16.mxu0 %v3163
        %4336 = vmatmul.mubr.bf16.gmra.mxu0 %v3083
        %v4337 = vpop.f32.mrf.mxu0
        %v4338 = vadd.f32 %v4177, %v4337
        %v4339 = vpop.f32.mrf.mxu0
        %v4340 = vpop.f32.mrf.mxu0
        %v4341 = vadd.f32 %v4180, %v4340
        %v4342 = vpop.f32.mrf.mxu0
        %4343 = vmatprep.mubr.bf16.mxu0 %v3164
        %4344 = vmatmul.mubr.bf16.gmra.mxu0 %v3084
        %v4345 = vpop.f32.mrf.mxu0
        %v4346 = vadd.f32 %v4185, %v4345
        %v4347 = vpop.f32.mrf.mxu0
        %v4348 = vpop.f32.mrf.mxu0
        %v4349 = vadd.f32 %v4188, %v4348
        %v4350 = vpop.f32.mrf.mxu0
        %4351 = vmatprep.mubr.bf16.mxu0 %v3165
        %4352 = vmatmul.mubr.bf16.gmra.mxu0 %v3085
        %v4353 = vpop.f32.mrf.mxu0
        %v4354 = vadd.f32 %v4193, %v4353
        %v4355 = vpop.f32.mrf.mxu0
        %v4356 = vpop.f32.mrf.mxu0
        %v4357 = vadd.f32 %v4196, %v4356
        %v4358 = vpop.f32.mrf.mxu0
        %4359 = vmatprep.mubr.bf16.mxu0 %v3166
        %4360 = vmatmul.mubr.bf16.gmra.mxu0 %v3086
        %v4361 = vpop.f32.mrf.mxu0
        %v4362 = vadd.f32 %v4201, %v4361
        %v4363 = vpop.f32.mrf.mxu0
        %v4364 = vpop.f32.mrf.mxu0
        %v4365 = vadd.f32 %v4204, %v4364
        %v4366 = vpop.f32.mrf.mxu0
        %4367 = vmatprep.mubr.bf16.mxu0 %v3167
        %4368 = vmatmul.mubr.bf16.gmra.mxu0 %v3087
        %v4369 = vpop.f32.mrf.mxu0
        %v4370 = vadd.f32 %v4209, %v4369
        %v4371 = vpop.f32.mrf.mxu0
        %v4372 = vpop.f32.mrf.mxu0
        %v4373 = vadd.f32 %v4212, %v4372
        %v4374 = vpop.f32.mrf.mxu0
        %4375 = vmatprep.mubr.bf16.mxu0 %v3168
        %4376 = vmatmul.mubr.bf16.gmra.mxu0 %v3088
        %v4377 = vpop.f32.mrf.mxu0
        %v4378 = vadd.f32 %v4217, %v4377
        %v4379 = vpop.f32.mrf.mxu0
        %v4380 = vpop.f32.mrf.mxu0
        %v4381 = vadd.f32 %v4220, %v4380
        %v4382 = vpop.f32.mrf.mxu0
        %4383 = vmatprep.mubr.bf16.mxu0 %v3169
        %4384 = vmatmul.mubr.bf16.gmra.mxu0 %v3089
        %v4385 = vpop.f32.mrf.mxu0
        %v4386 = vadd.f32 %v4225, %v4385
        %v4387 = vpop.f32.mrf.mxu0
        %v4388 = vpop.f32.mrf.mxu0
        %v4389 = vadd.f32 %v4228, %v4388
        %v4390 = vpop.f32.mrf.mxu0
        %4391 = vmatprep.mubr.bf16.mxu0 %v3170
        %4392 = vmatmul.mubr.bf16.gmra.mxu0 %v3090
        %v4393 = vpop.f32.mrf.mxu0
        %v4394 = vadd.f32 %v4233, %v4393
        %v4395 = vpop.f32.mrf.mxu0
        %v4396 = vpop.f32.mrf.mxu0
        %v4397 = vadd.f32 %v4236, %v4396
        %v4398 = vpop.f32.mrf.mxu0
        %4399 = vmatprep.mubr.bf16.mxu0 %v3171
        %4400 = vmatmul.mubr.bf16.gmra.mxu0 %v3091
        %v4401 = vpop.f32.mrf.mxu0
        %v4402 = vadd.f32 %v4241, %v4401
        %v4403 = vpop.f32.mrf.mxu0
        %v4404 = vpop.f32.mrf.mxu0
        %v4405 = vadd.f32 %v4244, %v4404
        %v4406 = vpop.f32.mrf.mxu0
        %4407 = vmatprep.mubr.bf16.mxu0 %v3172
        %4408 = vmatmul.mubr.bf16.gmra.mxu0 %v3092
        %v4409 = vpop.f32.mrf.mxu0
        %v4410 = vadd.f32 %v4249, %v4409
        %v4411 = vpop.f32.mrf.mxu0
        %v4412 = vpop.f32.mrf.mxu0
        %v4413 = vadd.f32 %v4252, %v4412
        %v4414 = vpop.f32.mrf.mxu0
        %4415 = vmatprep.mubr.bf16.mxu0 %v3173
        %4416 = vmatmul.mubr.bf16.gmra.mxu0 %v3093
        %v4417 = vpop.f32.mrf.mxu0
        %v4418 = vadd.f32 %v4257, %v4417
        %v4419 = vpop.f32.mrf.mxu0
        %v4420 = vpop.f32.mrf.mxu0
        %v4421 = vadd.f32 %v4260, %v4420
        %v4422 = vpop.f32.mrf.mxu0
        %4423 = vmatprep.mubr.bf16.mxu0 %v3174
        %4424 = vmatmul.mubr.bf16.gmra.mxu0 %v3094
        %v4425 = vpop.f32.mrf.mxu0
        %v4426 = vadd.f32 %v4265, %v4425
        %v4427 = vpop.f32.mrf.mxu0
        %v4428 = vpop.f32.mrf.mxu0
        %v4429 = vadd.f32 %v4268, %v4428
        %v4430 = vpop.f32.mrf.mxu0
        %4431 = vdwg.mxu0
        %4432 = vmatprep.subr.bf16.mxu0 0
        %4433 = vmatpush1.bf16.msra.mxu0 %v4005
        %4434 = vmatprep.subr.bf16.mxu0 0
        %4435 = vmatpush1.bf16.msra.mxu0 %v4004
        %4436 = vmatprep.subr.bf16.mxu0 0
        %4437 = vmatpush1.bf16.msra.mxu0 %v4003
        %4438 = vmatprep.subr.bf16.mxu0 0
        %4439 = vmatpush1.bf16.msra.mxu0 %v4002
        %4440 = vmatprep.subr.bf16.mxu0 0
        %4441 = vmatpush1.bf16.msra.mxu0 %v4001
        %4442 = vmatprep.subr.bf16.mxu0 0
        %4443 = vmatpush1.bf16.msra.mxu0 %v4000
        %4444 = vmatprep.subr.bf16.mxu0 0
        %4445 = vmatpush1.bf16.msra.mxu0 %v3999
        %4446 = vmatprep.subr.bf16.mxu0 0
        %4447 = vmatpush1.bf16.msra.mxu0 %v3998
        %4448 = vmatprep.subr.bf16.mxu0 0
        %4449 = vmatpush2.bf16.msra.mxu0 %v4013
        %4450 = vmatprep.subr.bf16.mxu0 0
        %4451 = vmatpush2.bf16.msra.mxu0 %v4012
        %4452 = vmatprep.subr.bf16.mxu0 0
        %4453 = vmatpush2.bf16.msra.mxu0 %v4011
        %4454 = vmatprep.subr.bf16.mxu0 0
        %4455 = vmatpush2.bf16.msra.mxu0 %v4010
        %4456 = vmatprep.subr.bf16.mxu0 0
        %4457 = vmatpush2.bf16.msra.mxu0 %v4009
        %4458 = vmatprep.subr.bf16.mxu0 0
        %4459 = vmatpush2.bf16.msra.mxu0 %v4008
        %4460 = vmatprep.subr.bf16.mxu0 0
        %4461 = vmatpush2.bf16.msra.mxu0 %v4007
        %4462 = vmatprep.subr.bf16.mxu0 0
        %4463 = vmatpush2.bf16.msra.mxu0 %v4006
        %4464 = vmatprep.mubr.bf16.mxu0 %v3287
        %4465 = vmatmul.mubr.bf16.gmra.mxu0 %v3223
        %v4466 = vpop.f32.mrf.mxu0
        %v4467 = vadd.f32 %v4306, %v4466
        %v4468 = vpop.f32.mrf.mxu0
        %v4469 = vpop.f32.mrf.mxu0
        %v4470 = vadd.f32 %v4309, %v4469
        %v4471 = vpop.f32.mrf.mxu0
        %4472 = vmatprep.mubr.bf16.mxu0 %v3288
        %4473 = vmatmul.mubr.bf16.gmra.mxu0 %v3224
        %v4474 = vpop.f32.mrf.mxu0
        %v4475 = vadd.f32 %v4314, %v4474
        %v4476 = vpop.f32.mrf.mxu0
        %v4477 = vpop.f32.mrf.mxu0
        %v4478 = vadd.f32 %v4317, %v4477
        %v4479 = vpop.f32.mrf.mxu0
        %4480 = vmatprep.mubr.bf16.mxu0 %v3289
        %4481 = vmatmul.mubr.bf16.gmra.mxu0 %v3225
        %v4482 = vpop.f32.mrf.mxu0
        %v4483 = vadd.f32 %v4322, %v4482
        %v4484 = vpop.f32.mrf.mxu0
        %v4485 = vpop.f32.mrf.mxu0
        %v4486 = vadd.f32 %v4325, %v4485
        %v4487 = vpop.f32.mrf.mxu0
        %4488 = vmatprep.mubr.bf16.mxu0 %v3290
        %4489 = vmatmul.mubr.bf16.gmra.mxu0 %v3226
        %v4490 = vpop.f32.mrf.mxu0
        %v4491 = vadd.f32 %v4330, %v4490
        %v4492 = vpop.f32.mrf.mxu0
        %v4493 = vpop.f32.mrf.mxu0
        %v4494 = vadd.f32 %v4333, %v4493
        %v4495 = vpop.f32.mrf.mxu0
        %4496 = vmatprep.mubr.bf16.mxu0 %v3291
        %4497 = vmatmul.mubr.bf16.gmra.mxu0 %v3227
        %v4498 = vpop.f32.mrf.mxu0
        %v4499 = vadd.f32 %v4338, %v4498
        %v4500 = vpop.f32.mrf.mxu0
        %v4501 = vpop.f32.mrf.mxu0
        %v4502 = vadd.f32 %v4341, %v4501
        %v4503 = vpop.f32.mrf.mxu0
        %4504 = vmatprep.mubr.bf16.mxu0 %v3292
        %4505 = vmatmul.mubr.bf16.gmra.mxu0 %v3228
        %v4506 = vpop.f32.mrf.mxu0
        %v4507 = vadd.f32 %v4346, %v4506
        %v4508 = vpop.f32.mrf.mxu0
        %v4509 = vpop.f32.mrf.mxu0
        %v4510 = vadd.f32 %v4349, %v4509
        %v4511 = vpop.f32.mrf.mxu0
        %4512 = vmatprep.mubr.bf16.mxu0 %v3293
        %4513 = vmatmul.mubr.bf16.gmra.mxu0 %v3229
        %v4514 = vpop.f32.mrf.mxu0
        %v4515 = vadd.f32 %v4354, %v4514
        %v4516 = vpop.f32.mrf.mxu0
        %v4517 = vpop.f32.mrf.mxu0
        %v4518 = vadd.f32 %v4357, %v4517
        %v4519 = vpop.f32.mrf.mxu0
        %4520 = vmatprep.mubr.bf16.mxu0 %v3294
        %4521 = vmatmul.mubr.bf16.gmra.mxu0 %v3230
        %v4522 = vpop.f32.mrf.mxu0
        %v4523 = vadd.f32 %v4362, %v4522
        %v4524 = vpop.f32.mrf.mxu0
        %v4525 = vpop.f32.mrf.mxu0
        %v4526 = vadd.f32 %v4365, %v4525
        %v4527 = vpop.f32.mrf.mxu0
        %4528 = vmatprep.mubr.bf16.mxu0 %v3295
        %4529 = vmatmul.mubr.bf16.gmra.mxu0 %v3231
        %v4530 = vpop.f32.mrf.mxu0
        %v4531 = vadd.f32 %v4370, %v4530
        %v4532 = vpop.f32.mrf.mxu0
        %v4533 = vpop.f32.mrf.mxu0
        %v4534 = vadd.f32 %v4373, %v4533
        %v4535 = vpop.f32.mrf.mxu0
        %4536 = vmatprep.mubr.bf16.mxu0 %v3296
        %4537 = vmatmul.mubr.bf16.gmra.mxu0 %v3232
        %v4538 = vpop.f32.mrf.mxu0
        %v4539 = vadd.f32 %v4378, %v4538
        %v4540 = vpop.f32.mrf.mxu0
        %v4541 = vpop.f32.mrf.mxu0
        %v4542 = vadd.f32 %v4381, %v4541
        %v4543 = vpop.f32.mrf.mxu0
        %4544 = vmatprep.mubr.bf16.mxu0 %v3297
        %4545 = vmatmul.mubr.bf16.gmra.mxu0 %v3233
        %v4546 = vpop.f32.mrf.mxu0
        %v4547 = vadd.f32 %v4386, %v4546
        %v4548 = vpop.f32.mrf.mxu0
        %v4549 = vpop.f32.mrf.mxu0
        %v4550 = vadd.f32 %v4389, %v4549
        %v4551 = vpop.f32.mrf.mxu0
        %4552 = vmatprep.mubr.bf16.mxu0 %v3298
        %4553 = vmatmul.mubr.bf16.gmra.mxu0 %v3234
        %v4554 = vpop.f32.mrf.mxu0
        %v4555 = vadd.f32 %v4394, %v4554
        %v4556 = vpop.f32.mrf.mxu0
        %v4557 = vpop.f32.mrf.mxu0
        %v4558 = vadd.f32 %v4397, %v4557
        %v4559 = vpop.f32.mrf.mxu0
        %4560 = vmatprep.mubr.bf16.mxu0 %v3299
        %4561 = vmatmul.mubr.bf16.gmra.mxu0 %v3235
        %v4562 = vpop.f32.mrf.mxu0
        %v4563 = vadd.f32 %v4402, %v4562
        %v4564 = vpop.f32.mrf.mxu0
        %v4565 = vpop.f32.mrf.mxu0
        %v4566 = vadd.f32 %v4405, %v4565
        %v4567 = vpop.f32.mrf.mxu0
        %4568 = vmatprep.mubr.bf16.mxu0 %v3300
        %4569 = vmatmul.mubr.bf16.gmra.mxu0 %v3236
        %v4570 = vpop.f32.mrf.mxu0
        %v4571 = vadd.f32 %v4410, %v4570
        %v4572 = vpop.f32.mrf.mxu0
        %v4573 = vpop.f32.mrf.mxu0
        %v4574 = vadd.f32 %v4413, %v4573
        %v4575 = vpop.f32.mrf.mxu0
        %4576 = vmatprep.mubr.bf16.mxu0 %v3301
        %4577 = vmatmul.mubr.bf16.gmra.mxu0 %v3237
        %v4578 = vpop.f32.mrf.mxu0
        %v4579 = vadd.f32 %v4418, %v4578
        %v4580 = vpop.f32.mrf.mxu0
        %v4581 = vpop.f32.mrf.mxu0
        %v4582 = vadd.f32 %v4421, %v4581
        %v4583 = vpop.f32.mrf.mxu0
        %4584 = vmatprep.mubr.bf16.mxu0 %v3302
        %4585 = vmatmul.mubr.bf16.gmra.mxu0 %v3238
        %v4586 = vpop.f32.mrf.mxu0
        %v4587 = vadd.f32 %v4426, %v4586
        %v4588 = vpop.f32.mrf.mxu0
        %v4589 = vpop.f32.mrf.mxu0
        %v4590 = vadd.f32 %v4429, %v4589
        %v4591 = vpop.f32.mrf.mxu0
        %4592 = vdwg.mxu0
        %4593 = vmatprep.subr.bf16.mxu0 0
        %4594 = vmatpush1.bf16.msra.mxu0 %v4021
        %4595 = vmatprep.subr.bf16.mxu0 0
        %4596 = vmatpush1.bf16.msra.mxu0 %v4020
        %4597 = vmatprep.subr.bf16.mxu0 0
        %4598 = vmatpush1.bf16.msra.mxu0 %v4019
        %4599 = vmatprep.subr.bf16.mxu0 0
        %4600 = vmatpush1.bf16.msra.mxu0 %v4018
        %4601 = vmatprep.subr.bf16.mxu0 0
        %4602 = vmatpush1.bf16.msra.mxu0 %v4017
        %4603 = vmatprep.subr.bf16.mxu0 0
        %4604 = vmatpush1.bf16.msra.mxu0 %v4016
        %4605 = vmatprep.subr.bf16.mxu0 0
        %4606 = vmatpush1.bf16.msra.mxu0 %v4015
        %4607 = vmatprep.subr.bf16.mxu0 0
        %4608 = vmatpush1.bf16.msra.mxu0 %v4014
        %4609 = vmatprep.subr.bf16.mxu0 0
        %4610 = vmatpush2.bf16.msra.mxu0 %v4029
        %4611 = vmatprep.subr.bf16.mxu0 0
        %4612 = vmatpush2.bf16.msra.mxu0 %v4028
        %4613 = vmatprep.subr.bf16.mxu0 0
        %4614 = vmatpush2.bf16.msra.mxu0 %v4027
        %4615 = vmatprep.subr.bf16.mxu0 0
        %4616 = vmatpush2.bf16.msra.mxu0 %v4026
        %4617 = vmatprep.subr.bf16.mxu0 0
        %4618 = vmatpush2.bf16.msra.mxu0 %v4025
        %4619 = vmatprep.subr.bf16.mxu0 0
        %4620 = vmatpush2.bf16.msra.mxu0 %v4024
        %4621 = vmatprep.subr.bf16.mxu0 0
        %4622 = vmatpush2.bf16.msra.mxu0 %v4023
        %4623 = vmatprep.subr.bf16.mxu0 0
        %4624 = vmatpush2.bf16.msra.mxu0 %v4022
        %4625 = vmatprep.mubr.bf16.mxu0 %v3431
        %4626 = vmatmul.mubr.bf16.gmra.mxu0 %v3367
        %v4627 = vpop.f32.mrf.mxu0
        %v4628 = vadd.f32 %v4467, %v4627
        %v4629 = vpop.f32.mrf.mxu0
        %v4630 = vpop.f32.mrf.mxu0
        %v4631 = vadd.f32 %v4470, %v4630
        %v4632 = vpop.f32.mrf.mxu0
        %4633 = vmatprep.mubr.bf16.mxu0 %v3432
        %4634 = vmatmul.mubr.bf16.gmra.mxu0 %v3368
        %v4635 = vpop.f32.mrf.mxu0
        %v4636 = vadd.f32 %v4475, %v4635
        %v4637 = vpop.f32.mrf.mxu0
        %v4638 = vpop.f32.mrf.mxu0
        %v4639 = vadd.f32 %v4478, %v4638
        %v4640 = vpop.f32.mrf.mxu0
        %4641 = vmatprep.mubr.bf16.mxu0 %v3433
        %4642 = vmatmul.mubr.bf16.gmra.mxu0 %v3369
        %v4643 = vpop.f32.mrf.mxu0
        %v4644 = vadd.f32 %v4483, %v4643
        %v4645 = vpop.f32.mrf.mxu0
        %v4646 = vpop.f32.mrf.mxu0
        %v4647 = vadd.f32 %v4486, %v4646
        %v4648 = vpop.f32.mrf.mxu0
        %4649 = vmatprep.mubr.bf16.mxu0 %v3434
        %4650 = vmatmul.mubr.bf16.gmra.mxu0 %v3370
        %v4651 = vpop.f32.mrf.mxu0
        %v4652 = vadd.f32 %v4491, %v4651
        %v4653 = vpop.f32.mrf.mxu0
        %v4654 = vpop.f32.mrf.mxu0
        %v4655 = vadd.f32 %v4494, %v4654
        %v4656 = vpop.f32.mrf.mxu0
        %4657 = vmatprep.mubr.bf16.mxu0 %v3435
        %4658 = vmatmul.mubr.bf16.gmra.mxu0 %v3371
        %v4659 = vpop.f32.mrf.mxu0
        %v4660 = vadd.f32 %v4499, %v4659
        %v4661 = vpop.f32.mrf.mxu0
        %v4662 = vpop.f32.mrf.mxu0
        %v4663 = vadd.f32 %v4502, %v4662
        %v4664 = vpop.f32.mrf.mxu0
        %4665 = vmatprep.mubr.bf16.mxu0 %v3436
        %4666 = vmatmul.mubr.bf16.gmra.mxu0 %v3372
        %v4667 = vpop.f32.mrf.mxu0
        %v4668 = vadd.f32 %v4507, %v4667
        %v4669 = vpop.f32.mrf.mxu0
        %v4670 = vpop.f32.mrf.mxu0
        %v4671 = vadd.f32 %v4510, %v4670
        %v4672 = vpop.f32.mrf.mxu0
        %4673 = vmatprep.mubr.bf16.mxu0 %v3437
        %4674 = vmatmul.mubr.bf16.gmra.mxu0 %v3373
        %v4675 = vpop.f32.mrf.mxu0
        %v4676 = vadd.f32 %v4515, %v4675
        %v4677 = vpop.f32.mrf.mxu0
        %v4678 = vpop.f32.mrf.mxu0
        %v4679 = vadd.f32 %v4518, %v4678
        %v4680 = vpop.f32.mrf.mxu0
        %4681 = vmatprep.mubr.bf16.mxu0 %v3438
        %4682 = vmatmul.mubr.bf16.gmra.mxu0 %v3374
        %v4683 = vpop.f32.mrf.mxu0
        %v4684 = vadd.f32 %v4523, %v4683
        %v4685 = vpop.f32.mrf.mxu0
        %v4686 = vpop.f32.mrf.mxu0
        %v4687 = vadd.f32 %v4526, %v4686
        %v4688 = vpop.f32.mrf.mxu0
        %4689 = vmatprep.mubr.bf16.mxu0 %v3439
        %4690 = vmatmul.mubr.bf16.gmra.mxu0 %v3375
        %v4691 = vpop.f32.mrf.mxu0
        %v4692 = vadd.f32 %v4531, %v4691
        %v4693 = vpop.f32.mrf.mxu0
        %v4694 = vpop.f32.mrf.mxu0
        %v4695 = vadd.f32 %v4534, %v4694
        %v4696 = vpop.f32.mrf.mxu0
        %4697 = vmatprep.mubr.bf16.mxu0 %v3440
        %4698 = vmatmul.mubr.bf16.gmra.mxu0 %v3376
        %v4699 = vpop.f32.mrf.mxu0
        %v4700 = vadd.f32 %v4539, %v4699
        %v4701 = vpop.f32.mrf.mxu0
        %v4702 = vpop.f32.mrf.mxu0
        %v4703 = vadd.f32 %v4542, %v4702
        %v4704 = vpop.f32.mrf.mxu0
        %4705 = vmatprep.mubr.bf16.mxu0 %v3441
        %4706 = vmatmul.mubr.bf16.gmra.mxu0 %v3377
        %v4707 = vpop.f32.mrf.mxu0
        %v4708 = vadd.f32 %v4547, %v4707
        %v4709 = vpop.f32.mrf.mxu0
        %v4710 = vpop.f32.mrf.mxu0
        %v4711 = vadd.f32 %v4550, %v4710
        %v4712 = vpop.f32.mrf.mxu0
        %4713 = vmatprep.mubr.bf16.mxu0 %v3442
        %4714 = vmatmul.mubr.bf16.gmra.mxu0 %v3378
        %v4715 = vpop.f32.mrf.mxu0
        %v4716 = vadd.f32 %v4555, %v4715
        %v4717 = vpop.f32.mrf.mxu0
        %v4718 = vpop.f32.mrf.mxu0
        %v4719 = vadd.f32 %v4558, %v4718
        %v4720 = vpop.f32.mrf.mxu0
        %4721 = vmatprep.mubr.bf16.mxu0 %v3443
        %4722 = vmatmul.mubr.bf16.gmra.mxu0 %v3379
        %v4723 = vpop.f32.mrf.mxu0
        %v4724 = vadd.f32 %v4563, %v4723
        %v4725 = vpop.f32.mrf.mxu0
        %v4726 = vpop.f32.mrf.mxu0
        %v4727 = vadd.f32 %v4566, %v4726
        %v4728 = vpop.f32.mrf.mxu0
        %4729 = vmatprep.mubr.bf16.mxu0 %v3444
        %4730 = vmatmul.mubr.bf16.gmra.mxu0 %v3380
        %v4731 = vpop.f32.mrf.mxu0
        %v4732 = vadd.f32 %v4571, %v4731
        %v4733 = vpop.f32.mrf.mxu0
        %v4734 = vpop.f32.mrf.mxu0
        %v4735 = vadd.f32 %v4574, %v4734
        %v4736 = vpop.f32.mrf.mxu0
        %4737 = vmatprep.mubr.bf16.mxu0 %v3445
        %4738 = vmatmul.mubr.bf16.gmra.mxu0 %v3381
        %v4739 = vpop.f32.mrf.mxu0
        %v4740 = vadd.f32 %v4579, %v4739
        %v4741 = vpop.f32.mrf.mxu0
        %v4742 = vpop.f32.mrf.mxu0
        %v4743 = vadd.f32 %v4582, %v4742
        %v4744 = vpop.f32.mrf.mxu0
        %4745 = vmatprep.mubr.bf16.mxu0 %v3446
        %4746 = vmatmul.mubr.bf16.gmra.mxu0 %v3382
        %v4747 = vpop.f32.mrf.mxu0
        %v4748 = vadd.f32 %v4587, %v4747
        %v4749 = vpop.f32.mrf.mxu0
        %v4750 = vpop.f32.mrf.mxu0
        %v4751 = vadd.f32 %v4590, %v4750
        %v4752 = vpop.f32.mrf.mxu0
        %4753 = vdwg.mxu0
        %4754 = vmatprep.subr.bf16.mxu0 0
        %4755 = vmatpush1.bf16.msra.mxu0 %v4037
        %4756 = vmatprep.subr.bf16.mxu0 0
        %4757 = vmatpush1.bf16.msra.mxu0 %v4036
        %4758 = vmatprep.subr.bf16.mxu0 0
        %4759 = vmatpush1.bf16.msra.mxu0 %v4035
        %4760 = vmatprep.subr.bf16.mxu0 0
        %4761 = vmatpush1.bf16.msra.mxu0 %v4034
        %4762 = vmatprep.subr.bf16.mxu0 0
        %4763 = vmatpush1.bf16.msra.mxu0 %v4033
        %4764 = vmatprep.subr.bf16.mxu0 0
        %4765 = vmatpush1.bf16.msra.mxu0 %v4032
        %4766 = vmatprep.subr.bf16.mxu0 0
        %4767 = vmatpush1.bf16.msra.mxu0 %v4031
        %4768 = vmatprep.subr.bf16.mxu0 0
        %4769 = vmatpush1.bf16.msra.mxu0 %v4030
        %4770 = vmatprep.subr.bf16.mxu0 0
        %4771 = vmatpush2.bf16.msra.mxu0 0
        %4772 = vmatprep.subr.bf16.mxu0 0
        %4773 = vmatpush2.bf16.msra.mxu0 0
        %4774 = vmatprep.subr.bf16.mxu0 0
        %4775 = vmatpush2.bf16.msra.mxu0 0
        %4776 = vmatprep.subr.bf16.mxu0 0
        %4777 = vmatpush2.bf16.msra.mxu0 0
        %4778 = vmatprep.subr.bf16.mxu0 0
        %4779 = vmatpush2.bf16.msra.mxu0 0
        %4780 = vmatprep.subr.bf16.mxu0 0
        %4781 = vmatpush2.bf16.msra.mxu0 0
        %4782 = vmatprep.subr.bf16.mxu0 0
        %4783 = vmatpush2.bf16.msra.mxu0 0
        %4784 = vmatprep.subr.bf16.mxu0 0
        %4785 = vmatpush2.bf16.msra.mxu0 0
        %4786 = vmatprep.mubr.bf16.mxu0 0
        %4787 = vmatmul.mubr.bf16.gmra.mxu0 %v3495
        %v4788 = vpop.f32.mrf.mxu0
        %v4789 = vadd.f32 %v4628, %v4788
        %v4790 = vpop.f32.mrf.mxu0
        %v4791 = vpop.f32.mrf.mxu0
        %v4792 = vadd.f32 %v4631, %v4791
        %v4793 = vpop.f32.mrf.mxu0
        %4794 = vmatprep.mubr.bf16.mxu0 0
        %4795 = vmatmul.mubr.bf16.gmra.mxu0 %v3496
        %v4796 = vpop.f32.mrf.mxu0
        %v4797 = vadd.f32 %v4636, %v4796
        %v4798 = vpop.f32.mrf.mxu0
        %v4799 = vpop.f32.mrf.mxu0
        %v4800 = vadd.f32 %v4639, %v4799
        %v4801 = vpop.f32.mrf.mxu0
        %4802 = vmatprep.mubr.bf16.mxu0 0
        %4803 = vmatmul.mubr.bf16.gmra.mxu0 %v3497
        %v4804 = vpop.f32.mrf.mxu0
        %v4805 = vadd.f32 %v4644, %v4804
        %v4806 = vpop.f32.mrf.mxu0
        %v4807 = vpop.f32.mrf.mxu0
        %v4808 = vadd.f32 %v4647, %v4807
        %v4809 = vpop.f32.mrf.mxu0
        %4810 = vmatprep.mubr.bf16.mxu0 0
        %4811 = vmatmul.mubr.bf16.gmra.mxu0 %v3498
        %v4812 = vpop.f32.mrf.mxu0
        %v4813 = vadd.f32 %v4652, %v4812
        %v4814 = vpop.f32.mrf.mxu0
        %v4815 = vpop.f32.mrf.mxu0
        %v4816 = vadd.f32 %v4655, %v4815
        %v4817 = vpop.f32.mrf.mxu0
        %4818 = vmatprep.mubr.bf16.mxu0 0
        %4819 = vmatmul.mubr.bf16.gmra.mxu0 %v3499
        %v4820 = vpop.f32.mrf.mxu0
        %v4821 = vadd.f32 %v4660, %v4820
        %v4822 = vpop.f32.mrf.mxu0
        %v4823 = vpop.f32.mrf.mxu0
        %v4824 = vadd.f32 %v4663, %v4823
        %v4825 = vpop.f32.mrf.mxu0
        %4826 = vmatprep.mubr.bf16.mxu0 0
        %4827 = vmatmul.mubr.bf16.gmra.mxu0 %v3500
        %v4828 = vpop.f32.mrf.mxu0
        %v4829 = vadd.f32 %v4668, %v4828
        %v4830 = vpop.f32.mrf.mxu0
        %v4831 = vpop.f32.mrf.mxu0
        %v4832 = vadd.f32 %v4671, %v4831
        %v4833 = vpop.f32.mrf.mxu0
        %4834 = vmatprep.mubr.bf16.mxu0 0
        %4835 = vmatmul.mubr.bf16.gmra.mxu0 %v3501
        %v4836 = vpop.f32.mrf.mxu0
        %v4837 = vadd.f32 %v4676, %v4836
        %v4838 = vpop.f32.mrf.mxu0
        %v4839 = vpop.f32.mrf.mxu0
        %v4840 = vadd.f32 %v4679, %v4839
        %v4841 = vpop.f32.mrf.mxu0
        %4842 = vmatprep.mubr.bf16.mxu0 0
        %4843 = vmatmul.mubr.bf16.gmra.mxu0 %v3502
        %v4844 = vpop.f32.mrf.mxu0
        %v4845 = vadd.f32 %v4684, %v4844
        %v4846 = vpop.f32.mrf.mxu0
        %v4847 = vpop.f32.mrf.mxu0
        %v4848 = vadd.f32 %v4687, %v4847
        %v4849 = vpop.f32.mrf.mxu0
        %4850 = vmatprep.mubr.bf16.mxu0 0
        %4851 = vmatmul.mubr.bf16.gmra.mxu0 %v3503
        %v4852 = vpop.f32.mrf.mxu0
        %v4853 = vadd.f32 %v4692, %v4852
        %v4854 = vpop.f32.mrf.mxu0
        %v4855 = vpop.f32.mrf.mxu0
        %v4856 = vadd.f32 %v4695, %v4855
        %v4857 = vpop.f32.mrf.mxu0
        %4858 = vmatprep.mubr.bf16.mxu0 0
        %4859 = vmatmul.mubr.bf16.gmra.mxu0 %v3504
        %v4860 = vpop.f32.mrf.mxu0
        %v4861 = vadd.f32 %v4700, %v4860
        %v4862 = vpop.f32.mrf.mxu0
        %v4863 = vpop.f32.mrf.mxu0
        %v4864 = vadd.f32 %v4703, %v4863
        %v4865 = vpop.f32.mrf.mxu0
        %4866 = vmatprep.mubr.bf16.mxu0 0
        %4867 = vmatmul.mubr.bf16.gmra.mxu0 %v3505
        %v4868 = vpop.f32.mrf.mxu0
        %v4869 = vadd.f32 %v4708, %v4868
        %v4870 = vpop.f32.mrf.mxu0
        %v4871 = vpop.f32.mrf.mxu0
        %v4872 = vadd.f32 %v4711, %v4871
        %v4873 = vpop.f32.mrf.mxu0
        %4874 = vmatprep.mubr.bf16.mxu0 0
        %4875 = vmatmul.mubr.bf16.gmra.mxu0 %v3506
        %v4876 = vpop.f32.mrf.mxu0
        %v4877 = vadd.f32 %v4716, %v4876
        %v4878 = vpop.f32.mrf.mxu0
        %v4879 = vpop.f32.mrf.mxu0
        %v4880 = vadd.f32 %v4719, %v4879
        %v4881 = vpop.f32.mrf.mxu0
        %4882 = vmatprep.mubr.bf16.mxu0 0
        %4883 = vmatmul.mubr.bf16.gmra.mxu0 %v3507
        %v4884 = vpop.f32.mrf.mxu0
        %v4885 = vadd.f32 %v4724, %v4884
        %v4886 = vpop.f32.mrf.mxu0
        %v4887 = vpop.f32.mrf.mxu0
        %v4888 = vadd.f32 %v4727, %v4887
        %v4889 = vpop.f32.mrf.mxu0
        %4890 = vmatprep.mubr.bf16.mxu0 0
        %4891 = vmatmul.mubr.bf16.gmra.mxu0 %v3508
        %v4892 = vpop.f32.mrf.mxu0
        %v4893 = vadd.f32 %v4732, %v4892
        %v4894 = vpop.f32.mrf.mxu0
        %v4895 = vpop.f32.mrf.mxu0
        %v4896 = vadd.f32 %v4735, %v4895
        %v4897 = vpop.f32.mrf.mxu0
        %4898 = vmatprep.mubr.bf16.mxu0 0
        %4899 = vmatmul.mubr.bf16.gmra.mxu0 %v3509
        %v4900 = vpop.f32.mrf.mxu0
        %v4901 = vadd.f32 %v4740, %v4900
        %v4902 = vpop.f32.mrf.mxu0
        %v4903 = vpop.f32.mrf.mxu0
        %v4904 = vadd.f32 %v4743, %v4903
        %v4905 = vpop.f32.mrf.mxu0
        %4906 = vmatprep.mubr.bf16.mxu0 0
        %4907 = vmatmul.mubr.bf16.gmra.mxu0 %v3510
        %v4908 = vpop.f32.mrf.mxu0
        %v4909 = vadd.f32 %v4748, %v4908
        %v4910 = vpop.f32.mrf.mxu0
        %v4911 = vpop.f32.mrf.mxu0
        %v4912 = vadd.f32 %v4751, %v4911
        %v4913 = vpop.f32.mrf.mxu0
        %4914 = vdwg.mxu0
        %vm4915 = vcmp.ge.f32.partialorder %v4789, 0.0
        %vm4916 = vcmp.ge.f32.partialorder %v4792, 0.0
        %vm4917 = vcmp.ge.f32.partialorder %v4797, 0.0
        %vm4918 = vcmp.ge.f32.partialorder %v4800, 0.0
        %vm4919 = vcmp.ge.f32.partialorder %v4805, 0.0
        %vm4920 = vcmp.ge.f32.partialorder %v4808, 0.0
        %vm4921 = vcmp.ge.f32.partialorder %v4813, 0.0
        %vm4922 = vcmp.ge.f32.partialorder %v4816, 0.0
        %vm4923 = vcmp.ge.f32.partialorder %v4821, 0.0
        %vm4924 = vcmp.ge.f32.partialorder %v4824, 0.0
        %vm4925 = vcmp.ge.f32.partialorder %v4829, 0.0
        %vm4926 = vcmp.ge.f32.partialorder %v4832, 0.0
        %vm4927 = vcmp.ge.f32.partialorder %v4837, 0.0
        %vm4928 = vcmp.ge.f32.partialorder %v4840, 0.0
        %vm4929 = vcmp.ge.f32.partialorder %v4845, 0.0
        %vm4930 = vcmp.ge.f32.partialorder %v4848, 0.0
        %vm4931 = vcmp.ge.f32.partialorder %v4853, 0.0
        %vm4932 = vcmp.ge.f32.partialorder %v4856, 0.0
        %vm4933 = vcmp.ge.f32.partialorder %v4861, 0.0
        %vm4934 = vcmp.ge.f32.partialorder %v4864, 0.0
        %vm4935 = vcmp.ge.f32.partialorder %v4869, 0.0
        %vm4936 = vcmp.ge.f32.partialorder %v4872, 0.0
        %vm4937 = vcmp.ge.f32.partialorder %v4877, 0.0
        %vm4938 = vcmp.ge.f32.partialorder %v4880, 0.0
        %vm4939 = vcmp.ge.f32.partialorder %v4885, 0.0
        %vm4940 = vcmp.ge.f32.partialorder %v4888, 0.0
        %vm4941 = vcmp.ge.f32.partialorder %v4893, 0.0
        %vm4942 = vcmp.ge.f32.partialorder %v4896, 0.0
        %vm4943 = vcmp.ge.f32.partialorder %v4901, 0.0
        %vm4944 = vcmp.ge.f32.partialorder %v4904, 0.0
        %vm4945 = vcmp.ge.f32.partialorder %v4909, 0.0
        %vm4946 = vcmp.ge.f32.partialorder %v4912, 0.0
        %v4947 = vstv %s447
        %v4948 = vmul.f32 %v4947, %v4789
        %v4949 = vmul.f32 %v4947, %v4792
        %v4950 = vmul.f32 %v4947, %v4797
        %v4951 = vmul.f32 %v4947, %v4800
        %v4952 = vmul.f32 %v4947, %v4805
        %v4953 = vmul.f32 %v4947, %v4808
        %v4954 = vmul.f32 %v4947, %v4813
        %v4955 = vmul.f32 %v4947, %v4816
        %v4956 = vmul.f32 %v4947, %v4821
        %v4957 = vmul.f32 %v4947, %v4824
        %v4958 = vmul.f32 %v4947, %v4829
        %v4959 = vmul.f32 %v4947, %v4832
        %v4960 = vmul.f32 %v4947, %v4837
        %v4961 = vmul.f32 %v4947, %v4840
        %v4962 = vmul.f32 %v4947, %v4845
        %v4963 = vmul.f32 %v4947, %v4848
        %v4964 = vmul.f32 %v4947, %v4853
        %v4965 = vmul.f32 %v4947, %v4856
        %v4966 = vmul.f32 %v4947, %v4861
        %v4967 = vmul.f32 %v4947, %v4864
        %v4968 = vmul.f32 %v4947, %v4869
        %v4969 = vmul.f32 %v4947, %v4872
        %v4970 = vmul.f32 %v4947, %v4877
        %v4971 = vmul.f32 %v4947, %v4880
        %v4972 = vmul.f32 %v4947, %v4885
        %v4973 = vmul.f32 %v4947, %v4888
        %v4974 = vmul.f32 %v4947, %v4893
        %v4975 = vmul.f32 %v4947, %v4896
        %v4976 = vmul.f32 %v4947, %v4901
        %v4977 = vmul.f32 %v4947, %v4904
        %v4978 = vmul.f32 %v4947, %v4909
        %v4979 = vmul.f32 %v4947, %v4912
        %v4980 = vsel %vm4915, %v4789, %v4948
        %v4981 = vsel %vm4916, %v4792, %v4949
        %v4982 = vsel %vm4917, %v4797, %v4950
        %v4983 = vsel %vm4918, %v4800, %v4951
        %v4984 = vsel %vm4919, %v4805, %v4952
        %v4985 = vsel %vm4920, %v4808, %v4953
        %v4986 = vsel %vm4921, %v4813, %v4954
        %v4987 = vsel %vm4922, %v4816, %v4955
        %v4988 = vsel %vm4923, %v4821, %v4956
        %v4989 = vsel %vm4924, %v4824, %v4957
        %v4990 = vsel %vm4925, %v4829, %v4958
        %v4991 = vsel %vm4926, %v4832, %v4959
        %v4992 = vsel %vm4927, %v4837, %v4960
        %v4993 = vsel %vm4928, %v4840, %v4961
        %v4994 = vsel %vm4929, %v4845, %v4962
        %v4995 = vsel %vm4930, %v4848, %v4963
        %v4996 = vsel %vm4931, %v4853, %v4964
        %v4997 = vsel %vm4932, %v4856, %v4965
        %v4998 = vsel %vm4933, %v4861, %v4966
        %v4999 = vsel %vm4934, %v4864, %v4967
        %v5000 = vsel %vm4935, %v4869, %v4968
        %v5001 = vsel %vm4936, %v4872, %v4969
        %v5002 = vsel %vm4937, %v4877, %v4970
        %v5003 = vsel %vm4938, %v4880, %v4971
        %v5004 = vsel %vm4939, %v4885, %v4972
        %v5005 = vsel %vm4940, %v4888, %v4973
        %v5006 = vsel %vm4941, %v4893, %v4974
        %v5007 = vsel %vm4942, %v4896, %v4975
        %v5008 = vsel %vm4943, %v4901, %v4976
        %v5009 = vsel %vm4944, %v4904, %v4977
        %v5010 = vsel %vm4945, %v4909, %v4978
        %v5011 = vsel %vm4946, %v4912, %v4979
        %v5012 = vpack.c.bf16 %v4981, %v4980
        %v5013 = vpack.c.bf16 %v4983, %v4982
        %v5014 = vpack.c.bf16 %v4985, %v4984
        %v5015 = vpack.c.bf16 %v4987, %v4986
        %v5016 = vpack.c.bf16 %v4989, %v4988
        %v5017 = vpack.c.bf16 %v4991, %v4990
        %v5018 = vpack.c.bf16 %v4993, %v4992
        %v5019 = vpack.c.bf16 %v4995, %v4994
        %v5020 = vpack.c.bf16 %v4997, %v4996
        %v5021 = vpack.c.bf16 %v4999, %v4998
        %v5022 = vpack.c.bf16 %v5001, %v5000
        %v5023 = vpack.c.bf16 %v5003, %v5002
        %v5024 = vpack.c.bf16 %v5005, %v5004
        %v5025 = vpack.c.bf16 %v5007, %v5006
        %v5026 = vpack.c.bf16 %v5009, %v5008
        %v5027 = vpack.c.bf16 %v5011, %v5010
        %v5044 = vunpack.c.l.b16 %v5012
        %v5045 = vunpack.c.h.b16 %v5012
        %v5046 = vunpack.c.l.b16 %v5013
        %v5047 = vunpack.c.h.b16 %v5013
        %v5048 = vunpack.c.l.b16 %v5014
        %v5049 = vunpack.c.h.b16 %v5014
        %v5050 = vunpack.c.l.b16 %v5015
        %v5051 = vunpack.c.h.b16 %v5015
        %v5052 = vunpack.c.l.b16 %v5016
        %v5053 = vunpack.c.h.b16 %v5016
        %v5054 = vunpack.c.l.b16 %v5017
        %v5055 = vunpack.c.h.b16 %v5017
        %v5056 = vunpack.c.l.b16 %v5018
        %v5057 = vunpack.c.h.b16 %v5018
        %v5058 = vunpack.c.l.b16 %v5019
        %v5059 = vunpack.c.h.b16 %v5019
        %v5060 = vunpack.c.l.b16 %v5020
        %v5061 = vunpack.c.h.b16 %v5020
        %v5062 = vunpack.c.l.b16 %v5021
        %v5063 = vunpack.c.h.b16 %v5021
        %v5064 = vunpack.c.l.b16 %v5022
        %v5065 = vunpack.c.h.b16 %v5022
        %v5066 = vunpack.c.l.b16 %v5023
        %v5067 = vunpack.c.h.b16 %v5023
        %v5068 = vunpack.c.l.b16 %v5024
        %v5069 = vunpack.c.h.b16 %v5024
        %v5070 = vunpack.c.l.b16 %v5025
        %v5071 = vunpack.c.h.b16 %v5025
        %v5072 = vunpack.c.l.b16 %v5026
        %v5073 = vunpack.c.h.b16 %v5026
        %v5074 = vunpack.c.l.b16 %v5027
        %v5075 = vunpack.c.h.b16 %v5027
        %v5076 = vpack.c.b16 %v5044, %v5044
        %v5077 = vpack.c.b16 %v5045, %v5045
        %v5078 = vpack.c.b16 %v5046, %v5046
        %v5079 = vpack.c.b16 %v5047, %v5047
        %v5080 = vpack.c.b16 %v5048, %v5048
        %v5081 = vpack.c.b16 %v5049, %v5049
        %v5082 = vpack.c.b16 %v5050, %v5050
        %v5083 = vpack.c.b16 %v5051, %v5051
        %v5084 = vpack.c.b16 %v5052, %v5052
        %v5085 = vpack.c.b16 %v5053, %v5053
        %v5086 = vpack.c.b16 %v5054, %v5054
        %v5087 = vpack.c.b16 %v5055, %v5055
        %v5088 = vpack.c.b16 %v5056, %v5056
        %v5089 = vpack.c.b16 %v5057, %v5057
        %v5090 = vpack.c.b16 %v5058, %v5058
        %v5091 = vpack.c.b16 %v5059, %v5059
        %v5092 = vpack.c.b16 %v5060, %v5060
        %v5093 = vpack.c.b16 %v5061, %v5061
        %v5094 = vpack.c.b16 %v5062, %v5062
        %v5095 = vpack.c.b16 %v5063, %v5063
        %v5096 = vpack.c.b16 %v5064, %v5064
        %v5097 = vpack.c.b16 %v5065, %v5065
        %v5098 = vpack.c.b16 %v5066, %v5066
        %v5099 = vpack.c.b16 %v5067, %v5067
        %v5100 = vpack.c.b16 %v5068, %v5068
        %v5101 = vpack.c.b16 %v5069, %v5069
        %v5102 = vpack.c.b16 %v5070, %v5070
        %v5103 = vpack.c.b16 %v5071, %v5071
        %v5104 = vpack.c.b16 %v5072, %v5072
        %v5105 = vpack.c.b16 %v5073, %v5073
        %v5106 = vpack.c.b16 %v5074, %v5074
        %v5107 = vpack.c.b16 %v5075, %v5075
        %v5109 = vshrl.u32 %v5076, 16
        %v5111 = vrot.slane %v5109, 7
        %v5112 = vshll.u32 %v5076, 16
        %v5114 = vor.u32 %v5111, %v5112
        %v5115 = vrot.slane %v5111, 4
        %v5117 = vshrl.u32 %v5077, 16
        %v5119 = vrot.slane %v5117, 7
        %v5120 = vshll.u32 %v5077, 16
        %v5122 = vor.u32 %v5119, %v5120
        %v5123 = vsel %vm633, %v5115, %v5122
        %v5124 = vrot.slane %v5119, 4
        %v5126 = vshrl.u32 %v5078, 16
        %v5128 = vrot.slane %v5126, 7
        %v5129 = vshll.u32 %v5078, 16
        %v5131 = vor.u32 %v5128, %v5129
        %v5132 = vrot.slane %v5128, 4
        %v5134 = vshrl.u32 %v5079, 16
        %v5136 = vrot.slane %v5134, 7
        %v5137 = vshll.u32 %v5079, 16
        %v5139 = vor.u32 %v5136, %v5137
        %v5140 = vsel %vm633, %v5132, %v5139
        %v5141 = vrot.slane %v5136, 4
        %v5143 = vshrl.u32 %v5080, 16
        %v5145 = vrot.slane %v5143, 7
        %v5146 = vshll.u32 %v5080, 16
        %v5148 = vor.u32 %v5145, %v5146
        %v5149 = vrot.slane %v5145, 4
        %v5151 = vshrl.u32 %v5081, 16
        %v5153 = vrot.slane %v5151, 7
        %v5154 = vshll.u32 %v5081, 16
        %v5156 = vor.u32 %v5153, %v5154
        %v5157 = vsel %vm633, %v5149, %v5156
        %v5158 = vrot.slane %v5153, 4
        %v5160 = vshrl.u32 %v5082, 16
        %v5162 = vrot.slane %v5160, 7
        %v5163 = vshll.u32 %v5082, 16
        %v5165 = vor.u32 %v5162, %v5163
        %v5166 = vrot.slane %v5162, 4
        %v5168 = vshrl.u32 %v5083, 16
        %v5170 = vrot.slane %v5168, 7
        %v5171 = vshll.u32 %v5083, 16
        %v5173 = vor.u32 %v5170, %v5171
        %v5174 = vsel %vm633, %v5166, %v5173
        %v5175 = vrot.slane %v5170, 4
        %v5177 = vshrl.u32 %v5084, 16
        %v5179 = vrot.slane %v5177, 7
        %v5180 = vshll.u32 %v5084, 16
        %v5182 = vor.u32 %v5179, %v5180
        %v5183 = vrot.slane %v5179, 4
        %v5185 = vshrl.u32 %v5085, 16
        %v5187 = vrot.slane %v5185, 7
        %v5188 = vshll.u32 %v5085, 16
        %v5190 = vor.u32 %v5187, %v5188
        %v5191 = vsel %vm633, %v5183, %v5190
        %v5192 = vrot.slane %v5187, 4
        %v5194 = vshrl.u32 %v5086, 16
        %v5196 = vrot.slane %v5194, 7
        %v5197 = vshll.u32 %v5086, 16
        %v5199 = vor.u32 %v5196, %v5197
        %v5200 = vrot.slane %v5196, 4
        %v5202 = vshrl.u32 %v5087, 16
        %v5204 = vrot.slane %v5202, 7
        %v5205 = vshll.u32 %v5087, 16
        %v5207 = vor.u32 %v5204, %v5205
        %v5208 = vsel %vm633, %v5200, %v5207
        %v5209 = vrot.slane %v5204, 4
        %v5211 = vshrl.u32 %v5088, 16
        %v5213 = vrot.slane %v5211, 7
        %v5214 = vshll.u32 %v5088, 16
        %v5216 = vor.u32 %v5213, %v5214
        %v5217 = vrot.slane %v5213, 4
        %v5219 = vshrl.u32 %v5089, 16
        %v5221 = vrot.slane %v5219, 7
        %v5222 = vshll.u32 %v5089, 16
        %v5224 = vor.u32 %v5221, %v5222
        %v5225 = vsel %vm633, %v5217, %v5224
        %v5226 = vrot.slane %v5221, 4
        %v5228 = vshrl.u32 %v5090, 16
        %v5230 = vrot.slane %v5228, 7
        %v5231 = vshll.u32 %v5090, 16
        %v5233 = vor.u32 %v5230, %v5231
        %v5234 = vrot.slane %v5230, 4
        %v5236 = vshrl.u32 %v5091, 16
        %v5238 = vrot.slane %v5236, 7
        %v5239 = vshll.u32 %v5091, 16
        %v5241 = vor.u32 %v5238, %v5239
        %v5242 = vsel %vm633, %v5234, %v5241
        %v5243 = vrot.slane %v5238, 4
        %v5245 = vshrl.u32 %v5092, 16
        %v5247 = vrot.slane %v5245, 7
        %v5248 = vshll.u32 %v5092, 16
        %v5250 = vor.u32 %v5247, %v5248
        %v5251 = vrot.slane %v5247, 4
        %v5253 = vshrl.u32 %v5093, 16
        %v5255 = vrot.slane %v5253, 7
        %v5256 = vshll.u32 %v5093, 16
        %v5258 = vor.u32 %v5255, %v5256
        %v5259 = vsel %vm633, %v5251, %v5258
        %v5260 = vrot.slane %v5255, 4
        %v5262 = vshrl.u32 %v5094, 16
        %v5264 = vrot.slane %v5262, 7
        %v5265 = vshll.u32 %v5094, 16
        %v5267 = vor.u32 %v5264, %v5265
        %v5268 = vrot.slane %v5264, 4
        %v5270 = vshrl.u32 %v5095, 16
        %v5272 = vrot.slane %v5270, 7
        %v5273 = vshll.u32 %v5095, 16
        %v5275 = vor.u32 %v5272, %v5273
        %v5276 = vsel %vm633, %v5268, %v5275
        %v5277 = vrot.slane %v5272, 4
        %v5279 = vshrl.u32 %v5096, 16
        %v5281 = vrot.slane %v5279, 7
        %v5282 = vshll.u32 %v5096, 16
        %v5284 = vor.u32 %v5281, %v5282
        %v5285 = vrot.slane %v5281, 4
        %v5287 = vshrl.u32 %v5097, 16
        %v5289 = vrot.slane %v5287, 7
        %v5290 = vshll.u32 %v5097, 16
        %v5292 = vor.u32 %v5289, %v5290
        %v5293 = vsel %vm633, %v5285, %v5292
        %v5294 = vrot.slane %v5289, 4
        %v5296 = vshrl.u32 %v5098, 16
        %v5298 = vrot.slane %v5296, 7
        %v5299 = vshll.u32 %v5098, 16
        %v5301 = vor.u32 %v5298, %v5299
        %v5302 = vrot.slane %v5298, 4
        %v5304 = vshrl.u32 %v5099, 16
        %v5306 = vrot.slane %v5304, 7
        %v5307 = vshll.u32 %v5099, 16
        %v5309 = vor.u32 %v5306, %v5307
        %v5310 = vsel %vm633, %v5302, %v5309
        %v5311 = vrot.slane %v5306, 4
        %v5313 = vshrl.u32 %v5100, 16
        %v5315 = vrot.slane %v5313, 7
        %v5316 = vshll.u32 %v5100, 16
        %v5318 = vor.u32 %v5315, %v5316
        %v5319 = vrot.slane %v5315, 4
        %v5321 = vshrl.u32 %v5101, 16
        %v5323 = vrot.slane %v5321, 7
        %v5324 = vshll.u32 %v5101, 16
        %v5326 = vor.u32 %v5323, %v5324
        %v5327 = vsel %vm633, %v5319, %v5326
        %v5328 = vrot.slane %v5323, 4
        %v5330 = vshrl.u32 %v5102, 16
        %v5332 = vrot.slane %v5330, 7
        %v5333 = vshll.u32 %v5102, 16
        %v5335 = vor.u32 %v5332, %v5333
        %v5336 = vrot.slane %v5332, 4
        %v5338 = vshrl.u32 %v5103, 16
        %v5340 = vrot.slane %v5338, 7
        %v5341 = vshll.u32 %v5103, 16
        %v5343 = vor.u32 %v5340, %v5341
        %v5344 = vsel %vm633, %v5336, %v5343
        %v5345 = vrot.slane %v5340, 4
        %v5347 = vshrl.u32 %v5104, 16
        %v5349 = vrot.slane %v5347, 7
        %v5350 = vshll.u32 %v5104, 16
        %v5352 = vor.u32 %v5349, %v5350
        %v5353 = vrot.slane %v5349, 4
        %v5355 = vshrl.u32 %v5105, 16
        %v5357 = vrot.slane %v5355, 7
        %v5358 = vshll.u32 %v5105, 16
        %v5360 = vor.u32 %v5357, %v5358
        %v5361 = vsel %vm633, %v5353, %v5360
        %v5362 = vrot.slane %v5357, 4
        %v5364 = vshrl.u32 %v5106, 16
        %v5366 = vrot.slane %v5364, 7
        %v5367 = vshll.u32 %v5106, 16
        %v5369 = vor.u32 %v5366, %v5367
        %v5370 = vrot.slane %v5366, 4
        %v5372 = vshrl.u32 %v5107, 16
        %v5374 = vrot.slane %v5372, 7
        %v5375 = vshll.u32 %v5107, 16
        %v5377 = vor.u32 %v5374, %v5375
        %v5378 = vsel %vm633, %v5370, %v5377
        %v5379 = vrot.slane %v5374, 4
        %v5428 = vsel %vm957, %v5114, %v1686
        %5429 = vst [vmem:[%s954] sm:$0xf] %v5428
        %5430 = vst [vmem:[%s954 + $0x4] sm:$0xf] %v5123
        %v5431 = vld [vmem:[%s954 + $0x8] sm:$0x1]
        %v5432 = vsel %vm963, %v5124, %v5431
        %5433 = vst [vmem:[%s954 + $0x8] sm:$0x1] %v5432
        %v5434 = vld [vmem:[%s954 + $0xc] sm:$0xf]
        %v5435 = vsel %vm957, %v5131, %v5434
        %5436 = vst [vmem:[%s954 + $0xc] sm:$0xf] %v5435
        %5437 = vst [vmem:[%s954 + $0x10] sm:$0xf] %v5140
        %v5438 = vld [vmem:[%s954 + $0x14] sm:$0x1]
        %v5439 = vsel %vm963, %v5141, %v5438
        %5440 = vst [vmem:[%s954 + $0x14] sm:$0x1] %v5439
        %v5441 = vld [vmem:[%s954 + $0x18] sm:$0xf]
        %v5442 = vsel %vm957, %v5148, %v5441
        %5443 = vst [vmem:[%s954 + $0x18] sm:$0xf] %v5442
        %5444 = vst [vmem:[%s954 + $0x1c] sm:$0xf] %v5157
        %v5445 = vld [vmem:[%s954 + $0x20] sm:$0x1]
        %v5446 = vsel %vm963, %v5158, %v5445
        %5447 = vst [vmem:[%s954 + $0x20] sm:$0x1] %v5446
        %v5448 = vld [vmem:[%s954 + $0x24] sm:$0xf]
        %v5449 = vsel %vm957, %v5165, %v5448
        %5450 = vst [vmem:[%s954 + $0x24] sm:$0xf] %v5449
        %5451 = vst [vmem:[%s954 + $0x28] sm:$0xf] %v5174
        %v5452 = vld [vmem:[%s954 + $0x2c] sm:$0x1]
        %v5453 = vsel %vm963, %v5175, %v5452
        %5454 = vst [vmem:[%s954 + $0x2c] sm:$0x1] %v5453
        %v5455 = vld [vmem:[%s954 + $0x30] sm:$0xf]
        %v5456 = vsel %vm957, %v5182, %v5455
        %5457 = vst [vmem:[%s954 + $0x30] sm:$0xf] %v5456
        %5458 = vst [vmem:[%s954 + $0x34] sm:$0xf] %v5191
        %v5459 = vld [vmem:[%s954 + $0x38] sm:$0x1]
        %v5460 = vsel %vm963, %v5192, %v5459
        %5461 = vst [vmem:[%s954 + $0x38] sm:$0x1] %v5460
        %v5462 = vld [vmem:[%s954 + $0x3c] sm:$0xf]
        %v5463 = vsel %vm957, %v5199, %v5462
        %5464 = vst [vmem:[%s954 + $0x3c] sm:$0xf] %v5463
        %5465 = vst [vmem:[%s954 + $0x40] sm:$0xf] %v5208
        %v5466 = vld [vmem:[%s954 + $0x44] sm:$0x1]
        %v5467 = vsel %vm963, %v5209, %v5466
        %5468 = vst [vmem:[%s954 + $0x44] sm:$0x1] %v5467
        %v5469 = vld [vmem:[%s954 + $0x48] sm:$0xf]
        %v5470 = vsel %vm957, %v5216, %v5469
        %5471 = vst [vmem:[%s954 + $0x48] sm:$0xf] %v5470
        %5472 = vst [vmem:[%s954 + $0x4c] sm:$0xf] %v5225
        %v5473 = vld [vmem:[%s954 + $0x50] sm:$0x1]
        %v5474 = vsel %vm963, %v5226, %v5473
        %5475 = vst [vmem:[%s954 + $0x50] sm:$0x1] %v5474
        %v5476 = vld [vmem:[%s954 + $0x54] sm:$0xf]
        %v5477 = vsel %vm957, %v5233, %v5476
        %5478 = vst [vmem:[%s954 + $0x54] sm:$0xf] %v5477
        %5479 = vst [vmem:[%s954 + $0x58] sm:$0xf] %v5242
        %v5480 = vld [vmem:[%s954 + $0x5c] sm:$0x1]
        %v5481 = vsel %vm963, %v5243, %v5480
        %5482 = vst [vmem:[%s954 + $0x5c] sm:$0x1] %v5481
        %v5483 = vld [vmem:[%s954 + $0x60] sm:$0xf]
        %v5484 = vsel %vm957, %v5250, %v5483
        %5485 = vst [vmem:[%s954 + $0x60] sm:$0xf] %v5484
        %5486 = vst [vmem:[%s954 + $0x64] sm:$0xf] %v5259
        %v5487 = vld [vmem:[%s954 + $0x68] sm:$0x1]
        %v5488 = vsel %vm963, %v5260, %v5487
        %5489 = vst [vmem:[%s954 + $0x68] sm:$0x1] %v5488
        %v5490 = vld [vmem:[%s954 + $0x6c] sm:$0xf]
        %v5491 = vsel %vm957, %v5267, %v5490
        %5492 = vst [vmem:[%s954 + $0x6c] sm:$0xf] %v5491
        %5493 = vst [vmem:[%s954 + $0x70] sm:$0xf] %v5276
        %v5494 = vld [vmem:[%s954 + $0x74] sm:$0x1]
        %v5495 = vsel %vm963, %v5277, %v5494
        %5496 = vst [vmem:[%s954 + $0x74] sm:$0x1] %v5495
        %v5497 = vld [vmem:[%s954 + $0x78] sm:$0xf]
        %v5498 = vsel %vm957, %v5284, %v5497
        %5499 = vst [vmem:[%s954 + $0x78] sm:$0xf] %v5498
        %5500 = vst [vmem:[%s954 + $0x7c] sm:$0xf] %v5293
        %v5501 = vld [vmem:[%s954 + $0x80] sm:$0x1]
        %v5502 = vsel %vm963, %v5294, %v5501
        %5503 = vst [vmem:[%s954 + $0x80] sm:$0x1] %v5502
        %v5504 = vld [vmem:[%s954 + $0x84] sm:$0xf]
        %v5505 = vsel %vm957, %v5301, %v5504
        %5506 = vst [vmem:[%s954 + $0x84] sm:$0xf] %v5505
        %5507 = vst [vmem:[%s954 + $0x88] sm:$0xf] %v5310
        %v5508 = vld [vmem:[%s954 + $0x8c] sm:$0x1]
        %v5509 = vsel %vm963, %v5311, %v5508
        %5510 = vst [vmem:[%s954 + $0x8c] sm:$0x1] %v5509
        %v5511 = vld [vmem:[%s954 + $0x90] sm:$0xf]
        %v5512 = vsel %vm957, %v5318, %v5511
        %5513 = vst [vmem:[%s954 + $0x90] sm:$0xf] %v5512
        %5514 = vst [vmem:[%s954 + $0x94] sm:$0xf] %v5327
        %v5515 = vld [vmem:[%s954 + $0x98] sm:$0x1]
        %v5516 = vsel %vm963, %v5328, %v5515
        %5517 = vst [vmem:[%s954 + $0x98] sm:$0x1] %v5516
        %v5518 = vld [vmem:[%s954 + $0x9c] sm:$0xf]
        %v5519 = vsel %vm957, %v5335, %v5518
        %5520 = vst [vmem:[%s954 + $0x9c] sm:$0xf] %v5519
        %5521 = vst [vmem:[%s954 + $0xa0] sm:$0xf] %v5344
        %v5522 = vld [vmem:[%s954 + $0xa4] sm:$0x1]
        %v5523 = vsel %vm963, %v5345, %v5522
        %5524 = vst [vmem:[%s954 + $0xa4] sm:$0x1] %v5523
        %v5525 = vld [vmem:[%s954 + $0xa8] sm:$0xf]
        %v5526 = vsel %vm957, %v5352, %v5525
        %5527 = vst [vmem:[%s954 + $0xa8] sm:$0xf] %v5526
        %5528 = vst [vmem:[%s954 + $0xac] sm:$0xf] %v5361
        %v5529 = vld [vmem:[%s954 + $0xb0] sm:$0x1]
        %v5530 = vsel %vm963, %v5362, %v5529
        %5531 = vst [vmem:[%s954 + $0xb0] sm:$0x1] %v5530
        %v5532 = vld [vmem:[%s954 + $0xb4] sm:$0xf]
        %v5533 = vsel %vm957, %v5369, %v5532
        %5534 = vst [vmem:[%s954 + $0xb4] sm:$0xf] %v5533
        %5535 = vst [vmem:[%s954 + $0xb8] sm:$0xf] %v5378
        %v5536 = vld [vmem:[%s954 + $0xbc] sm:$0x1]
        %v5537 = vsel %vm963, %v5379, %v5536
        %5538 = vst [vmem:[%s954 + $0xbc] sm:$0x1] %v5537
        %v5539 = vld [vmem:[#allocation2] sm:$0xf]
        %v5540 = vld [vmem:[#allocation2 + $0x4] sm:$0xf]
        %v5541 = vld [vmem:[#allocation2 + $0xc] sm:$0xf]
        %v5542 = vld [vmem:[#allocation2 + $0x10] sm:$0xf]
        %v5543 = vld [vmem:[#allocation2 + $0x18] sm:$0xf]
        %v5544 = vld [vmem:[#allocation2 + $0x1c] sm:$0xf]
        %v5545 = vld [vmem:[#allocation2 + $0x24] sm:$0xf]
        %v5546 = vld [vmem:[#allocation2 + $0x28] sm:$0xf]
        %v5547 = vld [vmem:[#allocation2 + $0x30] sm:$0xf]
        %v5548 = vld [vmem:[#allocation2 + $0x34] sm:$0xf]
        %v5549 = vld [vmem:[#allocation2 + $0x3c] sm:$0xf]
        %v5550 = vld [vmem:[#allocation2 + $0x40] sm:$0xf]
        %v5551 = vld [vmem:[#allocation2 + $0x48] sm:$0xf]
        %v5552 = vld [vmem:[#allocation2 + $0x4c] sm:$0xf]
        %v5553 = vld [vmem:[#allocation2 + $0x54] sm:$0xf]
        %v5554 = vld [vmem:[#allocation2 + $0x58] sm:$0xf]
        %v5555 = vld [vmem:[#allocation2 + $0x60] sm:$0xf]
        %v5556 = vld [vmem:[#allocation2 + $0x64] sm:$0xf]
        %v5557 = vld [vmem:[#allocation2 + $0x6c] sm:$0xf]
        %v5558 = vld [vmem:[#allocation2 + $0x70] sm:$0xf]
        %v5559 = vld [vmem:[#allocation2 + $0x78] sm:$0xf]
        %v5560 = vld [vmem:[#allocation2 + $0x7c] sm:$0xf]
        %v5561 = vld [vmem:[#allocation2 + $0x84] sm:$0xf]
        %v5562 = vld [vmem:[#allocation2 + $0x88] sm:$0xf]
        %v5563 = vld [vmem:[#allocation2 + $0x90] sm:$0xf]
        %v5564 = vld [vmem:[#allocation2 + $0x94] sm:$0xf]
        %v5565 = vld [vmem:[#allocation2 + $0x9c] sm:$0xf]
        %v5566 = vld [vmem:[#allocation2 + $0xa0] sm:$0xf]
        %v5567 = vld [vmem:[#allocation2 + $0xa8] sm:$0xf]
        %v5568 = vld [vmem:[#allocation2 + $0xac] sm:$0xf]
        %v5569 = vld [vmem:[#allocation2 + $0xb4] sm:$0xf]
        %v5570 = vld [vmem:[#allocation2 + $0xb8] sm:$0xf]
        %v5571 = vld [vmem:[#allocation2 + $0x8] sm:$0x1]
        %v5572 = vld [vmem:[#allocation2 + $0x14] sm:$0x1]
        %v5573 = vld [vmem:[#allocation2 + $0x20] sm:$0x1]
        %v5574 = vld [vmem:[#allocation2 + $0x2c] sm:$0x1]
        %v5575 = vld [vmem:[#allocation2 + $0x38] sm:$0x1]
        %v5576 = vld [vmem:[#allocation2 + $0x44] sm:$0x1]
        %v5577 = vld [vmem:[#allocation2 + $0x50] sm:$0x1]
        %v5578 = vld [vmem:[#allocation2 + $0x5c] sm:$0x1]
        %v5579 = vld [vmem:[#allocation2 + $0x68] sm:$0x1]
        %v5580 = vld [vmem:[#allocation2 + $0x74] sm:$0x1]
        %v5581 = vld [vmem:[#allocation2 + $0x80] sm:$0x1]
        %v5582 = vld [vmem:[#allocation2 + $0x8c] sm:$0x1]
        %v5583 = vld [vmem:[#allocation2 + $0x98] sm:$0x1]
        %v5584 = vld [vmem:[#allocation2 + $0xa4] sm:$0x1]
        %v5585 = vld [vmem:[#allocation2 + $0xb0] sm:$0x1]
        %v5586 = vld [vmem:[#allocation2 + $0xbc] sm:$0x1]
        %v5588 = vshrl.u32 %v5539, 16
        %v5590 = vrot.slane %v5588, 4
        %v5591 = vshll.u32 %v5539, 16
        %v5593 = vrot.slane %v5591, 5
        %v5594 = vor.u32 %v5590, %v5593
        %v5595 = vrot.slane %v5594, 4
        %v5597 = vshll.u32 %v5540, 16
        %v5599 = vrot.slane %v5597, 5
        %v5600 = vsel %vm1122, %v5595, %v5599
        %v5601 = vshrl.u32 %v5540, 16
        %v5603 = vrot.slane %v5601, 4
        %v5604 = vor.u32 %v5603, %v5599
        %v5605 = vrot.slane %v5604, 4
        %v5607 = vshll.u32 %v5571, 16
        %v5609 = vrot.slane %v5607, 5
        %v5610 = vsel %vm1122, %v5605, %v5609
        %v5612 = vshrl.u32 %v5541, 16
        %v5614 = vrot.slane %v5612, 4
        %v5615 = vshll.u32 %v5541, 16
        %v5617 = vrot.slane %v5615, 5
        %v5618 = vor.u32 %v5614, %v5617
        %v5619 = vrot.slane %v5618, 4
        %v5621 = vshll.u32 %v5542, 16
        %v5623 = vrot.slane %v5621, 5
        %v5624 = vsel %vm1122, %v5619, %v5623
        %v5625 = vshrl.u32 %v5542, 16
        %v5627 = vrot.slane %v5625, 4
        %v5628 = vor.u32 %v5627, %v5623
        %v5629 = vrot.slane %v5628, 4
        %v5631 = vshll.u32 %v5572, 16
        %v5633 = vrot.slane %v5631, 5
        %v5634 = vsel %vm1122, %v5629, %v5633
        %v5636 = vshrl.u32 %v5543, 16
        %v5638 = vrot.slane %v5636, 4
        %v5639 = vshll.u32 %v5543, 16
        %v5641 = vrot.slane %v5639, 5
        %v5642 = vor.u32 %v5638, %v5641
        %v5643 = vrot.slane %v5642, 4
        %v5645 = vshll.u32 %v5544, 16
        %v5647 = vrot.slane %v5645, 5
        %v5648 = vsel %vm1122, %v5643, %v5647
        %v5649 = vshrl.u32 %v5544, 16
        %v5651 = vrot.slane %v5649, 4
        %v5652 = vor.u32 %v5651, %v5647
        %v5653 = vrot.slane %v5652, 4
        %v5655 = vshll.u32 %v5573, 16
        %v5657 = vrot.slane %v5655, 5
        %v5658 = vsel %vm1122, %v5653, %v5657
        %v5660 = vshrl.u32 %v5545, 16
        %v5662 = vrot.slane %v5660, 4
        %v5663 = vshll.u32 %v5545, 16
        %v5665 = vrot.slane %v5663, 5
        %v5666 = vor.u32 %v5662, %v5665
        %v5667 = vrot.slane %v5666, 4
        %v5669 = vshll.u32 %v5546, 16
        %v5671 = vrot.slane %v5669, 5
        %v5672 = vsel %vm1122, %v5667, %v5671
        %v5673 = vshrl.u32 %v5546, 16
        %v5675 = vrot.slane %v5673, 4
        %v5676 = vor.u32 %v5675, %v5671
        %v5677 = vrot.slane %v5676, 4
        %v5679 = vshll.u32 %v5574, 16
        %v5681 = vrot.slane %v5679, 5
        %v5682 = vsel %vm1122, %v5677, %v5681
        %v5684 = vshrl.u32 %v5547, 16
        %v5686 = vrot.slane %v5684, 4
        %v5687 = vshll.u32 %v5547, 16
        %v5689 = vrot.slane %v5687, 5
        %v5690 = vor.u32 %v5686, %v5689
        %v5691 = vrot.slane %v5690, 4
        %v5693 = vshll.u32 %v5548, 16
        %v5695 = vrot.slane %v5693, 5
        %v5696 = vsel %vm1122, %v5691, %v5695
        %v5697 = vshrl.u32 %v5548, 16
        %v5699 = vrot.slane %v5697, 4
        %v5700 = vor.u32 %v5699, %v5695
        %v5701 = vrot.slane %v5700, 4
        %v5703 = vshll.u32 %v5575, 16
        %v5705 = vrot.slane %v5703, 5
        %v5706 = vsel %vm1122, %v5701, %v5705
        %v5708 = vshrl.u32 %v5549, 16
        %v5710 = vrot.slane %v5708, 4
        %v5711 = vshll.u32 %v5549, 16
        %v5713 = vrot.slane %v5711, 5
        %v5714 = vor.u32 %v5710, %v5713
        %v5715 = vrot.slane %v5714, 4
        %v5717 = vshll.u32 %v5550, 16
        %v5719 = vrot.slane %v5717, 5
        %v5720 = vsel %vm1122, %v5715, %v5719
        %v5721 = vshrl.u32 %v5550, 16
        %v5723 = vrot.slane %v5721, 4
        %v5724 = vor.u32 %v5723, %v5719
        %v5725 = vrot.slane %v5724, 4
        %v5727 = vshll.u32 %v5576, 16
        %v5729 = vrot.slane %v5727, 5
        %v5730 = vsel %vm1122, %v5725, %v5729
        %v5732 = vshrl.u32 %v5551, 16
        %v5734 = vrot.slane %v5732, 4
        %v5735 = vshll.u32 %v5551, 16
        %v5737 = vrot.slane %v5735, 5
        %v5738 = vor.u32 %v5734, %v5737
        %v5739 = vrot.slane %v5738, 4
        %v5741 = vshll.u32 %v5552, 16
        %v5743 = vrot.slane %v5741, 5
        %v5744 = vsel %vm1122, %v5739, %v5743
        %v5745 = vshrl.u32 %v5552, 16
        %v5747 = vrot.slane %v5745, 4
        %v5748 = vor.u32 %v5747, %v5743
        %v5749 = vrot.slane %v5748, 4
        %v5751 = vshll.u32 %v5577, 16
        %v5753 = vrot.slane %v5751, 5
        %v5754 = vsel %vm1122, %v5749, %v5753
        %v5756 = vshrl.u32 %v5553, 16
        %v5758 = vrot.slane %v5756, 4
        %v5759 = vshll.u32 %v5553, 16
        %v5761 = vrot.slane %v5759, 5
        %v5762 = vor.u32 %v5758, %v5761
        %v5763 = vrot.slane %v5762, 4
        %v5765 = vshll.u32 %v5554, 16
        %v5767 = vrot.slane %v5765, 5
        %v5768 = vsel %vm1122, %v5763, %v5767
        %v5769 = vshrl.u32 %v5554, 16
        %v5771 = vrot.slane %v5769, 4
        %v5772 = vor.u32 %v5771, %v5767
        %v5773 = vrot.slane %v5772, 4
        %v5775 = vshll.u32 %v5578, 16
        %v5777 = vrot.slane %v5775, 5
        %v5778 = vsel %vm1122, %v5773, %v5777
        %v5780 = vshrl.u32 %v5555, 16
        %v5782 = vrot.slane %v5780, 4
        %v5783 = vshll.u32 %v5555, 16
        %v5785 = vrot.slane %v5783, 5
        %v5786 = vor.u32 %v5782, %v5785
        %v5787 = vrot.slane %v5786, 4
        %v5789 = vshll.u32 %v5556, 16
        %v5791 = vrot.slane %v5789, 5
        %v5792 = vsel %vm1122, %v5787, %v5791
        %v5793 = vshrl.u32 %v5556, 16
        %v5795 = vrot.slane %v5793, 4
        %v5796 = vor.u32 %v5795, %v5791
        %v5797 = vrot.slane %v5796, 4
        %v5799 = vshll.u32 %v5579, 16
        %v5801 = vrot.slane %v5799, 5
        %v5802 = vsel %vm1122, %v5797, %v5801
        %v5804 = vshrl.u32 %v5557, 16
        %v5806 = vrot.slane %v5804, 4
        %v5807 = vshll.u32 %v5557, 16
        %v5809 = vrot.slane %v5807, 5
        %v5810 = vor.u32 %v5806, %v5809
        %v5811 = vrot.slane %v5810, 4
        %v5813 = vshll.u32 %v5558, 16
        %v5815 = vrot.slane %v5813, 5
        %v5816 = vsel %vm1122, %v5811, %v5815
        %v5817 = vshrl.u32 %v5558, 16
        %v5819 = vrot.slane %v5817, 4
        %v5820 = vor.u32 %v5819, %v5815
        %v5821 = vrot.slane %v5820, 4
        %v5823 = vshll.u32 %v5580, 16
        %v5825 = vrot.slane %v5823, 5
        %v5826 = vsel %vm1122, %v5821, %v5825
        %v5828 = vshrl.u32 %v5559, 16
        %v5830 = vrot.slane %v5828, 4
        %v5831 = vshll.u32 %v5559, 16
        %v5833 = vrot.slane %v5831, 5
        %v5834 = vor.u32 %v5830, %v5833
        %v5835 = vrot.slane %v5834, 4
        %v5837 = vshll.u32 %v5560, 16
        %v5839 = vrot.slane %v5837, 5
        %v5840 = vsel %vm1122, %v5835, %v5839
        %v5841 = vshrl.u32 %v5560, 16
        %v5843 = vrot.slane %v5841, 4
        %v5844 = vor.u32 %v5843, %v5839
        %v5845 = vrot.slane %v5844, 4
        %v5847 = vshll.u32 %v5581, 16
        %v5849 = vrot.slane %v5847, 5
        %v5850 = vsel %vm1122, %v5845, %v5849
        %v5852 = vshrl.u32 %v5561, 16
        %v5854 = vrot.slane %v5852, 4
        %v5855 = vshll.u32 %v5561, 16
        %v5857 = vrot.slane %v5855, 5
        %v5858 = vor.u32 %v5854, %v5857
        %v5859 = vrot.slane %v5858, 4
        %v5861 = vshll.u32 %v5562, 16
        %v5863 = vrot.slane %v5861, 5
        %v5864 = vsel %vm1122, %v5859, %v5863
        %v5865 = vshrl.u32 %v5562, 16
        %v5867 = vrot.slane %v5865, 4
        %v5868 = vor.u32 %v5867, %v5863
        %v5869 = vrot.slane %v5868, 4
        %v5871 = vshll.u32 %v5582, 16
        %v5873 = vrot.slane %v5871, 5
        %v5874 = vsel %vm1122, %v5869, %v5873
        %v5876 = vshrl.u32 %v5563, 16
        %v5878 = vrot.slane %v5876, 4
        %v5879 = vshll.u32 %v5563, 16
        %v5881 = vrot.slane %v5879, 5
        %v5882 = vor.u32 %v5878, %v5881
        %v5883 = vrot.slane %v5882, 4
        %v5885 = vshll.u32 %v5564, 16
        %v5887 = vrot.slane %v5885, 5
        %v5888 = vsel %vm1122, %v5883, %v5887
        %v5889 = vshrl.u32 %v5564, 16
        %v5891 = vrot.slane %v5889, 4
        %v5892 = vor.u32 %v5891, %v5887
        %v5893 = vrot.slane %v5892, 4
        %v5895 = vshll.u32 %v5583, 16
        %v5897 = vrot.slane %v5895, 5
        %v5898 = vsel %vm1122, %v5893, %v5897
        %v5900 = vshrl.u32 %v5565, 16
        %v5902 = vrot.slane %v5900, 4
        %v5903 = vshll.u32 %v5565, 16
        %v5905 = vrot.slane %v5903, 5
        %v5906 = vor.u32 %v5902, %v5905
        %v5907 = vrot.slane %v5906, 4
        %v5909 = vshll.u32 %v5566, 16
        %v5911 = vrot.slane %v5909, 5
        %v5912 = vsel %vm1122, %v5907, %v5911
        %v5913 = vshrl.u32 %v5566, 16
        %v5915 = vrot.slane %v5913, 4
        %v5916 = vor.u32 %v5915, %v5911
        %v5917 = vrot.slane %v5916, 4
        %v5919 = vshll.u32 %v5584, 16
        %v5921 = vrot.slane %v5919, 5
        %v5922 = vsel %vm1122, %v5917, %v5921
        %v5924 = vshrl.u32 %v5567, 16
        %v5926 = vrot.slane %v5924, 4
        %v5927 = vshll.u32 %v5567, 16
        %v5929 = vrot.slane %v5927, 5
        %v5930 = vor.u32 %v5926, %v5929
        %v5931 = vrot.slane %v5930, 4
        %v5933 = vshll.u32 %v5568, 16
        %v5935 = vrot.slane %v5933, 5
        %v5936 = vsel %vm1122, %v5931, %v5935
        %v5937 = vshrl.u32 %v5568, 16
        %v5939 = vrot.slane %v5937, 4
        %v5940 = vor.u32 %v5939, %v5935
        %v5941 = vrot.slane %v5940, 4
        %v5943 = vshll.u32 %v5585, 16
        %v5945 = vrot.slane %v5943, 5
        %v5946 = vsel %vm1122, %v5941, %v5945
        %v5948 = vshrl.u32 %v5569, 16
        %v5950 = vrot.slane %v5948, 4
        %v5951 = vshll.u32 %v5569, 16
        %v5953 = vrot.slane %v5951, 5
        %v5954 = vor.u32 %v5950, %v5953
        %v5955 = vrot.slane %v5954, 4
        %v5957 = vshll.u32 %v5570, 16
        %v5959 = vrot.slane %v5957, 5
        %v5960 = vsel %vm1122, %v5955, %v5959
        %v5961 = vshrl.u32 %v5570, 16
        %v5963 = vrot.slane %v5961, 4
        %v5964 = vor.u32 %v5963, %v5959
        %v5965 = vrot.slane %v5964, 4
        %v5967 = vshll.u32 %v5586, 16
        %v5969 = vrot.slane %v5967, 5
        %v5970 = vsel %vm1122, %v5965, %v5969
        %v5971 = vld [vmem:[#allocation2] sm:$0xe]
        %v5972 = vld [vmem:[#allocation2 + $0xc] sm:$0xe]
        %v5973 = vld [vmem:[#allocation2 + $0x18] sm:$0xe]
        %v5974 = vld [vmem:[#allocation2 + $0x24] sm:$0xe]
        %v5975 = vld [vmem:[#allocation2 + $0x30] sm:$0xe]
        %v5976 = vld [vmem:[#allocation2 + $0x3c] sm:$0xe]
        %v5977 = vld [vmem:[#allocation2 + $0x48] sm:$0xe]
        %v5978 = vld [vmem:[#allocation2 + $0x54] sm:$0xe]
        %v5979 = vld [vmem:[#allocation2 + $0x60] sm:$0xe]
        %v5980 = vld [vmem:[#allocation2 + $0x6c] sm:$0xe]
        %v5981 = vld [vmem:[#allocation2 + $0x78] sm:$0xe]
        %v5982 = vld [vmem:[#allocation2 + $0x84] sm:$0xe]
        %v5983 = vld [vmem:[#allocation2 + $0x90] sm:$0xe]
        %v5984 = vld [vmem:[#allocation2 + $0x9c] sm:$0xe]
        %v5985 = vld [vmem:[#allocation2 + $0xa8] sm:$0xe]
        %v5986 = vld [vmem:[#allocation2 + $0xb4] sm:$0xe]
        %v6035 = vrot.slane %v5971, 5
        %v6036 = vrot.slane %v6035, 4
        %v6037 = vrot.slane %v5540, 5
        %v6038 = vsel %vm1573, %v6036, %v6037
        %v6039 = vrot.slane %v6037, 4
        %v6040 = vrot.slane %v5571, 5
        %v6041 = vsel %vm1573, %v6039, %v6040
        %v6042 = vrot.slane %v5972, 5
        %v6043 = vrot.slane %v6042, 4
        %v6044 = vrot.slane %v5542, 5
        %v6045 = vsel %vm1573, %v6043, %v6044
        %v6046 = vrot.slane %v6044, 4
        %v6047 = vrot.slane %v5572, 5
        %v6048 = vsel %vm1573, %v6046, %v6047
        %v6049 = vrot.slane %v5973, 5
        %v6050 = vrot.slane %v6049, 4
        %v6051 = vrot.slane %v5544, 5
        %v6052 = vsel %vm1573, %v6050, %v6051
        %v6053 = vrot.slane %v6051, 4
        %v6054 = vrot.slane %v5573, 5
        %v6055 = vsel %vm1573, %v6053, %v6054
        %v6056 = vrot.slane %v5974, 5
        %v6057 = vrot.slane %v6056, 4
        %v6058 = vrot.slane %v5546, 5
        %v6059 = vsel %vm1573, %v6057, %v6058
        %v6060 = vrot.slane %v6058, 4
        %v6061 = vrot.slane %v5574, 5
        %v6062 = vsel %vm1573, %v6060, %v6061
        %v6063 = vrot.slane %v5975, 5
        %v6064 = vrot.slane %v6063, 4
        %v6065 = vrot.slane %v5548, 5
        %v6066 = vsel %vm1573, %v6064, %v6065
        %v6067 = vrot.slane %v6065, 4
        %v6068 = vrot.slane %v5575, 5
        %v6069 = vsel %vm1573, %v6067, %v6068
        %v6070 = vrot.slane %v5976, 5
        %v6071 = vrot.slane %v6070, 4
        %v6072 = vrot.slane %v5550, 5
        %v6073 = vsel %vm1573, %v6071, %v6072
        %v6074 = vrot.slane %v6072, 4
        %v6075 = vrot.slane %v5576, 5
        %v6076 = vsel %vm1573, %v6074, %v6075
        %v6077 = vrot.slane %v5977, 5
        %v6078 = vrot.slane %v6077, 4
        %v6079 = vrot.slane %v5552, 5
        %v6080 = vsel %vm1573, %v6078, %v6079
        %v6081 = vrot.slane %v6079, 4
        %v6082 = vrot.slane %v5577, 5
        %v6083 = vsel %vm1573, %v6081, %v6082
        %v6084 = vrot.slane %v5978, 5
        %v6085 = vrot.slane %v6084, 4
        %v6086 = vrot.slane %v5554, 5
        %v6087 = vsel %vm1573, %v6085, %v6086
        %v6088 = vrot.slane %v6086, 4
        %v6089 = vrot.slane %v5578, 5
        %v6090 = vsel %vm1573, %v6088, %v6089
        %v6091 = vrot.slane %v5979, 5
        %v6092 = vrot.slane %v6091, 4
        %v6093 = vrot.slane %v5556, 5
        %v6094 = vsel %vm1573, %v6092, %v6093
        %v6095 = vrot.slane %v6093, 4
        %v6096 = vrot.slane %v5579, 5
        %v6097 = vsel %vm1573, %v6095, %v6096
        %v6098 = vrot.slane %v5980, 5
        %v6099 = vrot.slane %v6098, 4
        %v6100 = vrot.slane %v5558, 5
        %v6101 = vsel %vm1573, %v6099, %v6100
        %v6102 = vrot.slane %v6100, 4
        %v6103 = vrot.slane %v5580, 5
        %v6104 = vsel %vm1573, %v6102, %v6103
        %v6105 = vrot.slane %v5981, 5
        %v6106 = vrot.slane %v6105, 4
        %v6107 = vrot.slane %v5560, 5
        %v6108 = vsel %vm1573, %v6106, %v6107
        %v6109 = vrot.slane %v6107, 4
        %v6110 = vrot.slane %v5581, 5
        %v6111 = vsel %vm1573, %v6109, %v6110
        %v6112 = vrot.slane %v5982, 5
        %v6113 = vrot.slane %v6112, 4
        %v6114 = vrot.slane %v5562, 5
        %v6115 = vsel %vm1573, %v6113, %v6114
        %v6116 = vrot.slane %v6114, 4
        %v6117 = vrot.slane %v5582, 5
        %v6118 = vsel %vm1573, %v6116, %v6117
        %v6119 = vrot.slane %v5983, 5
        %v6120 = vrot.slane %v6119, 4
        %v6121 = vrot.slane %v5564, 5
        %v6122 = vsel %vm1573, %v6120, %v6121
        %v6123 = vrot.slane %v6121, 4
        %v6124 = vrot.slane %v5583, 5
        %v6125 = vsel %vm1573, %v6123, %v6124
        %v6126 = vrot.slane %v5984, 5
        %v6127 = vrot.slane %v6126, 4
        %v6128 = vrot.slane %v5566, 5
        %v6129 = vsel %vm1573, %v6127, %v6128
        %v6130 = vrot.slane %v6128, 4
        %v6131 = vrot.slane %v5584, 5
        %v6132 = vsel %vm1573, %v6130, %v6131
        %v6133 = vrot.slane %v5985, 5
        %v6134 = vrot.slane %v6133, 4
        %v6135 = vrot.slane %v5568, 5
        %v6136 = vsel %vm1573, %v6134, %v6135
        %v6137 = vrot.slane %v6135, 4
        %v6138 = vrot.slane %v5585, 5
        %v6139 = vsel %vm1573, %v6137, %v6138
        %v6140 = vrot.slane %v5986, 5
        %v6141 = vrot.slane %v6140, 4
        %v6142 = vrot.slane %v5570, 5
        %v6143 = vsel %vm1573, %v6141, %v6142
        %v6144 = vrot.slane %v6142, 4
        %v6145 = vrot.slane %v5586, 5
        %v6146 = vsel %vm1573, %v6144, %v6145
        %v6147 = vld [vmem:[%s954] sm:$0xf]
        %v6148 = vld [vmem:[%s954 + $0x4] sm:$0xf]
        %v6149 = vld [vmem:[%s954 + $0xc] sm:$0xf]
        %v6150 = vld [vmem:[%s954 + $0x10] sm:$0xf]
        %v6151 = vld [vmem:[%s954 + $0x18] sm:$0xf]
        %v6152 = vld [vmem:[%s954 + $0x1c] sm:$0xf]
        %v6153 = vld [vmem:[%s954 + $0x24] sm:$0xf]
        %v6154 = vld [vmem:[%s954 + $0x28] sm:$0xf]
        %v6155 = vld [vmem:[%s954 + $0x30] sm:$0xf]
        %v6156 = vld [vmem:[%s954 + $0x34] sm:$0xf]
        %v6157 = vld [vmem:[%s954 + $0x3c] sm:$0xf]
        %v6158 = vld [vmem:[%s954 + $0x40] sm:$0xf]
        %v6159 = vld [vmem:[%s954 + $0x48] sm:$0xf]
        %v6160 = vld [vmem:[%s954 + $0x4c] sm:$0xf]
        %v6161 = vld [vmem:[%s954 + $0x54] sm:$0xf]
        %v6162 = vld [vmem:[%s954 + $0x58] sm:$0xf]
        %v6163 = vld [vmem:[%s954 + $0x60] sm:$0xf]
        %v6164 = vld [vmem:[%s954 + $0x64] sm:$0xf]
        %v6165 = vld [vmem:[%s954 + $0x6c] sm:$0xf]
        %v6166 = vld [vmem:[%s954 + $0x70] sm:$0xf]
        %v6167 = vld [vmem:[%s954 + $0x78] sm:$0xf]
        %v6168 = vld [vmem:[%s954 + $0x7c] sm:$0xf]
        %v6169 = vld [vmem:[%s954 + $0x84] sm:$0xf]
        %v6170 = vld [vmem:[%s954 + $0x88] sm:$0xf]
        %v6171 = vld [vmem:[%s954 + $0x90] sm:$0xf]
        %v6172 = vld [vmem:[%s954 + $0x94] sm:$0xf]
        %v6173 = vld [vmem:[%s954 + $0x9c] sm:$0xf]
        %v6174 = vld [vmem:[%s954 + $0xa0] sm:$0xf]
        %v6175 = vld [vmem:[%s954 + $0xa8] sm:$0xf]
        %v6176 = vld [vmem:[%s954 + $0xac] sm:$0xf]
        %v6177 = vld [vmem:[%s954 + $0xb4] sm:$0xf]
        %v6178 = vld [vmem:[%s954 + $0xb8] sm:$0xf]
        %v6179 = vld [vmem:[%s954 + $0x8] sm:$0x1]
        %v6180 = vld [vmem:[%s954 + $0x14] sm:$0x1]
        %v6181 = vld [vmem:[%s954 + $0x20] sm:$0x1]
        %v6182 = vld [vmem:[%s954 + $0x2c] sm:$0x1]
        %v6183 = vld [vmem:[%s954 + $0x38] sm:$0x1]
        %v6184 = vld [vmem:[%s954 + $0x44] sm:$0x1]
        %v6185 = vld [vmem:[%s954 + $0x50] sm:$0x1]
        %v6186 = vld [vmem:[%s954 + $0x5c] sm:$0x1]
        %v6187 = vld [vmem:[%s954 + $0x68] sm:$0x1]
        %v6188 = vld [vmem:[%s954 + $0x74] sm:$0x1]
        %v6189 = vld [vmem:[%s954 + $0x80] sm:$0x1]
        %v6190 = vld [vmem:[%s954 + $0x8c] sm:$0x1]
        %v6191 = vld [vmem:[%s954 + $0x98] sm:$0x1]
        %v6192 = vld [vmem:[%s954 + $0xa4] sm:$0x1]
        %v6193 = vld [vmem:[%s954 + $0xb0] sm:$0x1]
        %v6194 = vld [vmem:[%s954 + $0xbc] sm:$0x1]
        %v6196 = vshrl.u32 %v6147, 16
        %v6198 = vrot.slane %v6196, 4
        %v6199 = vshll.u32 %v6147, 16
        %v6201 = vrot.slane %v6199, 5
        %v6202 = vor.u32 %v6198, %v6201
        %v6203 = vrot.slane %v6202, 4
        %v6205 = vshll.u32 %v6148, 16
        %v6207 = vrot.slane %v6205, 5
        %v6208 = vsel %vm1122, %v6203, %v6207
        %v6209 = vshrl.u32 %v6148, 16
        %v6211 = vrot.slane %v6209, 4
        %v6212 = vor.u32 %v6211, %v6207
        %v6213 = vrot.slane %v6212, 4
        %v6215 = vshll.u32 %v6179, 16
        %v6217 = vrot.slane %v6215, 5
        %v6218 = vsel %vm1122, %v6213, %v6217
        %v6220 = vshrl.u32 %v6149, 16
        %v6222 = vrot.slane %v6220, 4
        %v6223 = vshll.u32 %v6149, 16
        %v6225 = vrot.slane %v6223, 5
        %v6226 = vor.u32 %v6222, %v6225
        %v6227 = vrot.slane %v6226, 4
        %v6229 = vshll.u32 %v6150, 16
        %v6231 = vrot.slane %v6229, 5
        %v6232 = vsel %vm1122, %v6227, %v6231
        %v6233 = vshrl.u32 %v6150, 16
        %v6235 = vrot.slane %v6233, 4
        %v6236 = vor.u32 %v6235, %v6231
        %v6237 = vrot.slane %v6236, 4
        %v6239 = vshll.u32 %v6180, 16
        %v6241 = vrot.slane %v6239, 5
        %v6242 = vsel %vm1122, %v6237, %v6241
        %v6244 = vshrl.u32 %v6151, 16
        %v6246 = vrot.slane %v6244, 4
        %v6247 = vshll.u32 %v6151, 16
        %v6249 = vrot.slane %v6247, 5
        %v6250 = vor.u32 %v6246, %v6249
        %v6251 = vrot.slane %v6250, 4
        %v6253 = vshll.u32 %v6152, 16
        %v6255 = vrot.slane %v6253, 5
        %v6256 = vsel %vm1122, %v6251, %v6255
        %v6257 = vshrl.u32 %v6152, 16
        %v6259 = vrot.slane %v6257, 4
        %v6260 = vor.u32 %v6259, %v6255
        %v6261 = vrot.slane %v6260, 4
        %v6263 = vshll.u32 %v6181, 16
        %v6265 = vrot.slane %v6263, 5
        %v6266 = vsel %vm1122, %v6261, %v6265
        %v6268 = vshrl.u32 %v6153, 16
        %v6270 = vrot.slane %v6268, 4
        %v6271 = vshll.u32 %v6153, 16
        %v6273 = vrot.slane %v6271, 5
        %v6274 = vor.u32 %v6270, %v6273
        %v6275 = vrot.slane %v6274, 4
        %v6277 = vshll.u32 %v6154, 16
        %v6279 = vrot.slane %v6277, 5
        %v6280 = vsel %vm1122, %v6275, %v6279
        %v6281 = vshrl.u32 %v6154, 16
        %v6283 = vrot.slane %v6281, 4
        %v6284 = vor.u32 %v6283, %v6279
        %v6285 = vrot.slane %v6284, 4
        %v6287 = vshll.u32 %v6182, 16
        %v6289 = vrot.slane %v6287, 5
        %v6290 = vsel %vm1122, %v6285, %v6289
        %v6292 = vshrl.u32 %v6155, 16
        %v6294 = vrot.slane %v6292, 4
        %v6295 = vshll.u32 %v6155, 16
        %v6297 = vrot.slane %v6295, 5
        %v6298 = vor.u32 %v6294, %v6297
        %v6299 = vrot.slane %v6298, 4
        %v6301 = vshll.u32 %v6156, 16
        %v6303 = vrot.slane %v6301, 5
        %v6304 = vsel %vm1122, %v6299, %v6303
        %v6305 = vshrl.u32 %v6156, 16
        %v6307 = vrot.slane %v6305, 4
        %v6308 = vor.u32 %v6307, %v6303
        %v6309 = vrot.slane %v6308, 4
        %v6311 = vshll.u32 %v6183, 16
        %v6313 = vrot.slane %v6311, 5
        %v6314 = vsel %vm1122, %v6309, %v6313
        %v6316 = vshrl.u32 %v6157, 16
        %v6318 = vrot.slane %v6316, 4
        %v6319 = vshll.u32 %v6157, 16
        %v6321 = vrot.slane %v6319, 5
        %v6322 = vor.u32 %v6318, %v6321
        %v6323 = vrot.slane %v6322, 4
        %v6325 = vshll.u32 %v6158, 16
        %v6327 = vrot.slane %v6325, 5
        %v6328 = vsel %vm1122, %v6323, %v6327
        %v6329 = vshrl.u32 %v6158, 16
        %v6331 = vrot.slane %v6329, 4
        %v6332 = vor.u32 %v6331, %v6327
        %v6333 = vrot.slane %v6332, 4
        %v6335 = vshll.u32 %v6184, 16
        %v6337 = vrot.slane %v6335, 5
        %v6338 = vsel %vm1122, %v6333, %v6337
        %v6340 = vshrl.u32 %v6159, 16
        %v6342 = vrot.slane %v6340, 4
        %v6343 = vshll.u32 %v6159, 16
        %v6345 = vrot.slane %v6343, 5
        %v6346 = vor.u32 %v6342, %v6345
        %v6347 = vrot.slane %v6346, 4
        %v6349 = vshll.u32 %v6160, 16
        %v6351 = vrot.slane %v6349, 5
        %v6352 = vsel %vm1122, %v6347, %v6351
        %v6353 = vshrl.u32 %v6160, 16
        %v6355 = vrot.slane %v6353, 4
        %v6356 = vor.u32 %v6355, %v6351
        %v6357 = vrot.slane %v6356, 4
        %v6359 = vshll.u32 %v6185, 16
        %v6361 = vrot.slane %v6359, 5
        %v6362 = vsel %vm1122, %v6357, %v6361
        %v6364 = vshrl.u32 %v6161, 16
        %v6366 = vrot.slane %v6364, 4
        %v6367 = vshll.u32 %v6161, 16
        %v6369 = vrot.slane %v6367, 5
        %v6370 = vor.u32 %v6366, %v6369
        %v6371 = vrot.slane %v6370, 4
        %v6373 = vshll.u32 %v6162, 16
        %v6375 = vrot.slane %v6373, 5
        %v6376 = vsel %vm1122, %v6371, %v6375
        %v6377 = vshrl.u32 %v6162, 16
        %v6379 = vrot.slane %v6377, 4
        %v6380 = vor.u32 %v6379, %v6375
        %v6381 = vrot.slane %v6380, 4
        %v6383 = vshll.u32 %v6186, 16
        %v6385 = vrot.slane %v6383, 5
        %v6386 = vsel %vm1122, %v6381, %v6385
        %v6388 = vshrl.u32 %v6163, 16
        %v6390 = vrot.slane %v6388, 4
        %v6391 = vshll.u32 %v6163, 16
        %v6393 = vrot.slane %v6391, 5
        %v6394 = vor.u32 %v6390, %v6393
        %v6395 = vrot.slane %v6394, 4
        %v6397 = vshll.u32 %v6164, 16
        %v6399 = vrot.slane %v6397, 5
        %v6400 = vsel %vm1122, %v6395, %v6399
        %v6401 = vshrl.u32 %v6164, 16
        %v6403 = vrot.slane %v6401, 4
        %v6404 = vor.u32 %v6403, %v6399
        %v6405 = vrot.slane %v6404, 4
        %v6407 = vshll.u32 %v6187, 16
        %v6409 = vrot.slane %v6407, 5
        %v6410 = vsel %vm1122, %v6405, %v6409
        %v6412 = vshrl.u32 %v6165, 16
        %v6414 = vrot.slane %v6412, 4
        %v6415 = vshll.u32 %v6165, 16
        %v6417 = vrot.slane %v6415, 5
        %v6418 = vor.u32 %v6414, %v6417
        %v6419 = vrot.slane %v6418, 4
        %v6421 = vshll.u32 %v6166, 16
        %v6423 = vrot.slane %v6421, 5
        %v6424 = vsel %vm1122, %v6419, %v6423
        %v6425 = vshrl.u32 %v6166, 16
        %v6427 = vrot.slane %v6425, 4
        %v6428 = vor.u32 %v6427, %v6423
        %v6429 = vrot.slane %v6428, 4
        %v6431 = vshll.u32 %v6188, 16
        %v6433 = vrot.slane %v6431, 5
        %v6434 = vsel %vm1122, %v6429, %v6433
        %v6436 = vshrl.u32 %v6167, 16
        %v6438 = vrot.slane %v6436, 4
        %v6439 = vshll.u32 %v6167, 16
        %v6441 = vrot.slane %v6439, 5
        %v6442 = vor.u32 %v6438, %v6441
        %v6443 = vrot.slane %v6442, 4
        %v6445 = vshll.u32 %v6168, 16
        %v6447 = vrot.slane %v6445, 5
        %v6448 = vsel %vm1122, %v6443, %v6447
        %v6449 = vshrl.u32 %v6168, 16
        %v6451 = vrot.slane %v6449, 4
        %v6452 = vor.u32 %v6451, %v6447
        %v6453 = vrot.slane %v6452, 4
        %v6455 = vshll.u32 %v6189, 16
        %v6457 = vrot.slane %v6455, 5
        %v6458 = vsel %vm1122, %v6453, %v6457
        %v6460 = vshrl.u32 %v6169, 16
        %v6462 = vrot.slane %v6460, 4
        %v6463 = vshll.u32 %v6169, 16
        %v6465 = vrot.slane %v6463, 5
        %v6466 = vor.u32 %v6462, %v6465
        %v6467 = vrot.slane %v6466, 4
        %v6469 = vshll.u32 %v6170, 16
        %v6471 = vrot.slane %v6469, 5
        %v6472 = vsel %vm1122, %v6467, %v6471
        %v6473 = vshrl.u32 %v6170, 16
        %v6475 = vrot.slane %v6473, 4
        %v6476 = vor.u32 %v6475, %v6471
        %v6477 = vrot.slane %v6476, 4
        %v6479 = vshll.u32 %v6190, 16
        %v6481 = vrot.slane %v6479, 5
        %v6482 = vsel %vm1122, %v6477, %v6481
        %v6484 = vshrl.u32 %v6171, 16
        %v6486 = vrot.slane %v6484, 4
        %v6487 = vshll.u32 %v6171, 16
        %v6489 = vrot.slane %v6487, 5
        %v6490 = vor.u32 %v6486, %v6489
        %v6491 = vrot.slane %v6490, 4
        %v6493 = vshll.u32 %v6172, 16
        %v6495 = vrot.slane %v6493, 5
        %v6496 = vsel %vm1122, %v6491, %v6495
        %v6497 = vshrl.u32 %v6172, 16
        %v6499 = vrot.slane %v6497, 4
        %v6500 = vor.u32 %v6499, %v6495
        %v6501 = vrot.slane %v6500, 4
        %v6503 = vshll.u32 %v6191, 16
        %v6505 = vrot.slane %v6503, 5
        %v6506 = vsel %vm1122, %v6501, %v6505
        %v6508 = vshrl.u32 %v6173, 16
        %v6510 = vrot.slane %v6508, 4
        %v6511 = vshll.u32 %v6173, 16
        %v6513 = vrot.slane %v6511, 5
        %v6514 = vor.u32 %v6510, %v6513
        %v6515 = vrot.slane %v6514, 4
        %v6517 = vshll.u32 %v6174, 16
        %v6519 = vrot.slane %v6517, 5
        %v6520 = vsel %vm1122, %v6515, %v6519
        %v6521 = vshrl.u32 %v6174, 16
        %v6523 = vrot.slane %v6521, 4
        %v6524 = vor.u32 %v6523, %v6519
        %v6525 = vrot.slane %v6524, 4
        %v6527 = vshll.u32 %v6192, 16
        %v6529 = vrot.slane %v6527, 5
        %v6530 = vsel %vm1122, %v6525, %v6529
        %v6532 = vshrl.u32 %v6175, 16
        %v6534 = vrot.slane %v6532, 4
        %v6535 = vshll.u32 %v6175, 16
        %v6537 = vrot.slane %v6535, 5
        %v6538 = vor.u32 %v6534, %v6537
        %v6539 = vrot.slane %v6538, 4
        %v6541 = vshll.u32 %v6176, 16
        %v6543 = vrot.slane %v6541, 5
        %v6544 = vsel %vm1122, %v6539, %v6543
        %v6545 = vshrl.u32 %v6176, 16
        %v6547 = vrot.slane %v6545, 4
        %v6548 = vor.u32 %v6547, %v6543
        %v6549 = vrot.slane %v6548, 4
        %v6551 = vshll.u32 %v6193, 16
        %v6553 = vrot.slane %v6551, 5
        %v6554 = vsel %vm1122, %v6549, %v6553
        %v6556 = vshrl.u32 %v6177, 16
        %v6558 = vrot.slane %v6556, 4
        %v6559 = vshll.u32 %v6177, 16
        %v6561 = vrot.slane %v6559, 5
        %v6562 = vor.u32 %v6558, %v6561
        %v6563 = vrot.slane %v6562, 4
        %v6565 = vshll.u32 %v6178, 16
        %v6567 = vrot.slane %v6565, 5
        %v6568 = vsel %vm1122, %v6563, %v6567
        %v6569 = vshrl.u32 %v6178, 16
        %v6571 = vrot.slane %v6569, 4
        %v6572 = vor.u32 %v6571, %v6567
        %v6573 = vrot.slane %v6572, 4
        %v6575 = vshll.u32 %v6194, 16
        %v6577 = vrot.slane %v6575, 5
        %v6578 = vsel %vm1122, %v6573, %v6577
        %v6579 = vld [vmem:[%s954] sm:$0xe]
        %v6580 = vld [vmem:[%s954 + $0xc] sm:$0xe]
        %v6581 = vld [vmem:[%s954 + $0x18] sm:$0xe]
        %v6582 = vld [vmem:[%s954 + $0x24] sm:$0xe]
        %v6583 = vld [vmem:[%s954 + $0x30] sm:$0xe]
        %v6584 = vld [vmem:[%s954 + $0x3c] sm:$0xe]
        %v6585 = vld [vmem:[%s954 + $0x48] sm:$0xe]
        %v6586 = vld [vmem:[%s954 + $0x54] sm:$0xe]
        %v6587 = vld [vmem:[%s954 + $0x60] sm:$0xe]
        %v6588 = vld [vmem:[%s954 + $0x6c] sm:$0xe]
        %v6589 = vld [vmem:[%s954 + $0x78] sm:$0xe]
        %v6590 = vld [vmem:[%s954 + $0x84] sm:$0xe]
        %v6591 = vld [vmem:[%s954 + $0x90] sm:$0xe]
        %v6592 = vld [vmem:[%s954 + $0x9c] sm:$0xe]
        %v6593 = vld [vmem:[%s954 + $0xa8] sm:$0xe]
        %v6594 = vld [vmem:[%s954 + $0xb4] sm:$0xe]
        %v6643 = vrot.slane %v6579, 5
        %v6644 = vrot.slane %v6643, 4
        %v6645 = vrot.slane %v6148, 5
        %v6646 = vsel %vm1573, %v6644, %v6645
        %v6647 = vrot.slane %v6645, 4
        %v6648 = vrot.slane %v6179, 5
        %v6649 = vsel %vm1573, %v6647, %v6648
        %v6650 = vrot.slane %v6580, 5
        %v6651 = vrot.slane %v6650, 4
        %v6652 = vrot.slane %v6150, 5
        %v6653 = vsel %vm1573, %v6651, %v6652
        %v6654 = vrot.slane %v6652, 4
        %v6655 = vrot.slane %v6180, 5
        %v6656 = vsel %vm1573, %v6654, %v6655
        %v6657 = vrot.slane %v6581, 5
        %v6658 = vrot.slane %v6657, 4
        %v6659 = vrot.slane %v6152, 5
        %v6660 = vsel %vm1573, %v6658, %v6659
        %v6661 = vrot.slane %v6659, 4
        %v6662 = vrot.slane %v6181, 5
        %v6663 = vsel %vm1573, %v6661, %v6662
        %v6664 = vrot.slane %v6582, 5
        %v6665 = vrot.slane %v6664, 4
        %v6666 = vrot.slane %v6154, 5
        %v6667 = vsel %vm1573, %v6665, %v6666
        %v6668 = vrot.slane %v6666, 4
        %v6669 = vrot.slane %v6182, 5
        %v6670 = vsel %vm1573, %v6668, %v6669
        %v6671 = vrot.slane %v6583, 5
        %v6672 = vrot.slane %v6671, 4
        %v6673 = vrot.slane %v6156, 5
        %v6674 = vsel %vm1573, %v6672, %v6673
        %v6675 = vrot.slane %v6673, 4
        %v6676 = vrot.slane %v6183, 5
        %v6677 = vsel %vm1573, %v6675, %v6676
        %v6678 = vrot.slane %v6584, 5
        %v6679 = vrot.slane %v6678, 4
        %v6680 = vrot.slane %v6158, 5
        %v6681 = vsel %vm1573, %v6679, %v6680
        %v6682 = vrot.slane %v6680, 4
        %v6683 = vrot.slane %v6184, 5
        %v6684 = vsel %vm1573, %v6682, %v6683
        %v6685 = vrot.slane %v6585, 5
        %v6686 = vrot.slane %v6685, 4
        %v6687 = vrot.slane %v6160, 5
        %v6688 = vsel %vm1573, %v6686, %v6687
        %v6689 = vrot.slane %v6687, 4
        %v6690 = vrot.slane %v6185, 5
        %v6691 = vsel %vm1573, %v6689, %v6690
        %v6692 = vrot.slane %v6586, 5
        %v6693 = vrot.slane %v6692, 4
        %v6694 = vrot.slane %v6162, 5
        %v6695 = vsel %vm1573, %v6693, %v6694
        %v6696 = vrot.slane %v6694, 4
        %v6697 = vrot.slane %v6186, 5
        %v6698 = vsel %vm1573, %v6696, %v6697
        %v6699 = vrot.slane %v6587, 5
        %v6700 = vrot.slane %v6699, 4
        %v6701 = vrot.slane %v6164, 5
        %v6702 = vsel %vm1573, %v6700, %v6701
        %v6703 = vrot.slane %v6701, 4
        %v6704 = vrot.slane %v6187, 5
        %v6705 = vsel %vm1573, %v6703, %v6704
        %v6706 = vrot.slane %v6588, 5
        %v6707 = vrot.slane %v6706, 4
        %v6708 = vrot.slane %v6166, 5
        %v6709 = vsel %vm1573, %v6707, %v6708
        %v6710 = vrot.slane %v6708, 4
        %v6711 = vrot.slane %v6188, 5
        %v6712 = vsel %vm1573, %v6710, %v6711
        %v6713 = vrot.slane %v6589, 5
        %v6714 = vrot.slane %v6713, 4
        %v6715 = vrot.slane %v6168, 5
        %v6716 = vsel %vm1573, %v6714, %v6715
        %v6717 = vrot.slane %v6715, 4
        %v6718 = vrot.slane %v6189, 5
        %v6719 = vsel %vm1573, %v6717, %v6718
        %v6720 = vrot.slane %v6590, 5
        %v6721 = vrot.slane %v6720, 4
        %v6722 = vrot.slane %v6170, 5
        %v6723 = vsel %vm1573, %v6721, %v6722
        %v6724 = vrot.slane %v6722, 4
        %v6725 = vrot.slane %v6190, 5
        %v6726 = vsel %vm1573, %v6724, %v6725
        %v6727 = vrot.slane %v6591, 5
        %v6728 = vrot.slane %v6727, 4
        %v6729 = vrot.slane %v6172, 5
        %v6730 = vsel %vm1573, %v6728, %v6729
        %v6731 = vrot.slane %v6729, 4
        %v6732 = vrot.slane %v6191, 5
        %v6733 = vsel %vm1573, %v6731, %v6732
        %v6734 = vrot.slane %v6592, 5
        %v6735 = vrot.slane %v6734, 4
        %v6736 = vrot.slane %v6174, 5
        %v6737 = vsel %vm1573, %v6735, %v6736
        %v6738 = vrot.slane %v6736, 4
        %v6739 = vrot.slane %v6192, 5
        %v6740 = vsel %vm1573, %v6738, %v6739
        %v6741 = vrot.slane %v6593, 5
        %v6742 = vrot.slane %v6741, 4
        %v6743 = vrot.slane %v6176, 5
        %v6744 = vsel %vm1573, %v6742, %v6743
        %v6745 = vrot.slane %v6743, 4
        %v6746 = vrot.slane %v6193, 5
        %v6747 = vsel %vm1573, %v6745, %v6746
        %v6748 = vrot.slane %v6594, 5
        %v6749 = vrot.slane %v6748, 4
        %v6750 = vrot.slane %v6178, 5
        %v6751 = vsel %vm1573, %v6749, %v6750
        %v6752 = vrot.slane %v6750, 4
        %v6753 = vrot.slane %v6194, 5
        %v6754 = vsel %vm1573, %v6752, %v6753
        %v6755 = vld [vmem:[%s2294] sm:$0xf]
        %v6756 = vld [vmem:[%s2294 + $0x4] sm:$0xf]
        %v6757 = vld [vmem:[%s2294 + $0xc] sm:$0xf]
        %v6758 = vld [vmem:[%s2294 + $0x10] sm:$0xf]
        %v6759 = vld [vmem:[%s2294 + $0x18] sm:$0xf]
        %v6760 = vld [vmem:[%s2294 + $0x1c] sm:$0xf]
        %v6761 = vld [vmem:[%s2294 + $0x24] sm:$0xf]
        %v6762 = vld [vmem:[%s2294 + $0x28] sm:$0xf]
        %v6763 = vld [vmem:[%s2294 + $0x30] sm:$0xf]
        %v6764 = vld [vmem:[%s2294 + $0x34] sm:$0xf]
        %v6765 = vld [vmem:[%s2294 + $0x3c] sm:$0xf]
        %v6766 = vld [vmem:[%s2294 + $0x40] sm:$0xf]
        %v6767 = vld [vmem:[%s2294 + $0x48] sm:$0xf]
        %v6768 = vld [vmem:[%s2294 + $0x4c] sm:$0xf]
        %v6769 = vld [vmem:[%s2294 + $0x54] sm:$0xf]
        %v6770 = vld [vmem:[%s2294 + $0x58] sm:$0xf]
        %v6771 = vld [vmem:[%s2294 + $0x60] sm:$0xf]
        %v6772 = vld [vmem:[%s2294 + $0x64] sm:$0xf]
        %v6773 = vld [vmem:[%s2294 + $0x6c] sm:$0xf]
        %v6774 = vld [vmem:[%s2294 + $0x70] sm:$0xf]
        %v6775 = vld [vmem:[%s2294 + $0x78] sm:$0xf]
        %v6776 = vld [vmem:[%s2294 + $0x7c] sm:$0xf]
        %v6777 = vld [vmem:[%s2294 + $0x84] sm:$0xf]
        %v6778 = vld [vmem:[%s2294 + $0x88] sm:$0xf]
        %v6779 = vld [vmem:[%s2294 + $0x90] sm:$0xf]
        %v6780 = vld [vmem:[%s2294 + $0x94] sm:$0xf]
        %v6781 = vld [vmem:[%s2294 + $0x9c] sm:$0xf]
        %v6782 = vld [vmem:[%s2294 + $0xa0] sm:$0xf]
        %v6783 = vld [vmem:[%s2294 + $0xa8] sm:$0xf]
        %v6784 = vld [vmem:[%s2294 + $0xac] sm:$0xf]
        %v6785 = vld [vmem:[%s2294 + $0xb4] sm:$0xf]
        %v6786 = vld [vmem:[%s2294 + $0xb8] sm:$0xf]
        %v6787 = vld [vmem:[%s2294 + $0x8] sm:$0x1]
        %v6788 = vld [vmem:[%s2294 + $0x14] sm:$0x1]
        %v6789 = vld [vmem:[%s2294 + $0x20] sm:$0x1]
        %v6790 = vld [vmem:[%s2294 + $0x2c] sm:$0x1]
        %v6791 = vld [vmem:[%s2294 + $0x38] sm:$0x1]
        %v6792 = vld [vmem:[%s2294 + $0x44] sm:$0x1]
        %v6793 = vld [vmem:[%s2294 + $0x50] sm:$0x1]
        %v6794 = vld [vmem:[%s2294 + $0x5c] sm:$0x1]
        %v6795 = vld [vmem:[%s2294 + $0x68] sm:$0x1]
        %v6796 = vld [vmem:[%s2294 + $0x74] sm:$0x1]
        %v6797 = vld [vmem:[%s2294 + $0x80] sm:$0x1]
        %v6798 = vld [vmem:[%s2294 + $0x8c] sm:$0x1]
        %v6799 = vld [vmem:[%s2294 + $0x98] sm:$0x1]
        %v6800 = vld [vmem:[%s2294 + $0xa4] sm:$0x1]
        %v6801 = vld [vmem:[%s2294 + $0xb0] sm:$0x1]
        %v6802 = vld [vmem:[%s2294 + $0xbc] sm:$0x1]
        %v6804 = vshrl.u32 %v6755, 16
        %v6806 = vrot.slane %v6804, 4
        %v6807 = vshll.u32 %v6755, 16
        %v6809 = vrot.slane %v6807, 5
        %v6810 = vor.u32 %v6806, %v6809
        %v6811 = vrot.slane %v6810, 4
        %v6813 = vshll.u32 %v6756, 16
        %v6815 = vrot.slane %v6813, 5
        %v6816 = vsel %vm1122, %v6811, %v6815
        %v6817 = vshrl.u32 %v6756, 16
        %v6819 = vrot.slane %v6817, 4
        %v6820 = vor.u32 %v6819, %v6815
        %v6821 = vrot.slane %v6820, 4
        %v6823 = vshll.u32 %v6787, 16
        %v6825 = vrot.slane %v6823, 5
        %v6826 = vsel %vm1122, %v6821, %v6825
        %v6828 = vshrl.u32 %v6757, 16
        %v6830 = vrot.slane %v6828, 4
        %v6831 = vshll.u32 %v6757, 16
        %v6833 = vrot.slane %v6831, 5
        %v6834 = vor.u32 %v6830, %v6833
        %v6835 = vrot.slane %v6834, 4
        %v6837 = vshll.u32 %v6758, 16
        %v6839 = vrot.slane %v6837, 5
        %v6840 = vsel %vm1122, %v6835, %v6839
        %v6841 = vshrl.u32 %v6758, 16
        %v6843 = vrot.slane %v6841, 4
        %v6844 = vor.u32 %v6843, %v6839
        %v6845 = vrot.slane %v6844, 4
        %v6847 = vshll.u32 %v6788, 16
        %v6849 = vrot.slane %v6847, 5
        %v6850 = vsel %vm1122, %v6845, %v6849
        %v6852 = vshrl.u32 %v6759, 16
        %v6854 = vrot.slane %v6852, 4
        %v6855 = vshll.u32 %v6759, 16
        %v6857 = vrot.slane %v6855, 5
        %v6858 = vor.u32 %v6854, %v6857
        %v6859 = vrot.slane %v6858, 4
        %v6861 = vshll.u32 %v6760, 16
        %v6863 = vrot.slane %v6861, 5
        %v6864 = vsel %vm1122, %v6859, %v6863
        %v6865 = vshrl.u32 %v6760, 16
        %v6867 = vrot.slane %v6865, 4
        %v6868 = vor.u32 %v6867, %v6863
        %v6869 = vrot.slane %v6868, 4
        %v6871 = vshll.u32 %v6789, 16
        %v6873 = vrot.slane %v6871, 5
        %v6874 = vsel %vm1122, %v6869, %v6873
        %v6876 = vshrl.u32 %v6761, 16
        %v6878 = vrot.slane %v6876, 4
        %v6879 = vshll.u32 %v6761, 16
        %v6881 = vrot.slane %v6879, 5
        %v6882 = vor.u32 %v6878, %v6881
        %v6883 = vrot.slane %v6882, 4
        %v6885 = vshll.u32 %v6762, 16
        %v6887 = vrot.slane %v6885, 5
        %v6888 = vsel %vm1122, %v6883, %v6887
        %v6889 = vshrl.u32 %v6762, 16
        %v6891 = vrot.slane %v6889, 4
        %v6892 = vor.u32 %v6891, %v6887
        %v6893 = vrot.slane %v6892, 4
        %v6895 = vshll.u32 %v6790, 16
        %v6897 = vrot.slane %v6895, 5
        %v6898 = vsel %vm1122, %v6893, %v6897
        %v6900 = vshrl.u32 %v6763, 16
        %v6902 = vrot.slane %v6900, 4
        %v6903 = vshll.u32 %v6763, 16
        %v6905 = vrot.slane %v6903, 5
        %v6906 = vor.u32 %v6902, %v6905
        %v6907 = vrot.slane %v6906, 4
        %v6909 = vshll.u32 %v6764, 16
        %v6911 = vrot.slane %v6909, 5
        %v6912 = vsel %vm1122, %v6907, %v6911
        %v6913 = vshrl.u32 %v6764, 16
        %v6915 = vrot.slane %v6913, 4
        %v6916 = vor.u32 %v6915, %v6911
        %v6917 = vrot.slane %v6916, 4
        %v6919 = vshll.u32 %v6791, 16
        %v6921 = vrot.slane %v6919, 5
        %v6922 = vsel %vm1122, %v6917, %v6921
        %v6924 = vshrl.u32 %v6765, 16
        %v6926 = vrot.slane %v6924, 4
        %v6927 = vshll.u32 %v6765, 16
        %v6929 = vrot.slane %v6927, 5
        %v6930 = vor.u32 %v6926, %v6929
        %v6931 = vrot.slane %v6930, 4
        %v6933 = vshll.u32 %v6766, 16
        %v6935 = vrot.slane %v6933, 5
        %v6936 = vsel %vm1122, %v6931, %v6935
        %v6937 = vshrl.u32 %v6766, 16
        %v6939 = vrot.slane %v6937, 4
        %v6940 = vor.u32 %v6939, %v6935
        %v6941 = vrot.slane %v6940, 4
        %v6943 = vshll.u32 %v6792, 16
        %v6945 = vrot.slane %v6943, 5
        %v6946 = vsel %vm1122, %v6941, %v6945
        %v6948 = vshrl.u32 %v6767, 16
        %v6950 = vrot.slane %v6948, 4
        %v6951 = vshll.u32 %v6767, 16
        %v6953 = vrot.slane %v6951, 5
        %v6954 = vor.u32 %v6950, %v6953
        %v6955 = vrot.slane %v6954, 4
        %v6957 = vshll.u32 %v6768, 16
        %v6959 = vrot.slane %v6957, 5
        %v6960 = vsel %vm1122, %v6955, %v6959
        %v6961 = vshrl.u32 %v6768, 16
        %v6963 = vrot.slane %v6961, 4
        %v6964 = vor.u32 %v6963, %v6959
        %v6965 = vrot.slane %v6964, 4
        %v6967 = vshll.u32 %v6793, 16
        %v6969 = vrot.slane %v6967, 5
        %v6970 = vsel %vm1122, %v6965, %v6969
        %v6972 = vshrl.u32 %v6769, 16
        %v6974 = vrot.slane %v6972, 4
        %v6975 = vshll.u32 %v6769, 16
        %v6977 = vrot.slane %v6975, 5
        %v6978 = vor.u32 %v6974, %v6977
        %v6979 = vrot.slane %v6978, 4
        %v6981 = vshll.u32 %v6770, 16
        %v6983 = vrot.slane %v6981, 5
        %v6984 = vsel %vm1122, %v6979, %v6983
        %v6985 = vshrl.u32 %v6770, 16
        %v6987 = vrot.slane %v6985, 4
        %v6988 = vor.u32 %v6987, %v6983
        %v6989 = vrot.slane %v6988, 4
        %v6991 = vshll.u32 %v6794, 16
        %v6993 = vrot.slane %v6991, 5
        %v6994 = vsel %vm1122, %v6989, %v6993
        %v6996 = vshrl.u32 %v6771, 16
        %v6998 = vrot.slane %v6996, 4
        %v6999 = vshll.u32 %v6771, 16
        %v7001 = vrot.slane %v6999, 5
        %v7002 = vor.u32 %v6998, %v7001
        %v7003 = vrot.slane %v7002, 4
        %v7005 = vshll.u32 %v6772, 16
        %v7007 = vrot.slane %v7005, 5
        %v7008 = vsel %vm1122, %v7003, %v7007
        %v7009 = vshrl.u32 %v6772, 16
        %v7011 = vrot.slane %v7009, 4
        %v7012 = vor.u32 %v7011, %v7007
        %v7013 = vrot.slane %v7012, 4
        %v7015 = vshll.u32 %v6795, 16
        %v7017 = vrot.slane %v7015, 5
        %v7018 = vsel %vm1122, %v7013, %v7017
        %v7020 = vshrl.u32 %v6773, 16
        %v7022 = vrot.slane %v7020, 4
        %v7023 = vshll.u32 %v6773, 16
        %v7025 = vrot.slane %v7023, 5
        %v7026 = vor.u32 %v7022, %v7025
        %v7027 = vrot.slane %v7026, 4
        %v7029 = vshll.u32 %v6774, 16
        %v7031 = vrot.slane %v7029, 5
        %v7032 = vsel %vm1122, %v7027, %v7031
        %v7033 = vshrl.u32 %v6774, 16
        %v7035 = vrot.slane %v7033, 4
        %v7036 = vor.u32 %v7035, %v7031
        %v7037 = vrot.slane %v7036, 4
        %v7039 = vshll.u32 %v6796, 16
        %v7041 = vrot.slane %v7039, 5
        %v7042 = vsel %vm1122, %v7037, %v7041
        %v7044 = vshrl.u32 %v6775, 16
        %v7046 = vrot.slane %v7044, 4
        %v7047 = vshll.u32 %v6775, 16
        %v7049 = vrot.slane %v7047, 5
        %v7050 = vor.u32 %v7046, %v7049
        %v7051 = vrot.slane %v7050, 4
        %v7053 = vshll.u32 %v6776, 16
        %v7055 = vrot.slane %v7053, 5
        %v7056 = vsel %vm1122, %v7051, %v7055
        %v7057 = vshrl.u32 %v6776, 16
        %v7059 = vrot.slane %v7057, 4
        %v7060 = vor.u32 %v7059, %v7055
        %v7061 = vrot.slane %v7060, 4
        %v7063 = vshll.u32 %v6797, 16
        %v7065 = vrot.slane %v7063, 5
        %v7066 = vsel %vm1122, %v7061, %v7065
        %v7068 = vshrl.u32 %v6777, 16
        %v7070 = vrot.slane %v7068, 4
        %v7071 = vshll.u32 %v6777, 16
        %v7073 = vrot.slane %v7071, 5
        %v7074 = vor.u32 %v7070, %v7073
        %v7075 = vrot.slane %v7074, 4
        %v7077 = vshll.u32 %v6778, 16
        %v7079 = vrot.slane %v7077, 5
        %v7080 = vsel %vm1122, %v7075, %v7079
        %v7081 = vshrl.u32 %v6778, 16
        %v7083 = vrot.slane %v7081, 4
        %v7084 = vor.u32 %v7083, %v7079
        %v7085 = vrot.slane %v7084, 4
        %v7087 = vshll.u32 %v6798, 16
        %v7089 = vrot.slane %v7087, 5
        %v7090 = vsel %vm1122, %v7085, %v7089
        %v7092 = vshrl.u32 %v6779, 16
        %v7094 = vrot.slane %v7092, 4
        %v7095 = vshll.u32 %v6779, 16
        %v7097 = vrot.slane %v7095, 5
        %v7098 = vor.u32 %v7094, %v7097
        %v7099 = vrot.slane %v7098, 4
        %v7101 = vshll.u32 %v6780, 16
        %v7103 = vrot.slane %v7101, 5
        %v7104 = vsel %vm1122, %v7099, %v7103
        %v7105 = vshrl.u32 %v6780, 16
        %v7107 = vrot.slane %v7105, 4
        %v7108 = vor.u32 %v7107, %v7103
        %v7109 = vrot.slane %v7108, 4
        %v7111 = vshll.u32 %v6799, 16
        %v7113 = vrot.slane %v7111, 5
        %v7114 = vsel %vm1122, %v7109, %v7113
        %v7116 = vshrl.u32 %v6781, 16
        %v7118 = vrot.slane %v7116, 4
        %v7119 = vshll.u32 %v6781, 16
        %v7121 = vrot.slane %v7119, 5
        %v7122 = vor.u32 %v7118, %v7121
        %v7123 = vrot.slane %v7122, 4
        %v7125 = vshll.u32 %v6782, 16
        %v7127 = vrot.slane %v7125, 5
        %v7128 = vsel %vm1122, %v7123, %v7127
        %v7129 = vshrl.u32 %v6782, 16
        %v7131 = vrot.slane %v7129, 4
        %v7132 = vor.u32 %v7131, %v7127
        %v7133 = vrot.slane %v7132, 4
        %v7135 = vshll.u32 %v6800, 16
        %v7137 = vrot.slane %v7135, 5
        %v7138 = vsel %vm1122, %v7133, %v7137
        %v7140 = vshrl.u32 %v6783, 16
        %v7142 = vrot.slane %v7140, 4
        %v7143 = vshll.u32 %v6783, 16
        %v7145 = vrot.slane %v7143, 5
        %v7146 = vor.u32 %v7142, %v7145
        %v7147 = vrot.slane %v7146, 4
        %v7149 = vshll.u32 %v6784, 16
        %v7151 = vrot.slane %v7149, 5
        %v7152 = vsel %vm1122, %v7147, %v7151
        %v7153 = vshrl.u32 %v6784, 16
        %v7155 = vrot.slane %v7153, 4
        %v7156 = vor.u32 %v7155, %v7151
        %v7157 = vrot.slane %v7156, 4
        %v7159 = vshll.u32 %v6801, 16
        %v7161 = vrot.slane %v7159, 5
        %v7162 = vsel %vm1122, %v7157, %v7161
        %v7164 = vshrl.u32 %v6785, 16
        %v7166 = vrot.slane %v7164, 4
        %v7167 = vshll.u32 %v6785, 16
        %v7169 = vrot.slane %v7167, 5
        %v7170 = vor.u32 %v7166, %v7169
        %v7171 = vrot.slane %v7170, 4
        %v7173 = vshll.u32 %v6786, 16
        %v7175 = vrot.slane %v7173, 5
        %v7176 = vsel %vm1122, %v7171, %v7175
        %v7177 = vshrl.u32 %v6786, 16
        %v7179 = vrot.slane %v7177, 4
        %v7180 = vor.u32 %v7179, %v7175
        %v7181 = vrot.slane %v7180, 4
        %v7183 = vshll.u32 %v6802, 16
        %v7185 = vrot.slane %v7183, 5
        %v7186 = vsel %vm1122, %v7181, %v7185
        %v7187 = vld [vmem:[%s2294] sm:$0xe]
        %v7188 = vld [vmem:[%s2294 + $0xc] sm:$0xe]
        %v7189 = vld [vmem:[%s2294 + $0x18] sm:$0xe]
        %v7190 = vld [vmem:[%s2294 + $0x24] sm:$0xe]
        %v7191 = vld [vmem:[%s2294 + $0x30] sm:$0xe]
        %v7192 = vld [vmem:[%s2294 + $0x3c] sm:$0xe]
        %v7193 = vld [vmem:[%s2294 + $0x48] sm:$0xe]
        %v7194 = vld [vmem:[%s2294 + $0x54] sm:$0xe]
        %v7195 = vld [vmem:[%s2294 + $0x60] sm:$0xe]
        %v7196 = vld [vmem:[%s2294 + $0x6c] sm:$0xe]
        %v7197 = vld [vmem:[%s2294 + $0x78] sm:$0xe]
        %v7198 = vld [vmem:[%s2294 + $0x84] sm:$0xe]
        %v7199 = vld [vmem:[%s2294 + $0x90] sm:$0xe]
        %v7200 = vld [vmem:[%s2294 + $0x9c] sm:$0xe]
        %v7201 = vld [vmem:[%s2294 + $0xa8] sm:$0xe]
        %v7202 = vld [vmem:[%s2294 + $0xb4] sm:$0xe]
        %v7251 = vrot.slane %v7187, 5
        %v7252 = vrot.slane %v7251, 4
        %v7253 = vrot.slane %v6756, 5
        %v7254 = vsel %vm1573, %v7252, %v7253
        %v7255 = vrot.slane %v7253, 4
        %v7256 = vrot.slane %v6787, 5
        %v7257 = vsel %vm1573, %v7255, %v7256
        %v7258 = vrot.slane %v7188, 5
        %v7259 = vrot.slane %v7258, 4
        %v7260 = vrot.slane %v6758, 5
        %v7261 = vsel %vm1573, %v7259, %v7260
        %v7262 = vrot.slane %v7260, 4
        %v7263 = vrot.slane %v6788, 5
        %v7264 = vsel %vm1573, %v7262, %v7263
        %v7265 = vrot.slane %v7189, 5
        %v7266 = vrot.slane %v7265, 4
        %v7267 = vrot.slane %v6760, 5
        %v7268 = vsel %vm1573, %v7266, %v7267
        %v7269 = vrot.slane %v7267, 4
        %v7270 = vrot.slane %v6789, 5
        %v7271 = vsel %vm1573, %v7269, %v7270
        %v7272 = vrot.slane %v7190, 5
        %v7273 = vrot.slane %v7272, 4
        %v7274 = vrot.slane %v6762, 5
        %v7275 = vsel %vm1573, %v7273, %v7274
        %v7276 = vrot.slane %v7274, 4
        %v7277 = vrot.slane %v6790, 5
        %v7278 = vsel %vm1573, %v7276, %v7277
        %v7279 = vrot.slane %v7191, 5
        %v7280 = vrot.slane %v7279, 4
        %v7281 = vrot.slane %v6764, 5
        %v7282 = vsel %vm1573, %v7280, %v7281
        %v7283 = vrot.slane %v7281, 4
        %v7284 = vrot.slane %v6791, 5
        %v7285 = vsel %vm1573, %v7283, %v7284
        %v7286 = vrot.slane %v7192, 5
        %v7287 = vrot.slane %v7286, 4
        %v7288 = vrot.slane %v6766, 5
        %v7289 = vsel %vm1573, %v7287, %v7288
        %v7290 = vrot.slane %v7288, 4
        %v7291 = vrot.slane %v6792, 5
        %v7292 = vsel %vm1573, %v7290, %v7291
        %v7293 = vrot.slane %v7193, 5
        %v7294 = vrot.slane %v7293, 4
        %v7295 = vrot.slane %v6768, 5
        %v7296 = vsel %vm1573, %v7294, %v7295
        %v7297 = vrot.slane %v7295, 4
        %v7298 = vrot.slane %v6793, 5
        %v7299 = vsel %vm1573, %v7297, %v7298
        %v7300 = vrot.slane %v7194, 5
        %v7301 = vrot.slane %v7300, 4
        %v7302 = vrot.slane %v6770, 5
        %v7303 = vsel %vm1573, %v7301, %v7302
        %v7304 = vrot.slane %v7302, 4
        %v7305 = vrot.slane %v6794, 5
        %v7306 = vsel %vm1573, %v7304, %v7305
        %v7307 = vrot.slane %v7195, 5
        %v7308 = vrot.slane %v7307, 4
        %v7309 = vrot.slane %v6772, 5
        %v7310 = vsel %vm1573, %v7308, %v7309
        %v7311 = vrot.slane %v7309, 4
        %v7312 = vrot.slane %v6795, 5
        %v7313 = vsel %vm1573, %v7311, %v7312
        %v7314 = vrot.slane %v7196, 5
        %v7315 = vrot.slane %v7314, 4
        %v7316 = vrot.slane %v6774, 5
        %v7317 = vsel %vm1573, %v7315, %v7316
        %v7318 = vrot.slane %v7316, 4
        %v7319 = vrot.slane %v6796, 5
        %v7320 = vsel %vm1573, %v7318, %v7319
        %v7321 = vrot.slane %v7197, 5
        %v7322 = vrot.slane %v7321, 4
        %v7323 = vrot.slane %v6776, 5
        %v7324 = vsel %vm1573, %v7322, %v7323
        %v7325 = vrot.slane %v7323, 4
        %v7326 = vrot.slane %v6797, 5
        %v7327 = vsel %vm1573, %v7325, %v7326
        %v7328 = vrot.slane %v7198, 5
        %v7329 = vrot.slane %v7328, 4
        %v7330 = vrot.slane %v6778, 5
        %v7331 = vsel %vm1573, %v7329, %v7330
        %v7332 = vrot.slane %v7330, 4
        %v7333 = vrot.slane %v6798, 5
        %v7334 = vsel %vm1573, %v7332, %v7333
        %v7335 = vrot.slane %v7199, 5
        %v7336 = vrot.slane %v7335, 4
        %v7337 = vrot.slane %v6780, 5
        %v7338 = vsel %vm1573, %v7336, %v7337
        %v7339 = vrot.slane %v7337, 4
        %v7340 = vrot.slane %v6799, 5
        %v7341 = vsel %vm1573, %v7339, %v7340
        %v7342 = vrot.slane %v7200, 5
        %v7343 = vrot.slane %v7342, 4
        %v7344 = vrot.slane %v6782, 5
        %v7345 = vsel %vm1573, %v7343, %v7344
        %v7346 = vrot.slane %v7344, 4
        %v7347 = vrot.slane %v6800, 5
        %v7348 = vsel %vm1573, %v7346, %v7347
        %v7349 = vrot.slane %v7201, 5
        %v7350 = vrot.slane %v7349, 4
        %v7351 = vrot.slane %v6784, 5
        %v7352 = vsel %vm1573, %v7350, %v7351
        %v7353 = vrot.slane %v7351, 4
        %v7354 = vrot.slane %v6801, 5
        %v7355 = vsel %vm1573, %v7353, %v7354
        %v7356 = vrot.slane %v7202, 5
        %v7357 = vrot.slane %v7356, 4
        %v7358 = vrot.slane %v6786, 5
        %v7359 = vsel %vm1573, %v7357, %v7358
        %v7360 = vrot.slane %v7358, 4
        %v7361 = vrot.slane %v6802, 5
        %v7362 = vsel %vm1573, %v7360, %v7361
        %v7379 = vunpack.c.l.b16 %v5539
        %v7380 = vunpack.c.l.b16 %v5540
        %v7381 = vunpack.c.l.b16 %v5541
        %v7382 = vunpack.c.l.b16 %v5542
        %v7383 = vunpack.c.l.b16 %v5543
        %v7384 = vunpack.c.l.b16 %v5544
        %v7385 = vunpack.c.l.b16 %v5545
        %v7386 = vunpack.c.l.b16 %v5546
        %v7387 = vunpack.c.l.b16 %v5547
        %v7388 = vunpack.c.l.b16 %v5548
        %v7389 = vunpack.c.l.b16 %v5549
        %v7390 = vunpack.c.l.b16 %v5550
        %v7391 = vunpack.c.l.b16 %v5551
        %v7392 = vunpack.c.l.b16 %v5552
        %v7393 = vunpack.c.l.b16 %v5553
        %v7394 = vunpack.c.l.b16 %v5554
        %v7395 = vunpack.c.l.b16 %v5555
        %v7396 = vunpack.c.l.b16 %v5556
        %v7397 = vunpack.c.l.b16 %v5557
        %v7398 = vunpack.c.l.b16 %v5558
        %v7399 = vunpack.c.l.b16 %v5559
        %v7400 = vunpack.c.l.b16 %v5560
        %v7401 = vunpack.c.l.b16 %v5561
        %v7402 = vunpack.c.l.b16 %v5562
        %v7403 = vunpack.c.l.b16 %v5563
        %v7404 = vunpack.c.l.b16 %v5564
        %v7405 = vunpack.c.l.b16 %v5565
        %v7406 = vunpack.c.l.b16 %v5566
        %v7407 = vunpack.c.l.b16 %v5567
        %v7408 = vunpack.c.l.b16 %v5568
        %v7409 = vunpack.c.l.b16 %v5569
        %v7410 = vunpack.c.l.b16 %v5570
        %v7411 = vpack.c.b16 %v7380, %v7379
        %v7412 = vpack.c.b16 %v7382, %v7381
        %v7413 = vpack.c.b16 %v7384, %v7383
        %v7414 = vpack.c.b16 %v7386, %v7385
        %v7415 = vpack.c.b16 %v7388, %v7387
        %v7416 = vpack.c.b16 %v7390, %v7389
        %v7417 = vpack.c.b16 %v7392, %v7391
        %v7418 = vpack.c.b16 %v7394, %v7393
        %v7419 = vpack.c.b16 %v7396, %v7395
        %v7420 = vpack.c.b16 %v7398, %v7397
        %v7421 = vpack.c.b16 %v7400, %v7399
        %v7422 = vpack.c.b16 %v7402, %v7401
        %v7423 = vpack.c.b16 %v7404, %v7403
        %v7424 = vpack.c.b16 %v7406, %v7405
        %v7425 = vpack.c.b16 %v7408, %v7407
        %v7426 = vpack.c.b16 %v7410, %v7409
        %v7443 = vunpack.c.l.b16 %v5600
        %v7444 = vunpack.c.l.b16 %v5610
        %v7445 = vunpack.c.l.b16 %v5624
        %v7446 = vunpack.c.l.b16 %v5634
        %v7447 = vunpack.c.l.b16 %v5648
        %v7448 = vunpack.c.l.b16 %v5658
        %v7449 = vunpack.c.l.b16 %v5672
        %v7450 = vunpack.c.l.b16 %v5682
        %v7451 = vunpack.c.l.b16 %v5696
        %v7452 = vunpack.c.l.b16 %v5706
        %v7453 = vunpack.c.l.b16 %v5720
        %v7454 = vunpack.c.l.b16 %v5730
        %v7455 = vunpack.c.l.b16 %v5744
        %v7456 = vunpack.c.l.b16 %v5754
        %v7457 = vunpack.c.l.b16 %v5768
        %v7458 = vunpack.c.l.b16 %v5778
        %v7459 = vunpack.c.l.b16 %v5792
        %v7460 = vunpack.c.l.b16 %v5802
        %v7461 = vunpack.c.l.b16 %v5816
        %v7462 = vunpack.c.l.b16 %v5826
        %v7463 = vunpack.c.l.b16 %v5840
        %v7464 = vunpack.c.l.b16 %v5850
        %v7465 = vunpack.c.l.b16 %v5864
        %v7466 = vunpack.c.l.b16 %v5874
        %v7467 = vunpack.c.l.b16 %v5888
        %v7468 = vunpack.c.l.b16 %v5898
        %v7469 = vunpack.c.l.b16 %v5912
        %v7470 = vunpack.c.l.b16 %v5922
        %v7471 = vunpack.c.l.b16 %v5936
        %v7472 = vunpack.c.l.b16 %v5946
        %v7473 = vunpack.c.l.b16 %v5960
        %v7474 = vunpack.c.l.b16 %v5970
        %v7475 = vpack.c.b16 %v7444, %v7443
        %v7476 = vpack.c.b16 %v7446, %v7445
        %v7477 = vpack.c.b16 %v7448, %v7447
        %v7478 = vpack.c.b16 %v7450, %v7449
        %v7479 = vpack.c.b16 %v7452, %v7451
        %v7480 = vpack.c.b16 %v7454, %v7453
        %v7481 = vpack.c.b16 %v7456, %v7455
        %v7482 = vpack.c.b16 %v7458, %v7457
        %v7483 = vpack.c.b16 %v7460, %v7459
        %v7484 = vpack.c.b16 %v7462, %v7461
        %v7485 = vpack.c.b16 %v7464, %v7463
        %v7486 = vpack.c.b16 %v7466, %v7465
        %v7487 = vpack.c.b16 %v7468, %v7467
        %v7488 = vpack.c.b16 %v7470, %v7469
        %v7489 = vpack.c.b16 %v7472, %v7471
        %v7490 = vpack.c.b16 %v7474, %v7473
        %v7507 = vunpack.c.l.b16 %v6038
        %v7508 = vunpack.c.l.b16 %v6041
        %v7509 = vunpack.c.l.b16 %v6045
        %v7510 = vunpack.c.l.b16 %v6048
        %v7511 = vunpack.c.l.b16 %v6052
        %v7512 = vunpack.c.l.b16 %v6055
        %v7513 = vunpack.c.l.b16 %v6059
        %v7514 = vunpack.c.l.b16 %v6062
        %v7515 = vunpack.c.l.b16 %v6066
        %v7516 = vunpack.c.l.b16 %v6069
        %v7517 = vunpack.c.l.b16 %v6073
        %v7518 = vunpack.c.l.b16 %v6076
        %v7519 = vunpack.c.l.b16 %v6080
        %v7520 = vunpack.c.l.b16 %v6083
        %v7521 = vunpack.c.l.b16 %v6087
        %v7522 = vunpack.c.l.b16 %v6090
        %v7523 = vunpack.c.l.b16 %v6094
        %v7524 = vunpack.c.l.b16 %v6097
        %v7525 = vunpack.c.l.b16 %v6101
        %v7526 = vunpack.c.l.b16 %v6104
        %v7527 = vunpack.c.l.b16 %v6108
        %v7528 = vunpack.c.l.b16 %v6111
        %v7529 = vunpack.c.l.b16 %v6115
        %v7530 = vunpack.c.l.b16 %v6118
        %v7531 = vunpack.c.l.b16 %v6122
        %v7532 = vunpack.c.l.b16 %v6125
        %v7533 = vunpack.c.l.b16 %v6129
        %v7534 = vunpack.c.l.b16 %v6132
        %v7535 = vunpack.c.l.b16 %v6136
        %v7536 = vunpack.c.l.b16 %v6139
        %v7537 = vunpack.c.l.b16 %v6143
        %v7538 = vunpack.c.l.b16 %v6146
        %v7539 = vpack.c.b16 %v7508, %v7507
        %v7540 = vpack.c.b16 %v7510, %v7509
        %v7541 = vpack.c.b16 %v7512, %v7511
        %v7542 = vpack.c.b16 %v7514, %v7513
        %v7543 = vpack.c.b16 %v7516, %v7515
        %v7544 = vpack.c.b16 %v7518, %v7517
        %v7545 = vpack.c.b16 %v7520, %v7519
        %v7546 = vpack.c.b16 %v7522, %v7521
        %v7547 = vpack.c.b16 %v7524, %v7523
        %v7548 = vpack.c.b16 %v7526, %v7525
        %v7549 = vpack.c.b16 %v7528, %v7527
        %v7550 = vpack.c.b16 %v7530, %v7529
        %v7551 = vpack.c.b16 %v7532, %v7531
        %v7552 = vpack.c.b16 %v7534, %v7533
        %v7553 = vpack.c.b16 %v7536, %v7535
        %v7554 = vpack.c.b16 %v7538, %v7537
        %v7587 = vunpack.c.l.b16 %v6147
        %v7588 = vunpack.c.l.b16 %v6148
        %v7589 = vunpack.c.l.b16 %v6149
        %v7590 = vunpack.c.l.b16 %v6150
        %v7591 = vunpack.c.l.b16 %v6151
        %v7592 = vunpack.c.l.b16 %v6152
        %v7593 = vunpack.c.l.b16 %v6153
        %v7594 = vunpack.c.l.b16 %v6154
        %v7595 = vunpack.c.l.b16 %v6155
        %v7596 = vunpack.c.l.b16 %v6156
        %v7597 = vunpack.c.l.b16 %v6157
        %v7598 = vunpack.c.l.b16 %v6158
        %v7599 = vunpack.c.l.b16 %v6159
        %v7600 = vunpack.c.l.b16 %v6160
        %v7601 = vunpack.c.l.b16 %v6161
        %v7602 = vunpack.c.l.b16 %v6162
        %v7603 = vunpack.c.l.b16 %v6163
        %v7604 = vunpack.c.l.b16 %v6164
        %v7605 = vunpack.c.l.b16 %v6165
        %v7606 = vunpack.c.l.b16 %v6166
        %v7607 = vunpack.c.l.b16 %v6167
        %v7608 = vunpack.c.l.b16 %v6168
        %v7609 = vunpack.c.l.b16 %v6169
        %v7610 = vunpack.c.l.b16 %v6170
        %v7611 = vunpack.c.l.b16 %v6171
        %v7612 = vunpack.c.l.b16 %v6172
        %v7613 = vunpack.c.l.b16 %v6173
        %v7614 = vunpack.c.l.b16 %v6174
        %v7615 = vunpack.c.l.b16 %v6175
        %v7616 = vunpack.c.l.b16 %v6176
        %v7617 = vunpack.c.l.b16 %v6177
        %v7618 = vunpack.c.l.b16 %v6178
        %v7619 = vpack.c.b16 %v7588, %v7587
        %v7620 = vpack.c.b16 %v7590, %v7589
        %v7621 = vpack.c.b16 %v7592, %v7591
        %v7622 = vpack.c.b16 %v7594, %v7593
        %v7623 = vpack.c.b16 %v7596, %v7595
        %v7624 = vpack.c.b16 %v7598, %v7597
        %v7625 = vpack.c.b16 %v7600, %v7599
        %v7626 = vpack.c.b16 %v7602, %v7601
        %v7627 = vpack.c.b16 %v7604, %v7603
        %v7628 = vpack.c.b16 %v7606, %v7605
        %v7629 = vpack.c.b16 %v7608, %v7607
        %v7630 = vpack.c.b16 %v7610, %v7609
        %v7631 = vpack.c.b16 %v7612, %v7611
        %v7632 = vpack.c.b16 %v7614, %v7613
        %v7633 = vpack.c.b16 %v7616, %v7615
        %v7634 = vpack.c.b16 %v7618, %v7617
        %v7651 = vunpack.c.l.b16 %v6208
        %v7652 = vunpack.c.l.b16 %v6218
        %v7653 = vunpack.c.l.b16 %v6232
        %v7654 = vunpack.c.l.b16 %v6242
        %v7655 = vunpack.c.l.b16 %v6256
        %v7656 = vunpack.c.l.b16 %v6266
        %v7657 = vunpack.c.l.b16 %v6280
        %v7658 = vunpack.c.l.b16 %v6290
        %v7659 = vunpack.c.l.b16 %v6304
        %v7660 = vunpack.c.l.b16 %v6314
        %v7661 = vunpack.c.l.b16 %v6328
        %v7662 = vunpack.c.l.b16 %v6338
        %v7663 = vunpack.c.l.b16 %v6352
        %v7664 = vunpack.c.l.b16 %v6362
        %v7665 = vunpack.c.l.b16 %v6376
        %v7666 = vunpack.c.l.b16 %v6386
        %v7667 = vunpack.c.l.b16 %v6400
        %v7668 = vunpack.c.l.b16 %v6410
        %v7669 = vunpack.c.l.b16 %v6424
        %v7670 = vunpack.c.l.b16 %v6434
        %v7671 = vunpack.c.l.b16 %v6448
        %v7672 = vunpack.c.l.b16 %v6458
        %v7673 = vunpack.c.l.b16 %v6472
        %v7674 = vunpack.c.l.b16 %v6482
        %v7675 = vunpack.c.l.b16 %v6496
        %v7676 = vunpack.c.l.b16 %v6506
        %v7677 = vunpack.c.l.b16 %v6520
        %v7678 = vunpack.c.l.b16 %v6530
        %v7679 = vunpack.c.l.b16 %v6544
        %v7680 = vunpack.c.l.b16 %v6554
        %v7681 = vunpack.c.l.b16 %v6568
        %v7682 = vunpack.c.l.b16 %v6578
        %v7683 = vpack.c.b16 %v7652, %v7651
        %v7684 = vpack.c.b16 %v7654, %v7653
        %v7685 = vpack.c.b16 %v7656, %v7655
        %v7686 = vpack.c.b16 %v7658, %v7657
        %v7687 = vpack.c.b16 %v7660, %v7659
        %v7688 = vpack.c.b16 %v7662, %v7661
        %v7689 = vpack.c.b16 %v7664, %v7663
        %v7690 = vpack.c.b16 %v7666, %v7665
        %v7691 = vpack.c.b16 %v7668, %v7667
        %v7692 = vpack.c.b16 %v7670, %v7669
        %v7693 = vpack.c.b16 %v7672, %v7671
        %v7694 = vpack.c.b16 %v7674, %v7673
        %v7695 = vpack.c.b16 %v7676, %v7675
        %v7696 = vpack.c.b16 %v7678, %v7677
        %v7697 = vpack.c.b16 %v7680, %v7679
        %v7698 = vpack.c.b16 %v7682, %v7681
        %v7715 = vunpack.c.l.b16 %v6646
        %v7716 = vunpack.c.l.b16 %v6649
        %v7717 = vunpack.c.l.b16 %v6653
        %v7718 = vunpack.c.l.b16 %v6656
        %v7719 = vunpack.c.l.b16 %v6660
        %v7720 = vunpack.c.l.b16 %v6663
        %v7721 = vunpack.c.l.b16 %v6667
        %v7722 = vunpack.c.l.b16 %v6670
        %v7723 = vunpack.c.l.b16 %v6674
        %v7724 = vunpack.c.l.b16 %v6677
        %v7725 = vunpack.c.l.b16 %v6681
        %v7726 = vunpack.c.l.b16 %v6684
        %v7727 = vunpack.c.l.b16 %v6688
        %v7728 = vunpack.c.l.b16 %v6691
        %v7729 = vunpack.c.l.b16 %v6695
        %v7730 = vunpack.c.l.b16 %v6698
        %v7731 = vunpack.c.l.b16 %v6702
        %v7732 = vunpack.c.l.b16 %v6705
        %v7733 = vunpack.c.l.b16 %v6709
        %v7734 = vunpack.c.l.b16 %v6712
        %v7735 = vunpack.c.l.b16 %v6716
        %v7736 = vunpack.c.l.b16 %v6719
        %v7737 = vunpack.c.l.b16 %v6723
        %v7738 = vunpack.c.l.b16 %v6726
        %v7739 = vunpack.c.l.b16 %v6730
        %v7740 = vunpack.c.l.b16 %v6733
        %v7741 = vunpack.c.l.b16 %v6737
        %v7742 = vunpack.c.l.b16 %v6740
        %v7743 = vunpack.c.l.b16 %v6744
        %v7744 = vunpack.c.l.b16 %v6747
        %v7745 = vunpack.c.l.b16 %v6751
        %v7746 = vunpack.c.l.b16 %v6754
        %v7747 = vpack.c.b16 %v7716, %v7715
        %v7748 = vpack.c.b16 %v7718, %v7717
        %v7749 = vpack.c.b16 %v7720, %v7719
        %v7750 = vpack.c.b16 %v7722, %v7721
        %v7751 = vpack.c.b16 %v7724, %v7723
        %v7752 = vpack.c.b16 %v7726, %v7725
        %v7753 = vpack.c.b16 %v7728, %v7727
        %v7754 = vpack.c.b16 %v7730, %v7729
        %v7755 = vpack.c.b16 %v7732, %v7731
        %v7756 = vpack.c.b16 %v7734, %v7733
        %v7757 = vpack.c.b16 %v7736, %v7735
        %v7758 = vpack.c.b16 %v7738, %v7737
        %v7759 = vpack.c.b16 %v7740, %v7739
        %v7760 = vpack.c.b16 %v7742, %v7741
        %v7761 = vpack.c.b16 %v7744, %v7743
        %v7762 = vpack.c.b16 %v7746, %v7745
        %v7795 = vunpack.c.l.b16 %v6755
        %v7796 = vunpack.c.l.b16 %v6756
        %v7797 = vunpack.c.l.b16 %v6757
        %v7798 = vunpack.c.l.b16 %v6758
        %v7799 = vunpack.c.l.b16 %v6759
        %v7800 = vunpack.c.l.b16 %v6760
        %v7801 = vunpack.c.l.b16 %v6761
        %v7802 = vunpack.c.l.b16 %v6762
        %v7803 = vunpack.c.l.b16 %v6763
        %v7804 = vunpack.c.l.b16 %v6764
        %v7805 = vunpack.c.l.b16 %v6765
        %v7806 = vunpack.c.l.b16 %v6766
        %v7807 = vunpack.c.l.b16 %v6767
        %v7808 = vunpack.c.l.b16 %v6768
        %v7809 = vunpack.c.l.b16 %v6769
        %v7810 = vunpack.c.l.b16 %v6770
        %v7811 = vunpack.c.l.b16 %v6771
        %v7812 = vunpack.c.l.b16 %v6772
        %v7813 = vunpack.c.l.b16 %v6773
        %v7814 = vunpack.c.l.b16 %v6774
        %v7815 = vunpack.c.l.b16 %v6775
        %v7816 = vunpack.c.l.b16 %v6776
        %v7817 = vunpack.c.l.b16 %v6777
        %v7818 = vunpack.c.l.b16 %v6778
        %v7819 = vunpack.c.l.b16 %v6779
        %v7820 = vunpack.c.l.b16 %v6780
        %v7821 = vunpack.c.l.b16 %v6781
        %v7822 = vunpack.c.l.b16 %v6782
        %v7823 = vunpack.c.l.b16 %v6783
        %v7824 = vunpack.c.l.b16 %v6784
        %v7825 = vunpack.c.l.b16 %v6785
        %v7826 = vunpack.c.l.b16 %v6786
        %v7827 = vpack.c.b16 %v7796, %v7795
        %v7828 = vpack.c.b16 %v7798, %v7797
        %v7829 = vpack.c.b16 %v7800, %v7799
        %v7830 = vpack.c.b16 %v7802, %v7801
        %v7831 = vpack.c.b16 %v7804, %v7803
        %v7832 = vpack.c.b16 %v7806, %v7805
        %v7833 = vpack.c.b16 %v7808, %v7807
        %v7834 = vpack.c.b16 %v7810, %v7809
        %v7835 = vpack.c.b16 %v7812, %v7811
        %v7836 = vpack.c.b16 %v7814, %v7813
        %v7837 = vpack.c.b16 %v7816, %v7815
        %v7838 = vpack.c.b16 %v7818, %v7817
        %v7839 = vpack.c.b16 %v7820, %v7819
        %v7840 = vpack.c.b16 %v7822, %v7821
        %v7841 = vpack.c.b16 %v7824, %v7823
        %v7842 = vpack.c.b16 %v7826, %v7825
        %v7859 = vunpack.c.l.b16 %v6816
        %v7860 = vunpack.c.l.b16 %v6826
        %v7861 = vunpack.c.l.b16 %v6840
        %v7862 = vunpack.c.l.b16 %v6850
        %v7863 = vunpack.c.l.b16 %v6864
        %v7864 = vunpack.c.l.b16 %v6874
        %v7865 = vunpack.c.l.b16 %v6888
        %v7866 = vunpack.c.l.b16 %v6898
        %v7867 = vunpack.c.l.b16 %v6912
        %v7868 = vunpack.c.l.b16 %v6922
        %v7869 = vunpack.c.l.b16 %v6936
        %v7870 = vunpack.c.l.b16 %v6946
        %v7871 = vunpack.c.l.b16 %v6960
        %v7872 = vunpack.c.l.b16 %v6970
        %v7873 = vunpack.c.l.b16 %v6984
        %v7874 = vunpack.c.l.b16 %v6994
        %v7875 = vunpack.c.l.b16 %v7008
        %v7876 = vunpack.c.l.b16 %v7018
        %v7877 = vunpack.c.l.b16 %v7032
        %v7878 = vunpack.c.l.b16 %v7042
        %v7879 = vunpack.c.l.b16 %v7056
        %v7880 = vunpack.c.l.b16 %v7066
        %v7881 = vunpack.c.l.b16 %v7080
        %v7882 = vunpack.c.l.b16 %v7090
        %v7883 = vunpack.c.l.b16 %v7104
        %v7884 = vunpack.c.l.b16 %v7114
        %v7885 = vunpack.c.l.b16 %v7128
        %v7886 = vunpack.c.l.b16 %v7138
        %v7887 = vunpack.c.l.b16 %v7152
        %v7888 = vunpack.c.l.b16 %v7162
        %v7889 = vunpack.c.l.b16 %v7176
        %v7890 = vunpack.c.l.b16 %v7186
        %v7891 = vpack.c.b16 %v7860, %v7859
        %v7892 = vpack.c.b16 %v7862, %v7861
        %v7893 = vpack.c.b16 %v7864, %v7863
        %v7894 = vpack.c.b16 %v7866, %v7865
        %v7895 = vpack.c.b16 %v7868, %v7867
        %v7896 = vpack.c.b16 %v7870, %v7869
        %v7897 = vpack.c.b16 %v7872, %v7871
        %v7898 = vpack.c.b16 %v7874, %v7873
        %v7899 = vpack.c.b16 %v7876, %v7875
        %v7900 = vpack.c.b16 %v7878, %v7877
        %v7901 = vpack.c.b16 %v7880, %v7879
        %v7902 = vpack.c.b16 %v7882, %v7881
        %v7903 = vpack.c.b16 %v7884, %v7883
        %v7904 = vpack.c.b16 %v7886, %v7885
        %v7905 = vpack.c.b16 %v7888, %v7887
        %v7906 = vpack.c.b16 %v7890, %v7889
        %v7923 = vunpack.c.l.b16 %v7254
        %v7924 = vunpack.c.l.b16 %v7257
        %v7925 = vunpack.c.l.b16 %v7261
        %v7926 = vunpack.c.l.b16 %v7264
        %v7927 = vunpack.c.l.b16 %v7268
        %v7928 = vunpack.c.l.b16 %v7271
        %v7929 = vunpack.c.l.b16 %v7275
        %v7930 = vunpack.c.l.b16 %v7278
        %v7931 = vunpack.c.l.b16 %v7282
        %v7932 = vunpack.c.l.b16 %v7285
        %v7933 = vunpack.c.l.b16 %v7289
        %v7934 = vunpack.c.l.b16 %v7292
        %v7935 = vunpack.c.l.b16 %v7296
        %v7936 = vunpack.c.l.b16 %v7299
        %v7937 = vunpack.c.l.b16 %v7303
        %v7938 = vunpack.c.l.b16 %v7306
        %v7939 = vunpack.c.l.b16 %v7310
        %v7940 = vunpack.c.l.b16 %v7313
        %v7941 = vunpack.c.l.b16 %v7317
        %v7942 = vunpack.c.l.b16 %v7320
        %v7943 = vunpack.c.l.b16 %v7324
        %v7944 = vunpack.c.l.b16 %v7327
        %v7945 = vunpack.c.l.b16 %v7331
        %v7946 = vunpack.c.l.b16 %v7334
        %v7947 = vunpack.c.l.b16 %v7338
        %v7948 = vunpack.c.l.b16 %v7341
        %v7949 = vunpack.c.l.b16 %v7345
        %v7950 = vunpack.c.l.b16 %v7348
        %v7951 = vunpack.c.l.b16 %v7352
        %v7952 = vunpack.c.l.b16 %v7355
        %v7953 = vunpack.c.l.b16 %v7359
        %v7954 = vunpack.c.l.b16 %v7362
        %v7955 = vpack.c.b16 %v7924, %v7923
        %v7956 = vpack.c.b16 %v7926, %v7925
        %v7957 = vpack.c.b16 %v7928, %v7927
        %v7958 = vpack.c.b16 %v7930, %v7929
        %v7959 = vpack.c.b16 %v7932, %v7931
        %v7960 = vpack.c.b16 %v7934, %v7933
        %v7961 = vpack.c.b16 %v7936, %v7935
        %v7962 = vpack.c.b16 %v7938, %v7937
        %v7963 = vpack.c.b16 %v7940, %v7939
        %v7964 = vpack.c.b16 %v7942, %v7941
        %v7965 = vpack.c.b16 %v7944, %v7943
        %v7966 = vpack.c.b16 %v7946, %v7945
        %v7967 = vpack.c.b16 %v7948, %v7947
        %v7968 = vpack.c.b16 %v7950, %v7949
        %v7969 = vpack.c.b16 %v7952, %v7951
        %v7970 = vpack.c.b16 %v7954, %v7953
        %v7987 = vld [vmem:[#allocation10] sm:$0xf]
        %v7988 = vld [vmem:[#allocation10 + $0x4] sm:$0xf]
        %v7989 = vld [vmem:[#allocation10 + $0x8] sm:$0xf]
        %v7990 = vld [vmem:[#allocation10 + $0xc] sm:$0xf]
        %v7991 = vld [vmem:[#allocation10 + $0x10] sm:$0xf]
        %v7992 = vld [vmem:[#allocation10 + $0x14] sm:$0xf]
        %v7993 = vld [vmem:[#allocation10 + $0x18] sm:$0xf]
        %v7994 = vld [vmem:[#allocation10 + $0x1c] sm:$0xf]
        %v7995 = vld [vmem:[#allocation10 + $0x20] sm:$0xf]
        %v7996 = vld [vmem:[#allocation10 + $0x24] sm:$0xf]
        %v7997 = vld [vmem:[#allocation10 + $0x28] sm:$0xf]
        %v7998 = vld [vmem:[#allocation10 + $0x2c] sm:$0xf]
        %v7999 = vld [vmem:[#allocation10 + $0x30] sm:$0xf]
        %v8000 = vld [vmem:[#allocation10 + $0x34] sm:$0xf]
        %v8001 = vld [vmem:[#allocation10 + $0x38] sm:$0xf]
        %v8002 = vld [vmem:[#allocation10 + $0x3c] sm:$0xf]
        %v8003 = vld [vmem:[#allocation10 + $0x40] sm:$0xf]
        %v8004 = vld [vmem:[#allocation10 + $0x44] sm:$0xf]
        %v8005 = vld [vmem:[#allocation10 + $0x48] sm:$0xf]
        %v8006 = vld [vmem:[#allocation10 + $0x4c] sm:$0xf]
        %v8007 = vld [vmem:[#allocation10 + $0x50] sm:$0xf]
        %v8008 = vld [vmem:[#allocation10 + $0x54] sm:$0xf]
        %v8009 = vld [vmem:[#allocation10 + $0x58] sm:$0xf]
        %v8010 = vld [vmem:[#allocation10 + $0x5c] sm:$0xf]
        %v8011 = vld [vmem:[#allocation10 + $0x60] sm:$0xf]
        %v8012 = vld [vmem:[#allocation10 + $0x64] sm:$0xf]
        %v8013 = vld [vmem:[#allocation10 + $0x68] sm:$0xf]
        %v8014 = vld [vmem:[#allocation10 + $0x6c] sm:$0xf]
        %v8015 = vld [vmem:[#allocation10 + $0x70] sm:$0xf]
        %v8016 = vld [vmem:[#allocation10 + $0x74] sm:$0xf]
        %v8017 = vld [vmem:[#allocation10 + $0x78] sm:$0xf]
        %v8018 = vld [vmem:[#allocation10 + $0x7c] sm:$0xf]
        %v8019 = vld [vmem:[#allocation10 + $0x80] sm:$0xf]
        %v8020 = vld [vmem:[#allocation10 + $0x84] sm:$0xf]
        %v8021 = vld [vmem:[#allocation10 + $0x88] sm:$0xf]
        %v8022 = vld [vmem:[#allocation10 + $0x8c] sm:$0xf]
        %v8023 = vld [vmem:[#allocation10 + $0x90] sm:$0xf]
        %v8024 = vld [vmem:[#allocation10 + $0x94] sm:$0xf]
        %v8025 = vld [vmem:[#allocation10 + $0x98] sm:$0xf]
        %v8026 = vld [vmem:[#allocation10 + $0x9c] sm:$0xf]
        %v8027 = vld [vmem:[#allocation10 + $0xa0] sm:$0xf]
        %v8028 = vld [vmem:[#allocation10 + $0xa4] sm:$0xf]
        %v8029 = vld [vmem:[#allocation10 + $0xa8] sm:$0xf]
        %v8030 = vld [vmem:[#allocation10 + $0xac] sm:$0xf]
        %v8031 = vld [vmem:[#allocation10 + $0xb0] sm:$0xf]
        %v8032 = vld [vmem:[#allocation10 + $0xb4] sm:$0xf]
        %v8033 = vld [vmem:[#allocation10 + $0xb8] sm:$0xf]
        %v8034 = vld [vmem:[#allocation10 + $0xbc] sm:$0xf]
        %v8035 = vld [vmem:[#allocation10 + $0xc0] sm:$0xf]
        %v8036 = vld [vmem:[#allocation10 + $0xc4] sm:$0xf]
        %v8037 = vld [vmem:[#allocation10 + $0xc8] sm:$0xf]
        %v8038 = vld [vmem:[#allocation10 + $0xcc] sm:$0xf]
        %v8039 = vld [vmem:[#allocation10 + $0xd0] sm:$0xf]
        %v8040 = vld [vmem:[#allocation10 + $0xd4] sm:$0xf]
        %v8041 = vld [vmem:[#allocation10 + $0xd8] sm:$0xf]
        %v8042 = vld [vmem:[#allocation10 + $0xdc] sm:$0xf]
        %v8043 = vld [vmem:[#allocation10 + $0xe0] sm:$0xf]
        %v8044 = vld [vmem:[#allocation10 + $0xe4] sm:$0xf]
        %v8045 = vld [vmem:[#allocation10 + $0xe8] sm:$0xf]
        %v8046 = vld [vmem:[#allocation10 + $0xec] sm:$0xf]
        %v8047 = vld [vmem:[#allocation10 + $0xf0] sm:$0xf]
        %v8048 = vld [vmem:[#allocation10 + $0xf4] sm:$0xf]
        %v8049 = vld [vmem:[#allocation10 + $0xf8] sm:$0xf]
        %v8050 = vld [vmem:[#allocation10 + $0xfc] sm:$0xf]
        %v8051 = vld [vmem:[#allocation10 + $0x100] sm:$0xf]
        %v8052 = vld [vmem:[#allocation10 + $0x104] sm:$0xf]
        %v8053 = vld [vmem:[#allocation10 + $0x108] sm:$0xf]
        %v8054 = vld [vmem:[#allocation10 + $0x10c] sm:$0xf]
        %v8055 = vld [vmem:[#allocation10 + $0x110] sm:$0xf]
        %v8056 = vld [vmem:[#allocation10 + $0x114] sm:$0xf]
        %v8057 = vld [vmem:[#allocation10 + $0x118] sm:$0xf]
        %v8058 = vld [vmem:[#allocation10 + $0x11c] sm:$0xf]
        %v8059 = vld [vmem:[#allocation10 + $0x120] sm:$0xf]
        %v8060 = vld [vmem:[#allocation10 + $0x124] sm:$0xf]
        %v8061 = vld [vmem:[#allocation10 + $0x128] sm:$0xf]
        %v8062 = vld [vmem:[#allocation10 + $0x12c] sm:$0xf]
        %v8063 = vld [vmem:[#allocation10 + $0x130] sm:$0xf]
        %v8064 = vld [vmem:[#allocation10 + $0x134] sm:$0xf]
        %v8065 = vld [vmem:[#allocation10 + $0x138] sm:$0xf]
        %v8066 = vld [vmem:[#allocation10 + $0x13c] sm:$0xf]
        %v8067 = vld [vmem:[#allocation10 + $0x140] sm:$0xf]
        %v8068 = vld [vmem:[#allocation10 + $0x144] sm:$0xf]
        %v8069 = vld [vmem:[#allocation10 + $0x148] sm:$0xf]
        %v8070 = vld [vmem:[#allocation10 + $0x14c] sm:$0xf]
        %v8071 = vld [vmem:[#allocation10 + $0x150] sm:$0xf]
        %v8072 = vld [vmem:[#allocation10 + $0x154] sm:$0xf]
        %v8073 = vld [vmem:[#allocation10 + $0x158] sm:$0xf]
        %v8074 = vld [vmem:[#allocation10 + $0x15c] sm:$0xf]
        %v8075 = vld [vmem:[#allocation10 + $0x160] sm:$0xf]
        %v8076 = vld [vmem:[#allocation10 + $0x164] sm:$0xf]
        %v8077 = vld [vmem:[#allocation10 + $0x168] sm:$0xf]
        %v8078 = vld [vmem:[#allocation10 + $0x16c] sm:$0xf]
        %v8079 = vld [vmem:[#allocation10 + $0x170] sm:$0xf]
        %v8080 = vld [vmem:[#allocation10 + $0x174] sm:$0xf]
        %v8081 = vld [vmem:[#allocation10 + $0x178] sm:$0xf]
        %v8082 = vld [vmem:[#allocation10 + $0x17c] sm:$0xf]
        %v8083 = vld [vmem:[#allocation10 + $0x180] sm:$0xf]
        %v8084 = vld [vmem:[#allocation10 + $0x184] sm:$0xf]
        %v8085 = vld [vmem:[#allocation10 + $0x188] sm:$0xf]
        %v8086 = vld [vmem:[#allocation10 + $0x18c] sm:$0xf]
        %v8087 = vld [vmem:[#allocation10 + $0x190] sm:$0xf]
        %v8088 = vld [vmem:[#allocation10 + $0x194] sm:$0xf]
        %v8089 = vld [vmem:[#allocation10 + $0x198] sm:$0xf]
        %v8090 = vld [vmem:[#allocation10 + $0x19c] sm:$0xf]
        %v8091 = vld [vmem:[#allocation10 + $0x1a0] sm:$0xf]
        %v8092 = vld [vmem:[#allocation10 + $0x1a4] sm:$0xf]
        %v8093 = vld [vmem:[#allocation10 + $0x1a8] sm:$0xf]
        %v8094 = vld [vmem:[#allocation10 + $0x1ac] sm:$0xf]
        %v8095 = vld [vmem:[#allocation10 + $0x1b0] sm:$0xf]
        %v8096 = vld [vmem:[#allocation10 + $0x1b4] sm:$0xf]
        %v8097 = vld [vmem:[#allocation10 + $0x1b8] sm:$0xf]
        %v8098 = vld [vmem:[#allocation10 + $0x1bc] sm:$0xf]
        %v8099 = vld [vmem:[#allocation10 + $0x1c0] sm:$0xf]
        %v8100 = vld [vmem:[#allocation10 + $0x1c4] sm:$0xf]
        %v8101 = vld [vmem:[#allocation10 + $0x1c8] sm:$0xf]
        %v8102 = vld [vmem:[#allocation10 + $0x1cc] sm:$0xf]
        %v8103 = vld [vmem:[#allocation10 + $0x1d0] sm:$0xf]
        %v8104 = vld [vmem:[#allocation10 + $0x1d4] sm:$0xf]
        %v8105 = vld [vmem:[#allocation10 + $0x1d8] sm:$0xf]
        %v8106 = vld [vmem:[#allocation10 + $0x1dc] sm:$0xf]
        %v8107 = vld [vmem:[#allocation10 + $0x1e0] sm:$0xf]
        %v8108 = vld [vmem:[#allocation10 + $0x1e4] sm:$0xf]
        %v8109 = vld [vmem:[#allocation10 + $0x1e8] sm:$0xf]
        %v8110 = vld [vmem:[#allocation10 + $0x1ec] sm:$0xf]
        %v8111 = vld [vmem:[#allocation10 + $0x1f0] sm:$0xf]
        %v8112 = vld [vmem:[#allocation10 + $0x1f4] sm:$0xf]
        %v8113 = vld [vmem:[#allocation10 + $0x1f8] sm:$0xf]
        %v8114 = vld [vmem:[#allocation10 + $0x1fc] sm:$0xf]
        %v8115 = vld [vmem:[#allocation10 + $0x200] sm:$0xf]
        %v8116 = vld [vmem:[#allocation10 + $0x204] sm:$0xf]
        %v8117 = vld [vmem:[#allocation10 + $0x208] sm:$0xf]
        %v8118 = vld [vmem:[#allocation10 + $0x20c] sm:$0xf]
        %v8119 = vld [vmem:[#allocation10 + $0x210] sm:$0xf]
        %v8120 = vld [vmem:[#allocation10 + $0x214] sm:$0xf]
        %v8121 = vld [vmem:[#allocation10 + $0x218] sm:$0xf]
        %v8122 = vld [vmem:[#allocation10 + $0x21c] sm:$0xf]
        %v8123 = vld [vmem:[#allocation10 + $0x220] sm:$0xf]
        %v8124 = vld [vmem:[#allocation10 + $0x224] sm:$0xf]
        %v8125 = vld [vmem:[#allocation10 + $0x228] sm:$0xf]
        %v8126 = vld [vmem:[#allocation10 + $0x22c] sm:$0xf]
        %v8127 = vld [vmem:[#allocation10 + $0x230] sm:$0xf]
        %v8128 = vld [vmem:[#allocation10 + $0x234] sm:$0xf]
        %v8129 = vld [vmem:[#allocation10 + $0x238] sm:$0xf]
        %v8130 = vld [vmem:[#allocation10 + $0x23c] sm:$0xf]
        %v8131 = vld [vmem:[#allocation12] sm:$0x1]
        %v8133 = vlaneseq
        %v8134 = vshrl.u32 %v8133, 7
        %v8135 = vsub.s32 0, %v8134
        %v8136 = vrot.slane %v8131, %v8135
        %v8282 = vunpack.c.l.b16 %v7987
        %v8283 = vunpack.c.l.b16 %v7988
        %v8284 = vunpack.c.l.b16 %v7989
        %v8285 = vunpack.c.l.b16 %v7990
        %v8286 = vunpack.c.l.b16 %v7991
        %v8287 = vunpack.c.l.b16 %v7992
        %v8288 = vunpack.c.l.b16 %v7993
        %v8289 = vunpack.c.l.b16 %v7994
        %v8290 = vunpack.c.l.b16 %v7995
        %v8291 = vunpack.c.l.b16 %v7996
        %v8292 = vunpack.c.l.b16 %v7997
        %v8293 = vunpack.c.l.b16 %v7998
        %v8294 = vunpack.c.l.b16 %v7999
        %v8295 = vunpack.c.l.b16 %v8000
        %v8296 = vunpack.c.l.b16 %v8001
        %v8297 = vunpack.c.l.b16 %v8002
        %v8298 = vunpack.c.l.b16 %v8003
        %v8299 = vunpack.c.l.b16 %v8004
        %v8300 = vunpack.c.l.b16 %v8005
        %v8301 = vunpack.c.l.b16 %v8006
        %v8302 = vunpack.c.l.b16 %v8007
        %v8303 = vunpack.c.l.b16 %v8008
        %v8304 = vunpack.c.l.b16 %v8009
        %v8305 = vunpack.c.l.b16 %v8010
        %v8306 = vunpack.c.l.b16 %v8011
        %v8307 = vunpack.c.l.b16 %v8012
        %v8308 = vunpack.c.l.b16 %v8013
        %v8309 = vunpack.c.l.b16 %v8014
        %v8310 = vunpack.c.l.b16 %v8015
        %v8311 = vunpack.c.l.b16 %v8016
        %v8312 = vunpack.c.l.b16 %v8017
        %v8313 = vunpack.c.l.b16 %v8018
        %v8314 = vunpack.c.l.b16 %v8019
        %v8315 = vunpack.c.l.b16 %v8020
        %v8316 = vunpack.c.l.b16 %v8021
        %v8317 = vunpack.c.l.b16 %v8022
        %v8318 = vunpack.c.l.b16 %v8023
        %v8319 = vunpack.c.l.b16 %v8024
        %v8320 = vunpack.c.l.b16 %v8025
        %v8321 = vunpack.c.l.b16 %v8026
        %v8322 = vunpack.c.l.b16 %v8027
        %v8323 = vunpack.c.l.b16 %v8028
        %v8324 = vunpack.c.l.b16 %v8029
        %v8325 = vunpack.c.l.b16 %v8030
        %v8326 = vunpack.c.l.b16 %v8031
        %v8327 = vunpack.c.l.b16 %v8032
        %v8328 = vunpack.c.l.b16 %v8033
        %v8329 = vunpack.c.l.b16 %v8034
        %v8330 = vunpack.c.l.b16 %v8035
        %v8331 = vunpack.c.l.b16 %v8036
        %v8332 = vunpack.c.l.b16 %v8037
        %v8333 = vunpack.c.l.b16 %v8038
        %v8334 = vunpack.c.l.b16 %v8039
        %v8335 = vunpack.c.l.b16 %v8040
        %v8336 = vunpack.c.l.b16 %v8041
        %v8337 = vunpack.c.l.b16 %v8042
        %v8338 = vunpack.c.l.b16 %v8043
        %v8339 = vunpack.c.l.b16 %v8044
        %v8340 = vunpack.c.l.b16 %v8045
        %v8341 = vunpack.c.l.b16 %v8046
        %v8342 = vunpack.c.l.b16 %v8047
        %v8343 = vunpack.c.l.b16 %v8048
        %v8344 = vunpack.c.l.b16 %v8049
        %v8345 = vunpack.c.l.b16 %v8050
        %v8346 = vunpack.c.l.b16 %v8051
        %v8347 = vunpack.c.l.b16 %v8052
        %v8348 = vunpack.c.l.b16 %v8053
        %v8349 = vunpack.c.l.b16 %v8054
        %v8350 = vunpack.c.l.b16 %v8055
        %v8351 = vunpack.c.l.b16 %v8056
        %v8352 = vunpack.c.l.b16 %v8057
        %v8353 = vunpack.c.l.b16 %v8058
        %v8354 = vunpack.c.l.b16 %v8059
        %v8355 = vunpack.c.l.b16 %v8060
        %v8356 = vunpack.c.l.b16 %v8061
        %v8357 = vunpack.c.l.b16 %v8062
        %v8358 = vunpack.c.l.b16 %v8063
        %v8359 = vunpack.c.l.b16 %v8064
        %v8360 = vunpack.c.l.b16 %v8065
        %v8361 = vunpack.c.l.b16 %v8066
        %v8362 = vunpack.c.l.b16 %v8067
        %v8363 = vunpack.c.l.b16 %v8068
        %v8364 = vunpack.c.l.b16 %v8069
        %v8365 = vunpack.c.l.b16 %v8070
        %v8366 = vunpack.c.l.b16 %v8071
        %v8367 = vunpack.c.l.b16 %v8072
        %v8368 = vunpack.c.l.b16 %v8073
        %v8369 = vunpack.c.l.b16 %v8074
        %v8370 = vunpack.c.l.b16 %v8075
        %v8371 = vunpack.c.l.b16 %v8076
        %v8372 = vunpack.c.l.b16 %v8077
        %v8373 = vunpack.c.l.b16 %v8078
        %v8374 = vunpack.c.l.b16 %v8079
        %v8375 = vunpack.c.l.b16 %v8080
        %v8376 = vunpack.c.l.b16 %v8081
        %v8377 = vunpack.c.l.b16 %v8082
        %v8378 = vunpack.c.l.b16 %v8083
        %v8379 = vunpack.c.l.b16 %v8084
        %v8380 = vunpack.c.l.b16 %v8085
        %v8381 = vunpack.c.l.b16 %v8086
        %v8382 = vunpack.c.l.b16 %v8087
        %v8383 = vunpack.c.l.b16 %v8088
        %v8384 = vunpack.c.l.b16 %v8089
        %v8385 = vunpack.c.l.b16 %v8090
        %v8386 = vunpack.c.l.b16 %v8091
        %v8387 = vunpack.c.l.b16 %v8092
        %v8388 = vunpack.c.l.b16 %v8093
        %v8389 = vunpack.c.l.b16 %v8094
        %v8390 = vunpack.c.l.b16 %v8095
        %v8391 = vunpack.c.l.b16 %v8096
        %v8392 = vunpack.c.l.b16 %v8097
        %v8393 = vunpack.c.l.b16 %v8098
        %v8394 = vunpack.c.l.b16 %v8099
        %v8395 = vunpack.c.l.b16 %v8100
        %v8396 = vunpack.c.l.b16 %v8101
        %v8397 = vunpack.c.l.b16 %v8102
        %v8398 = vunpack.c.l.b16 %v8103
        %v8399 = vunpack.c.l.b16 %v8104
        %v8400 = vunpack.c.l.b16 %v8105
        %v8401 = vunpack.c.l.b16 %v8106
        %v8402 = vunpack.c.l.b16 %v8107
        %v8403 = vunpack.c.l.b16 %v8108
        %v8404 = vunpack.c.l.b16 %v8109
        %v8405 = vunpack.c.l.b16 %v8110
        %v8406 = vunpack.c.l.b16 %v8111
        %v8407 = vunpack.c.l.b16 %v8112
        %v8408 = vunpack.c.l.b16 %v8113
        %v8409 = vunpack.c.l.b16 %v8114
        %v8410 = vunpack.c.l.b16 %v8115
        %v8411 = vunpack.c.l.b16 %v8116
        %v8412 = vunpack.c.l.b16 %v8117
        %v8413 = vunpack.c.l.b16 %v8118
        %v8414 = vunpack.c.l.b16 %v8119
        %v8415 = vunpack.c.l.b16 %v8120
        %v8416 = vunpack.c.l.b16 %v8121
        %v8417 = vunpack.c.l.b16 %v8122
        %v8418 = vunpack.c.l.b16 %v8123
        %v8419 = vunpack.c.l.b16 %v8124
        %v8420 = vunpack.c.l.b16 %v8125
        %v8421 = vunpack.c.l.b16 %v8126
        %v8422 = vunpack.c.l.b16 %v8127
        %v8423 = vunpack.c.l.b16 %v8128
        %v8424 = vunpack.c.l.b16 %v8129
        %v8425 = vunpack.c.l.b16 %v8130
        %v8426 = vpack.c.b16 %v8283, %v8282
        %v8427 = vpack.c.b16 %v8285, %v8284
        %v8428 = vpack.c.b16 %v8287, %v8286
        %v8429 = vpack.c.b16 %v8289, %v8288
        %v8430 = vpack.c.b16 %v8291, %v8290
        %v8431 = vpack.c.b16 %v8293, %v8292
        %v8432 = vpack.c.b16 %v8295, %v8294
        %v8433 = vpack.c.b16 %v8297, %v8296
        %v8434 = vpack.c.b16 %v8299, %v8298
        %v8435 = vpack.c.b16 %v8301, %v8300
        %v8436 = vpack.c.b16 %v8303, %v8302
        %v8437 = vpack.c.b16 %v8305, %v8304
        %v8438 = vpack.c.b16 %v8307, %v8306
        %v8439 = vpack.c.b16 %v8309, %v8308
        %v8440 = vpack.c.b16 %v8311, %v8310
        %v8441 = vpack.c.b16 %v8313, %v8312
        %v8442 = vpack.c.b16 %v8315, %v8314
        %v8443 = vpack.c.b16 %v8317, %v8316
        %v8444 = vpack.c.b16 %v8319, %v8318
        %v8445 = vpack.c.b16 %v8321, %v8320
        %v8446 = vpack.c.b16 %v8323, %v8322
        %v8447 = vpack.c.b16 %v8325, %v8324
        %v8448 = vpack.c.b16 %v8327, %v8326
        %v8449 = vpack.c.b16 %v8329, %v8328
        %v8450 = vpack.c.b16 %v8331, %v8330
        %v8451 = vpack.c.b16 %v8333, %v8332
        %v8452 = vpack.c.b16 %v8335, %v8334
        %v8453 = vpack.c.b16 %v8337, %v8336
        %v8454 = vpack.c.b16 %v8339, %v8338
        %v8455 = vpack.c.b16 %v8341, %v8340
        %v8456 = vpack.c.b16 %v8343, %v8342
        %v8457 = vpack.c.b16 %v8345, %v8344
        %v8458 = vpack.c.b16 %v8347, %v8346
        %v8459 = vpack.c.b16 %v8349, %v8348
        %v8460 = vpack.c.b16 %v8351, %v8350
        %v8461 = vpack.c.b16 %v8353, %v8352
        %v8462 = vpack.c.b16 %v8355, %v8354
        %v8463 = vpack.c.b16 %v8357, %v8356
        %v8464 = vpack.c.b16 %v8359, %v8358
        %v8465 = vpack.c.b16 %v8361, %v8360
        %v8466 = vpack.c.b16 %v8363, %v8362
        %v8467 = vpack.c.b16 %v8365, %v8364
        %v8468 = vpack.c.b16 %v8367, %v8366
        %v8469 = vpack.c.b16 %v8369, %v8368
        %v8470 = vpack.c.b16 %v8371, %v8370
        %v8471 = vpack.c.b16 %v8373, %v8372
        %v8472 = vpack.c.b16 %v8375, %v8374
        %v8473 = vpack.c.b16 %v8377, %v8376
        %v8474 = vpack.c.b16 %v8379, %v8378
        %v8475 = vpack.c.b16 %v8381, %v8380
        %v8476 = vpack.c.b16 %v8383, %v8382
        %v8477 = vpack.c.b16 %v8385, %v8384
        %v8478 = vpack.c.b16 %v8387, %v8386
        %v8479 = vpack.c.b16 %v8389, %v8388
        %v8480 = vpack.c.b16 %v8391, %v8390
        %v8481 = vpack.c.b16 %v8393, %v8392
        %v8482 = vpack.c.b16 %v8395, %v8394
        %v8483 = vpack.c.b16 %v8397, %v8396
        %v8484 = vpack.c.b16 %v8399, %v8398
        %v8485 = vpack.c.b16 %v8401, %v8400
        %v8486 = vpack.c.b16 %v8403, %v8402
        %v8487 = vpack.c.b16 %v8405, %v8404
        %v8488 = vpack.c.b16 %v8407, %v8406
        %v8489 = vpack.c.b16 %v8409, %v8408
        %v8490 = vpack.c.b16 %v8411, %v8410
        %v8491 = vpack.c.b16 %v8413, %v8412
        %v8492 = vpack.c.b16 %v8415, %v8414
        %v8493 = vpack.c.b16 %v8417, %v8416
        %v8494 = vpack.c.b16 %v8419, %v8418
        %v8495 = vpack.c.b16 %v8421, %v8420
        %v8496 = vpack.c.b16 %v8423, %v8422
        %v8497 = vpack.c.b16 %v8425, %v8424
        %8570 = vmatprep.subr.bf16.mxu0 0
        %8571 = vmatpush1.bf16.msra.mxu0 %v8433
        %8572 = vmatprep.subr.bf16.mxu0 0
        %8573 = vmatpush1.bf16.msra.mxu0 %v8432
        %8574 = vmatprep.subr.bf16.mxu0 0
        %8575 = vmatpush1.bf16.msra.mxu0 %v8431
        %8576 = vmatprep.subr.bf16.mxu0 0
        %8577 = vmatpush1.bf16.msra.mxu0 %v8430
        %8578 = vmatprep.subr.bf16.mxu0 0
        %8579 = vmatpush1.bf16.msra.mxu0 %v8429
        %8580 = vmatprep.subr.bf16.mxu0 0
        %8581 = vmatpush1.bf16.msra.mxu0 %v8428
        %8582 = vmatprep.subr.bf16.mxu0 0
        %8583 = vmatpush1.bf16.msra.mxu0 %v8427
        %8584 = vmatprep.subr.bf16.mxu0 0
        %8585 = vmatpush1.bf16.msra.mxu0 %v8426
        %8586 = vmatprep.subr.bf16.mxu0 0
        %8587 = vmatpush2.bf16.msra.mxu0 %v8441
        %8588 = vmatprep.subr.bf16.mxu0 0
        %8589 = vmatpush2.bf16.msra.mxu0 %v8440
        %8590 = vmatprep.subr.bf16.mxu0 0
        %8591 = vmatpush2.bf16.msra.mxu0 %v8439
        %8592 = vmatprep.subr.bf16.mxu0 0
        %8593 = vmatpush2.bf16.msra.mxu0 %v8438
        %8594 = vmatprep.subr.bf16.mxu0 0
        %8595 = vmatpush2.bf16.msra.mxu0 %v8437
        %8596 = vmatprep.subr.bf16.mxu0 0
        %8597 = vmatpush2.bf16.msra.mxu0 %v8436
        %8598 = vmatprep.subr.bf16.mxu0 0
        %8599 = vmatpush2.bf16.msra.mxu0 %v8435
        %8600 = vmatprep.subr.bf16.mxu0 0
        %8601 = vmatpush2.bf16.msra.mxu0 %v8434
        %8602 = vmatprep.mubr.bf16.mxu0 %v7475
        %8603 = vmatmul.mubr.bf16.gmra.mxu0 %v7411
        %v8604 = vpop.f32.mrf.mxu0
        %v8605 = vadd.f32 %v8136, %v8604
        %v8606 = vpop.f32.mrf.mxu0
        %v8607 = vpop.f32.mrf.mxu0
        %v8608 = vadd.f32 %v8136, %v8607
        %v8609 = vpop.f32.mrf.mxu0
        %8610 = vmatprep.mubr.bf16.mxu0 %v7476
        %8611 = vmatmul.mubr.bf16.gmra.mxu0 %v7412
        %v8612 = vpop.f32.mrf.mxu0
        %v8613 = vadd.f32 %v8136, %v8612
        %v8614 = vpop.f32.mrf.mxu0
        %v8615 = vpop.f32.mrf.mxu0
        %v8616 = vadd.f32 %v8136, %v8615
        %v8617 = vpop.f32.mrf.mxu0
        %8618 = vmatprep.mubr.bf16.mxu0 %v7477
        %8619 = vmatmul.mubr.bf16.gmra.mxu0 %v7413
        %v8620 = vpop.f32.mrf.mxu0
        %v8621 = vadd.f32 %v8136, %v8620
        %v8622 = vpop.f32.mrf.mxu0
        %v8623 = vpop.f32.mrf.mxu0
        %v8624 = vadd.f32 %v8136, %v8623
        %v8625 = vpop.f32.mrf.mxu0
        %8626 = vmatprep.mubr.bf16.mxu0 %v7478
        %8627 = vmatmul.mubr.bf16.gmra.mxu0 %v7414
        %v8628 = vpop.f32.mrf.mxu0
        %v8629 = vadd.f32 %v8136, %v8628
        %v8630 = vpop.f32.mrf.mxu0
        %v8631 = vpop.f32.mrf.mxu0
        %v8632 = vadd.f32 %v8136, %v8631
        %v8633 = vpop.f32.mrf.mxu0
        %8634 = vmatprep.mubr.bf16.mxu0 %v7479
        %8635 = vmatmul.mubr.bf16.gmra.mxu0 %v7415
        %v8636 = vpop.f32.mrf.mxu0
        %v8637 = vadd.f32 %v8136, %v8636
        %v8638 = vpop.f32.mrf.mxu0
        %v8639 = vpop.f32.mrf.mxu0
        %v8640 = vadd.f32 %v8136, %v8639
        %v8641 = vpop.f32.mrf.mxu0
        %8642 = vmatprep.mubr.bf16.mxu0 %v7480
        %8643 = vmatmul.mubr.bf16.gmra.mxu0 %v7416
        %v8644 = vpop.f32.mrf.mxu0
        %v8645 = vadd.f32 %v8136, %v8644
        %v8646 = vpop.f32.mrf.mxu0
        %v8647 = vpop.f32.mrf.mxu0
        %v8648 = vadd.f32 %v8136, %v8647
        %v8649 = vpop.f32.mrf.mxu0
        %8650 = vmatprep.mubr.bf16.mxu0 %v7481
        %8651 = vmatmul.mubr.bf16.gmra.mxu0 %v7417
        %v8652 = vpop.f32.mrf.mxu0
        %v8653 = vadd.f32 %v8136, %v8652
        %v8654 = vpop.f32.mrf.mxu0
        %v8655 = vpop.f32.mrf.mxu0
        %v8656 = vadd.f32 %v8136, %v8655
        %v8657 = vpop.f32.mrf.mxu0
        %8658 = vmatprep.mubr.bf16.mxu0 %v7482
        %8659 = vmatmul.mubr.bf16.gmra.mxu0 %v7418
        %v8660 = vpop.f32.mrf.mxu0
        %v8661 = vadd.f32 %v8136, %v8660
        %v8662 = vpop.f32.mrf.mxu0
        %v8663 = vpop.f32.mrf.mxu0
        %v8664 = vadd.f32 %v8136, %v8663
        %v8665 = vpop.f32.mrf.mxu0
        %8666 = vmatprep.mubr.bf16.mxu0 %v7483
        %8667 = vmatmul.mubr.bf16.gmra.mxu0 %v7419
        %v8668 = vpop.f32.mrf.mxu0
        %v8669 = vadd.f32 %v8136, %v8668
        %v8670 = vpop.f32.mrf.mxu0
        %v8671 = vpop.f32.mrf.mxu0
        %v8672 = vadd.f32 %v8136, %v8671
        %v8673 = vpop.f32.mrf.mxu0
        %8674 = vmatprep.mubr.bf16.mxu0 %v7484
        %8675 = vmatmul.mubr.bf16.gmra.mxu0 %v7420
        %v8676 = vpop.f32.mrf.mxu0
        %v8677 = vadd.f32 %v8136, %v8676
        %v8678 = vpop.f32.mrf.mxu0
        %v8679 = vpop.f32.mrf.mxu0
        %v8680 = vadd.f32 %v8136, %v8679
        %v8681 = vpop.f32.mrf.mxu0
        %8682 = vmatprep.mubr.bf16.mxu0 %v7485
        %8683 = vmatmul.mubr.bf16.gmra.mxu0 %v7421
        %v8684 = vpop.f32.mrf.mxu0
        %v8685 = vadd.f32 %v8136, %v8684
        %v8686 = vpop.f32.mrf.mxu0
        %v8687 = vpop.f32.mrf.mxu0
        %v8688 = vadd.f32 %v8136, %v8687
        %v8689 = vpop.f32.mrf.mxu0
        %8690 = vmatprep.mubr.bf16.mxu0 %v7486
        %8691 = vmatmul.mubr.bf16.gmra.mxu0 %v7422
        %v8692 = vpop.f32.mrf.mxu0
        %v8693 = vadd.f32 %v8136, %v8692
        %v8694 = vpop.f32.mrf.mxu0
        %v8695 = vpop.f32.mrf.mxu0
        %v8696 = vadd.f32 %v8136, %v8695
        %v8697 = vpop.f32.mrf.mxu0
        %8698 = vmatprep.mubr.bf16.mxu0 %v7487
        %8699 = vmatmul.mubr.bf16.gmra.mxu0 %v7423
        %v8700 = vpop.f32.mrf.mxu0
        %v8701 = vadd.f32 %v8136, %v8700
        %v8702 = vpop.f32.mrf.mxu0
        %v8703 = vpop.f32.mrf.mxu0
        %v8704 = vadd.f32 %v8136, %v8703
        %v8705 = vpop.f32.mrf.mxu0
        %8706 = vmatprep.mubr.bf16.mxu0 %v7488
        %8707 = vmatmul.mubr.bf16.gmra.mxu0 %v7424
        %v8708 = vpop.f32.mrf.mxu0
        %v8709 = vadd.f32 %v8136, %v8708
        %v8710 = vpop.f32.mrf.mxu0
        %v8711 = vpop.f32.mrf.mxu0
        %v8712 = vadd.f32 %v8136, %v8711
        %v8713 = vpop.f32.mrf.mxu0
        %8714 = vmatprep.mubr.bf16.mxu0 %v7489
        %8715 = vmatmul.mubr.bf16.gmra.mxu0 %v7425
        %v8716 = vpop.f32.mrf.mxu0
        %v8717 = vadd.f32 %v8136, %v8716
        %v8718 = vpop.f32.mrf.mxu0
        %v8719 = vpop.f32.mrf.mxu0
        %v8720 = vadd.f32 %v8136, %v8719
        %v8721 = vpop.f32.mrf.mxu0
        %8722 = vmatprep.mubr.bf16.mxu0 %v7490
        %8723 = vmatmul.mubr.bf16.gmra.mxu0 %v7426
        %v8724 = vpop.f32.mrf.mxu0
        %v8725 = vadd.f32 %v8136, %v8724
        %v8726 = vpop.f32.mrf.mxu0
        %v8727 = vpop.f32.mrf.mxu0
        %v8728 = vadd.f32 %v8136, %v8727
        %v8729 = vpop.f32.mrf.mxu0
        %8730 = vdwg.mxu0
        %8731 = vmatprep.subr.bf16.mxu0 0
        %8732 = vmatpush1.bf16.msra.mxu0 %v8449
        %8733 = vmatprep.subr.bf16.mxu0 0
        %8734 = vmatpush1.bf16.msra.mxu0 %v8448
        %8735 = vmatprep.subr.bf16.mxu0 0
        %8736 = vmatpush1.bf16.msra.mxu0 %v8447
        %8737 = vmatprep.subr.bf16.mxu0 0
        %8738 = vmatpush1.bf16.msra.mxu0 %v8446
        %8739 = vmatprep.subr.bf16.mxu0 0
        %8740 = vmatpush1.bf16.msra.mxu0 %v8445
        %8741 = vmatprep.subr.bf16.mxu0 0
        %8742 = vmatpush1.bf16.msra.mxu0 %v8444
        %8743 = vmatprep.subr.bf16.mxu0 0
        %8744 = vmatpush1.bf16.msra.mxu0 %v8443
        %8745 = vmatprep.subr.bf16.mxu0 0
        %8746 = vmatpush1.bf16.msra.mxu0 %v8442
        %8747 = vmatprep.subr.bf16.mxu0 0
        %8748 = vmatpush2.bf16.msra.mxu0 %v8457
        %8749 = vmatprep.subr.bf16.mxu0 0
        %8750 = vmatpush2.bf16.msra.mxu0 %v8456
        %8751 = vmatprep.subr.bf16.mxu0 0
        %8752 = vmatpush2.bf16.msra.mxu0 %v8455
        %8753 = vmatprep.subr.bf16.mxu0 0
        %8754 = vmatpush2.bf16.msra.mxu0 %v8454
        %8755 = vmatprep.subr.bf16.mxu0 0
        %8756 = vmatpush2.bf16.msra.mxu0 %v8453
        %8757 = vmatprep.subr.bf16.mxu0 0
        %8758 = vmatpush2.bf16.msra.mxu0 %v8452
        %8759 = vmatprep.subr.bf16.mxu0 0
        %8760 = vmatpush2.bf16.msra.mxu0 %v8451
        %8761 = vmatprep.subr.bf16.mxu0 0
        %8762 = vmatpush2.bf16.msra.mxu0 %v8450
        %8763 = vmatprep.mubr.bf16.mxu0 %v7619
        %8764 = vmatmul.mubr.bf16.gmra.mxu0 %v7539
        %v8765 = vpop.f32.mrf.mxu0
        %v8766 = vadd.f32 %v8605, %v8765
        %v8767 = vpop.f32.mrf.mxu0
        %v8768 = vpop.f32.mrf.mxu0
        %v8769 = vadd.f32 %v8608, %v8768
        %v8770 = vpop.f32.mrf.mxu0
        %8771 = vmatprep.mubr.bf16.mxu0 %v7620
        %8772 = vmatmul.mubr.bf16.gmra.mxu0 %v7540
        %v8773 = vpop.f32.mrf.mxu0
        %v8774 = vadd.f32 %v8613, %v8773
        %v8775 = vpop.f32.mrf.mxu0
        %v8776 = vpop.f32.mrf.mxu0
        %v8777 = vadd.f32 %v8616, %v8776
        %v8778 = vpop.f32.mrf.mxu0
        %8779 = vmatprep.mubr.bf16.mxu0 %v7621
        %8780 = vmatmul.mubr.bf16.gmra.mxu0 %v7541
        %v8781 = vpop.f32.mrf.mxu0
        %v8782 = vadd.f32 %v8621, %v8781
        %v8783 = vpop.f32.mrf.mxu0
        %v8784 = vpop.f32.mrf.mxu0
        %v8785 = vadd.f32 %v8624, %v8784
        %v8786 = vpop.f32.mrf.mxu0
        %8787 = vmatprep.mubr.bf16.mxu0 %v7622
        %8788 = vmatmul.mubr.bf16.gmra.mxu0 %v7542
        %v8789 = vpop.f32.mrf.mxu0
        %v8790 = vadd.f32 %v8629, %v8789
        %v8791 = vpop.f32.mrf.mxu0
        %v8792 = vpop.f32.mrf.mxu0
        %v8793 = vadd.f32 %v8632, %v8792
        %v8794 = vpop.f32.mrf.mxu0
        %8795 = vmatprep.mubr.bf16.mxu0 %v7623
        %8796 = vmatmul.mubr.bf16.gmra.mxu0 %v7543
        %v8797 = vpop.f32.mrf.mxu0
        %v8798 = vadd.f32 %v8637, %v8797
        %v8799 = vpop.f32.mrf.mxu0
        %v8800 = vpop.f32.mrf.mxu0
        %v8801 = vadd.f32 %v8640, %v8800
        %v8802 = vpop.f32.mrf.mxu0
        %8803 = vmatprep.mubr.bf16.mxu0 %v7624
        %8804 = vmatmul.mubr.bf16.gmra.mxu0 %v7544
        %v8805 = vpop.f32.mrf.mxu0
        %v8806 = vadd.f32 %v8645, %v8805
        %v8807 = vpop.f32.mrf.mxu0
        %v8808 = vpop.f32.mrf.mxu0
        %v8809 = vadd.f32 %v8648, %v8808
        %v8810 = vpop.f32.mrf.mxu0
        %8811 = vmatprep.mubr.bf16.mxu0 %v7625
        %8812 = vmatmul.mubr.bf16.gmra.mxu0 %v7545
        %v8813 = vpop.f32.mrf.mxu0
        %v8814 = vadd.f32 %v8653, %v8813
        %v8815 = vpop.f32.mrf.mxu0
        %v8816 = vpop.f32.mrf.mxu0
        %v8817 = vadd.f32 %v8656, %v8816
        %v8818 = vpop.f32.mrf.mxu0
        %8819 = vmatprep.mubr.bf16.mxu0 %v7626
        %8820 = vmatmul.mubr.bf16.gmra.mxu0 %v7546
        %v8821 = vpop.f32.mrf.mxu0
        %v8822 = vadd.f32 %v8661, %v8821
        %v8823 = vpop.f32.mrf.mxu0
        %v8824 = vpop.f32.mrf.mxu0
        %v8825 = vadd.f32 %v8664, %v8824
        %v8826 = vpop.f32.mrf.mxu0
        %8827 = vmatprep.mubr.bf16.mxu0 %v7627
        %8828 = vmatmul.mubr.bf16.gmra.mxu0 %v7547
        %v8829 = vpop.f32.mrf.mxu0
        %v8830 = vadd.f32 %v8669, %v8829
        %v8831 = vpop.f32.mrf.mxu0
        %v8832 = vpop.f32.mrf.mxu0
        %v8833 = vadd.f32 %v8672, %v8832
        %v8834 = vpop.f32.mrf.mxu0
        %8835 = vmatprep.mubr.bf16.mxu0 %v7628
        %8836 = vmatmul.mubr.bf16.gmra.mxu0 %v7548
        %v8837 = vpop.f32.mrf.mxu0
        %v8838 = vadd.f32 %v8677, %v8837
        %v8839 = vpop.f32.mrf.mxu0
        %v8840 = vpop.f32.mrf.mxu0
        %v8841 = vadd.f32 %v8680, %v8840
        %v8842 = vpop.f32.mrf.mxu0
        %8843 = vmatprep.mubr.bf16.mxu0 %v7629
        %8844 = vmatmul.mubr.bf16.gmra.mxu0 %v7549
        %v8845 = vpop.f32.mrf.mxu0
        %v8846 = vadd.f32 %v8685, %v8845
        %v8847 = vpop.f32.mrf.mxu0
        %v8848 = vpop.f32.mrf.mxu0
        %v8849 = vadd.f32 %v8688, %v8848
        %v8850 = vpop.f32.mrf.mxu0
        %8851 = vmatprep.mubr.bf16.mxu0 %v7630
        %8852 = vmatmul.mubr.bf16.gmra.mxu0 %v7550
        %v8853 = vpop.f32.mrf.mxu0
        %v8854 = vadd.f32 %v8693, %v8853
        %v8855 = vpop.f32.mrf.mxu0
        %v8856 = vpop.f32.mrf.mxu0
        %v8857 = vadd.f32 %v8696, %v8856
        %v8858 = vpop.f32.mrf.mxu0
        %8859 = vmatprep.mubr.bf16.mxu0 %v7631
        %8860 = vmatmul.mubr.bf16.gmra.mxu0 %v7551
        %v8861 = vpop.f32.mrf.mxu0
        %v8862 = vadd.f32 %v8701, %v8861
        %v8863 = vpop.f32.mrf.mxu0
        %v8864 = vpop.f32.mrf.mxu0
        %v8865 = vadd.f32 %v8704, %v8864
        %v8866 = vpop.f32.mrf.mxu0
        %8867 = vmatprep.mubr.bf16.mxu0 %v7632
        %8868 = vmatmul.mubr.bf16.gmra.mxu0 %v7552
        %v8869 = vpop.f32.mrf.mxu0
        %v8870 = vadd.f32 %v8709, %v8869
        %v8871 = vpop.f32.mrf.mxu0
        %v8872 = vpop.f32.mrf.mxu0
        %v8873 = vadd.f32 %v8712, %v8872
        %v8874 = vpop.f32.mrf.mxu0
        %8875 = vmatprep.mubr.bf16.mxu0 %v7633
        %8876 = vmatmul.mubr.bf16.gmra.mxu0 %v7553
        %v8877 = vpop.f32.mrf.mxu0
        %v8878 = vadd.f32 %v8717, %v8877
        %v8879 = vpop.f32.mrf.mxu0
        %v8880 = vpop.f32.mrf.mxu0
        %v8881 = vadd.f32 %v8720, %v8880
        %v8882 = vpop.f32.mrf.mxu0
        %8883 = vmatprep.mubr.bf16.mxu0 %v7634
        %8884 = vmatmul.mubr.bf16.gmra.mxu0 %v7554
        %v8885 = vpop.f32.mrf.mxu0
        %v8886 = vadd.f32 %v8725, %v8885
        %v8887 = vpop.f32.mrf.mxu0
        %v8888 = vpop.f32.mrf.mxu0
        %v8889 = vadd.f32 %v8728, %v8888
        %v8890 = vpop.f32.mrf.mxu0
        %8891 = vdwg.mxu0
        %8892 = vmatprep.subr.bf16.mxu0 0
        %8893 = vmatpush1.bf16.msra.mxu0 %v8465
        %8894 = vmatprep.subr.bf16.mxu0 0
        %8895 = vmatpush1.bf16.msra.mxu0 %v8464
        %8896 = vmatprep.subr.bf16.mxu0 0
        %8897 = vmatpush1.bf16.msra.mxu0 %v8463
        %8898 = vmatprep.subr.bf16.mxu0 0
        %8899 = vmatpush1.bf16.msra.mxu0 %v8462
        %8900 = vmatprep.subr.bf16.mxu0 0
        %8901 = vmatpush1.bf16.msra.mxu0 %v8461
        %8902 = vmatprep.subr.bf16.mxu0 0
        %8903 = vmatpush1.bf16.msra.mxu0 %v8460
        %8904 = vmatprep.subr.bf16.mxu0 0
        %8905 = vmatpush1.bf16.msra.mxu0 %v8459
        %8906 = vmatprep.subr.bf16.mxu0 0
        %8907 = vmatpush1.bf16.msra.mxu0 %v8458
        %8908 = vmatprep.subr.bf16.mxu0 0
        %8909 = vmatpush2.bf16.msra.mxu0 %v8473
        %8910 = vmatprep.subr.bf16.mxu0 0
        %8911 = vmatpush2.bf16.msra.mxu0 %v8472
        %8912 = vmatprep.subr.bf16.mxu0 0
        %8913 = vmatpush2.bf16.msra.mxu0 %v8471
        %8914 = vmatprep.subr.bf16.mxu0 0
        %8915 = vmatpush2.bf16.msra.mxu0 %v8470
        %8916 = vmatprep.subr.bf16.mxu0 0
        %8917 = vmatpush2.bf16.msra.mxu0 %v8469
        %8918 = vmatprep.subr.bf16.mxu0 0
        %8919 = vmatpush2.bf16.msra.mxu0 %v8468
        %8920 = vmatprep.subr.bf16.mxu0 0
        %8921 = vmatpush2.bf16.msra.mxu0 %v8467
        %8922 = vmatprep.subr.bf16.mxu0 0
        %8923 = vmatpush2.bf16.msra.mxu0 %v8466
        %8924 = vmatprep.mubr.bf16.mxu0 %v7747
        %8925 = vmatmul.mubr.bf16.gmra.mxu0 %v7683
        %v8926 = vpop.f32.mrf.mxu0
        %v8927 = vadd.f32 %v8766, %v8926
        %v8928 = vpop.f32.mrf.mxu0
        %v8929 = vpop.f32.mrf.mxu0
        %v8930 = vadd.f32 %v8769, %v8929
        %v8931 = vpop.f32.mrf.mxu0
        %8932 = vmatprep.mubr.bf16.mxu0 %v7748
        %8933 = vmatmul.mubr.bf16.gmra.mxu0 %v7684
        %v8934 = vpop.f32.mrf.mxu0
        %v8935 = vadd.f32 %v8774, %v8934
        %v8936 = vpop.f32.mrf.mxu0
        %v8937 = vpop.f32.mrf.mxu0
        %v8938 = vadd.f32 %v8777, %v8937
        %v8939 = vpop.f32.mrf.mxu0
        %8940 = vmatprep.mubr.bf16.mxu0 %v7749
        %8941 = vmatmul.mubr.bf16.gmra.mxu0 %v7685
        %v8942 = vpop.f32.mrf.mxu0
        %v8943 = vadd.f32 %v8782, %v8942
        %v8944 = vpop.f32.mrf.mxu0
        %v8945 = vpop.f32.mrf.mxu0
        %v8946 = vadd.f32 %v8785, %v8945
        %v8947 = vpop.f32.mrf.mxu0
        %8948 = vmatprep.mubr.bf16.mxu0 %v7750
        %8949 = vmatmul.mubr.bf16.gmra.mxu0 %v7686
        %v8950 = vpop.f32.mrf.mxu0
        %v8951 = vadd.f32 %v8790, %v8950
        %v8952 = vpop.f32.mrf.mxu0
        %v8953 = vpop.f32.mrf.mxu0
        %v8954 = vadd.f32 %v8793, %v8953
        %v8955 = vpop.f32.mrf.mxu0
        %8956 = vmatprep.mubr.bf16.mxu0 %v7751
        %8957 = vmatmul.mubr.bf16.gmra.mxu0 %v7687
        %v8958 = vpop.f32.mrf.mxu0
        %v8959 = vadd.f32 %v8798, %v8958
        %v8960 = vpop.f32.mrf.mxu0
        %v8961 = vpop.f32.mrf.mxu0
        %v8962 = vadd.f32 %v8801, %v8961
        %v8963 = vpop.f32.mrf.mxu0
        %8964 = vmatprep.mubr.bf16.mxu0 %v7752
        %8965 = vmatmul.mubr.bf16.gmra.mxu0 %v7688
        %v8966 = vpop.f32.mrf.mxu0
        %v8967 = vadd.f32 %v8806, %v8966
        %v8968 = vpop.f32.mrf.mxu0
        %v8969 = vpop.f32.mrf.mxu0
        %v8970 = vadd.f32 %v8809, %v8969
        %v8971 = vpop.f32.mrf.mxu0
        %8972 = vmatprep.mubr.bf16.mxu0 %v7753
        %8973 = vmatmul.mubr.bf16.gmra.mxu0 %v7689
        %v8974 = vpop.f32.mrf.mxu0
        %v8975 = vadd.f32 %v8814, %v8974
        %v8976 = vpop.f32.mrf.mxu0
        %v8977 = vpop.f32.mrf.mxu0
        %v8978 = vadd.f32 %v8817, %v8977
        %v8979 = vpop.f32.mrf.mxu0
        %8980 = vmatprep.mubr.bf16.mxu0 %v7754
        %8981 = vmatmul.mubr.bf16.gmra.mxu0 %v7690
        %v8982 = vpop.f32.mrf.mxu0
        %v8983 = vadd.f32 %v8822, %v8982
        %v8984 = vpop.f32.mrf.mxu0
        %v8985 = vpop.f32.mrf.mxu0
        %v8986 = vadd.f32 %v8825, %v8985
        %v8987 = vpop.f32.mrf.mxu0
        %8988 = vmatprep.mubr.bf16.mxu0 %v7755
        %8989 = vmatmul.mubr.bf16.gmra.mxu0 %v7691
        %v8990 = vpop.f32.mrf.mxu0
        %v8991 = vadd.f32 %v8830, %v8990
        %v8992 = vpop.f32.mrf.mxu0
        %v8993 = vpop.f32.mrf.mxu0
        %v8994 = vadd.f32 %v8833, %v8993
        %v8995 = vpop.f32.mrf.mxu0
        %8996 = vmatprep.mubr.bf16.mxu0 %v7756
        %8997 = vmatmul.mubr.bf16.gmra.mxu0 %v7692
        %v8998 = vpop.f32.mrf.mxu0
        %v8999 = vadd.f32 %v8838, %v8998
        %v9000 = vpop.f32.mrf.mxu0
        %v9001 = vpop.f32.mrf.mxu0
        %v9002 = vadd.f32 %v8841, %v9001
        %v9003 = vpop.f32.mrf.mxu0
        %9004 = vmatprep.mubr.bf16.mxu0 %v7757
        %9005 = vmatmul.mubr.bf16.gmra.mxu0 %v7693
        %v9006 = vpop.f32.mrf.mxu0
        %v9007 = vadd.f32 %v8846, %v9006
        %v9008 = vpop.f32.mrf.mxu0
        %v9009 = vpop.f32.mrf.mxu0
        %v9010 = vadd.f32 %v8849, %v9009
        %v9011 = vpop.f32.mrf.mxu0
        %9012 = vmatprep.mubr.bf16.mxu0 %v7758
        %9013 = vmatmul.mubr.bf16.gmra.mxu0 %v7694
        %v9014 = vpop.f32.mrf.mxu0
        %v9015 = vadd.f32 %v8854, %v9014
        %v9016 = vpop.f32.mrf.mxu0
        %v9017 = vpop.f32.mrf.mxu0
        %v9018 = vadd.f32 %v8857, %v9017
        %v9019 = vpop.f32.mrf.mxu0
        %9020 = vmatprep.mubr.bf16.mxu0 %v7759
        %9021 = vmatmul.mubr.bf16.gmra.mxu0 %v7695
        %v9022 = vpop.f32.mrf.mxu0
        %v9023 = vadd.f32 %v8862, %v9022
        %v9024 = vpop.f32.mrf.mxu0
        %v9025 = vpop.f32.mrf.mxu0
        %v9026 = vadd.f32 %v8865, %v9025
        %v9027 = vpop.f32.mrf.mxu0
        %9028 = vmatprep.mubr.bf16.mxu0 %v7760
        %9029 = vmatmul.mubr.bf16.gmra.mxu0 %v7696
        %v9030 = vpop.f32.mrf.mxu0
        %v9031 = vadd.f32 %v8870, %v9030
        %v9032 = vpop.f32.mrf.mxu0
        %v9033 = vpop.f32.mrf.mxu0
        %v9034 = vadd.f32 %v8873, %v9033
        %v9035 = vpop.f32.mrf.mxu0
        %9036 = vmatprep.mubr.bf16.mxu0 %v7761
        %9037 = vmatmul.mubr.bf16.gmra.mxu0 %v7697
        %v9038 = vpop.f32.mrf.mxu0
        %v9039 = vadd.f32 %v8878, %v9038
        %v9040 = vpop.f32.mrf.mxu0
        %v9041 = vpop.f32.mrf.mxu0
        %v9042 = vadd.f32 %v8881, %v9041
        %v9043 = vpop.f32.mrf.mxu0
        %9044 = vmatprep.mubr.bf16.mxu0 %v7762
        %9045 = vmatmul.mubr.bf16.gmra.mxu0 %v7698
        %v9046 = vpop.f32.mrf.mxu0
        %v9047 = vadd.f32 %v8886, %v9046
        %v9048 = vpop.f32.mrf.mxu0
        %v9049 = vpop.f32.mrf.mxu0
        %v9050 = vadd.f32 %v8889, %v9049
        %v9051 = vpop.f32.mrf.mxu0
        %9052 = vdwg.mxu0
        %9053 = vmatprep.subr.bf16.mxu0 0
        %9054 = vmatpush1.bf16.msra.mxu0 %v8481
        %9055 = vmatprep.subr.bf16.mxu0 0
        %9056 = vmatpush1.bf16.msra.mxu0 %v8480
        %9057 = vmatprep.subr.bf16.mxu0 0
        %9058 = vmatpush1.bf16.msra.mxu0 %v8479
        %9059 = vmatprep.subr.bf16.mxu0 0
        %9060 = vmatpush1.bf16.msra.mxu0 %v8478
        %9061 = vmatprep.subr.bf16.mxu0 0
        %9062 = vmatpush1.bf16.msra.mxu0 %v8477
        %9063 = vmatprep.subr.bf16.mxu0 0
        %9064 = vmatpush1.bf16.msra.mxu0 %v8476
        %9065 = vmatprep.subr.bf16.mxu0 0
        %9066 = vmatpush1.bf16.msra.mxu0 %v8475
        %9067 = vmatprep.subr.bf16.mxu0 0
        %9068 = vmatpush1.bf16.msra.mxu0 %v8474
        %9069 = vmatprep.subr.bf16.mxu0 0
        %9070 = vmatpush2.bf16.msra.mxu0 %v8489
        %9071 = vmatprep.subr.bf16.mxu0 0
        %9072 = vmatpush2.bf16.msra.mxu0 %v8488
        %9073 = vmatprep.subr.bf16.mxu0 0
        %9074 = vmatpush2.bf16.msra.mxu0 %v8487
        %9075 = vmatprep.subr.bf16.mxu0 0
        %9076 = vmatpush2.bf16.msra.mxu0 %v8486
        %9077 = vmatprep.subr.bf16.mxu0 0
        %9078 = vmatpush2.bf16.msra.mxu0 %v8485
        %9079 = vmatprep.subr.bf16.mxu0 0
        %9080 = vmatpush2.bf16.msra.mxu0 %v8484
        %9081 = vmatprep.subr.bf16.mxu0 0
        %9082 = vmatpush2.bf16.msra.mxu0 %v8483
        %9083 = vmatprep.subr.bf16.mxu0 0
        %9084 = vmatpush2.bf16.msra.mxu0 %v8482
        %9085 = vmatprep.mubr.bf16.mxu0 %v7891
        %9086 = vmatmul.mubr.bf16.gmra.mxu0 %v7827
        %v9087 = vpop.f32.mrf.mxu0
        %v9088 = vadd.f32 %v8927, %v9087
        %v9089 = vpop.f32.mrf.mxu0
        %v9090 = vpop.f32.mrf.mxu0
        %v9091 = vadd.f32 %v8930, %v9090
        %v9092 = vpop.f32.mrf.mxu0
        %9093 = vmatprep.mubr.bf16.mxu0 %v7892
        %9094 = vmatmul.mubr.bf16.gmra.mxu0 %v7828
        %v9095 = vpop.f32.mrf.mxu0
        %v9096 = vadd.f32 %v8935, %v9095
        %v9097 = vpop.f32.mrf.mxu0
        %v9098 = vpop.f32.mrf.mxu0
        %v9099 = vadd.f32 %v8938, %v9098
        %v9100 = vpop.f32.mrf.mxu0
        %9101 = vmatprep.mubr.bf16.mxu0 %v7893
        %9102 = vmatmul.mubr.bf16.gmra.mxu0 %v7829
        %v9103 = vpop.f32.mrf.mxu0
        %v9104 = vadd.f32 %v8943, %v9103
        %v9105 = vpop.f32.mrf.mxu0
        %v9106 = vpop.f32.mrf.mxu0
        %v9107 = vadd.f32 %v8946, %v9106
        %v9108 = vpop.f32.mrf.mxu0
        %9109 = vmatprep.mubr.bf16.mxu0 %v7894
        %9110 = vmatmul.mubr.bf16.gmra.mxu0 %v7830
        %v9111 = vpop.f32.mrf.mxu0
        %v9112 = vadd.f32 %v8951, %v9111
        %v9113 = vpop.f32.mrf.mxu0
        %v9114 = vpop.f32.mrf.mxu0
        %v9115 = vadd.f32 %v8954, %v9114
        %v9116 = vpop.f32.mrf.mxu0
        %9117 = vmatprep.mubr.bf16.mxu0 %v7895
        %9118 = vmatmul.mubr.bf16.gmra.mxu0 %v7831
        %v9119 = vpop.f32.mrf.mxu0
        %v9120 = vadd.f32 %v8959, %v9119
        %v9121 = vpop.f32.mrf.mxu0
        %v9122 = vpop.f32.mrf.mxu0
        %v9123 = vadd.f32 %v8962, %v9122
        %v9124 = vpop.f32.mrf.mxu0
        %9125 = vmatprep.mubr.bf16.mxu0 %v7896
        %9126 = vmatmul.mubr.bf16.gmra.mxu0 %v7832
        %v9127 = vpop.f32.mrf.mxu0
        %v9128 = vadd.f32 %v8967, %v9127
        %v9129 = vpop.f32.mrf.mxu0
        %v9130 = vpop.f32.mrf.mxu0
        %v9131 = vadd.f32 %v8970, %v9130
        %v9132 = vpop.f32.mrf.mxu0
        %9133 = vmatprep.mubr.bf16.mxu0 %v7897
        %9134 = vmatmul.mubr.bf16.gmra.mxu0 %v7833
        %v9135 = vpop.f32.mrf.mxu0
        %v9136 = vadd.f32 %v8975, %v9135
        %v9137 = vpop.f32.mrf.mxu0
        %v9138 = vpop.f32.mrf.mxu0
        %v9139 = vadd.f32 %v8978, %v9138
        %v9140 = vpop.f32.mrf.mxu0
        %9141 = vmatprep.mubr.bf16.mxu0 %v7898
        %9142 = vmatmul.mubr.bf16.gmra.mxu0 %v7834
        %v9143 = vpop.f32.mrf.mxu0
        %v9144 = vadd.f32 %v8983, %v9143
        %v9145 = vpop.f32.mrf.mxu0
        %v9146 = vpop.f32.mrf.mxu0
        %v9147 = vadd.f32 %v8986, %v9146
        %v9148 = vpop.f32.mrf.mxu0
        %9149 = vmatprep.mubr.bf16.mxu0 %v7899
        %9150 = vmatmul.mubr.bf16.gmra.mxu0 %v7835
        %v9151 = vpop.f32.mrf.mxu0
        %v9152 = vadd.f32 %v8991, %v9151
        %v9153 = vpop.f32.mrf.mxu0
        %v9154 = vpop.f32.mrf.mxu0
        %v9155 = vadd.f32 %v8994, %v9154
        %v9156 = vpop.f32.mrf.mxu0
        %9157 = vmatprep.mubr.bf16.mxu0 %v7900
        %9158 = vmatmul.mubr.bf16.gmra.mxu0 %v7836
        %v9159 = vpop.f32.mrf.mxu0
        %v9160 = vadd.f32 %v8999, %v9159
        %v9161 = vpop.f32.mrf.mxu0
        %v9162 = vpop.f32.mrf.mxu0
        %v9163 = vadd.f32 %v9002, %v9162
        %v9164 = vpop.f32.mrf.mxu0
        %9165 = vmatprep.mubr.bf16.mxu0 %v7901
        %9166 = vmatmul.mubr.bf16.gmra.mxu0 %v7837
        %v9167 = vpop.f32.mrf.mxu0
        %v9168 = vadd.f32 %v9007, %v9167
        %v9169 = vpop.f32.mrf.mxu0
        %v9170 = vpop.f32.mrf.mxu0
        %v9171 = vadd.f32 %v9010, %v9170
        %v9172 = vpop.f32.mrf.mxu0
        %9173 = vmatprep.mubr.bf16.mxu0 %v7902
        %9174 = vmatmul.mubr.bf16.gmra.mxu0 %v7838
        %v9175 = vpop.f32.mrf.mxu0
        %v9176 = vadd.f32 %v9015, %v9175
        %v9177 = vpop.f32.mrf.mxu0
        %v9178 = vpop.f32.mrf.mxu0
        %v9179 = vadd.f32 %v9018, %v9178
        %v9180 = vpop.f32.mrf.mxu0
        %9181 = vmatprep.mubr.bf16.mxu0 %v7903
        %9182 = vmatmul.mubr.bf16.gmra.mxu0 %v7839
        %v9183 = vpop.f32.mrf.mxu0
        %v9184 = vadd.f32 %v9023, %v9183
        %v9185 = vpop.f32.mrf.mxu0
        %v9186 = vpop.f32.mrf.mxu0
        %v9187 = vadd.f32 %v9026, %v9186
        %v9188 = vpop.f32.mrf.mxu0
        %9189 = vmatprep.mubr.bf16.mxu0 %v7904
        %9190 = vmatmul.mubr.bf16.gmra.mxu0 %v7840
        %v9191 = vpop.f32.mrf.mxu0
        %v9192 = vadd.f32 %v9031, %v9191
        %v9193 = vpop.f32.mrf.mxu0
        %v9194 = vpop.f32.mrf.mxu0
        %v9195 = vadd.f32 %v9034, %v9194
        %v9196 = vpop.f32.mrf.mxu0
        %9197 = vmatprep.mubr.bf16.mxu0 %v7905
        %9198 = vmatmul.mubr.bf16.gmra.mxu0 %v7841
        %v9199 = vpop.f32.mrf.mxu0
        %v9200 = vadd.f32 %v9039, %v9199
        %v9201 = vpop.f32.mrf.mxu0
        %v9202 = vpop.f32.mrf.mxu0
        %v9203 = vadd.f32 %v9042, %v9202
        %v9204 = vpop.f32.mrf.mxu0
        %9205 = vmatprep.mubr.bf16.mxu0 %v7906
        %9206 = vmatmul.mubr.bf16.gmra.mxu0 %v7842
        %v9207 = vpop.f32.mrf.mxu0
        %v9208 = vadd.f32 %v9047, %v9207
        %v9209 = vpop.f32.mrf.mxu0
        %v9210 = vpop.f32.mrf.mxu0
        %v9211 = vadd.f32 %v9050, %v9210
        %v9212 = vpop.f32.mrf.mxu0
        %9213 = vdwg.mxu0
        %9214 = vmatprep.subr.bf16.mxu0 0
        %9215 = vmatpush1.bf16.msra.mxu0 %v8497
        %9216 = vmatprep.subr.bf16.mxu0 0
        %9217 = vmatpush1.bf16.msra.mxu0 %v8496
        %9218 = vmatprep.subr.bf16.mxu0 0
        %9219 = vmatpush1.bf16.msra.mxu0 %v8495
        %9220 = vmatprep.subr.bf16.mxu0 0
        %9221 = vmatpush1.bf16.msra.mxu0 %v8494
        %9222 = vmatprep.subr.bf16.mxu0 0
        %9223 = vmatpush1.bf16.msra.mxu0 %v8493
        %9224 = vmatprep.subr.bf16.mxu0 0
        %9225 = vmatpush1.bf16.msra.mxu0 %v8492
        %9226 = vmatprep.subr.bf16.mxu0 0
        %9227 = vmatpush1.bf16.msra.mxu0 %v8491
        %9228 = vmatprep.subr.bf16.mxu0 0
        %9229 = vmatpush1.bf16.msra.mxu0 %v8490
        %9230 = vmatprep.subr.bf16.mxu0 0
        %9231 = vmatpush2.bf16.msra.mxu0 0
        %9232 = vmatprep.subr.bf16.mxu0 0
        %9233 = vmatpush2.bf16.msra.mxu0 0
        %9234 = vmatprep.subr.bf16.mxu0 0
        %9235 = vmatpush2.bf16.msra.mxu0 0
        %9236 = vmatprep.subr.bf16.mxu0 0
        %9237 = vmatpush2.bf16.msra.mxu0 0
        %9238 = vmatprep.subr.bf16.mxu0 0
        %9239 = vmatpush2.bf16.msra.mxu0 0
        %9240 = vmatprep.subr.bf16.mxu0 0
        %9241 = vmatpush2.bf16.msra.mxu0 0
        %9242 = vmatprep.subr.bf16.mxu0 0
        %9243 = vmatpush2.bf16.msra.mxu0 0
        %9244 = vmatprep.subr.bf16.mxu0 0
        %9245 = vmatpush2.bf16.msra.mxu0 0
        %9246 = vmatprep.mubr.bf16.mxu0 0
        %9247 = vmatmul.mubr.bf16.gmra.mxu0 %v7955
        %v9248 = vpop.f32.mrf.mxu0
        %v9249 = vadd.f32 %v9088, %v9248
        %v9250 = vpop.f32.mrf.mxu0
        %v9251 = vpop.f32.mrf.mxu0
        %v9252 = vadd.f32 %v9091, %v9251
        %v9253 = vpop.f32.mrf.mxu0
        %9254 = vmatprep.mubr.bf16.mxu0 0
        %9255 = vmatmul.mubr.bf16.gmra.mxu0 %v7956
        %v9256 = vpop.f32.mrf.mxu0
        %v9257 = vadd.f32 %v9096, %v9256
        %v9258 = vpop.f32.mrf.mxu0
        %v9259 = vpop.f32.mrf.mxu0
        %v9260 = vadd.f32 %v9099, %v9259
        %v9261 = vpop.f32.mrf.mxu0
        %9262 = vmatprep.mubr.bf16.mxu0 0
        %9263 = vmatmul.mubr.bf16.gmra.mxu0 %v7957
        %v9264 = vpop.f32.mrf.mxu0
        %v9265 = vadd.f32 %v9104, %v9264
        %v9266 = vpop.f32.mrf.mxu0
        %v9267 = vpop.f32.mrf.mxu0
        %v9268 = vadd.f32 %v9107, %v9267
        %v9269 = vpop.f32.mrf.mxu0
        %9270 = vmatprep.mubr.bf16.mxu0 0
        %9271 = vmatmul.mubr.bf16.gmra.mxu0 %v7958
        %v9272 = vpop.f32.mrf.mxu0
        %v9273 = vadd.f32 %v9112, %v9272
        %v9274 = vpop.f32.mrf.mxu0
        %v9275 = vpop.f32.mrf.mxu0
        %v9276 = vadd.f32 %v9115, %v9275
        %v9277 = vpop.f32.mrf.mxu0
        %9278 = vmatprep.mubr.bf16.mxu0 0
        %9279 = vmatmul.mubr.bf16.gmra.mxu0 %v7959
        %v9280 = vpop.f32.mrf.mxu0
        %v9281 = vadd.f32 %v9120, %v9280
        %v9282 = vpop.f32.mrf.mxu0
        %v9283 = vpop.f32.mrf.mxu0
        %v9284 = vadd.f32 %v9123, %v9283
        %v9285 = vpop.f32.mrf.mxu0
        %9286 = vmatprep.mubr.bf16.mxu0 0
        %9287 = vmatmul.mubr.bf16.gmra.mxu0 %v7960
        %v9288 = vpop.f32.mrf.mxu0
        %v9289 = vadd.f32 %v9128, %v9288
        %v9290 = vpop.f32.mrf.mxu0
        %v9291 = vpop.f32.mrf.mxu0
        %v9292 = vadd.f32 %v9131, %v9291
        %v9293 = vpop.f32.mrf.mxu0
        %9294 = vmatprep.mubr.bf16.mxu0 0
        %9295 = vmatmul.mubr.bf16.gmra.mxu0 %v7961
        %v9296 = vpop.f32.mrf.mxu0
        %v9297 = vadd.f32 %v9136, %v9296
        %v9298 = vpop.f32.mrf.mxu0
        %v9299 = vpop.f32.mrf.mxu0
        %v9300 = vadd.f32 %v9139, %v9299
        %v9301 = vpop.f32.mrf.mxu0
        %9302 = vmatprep.mubr.bf16.mxu0 0
        %9303 = vmatmul.mubr.bf16.gmra.mxu0 %v7962
        %v9304 = vpop.f32.mrf.mxu0
        %v9305 = vadd.f32 %v9144, %v9304
        %v9306 = vpop.f32.mrf.mxu0
        %v9307 = vpop.f32.mrf.mxu0
        %v9308 = vadd.f32 %v9147, %v9307
        %v9309 = vpop.f32.mrf.mxu0
        %9310 = vmatprep.mubr.bf16.mxu0 0
        %9311 = vmatmul.mubr.bf16.gmra.mxu0 %v7963
        %v9312 = vpop.f32.mrf.mxu0
        %v9313 = vadd.f32 %v9152, %v9312
        %v9314 = vpop.f32.mrf.mxu0
        %v9315 = vpop.f32.mrf.mxu0
        %v9316 = vadd.f32 %v9155, %v9315
        %v9317 = vpop.f32.mrf.mxu0
        %9318 = vmatprep.mubr.bf16.mxu0 0
        %9319 = vmatmul.mubr.bf16.gmra.mxu0 %v7964
        %v9320 = vpop.f32.mrf.mxu0
        %v9321 = vadd.f32 %v9160, %v9320
        %v9322 = vpop.f32.mrf.mxu0
        %v9323 = vpop.f32.mrf.mxu0
        %v9324 = vadd.f32 %v9163, %v9323
        %v9325 = vpop.f32.mrf.mxu0
        %9326 = vmatprep.mubr.bf16.mxu0 0
        %9327 = vmatmul.mubr.bf16.gmra.mxu0 %v7965
        %v9328 = vpop.f32.mrf.mxu0
        %v9329 = vadd.f32 %v9168, %v9328
        %v9330 = vpop.f32.mrf.mxu0
        %v9331 = vpop.f32.mrf.mxu0
        %v9332 = vadd.f32 %v9171, %v9331
        %v9333 = vpop.f32.mrf.mxu0
        %9334 = vmatprep.mubr.bf16.mxu0 0
        %9335 = vmatmul.mubr.bf16.gmra.mxu0 %v7966
        %v9336 = vpop.f32.mrf.mxu0
        %v9337 = vadd.f32 %v9176, %v9336
        %v9338 = vpop.f32.mrf.mxu0
        %v9339 = vpop.f32.mrf.mxu0
        %v9340 = vadd.f32 %v9179, %v9339
        %v9341 = vpop.f32.mrf.mxu0
        %9342 = vmatprep.mubr.bf16.mxu0 0
        %9343 = vmatmul.mubr.bf16.gmra.mxu0 %v7967
        %v9344 = vpop.f32.mrf.mxu0
        %v9345 = vadd.f32 %v9184, %v9344
        %v9346 = vpop.f32.mrf.mxu0
        %v9347 = vpop.f32.mrf.mxu0
        %v9348 = vadd.f32 %v9187, %v9347
        %v9349 = vpop.f32.mrf.mxu0
        %9350 = vmatprep.mubr.bf16.mxu0 0
        %9351 = vmatmul.mubr.bf16.gmra.mxu0 %v7968
        %v9352 = vpop.f32.mrf.mxu0
        %v9353 = vadd.f32 %v9192, %v9352
        %v9354 = vpop.f32.mrf.mxu0
        %v9355 = vpop.f32.mrf.mxu0
        %v9356 = vadd.f32 %v9195, %v9355
        %v9357 = vpop.f32.mrf.mxu0
        %9358 = vmatprep.mubr.bf16.mxu0 0
        %9359 = vmatmul.mubr.bf16.gmra.mxu0 %v7969
        %v9360 = vpop.f32.mrf.mxu0
        %v9361 = vadd.f32 %v9200, %v9360
        %v9362 = vpop.f32.mrf.mxu0
        %v9363 = vpop.f32.mrf.mxu0
        %v9364 = vadd.f32 %v9203, %v9363
        %v9365 = vpop.f32.mrf.mxu0
        %9366 = vmatprep.mubr.bf16.mxu0 0
        %9367 = vmatmul.mubr.bf16.gmra.mxu0 %v7970
        %v9368 = vpop.f32.mrf.mxu0
        %v9369 = vadd.f32 %v9208, %v9368
        %v9370 = vpop.f32.mrf.mxu0
        %v9371 = vpop.f32.mrf.mxu0
        %v9372 = vadd.f32 %v9211, %v9371
        %v9373 = vpop.f32.mrf.mxu0
        %9374 = vdwg.mxu0
        %v9375 = vadd.f32 %v9249, %v9252
        %v9376 = vadd.f32 %v9375, %v9257
        %v9377 = vadd.f32 %v9376, %v9260
        %v9378 = vadd.f32 %v9377, %v9265
        %v9379 = vadd.f32 %v9378, %v9268
        %v9380 = vadd.f32 %v9379, %v9273
        %v9381 = vadd.f32 %v9380, %v9276
        %v9382 = vadd.f32 %v9381, %v9281
        %v9383 = vadd.f32 %v9382, %v9284
        %v9384 = vadd.f32 %v9383, %v9289
        %v9385 = vadd.f32 %v9384, %v9292
        %v9386 = vadd.f32 %v9385, %v9297
        %v9387 = vadd.f32 %v9386, %v9300
        %v9388 = vadd.f32 %v9387, %v9305
        %v9389 = vadd.f32 %v9388, %v9308
        %v9390 = vadd.f32 %v9389, %v9313
        %v9391 = vadd.f32 %v9390, %v9316
        %v9392 = vadd.f32 %v9391, %v9321
        %v9393 = vadd.f32 %v9392, %v9324
        %v9394 = vadd.f32 %v9393, %v9329
        %v9395 = vadd.f32 %v9394, %v9332
        %v9396 = vadd.f32 %v9395, %v9337
        %v9397 = vadd.f32 %v9396, %v9340
        %v9398 = vadd.f32 %v9397, %v9345
        %v9399 = vadd.f32 %v9398, %v9348
        %v9400 = vadd.f32 %v9399, %v9353
        %v9401 = vadd.f32 %v9400, %v9356
        %v9402 = vadd.f32 %v9401, %v9361
        %v9403 = vadd.f32 %v9402, %v9364
        %v9404 = vadd.f32 %v9403, %v9369
        %v9405 = vadd.f32 %v9404, %v9372
        %v9406 = vrot.slane %v9405, 4
        %v9407 = vadd.f32 %v9405, %v9406
        %v9408 = vrot.slane %v9407, 2
        %v9409 = vadd.f32 %v9407, %v9408
        %v9410 = vrot.slane %v9409, 1
        %v9411 = vadd.f32 %v9409, %v9410
        %v9412 = vrcp.pop 256.0
        %v9413 = vmul.f32 %v9411, %v9412
        %v9414 = vld [vmem:[%s5] sm:$0xff]
        %v9415 = vmul.f32 %v9413, %v9414
        %9416 = vadd.xlane.f32.xlu0 %v9415
        %v9417 = vpop.xlane.xlu0 %9416
        %v9418 = vld [vmem:[%s6] sm:$0xff]
        %v9419 = vadd.f32 %v9417, %v9418
        %vm9420 = vcmp.ge.f32.partialorder %v9419, 0.0
        %v9421 = vstv %s448
        %v9422 = vmul.f32 %v9421, %v9419
        %v9423 = vsel %vm9420, %v9419, %v9422
        %v9424 = vld [vmem:[%s7] sm:$0xff]
        %9426 = vset.pattern.permute.xlu0 0
        %9427 = vperm.xlu0 %9426, %v9423
        %v9428 = vpop.permute.xlu0 %9427
        %v9430 = vmul.f32 %v9428, %v9424
        %v9431 = vrot.slane %v9430, 4
        %v9432 = vadd.f32 %v9430, %v9431
        %v9433 = vrot.slane %v9432, 2
        %v9434 = vadd.f32 %v9432, %v9433
        %v9435 = vrot.slane %v9434, 1
        %v9436 = vadd.f32 %v9434, %v9435
        %v9437 = vld [vmem:[%s8] sm:$0x1]
        %v9438 = vadd.f32 %v9436, %v9437
        %v9439 = vsub.f32 0.0, %v9438
        %v9440 = vmul.f32 %v9439, 1.442695
        %v9441 = vpow.pop %v9440
        %v9442 = vadd.f32 %v9441, 1.0
        %v9443 = vrcp.pop %v9442
        %v9444 = vlaneseq
        %v9445 = vshrl.u32 %v9444, 7
        %v9446 = vsub.s32 0, %v9445
        %v9447 = vrot.slane %v9443, %v9446
        %v9448 = vmul.f32 %v9249, %v9447
        %v9449 = vmul.f32 %v9252, %v9447
        %v9450 = vmul.f32 %v9257, %v9447
        %v9451 = vmul.f32 %v9260, %v9447
        %v9452 = vmul.f32 %v9265, %v9447
        %v9453 = vmul.f32 %v9268, %v9447
        %v9454 = vmul.f32 %v9273, %v9447
        %v9455 = vmul.f32 %v9276, %v9447
        %v9456 = vmul.f32 %v9281, %v9447
        %v9457 = vmul.f32 %v9284, %v9447
        %v9458 = vmul.f32 %v9289, %v9447
        %v9459 = vmul.f32 %v9292, %v9447
        %v9460 = vmul.f32 %v9297, %v9447
        %v9461 = vmul.f32 %v9300, %v9447
        %v9462 = vmul.f32 %v9305, %v9447
        %v9463 = vmul.f32 %v9308, %v9447
        %v9464 = vmul.f32 %v9313, %v9447
        %v9465 = vmul.f32 %v9316, %v9447
        %v9466 = vmul.f32 %v9321, %v9447
        %v9467 = vmul.f32 %v9324, %v9447
        %v9468 = vmul.f32 %v9329, %v9447
        %v9469 = vmul.f32 %v9332, %v9447
        %v9470 = vmul.f32 %v9337, %v9447
        %v9471 = vmul.f32 %v9340, %v9447
        %v9472 = vmul.f32 %v9345, %v9447
        %v9473 = vmul.f32 %v9348, %v9447
        %v9474 = vmul.f32 %v9353, %v9447
        %v9475 = vmul.f32 %v9356, %v9447
        %v9476 = vmul.f32 %v9361, %v9447
        %v9477 = vmul.f32 %v9364, %v9447
        %v9478 = vmul.f32 %v9369, %v9447
        %v9479 = vmul.f32 %v9372, %v9447
        %v9480 = vadd.f32 %v9448, %v449
        %v9481 = vadd.f32 %v9449, %v450
        %v9482 = vadd.f32 %v9450, %v451
        %v9483 = vadd.f32 %v9451, %v452
        %v9484 = vadd.f32 %v9452, %v453
        %v9485 = vadd.f32 %v9453, %v454
        %v9486 = vadd.f32 %v9454, %v455
        %v9487 = vadd.f32 %v9455, %v456
        %v9488 = vadd.f32 %v9456, %v457
        %v9489 = vadd.f32 %v9457, %v458
        %v9490 = vadd.f32 %v9458, %v459
        %v9491 = vadd.f32 %v9459, %v460
        %v9492 = vadd.f32 %v9460, %v461
        %v9493 = vadd.f32 %v9461, %v462
        %v9494 = vadd.f32 %v9462, %v463
        %v9495 = vadd.f32 %v9463, %v464
        %v9496 = vadd.f32 %v9464, %v465
        %v9497 = vadd.f32 %v9465, %v466
        %v9498 = vadd.f32 %v9466, %v467
        %v9499 = vadd.f32 %v9467, %v468
        %v9500 = vadd.f32 %v9468, %v469
        %v9501 = vadd.f32 %v9469, %v470
        %v9502 = vadd.f32 %v9470, %v471
        %v9503 = vadd.f32 %v9471, %v472
        %v9504 = vadd.f32 %v9472, %v473
        %v9505 = vadd.f32 %v9473, %v474
        %v9506 = vadd.f32 %v9474, %v475
        %v9507 = vadd.f32 %v9475, %v476
        %v9508 = vadd.f32 %v9476, %v477
        %v9509 = vadd.f32 %v9477, %v478
        %v9510 = vadd.f32 %v9478, %v479
        %v9511 = vadd.f32 %v9479, %v480
        %9512 = vst [vmem:[%s445] sm:$0xff] %v9480
        %9513 = vst [vmem:[%s445 + $0x8] sm:$0xff] %v9481
        %9514 = vst [vmem:[%s445 + $0x10] sm:$0xff] %v9482
        %9515 = vst [vmem:[%s445 + $0x18] sm:$0xff] %v9483
        %9516 = vst [vmem:[%s445 + $0x20] sm:$0xff] %v9484
        %9517 = vst [vmem:[%s445 + $0x28] sm:$0xff] %v9485
        %9518 = vst [vmem:[%s445 + $0x30] sm:$0xff] %v9486
        %9519 = vst [vmem:[%s445 + $0x38] sm:$0xff] %v9487
        %9520 = vst [vmem:[%s445 + $0x40] sm:$0xff] %v9488
        %9521 = vst [vmem:[%s445 + $0x48] sm:$0xff] %v9489
        %9522 = vst [vmem:[%s445 + $0x50] sm:$0xff] %v9490
        %9523 = vst [vmem:[%s445 + $0x58] sm:$0xff] %v9491
        %9524 = vst [vmem:[%s445 + $0x60] sm:$0xff] %v9492
        %9525 = vst [vmem:[%s445 + $0x68] sm:$0xff] %v9493
        %9526 = vst [vmem:[%s445 + $0x70] sm:$0xff] %v9494
        %9527 = vst [vmem:[%s445 + $0x78] sm:$0xff] %v9495
        %9528 = vst [vmem:[%s445 + $0x80] sm:$0xff] %v9496
        %9529 = vst [vmem:[%s445 + $0x88] sm:$0xff] %v9497
        %9530 = vst [vmem:[%s445 + $0x90] sm:$0xff] %v9498
        %9531 = vst [vmem:[%s445 + $0x98] sm:$0xff] %v9499
        %9532 = vst [vmem:[%s445 + $0xa0] sm:$0xff] %v9500
        %9533 = vst [vmem:[%s445 + $0xa8] sm:$0xff] %v9501
        %9534 = vst [vmem:[%s445 + $0xb0] sm:$0xff] %v9502
        %9535 = vst [vmem:[%s445 + $0xb8] sm:$0xff] %v9503
        %9536 = vst [vmem:[%s445 + $0xc0] sm:$0xff] %v9504
        %9537 = vst [vmem:[%s445 + $0xc8] sm:$0xff] %v9505
        %9538 = vst [vmem:[%s445 + $0xd0] sm:$0xff] %v9506
        %9539 = vst [vmem:[%s445 + $0xd8] sm:$0xff] %v9507
        %9540 = vst [vmem:[%s445 + $0xe0] sm:$0xff] %v9508
        %9541 = vst [vmem:[%s445 + $0xe8] sm:$0xff] %v9509
        %9542 = vst [vmem:[%s445 + $0xf0] sm:$0xff] %v9510
        %9543 = vst [vmem:[%s445 + $0xf8] sm:$0xff] %v9511
        %s9544 = sand.u32 %s253, 1
        %s9545 = scalar_lea.sflag [#allocation5], %s9544
        %s9546 = sand.u32 %s253, 1
        %s9547 = smul.addr %s9546, 256
        %s9548 = scalar_lea.vmem [#allocation14], %s9547
        // Predicated region
        $region85: #{tpu_custom_call.1} parent=59 // pred_check
          %p9549 = pneg %p263
        $region86: #{tpu_custom_call.1} parent=59 // pred_check_branch
          %9551 = sbr.rel (%p9549) target = $region88
        $region87: #{tpu_custom_call.1} parent=59 // pred_region
          %s9553 = ssub.s32 4096, 4096
          %9554 = vsyncadd %s9545, %s9553
          %s9555 = smul.addr %s30, 32
          %s9556 = smul.addr %s9555, 128
          %s9557 = scalar_lea.hbm %s10, %s9556
          %s9558 = sshll.u32 %s9548, 4
          %s9559 = int_to_ptr.vmem [resolvable:$true] %s9558
          %9564 = dma.vmem_to_hbm [thread:$0]  %s9559, 4096, %s9557, %s9545, 128, 128, 8
        $region88: #{tpu_custom_call.1} parent=59 // pred_fallthru
          _
      $region60: #{tpu_custom_call.1} parent=5 // pred_fallthru
        _
      %p9565 = scmp.le.s32.totalorder 2, %s25
      // Predicated region
      $region89: #{tpu_custom_call.1} parent=5 // pred_check
        %p9566 = pneg %p9565
      $region90: #{tpu_custom_call.1} parent=5 // pred_check_branch
        %9568 = sbr.rel (%p9566) target = $region92
      $region91: #{tpu_custom_call.1} parent=5 // pred_region
        %s9569 = ssub.s32 %s25, 2
        // Predicated region
        $region93: #{tpu_custom_call.1} parent=91 // pred_check
          %p9570 = pneg %p269
        $region94: #{tpu_custom_call.1} parent=91 // pred_check_branch
          %9572 = sbr.rel (%p9570) target = $region96
        $region95: #{tpu_custom_call.1} parent=91 // pred_region
          %s9573 = sand.u32 %s254, 1
          %s9574 = scalar_lea.sflag [#allocation5], %s9573
          %s9575 = sand.u32 %s254, 1
          %s9576 = smul.addr %s9575, 256
          %s9577 = scalar_lea.vmem [#allocation14], %s9576
          %9578 = dma.done %s9574, 4096
        $region96: #{tpu_custom_call.1} parent=91 // pred_fallthru
          _
      $region92: #{tpu_custom_call.1} parent=5 // pred_fallthru
        _
    $region6: #{tpu_custom_call.1} parent=1 // loop_footer
      %s29 = sadd.s32 1, %s25
    $region7: #{tpu_custom_call.1} parent=1 // loop_footer_branch
      %24 = sbr.rel target = $region3
    $region8: #{tpu_custom_call.1} parent=1 // loop_exit
      _
    %9579 = vsyncpa [#allocation4], 1
    %s9580 = scalar_lea.sflag [#allocation4], 1
    %9581 = vsyncpa %s9580, 1
    %9582 = vsyncpa [#allocation8], 1
    %9583 = vsyncpa [#allocation11], 1
    %9584 = vsyncpa [#allocation5], 1
    %s9585 = scalar_lea.sflag [#allocation5], 1
    %9586 = vsyncpa %s9585, 1
    %9587 = vsyncpa [#allocation6], 1
    %s9588 = scalar_lea.sflag [#allocation6], 1
    %9589 = vsyncpa %s9588, 1

</llo_original>
